<compile_context>
chip_gen: v5e
topology: v5e:2x2
jax: 0.10.0
libtpu: 0.0.40
codegen_flags: <defaults>
</compile_context>

<pallas_src>
import math
from functools import partial

import jax
import jax.numpy as jnp
from jax.experimental import pallas as pl
from jax.experimental.pallas import tpu as pltpu

C_PAD = 128  # every channel dimension is padded to one full 128-lane vreg


# ---------------------------------------------------------------------------
# Parameter packing: PyTorch layouts -> kernel layouts (runs once, outside jit)
# ---------------------------------------------------------------------------
def pack_fc(w_pt, b_pt, ih, iw):
    """nn.Linear weight (out=64*ih*iw, in) / bias (out,) -> kernel layout.

    Kernel layout: (latent, (ih+2)*(iw+2)*C_PAD) bf16, columns laid out NHWC over
    the *zero-padded* (ih+2, iw+2) grid (halo columns identically zero), so the fc
    output is the conv0 padded input and is stored with ONE dense full-buffer write.
    """
    out_dim, latent_dim = w_pt.shape
    assert out_dim == 64 * ih * iw
    w = w_pt.reshape(64, ih, iw, latent_dim)                 # [c, i, j, l]
    w = jnp.transpose(w, (3, 1, 2, 0))                       # [l, i, j, c]
    wk = jnp.zeros((latent_dim, ih + 2, iw + 2, C_PAD), jnp.float32)
    wk = wk.at[:, 1:1 + ih, 1:1 + iw, :64].set(w)
    wk = wk.reshape(latent_dim, (ih + 2) * (iw + 2) * C_PAD)
    b = jnp.transpose(b_pt.reshape(64, ih, iw), (1, 2, 0))   # [i, j, c]
    bk = jnp.zeros((ih + 2, iw + 2, C_PAD), jnp.float32)
    bk = bk.at[1:1 + ih, 1:1 + iw, :64].set(b)
    bk = bk.reshape(1, (ih + 2) * (iw + 2) * C_PAD)
    return wk.astype(jnp.bfloat16), bk                       # bias stays f32


def pack_conv(w_pt, b_pt):
    """nn.Conv2d weight (Cout, Cin, 3, 3) / bias (Cout,) -> kernel layout.

    Kernel layout: (9*C_PAD, C_PAD) bf16, row index kh*3*C_PAD + kw*C_PAD + cin,
    matching the in-kernel im2col (kh-major, kw-middle, cin-minor lane order).
    """
    cout, cin, kh, kw = w_pt.shape
    assert kh == 3 and kw == 3 and cin <= C_PAD and cout <= C_PAD
    w = jnp.transpose(w_pt, (2, 3, 1, 0))                    # [kh, kw, ci, co]
    wk = jnp.zeros((3, 3, C_PAD, C_PAD), jnp.float32).at[:, :, :cin, :cout].set(w)
    wk = wk.reshape(9 * C_PAD, C_PAD)
    bk = jnp.zeros((1, C_PAD), jnp.float32).at[0, :cout].set(b_pt)
    return wk.astype(jnp.bfloat16), bk


def pack_params(torch_params, ih, iw):
    packed = {}
    packed["fc_w"], packed["fc_b"] = pack_fc(
        torch_params["fc_w"], torch_params["fc_b"], ih, iw)
    for i in range(4):
        packed[f"w{i}"], packed[f"b{i}"] = pack_conv(
            torch_params[f"w{i}"], torch_params[f"b{i}"])
    return packed


# ---------------------------------------------------------------------------
# Fused decoder kernel (one grid step == Bt batch elements)
# ---------------------------------------------------------------------------
def _decoder_kernel(latent_ref, fcw_ref, fcb_ref,
                    w0_ref, b0_ref, w1_ref, b1_ref,
                    w2_ref, b2_ref, w3_ref, b3_ref,
                    out_ref,
                    p0_ref, p1_ref, p2_ref, p3_ref,
                    *, ih, iw, height, width, channels):
    C = C_PAD
    Bt = latent_ref.shape[0]

    def zero_halo(pref):
        # Zero only the 1-pixel halo ring; the interior is fully overwritten right
        # after.  Done EVERY grid step (not gated on program_id) so it is correct
        # when the batch axis is split across v7x's two TensorCores.
        _, Hp, Wp, _ = pref.shape
        zrow = jnp.zeros((Bt, 1, Wp, C), pref.dtype)
        pref[:, 0:1, :, :] = zrow
        pref[:, Hp - 1:Hp, :, :] = zrow
        zcol = jnp.zeros((Bt, Hp - 2, 1, C), pref.dtype)
        pref[:, 1:Hp - 1, 0:1, :] = zcol
        pref[:, 1:Hp - 1, Wp - 1:Wp, :] = zcol

    def conv3x3(pref, w_ref, b_ref):
        # pref : (Bt, H+2, W+2, C) bf16 zero-padded NHWC input (VMEM scratch)
        # w_ref: (9C, C) bf16  [kh*3C + kw*C + cin, cout]    b_ref: (1, C) f32
        _, Hp, Wp, _ = pref.shape
        H, W = Hp - 2, Wp - 2
        xp = pref[...]
        # kw-im2col: 3 width-shifted slabs concatenated on the lane axis (K = 3C)
        xcat = jnp.concatenate(
            [xp[:, :, 0:W, :], xp[:, :, 1:1 + W, :], xp[:, :, 2:2 + W, :]],
            axis=-1)                                         # (Bt, H+2, W, 3C)
        if H * W <= 64:
            # Tiny-M convs: fuse all 9 taps into ONE matmul (K = 9C) — fewer MXU
            # issue/drain sequences on the half-filled 256-wide v6e/v7x array.
            patch = jnp.concatenate(
                [xcat[:, 0:H], xcat[:, 1:1 + H], xcat[:, 2:2 + H]], axis=-1)
            patch = patch.reshape(Bt * H * W, 9 * C)
            return jnp.dot(patch, w_ref[...],
                           preferred_element_type=jnp.float32) + b_ref[...]
        # Large convs: 3 kh matmuls; accumulator initialised by the first dot with
        # the bias folded in (no zero materialisation, one fewer full-tile add).
        acc = jnp.dot(xcat[:, 0:H].reshape(Bt * H * W, 3 * C), w_ref[0:3 * C, :],
                      preferred_element_type=jnp.float32) + b_ref[...]
        for kh in (1, 2):                                    # static Python loop
            acc = acc + jnp.dot(xcat[:, kh:kh + H].reshape(Bt * H * W, 3 * C),
                                w_ref[kh * 3 * C:(kh + 1) * 3 * C, :],
                                preferred_element_type=jnp.float32)
        return acc                                           # (Bt*H*W, C) f32

    def up2_into(pref, y, H, W):
        # y: (Bt*H*W, C) f32 activated -> 2x nearest upsample -> bf16 interior of
        # the next zero-halo-padded VMEM buffer.
        y = y.reshape(Bt, H, W, C)
        y = jnp.broadcast_to(y[:, :, None, :, :], (Bt, H, 2, W, C)).reshape(Bt, 2 * H, W, C)
        y = jnp.broadcast_to(y[:, :, :, None, :], (Bt, 2 * H, W, 2, C)).reshape(Bt, 2 * H, 2 * W, C)
        zero_halo(pref)
        pref[:, 1:1 + 2 * H, 1:1 + 2 * W, :] = y.astype(jnp.bfloat16)

    # ---- fc: latent -> zero-padded NHWC conv0 input; ONE dense full-buffer store
    # (weights pre-permuted + halo-padded so no scatter / no separate zero fill).
    L = latent_ref.shape[-1]
    lat = latent_ref[...].reshape(Bt, L).astype(jnp.bfloat16)
    fc = jnp.dot(lat, fcw_ref[...],
                 preferred_element_type=jnp.float32) + fcb_ref[...]    # (Bt, (ih+2)*(iw+2)*C)
    p0_ref[...] = fc.reshape(Bt, ih + 2, iw + 2, C).astype(jnp.bfloat16)

    # ---- conv stack (ReLU x3, then Sigmoid); all activations stay in VMEM
    y = jnp.maximum(conv3x3(p0_ref, w0_ref, b0_ref), 0.0)              # (Bt*ih*iw, C)
    up2_into(p1_ref, y, ih, iw)
    y = jnp.maximum(conv3x3(p1_ref, w1_ref, b1_ref), 0.0)              # (Bt*4*ih*iw, C)
    up2_into(p2_ref, y, 2 * ih, 2 * iw)
    y = jnp.maximum(conv3x3(p2_ref, w2_ref, b2_ref), 0.0)              # (Bt*16*ih*iw, C)
    up2_into(p3_ref, y, 4 * ih, 4 * iw)
    z = conv3x3(p3_ref, w3_ref, b3_ref)                                # pre-sigmoid

    # ---- crop + channel-planar epilogue: slice to the sublane group that holds
    # the real channels BEFORE transposing, apply sigmoid on the lane-dense slab.
    H3, W3 = 8 * ih, 8 * iw
    c_sub = min(C, 8 * ((channels + 7) // 8))
    z = z.reshape(Bt, H3, W3, C)[:, :height, :width, :c_sub]
    z = z.reshape(Bt, height * width, c_sub)
    if Bt == 1:
        zt = z.reshape(height * width, c_sub).T.reshape(1, c_sub, height * width)
    else:
        zt = jnp.transpose(z, (0, 2, 1))                               # (Bt, c_sub, H*W)
    out_ref[...] = jax.nn.sigmoid(zt[:, :channels, :])


# ---------------------------------------------------------------------------
# Public forward
# ---------------------------------------------------------------------------
def _scratch_bytes_per_image(ih, iw):
    total = 0
    for s in (1, 2, 4, 8):
        total += (s * ih + 2) * (s * iw + 2) * C_PAD * 2     # bf16 padded buffers
    total += 3 * (8 * ih) * (8 * iw) * 3 * C_PAD * 2         # im2col / acc temporaries
    return total


def position_decoder_forward(packed, latent, *, channels, height, width,
                             batch_block=None):
    B, L = latent.shape
    ih = math.ceil(height / 8)
    iw = math.ceil(width / 8)

    if batch_block is None:
        # Amortise the per-grid-step overhead by stacking Bt images on the matmul
        # M axis, but keep >=2 grid steps (v7x's two TensorCores both get work)
        # and stay well inside scoped VMEM.
        vmem_cap = max(1, (12 * 1024 * 1024) // _scratch_bytes_per_image(ih, iw))
        batch_block = max(1, min(B // 2, vmem_cap, 8))
    batch_block = max(1, min(batch_block, B))
    while B % batch_block != 0:
        batch_block -= 1
    Bt = batch_block

    latent3 = latent.reshape(B, 1, L)   # last two block dims == full array dims

    def const_spec(arr):
        zeros = (0,) * arr.ndim
        return pl.BlockSpec(arr.shape, lambda b, _z=zeros: _z)
        # TODO(synk): pipeline_mode=pl.Buffered(1) would drop the ~1.2 MB of
        # pointless double-buffering for these constant-index weights; left at the
        # default since VMEM headroom is ample at these sizes.

    kernel = partial(_decoder_kernel, ih=ih, iw=iw,
                     height=height, width=width, channels=channels)

    out = pl.pallas_call(
        kernel,
        out_shape=jax.ShapeDtypeStruct((B, channels, height * width), jnp.float32),
        grid_spec=pltpu.PrefetchScalarGridSpec(
            num_scalar_prefetch=0,
            grid=(B // Bt,),
            in_specs=[
                pl.BlockSpec((Bt, 1, L), lambda b: (b, 0, 0)),          # latent
                const_spec(packed["fc_w"]), const_spec(packed["fc_b"]),
                const_spec(packed["w0"]), const_spec(packed["b0"]),
                const_spec(packed["w1"]), const_spec(packed["b1"]),
                const_spec(packed["w2"]), const_spec(packed["b2"]),
                const_spec(packed["w3"]), const_spec(packed["b3"]),
            ],
            out_specs=pl.BlockSpec((Bt, channels, height * width),
                                   lambda b: (b, 0, 0)),
            scratch_shapes=[  # zero-halo-padded NHWC activation buffers (bf16, C=128)
                pltpu.VMEM((Bt, ih + 2, iw + 2, C_PAD), jnp.bfloat16),
                pltpu.VMEM((Bt, 2 * ih + 2, 2 * iw + 2, C_PAD), jnp.bfloat16),
                pltpu.VMEM((Bt, 4 * ih + 2, 4 * iw + 2, C_PAD), jnp.bfloat16),
                pltpu.VMEM((Bt, 8 * ih + 2, 8 * iw + 2, C_PAD), jnp.bfloat16),
            ],
        ),
        compiler_params=pltpu.CompilerParams(
            dimension_semantics=("parallel",),      # batch axis across v7x's 2 TCs
            vmem_limit_bytes=32 * 1024 * 1024,
        ),
    )(latent3, packed["fc_w"], packed["fc_b"],
      packed["w0"], packed["b0"], packed["w1"], packed["b1"],
      packed["w2"], packed["b2"], packed["w3"], packed["b3"])

    # TODO(synk): for much larger spatial sizes (>~128x128) the all-in-VMEM design
    # needs a W-tiled "arbitrary" grid axis on conv2/conv3 to fit v7x's 64 MiB VMEM.
    return out.reshape(B, channels, height, width)          # metadata-only reshape


# ---------------------------------------------------------------------------
# Synthetic init (PyTorch layouts) + pure-XLA reference for validation
# ---------------------------------------------------------------------------
def init_torch_params(key, latent_dim, channels, ih, iw):
    ks = jax.random.split(key, 10)

    def u(k, shape, fan_in):
        bound = 1.0 / math.sqrt(fan_in)
        return jax.random.uniform(k, shape, jnp.float32, -bound, bound)

    p = {}
    fc_out = 64 * ih * iw
    p["fc_w"] = u(ks[0], (fc_out, latent_dim), latent_dim)   # (out, in)
    p["fc_b"] = u(ks[1], (fc_out,), latent_dim)
    conv_dims = [(64, 64), (64, 32), (32, 16), (16, channels)]
    for i, (cin, cout) in enumerate(conv_dims):
        fan = cin * 9
        p[f"w{i}"] = u(ks[2 + 2 * i], (cout, cin, 3, 3), fan)  # torch OIHW
        p[f"b{i}"] = u(ks[3 + 2 * i], (cout,), fan)
    return p


def reference_forward(tp, latent, *, channels, height, width):
    ih, iw = math.ceil(height / 8), math.ceil(width / 8)
    B = latent.shape[0]

    def conv(x, w, b):
        y = jax.lax.conv_general_dilated(
            x, w, (1, 1), ((1, 1), (1, 1)),
            dimension_numbers=("NCHW", "OIHW", "NCHW"))
        return y + b[None, :, None, None]

    x = latent @ tp["fc_w"].T + tp["fc_b"]
    x = x.reshape(B, 64, ih, iw)
    x = jax.nn.relu(conv(x, tp["w0"], tp["b0"]))
    x = jnp.repeat(jnp.repeat(x, 2, axis=2), 2, axis=3)
    x = jax.nn.relu(conv(x, tp["w1"], tp["b1"]))
    x = jnp.repeat(jnp.repeat(x, 2, axis=2), 2, axis=3)
    x = jax.nn.relu(conv(x, tp["w2"], tp["b2"]))
    x = jnp.repeat(jnp.repeat(x, 2, axis=2), 2, axis=3)
    x = jax.nn.sigmoid(conv(x, tp["w3"], tp["b3"]))
    return x[:, :, :height, :width]


# ---------------------------------------------------------------------------
if __name__ == "__main__":
    LATENT_DIM = 32
    CHANNELS, HEIGHT, WIDTH = 3, 16, 16
    BATCH = 2

    init_h = math.ceil(HEIGHT / 8)
    init_w = math.ceil(WIDTH / 8)

    key = jax.random.PRNGKey(0)
    k_params, k_input = jax.random.split(key)
    torch_params = init_torch_params(k_params, LATENT_DIM, CHANNELS, init_h, init_w)
    packed = pack_params(torch_params, init_h, init_w)
    latent_A = jax.random.normal(k_input, (BATCH, LATENT_DIM), jnp.float32)

    fwd = jax.jit(partial(position_decoder_forward,
                          channels=CHANNELS, height=HEIGHT, width=WIDTH))
    out = jax.block_until_ready(fwd(packed, latent_A))

    assert out.shape == (BATCH, CHANNELS, HEIGHT, WIDTH), out.shape
    assert bool(jnp.all(jnp.isfinite(out)))
    assert bool(jnp.all((out >= 0.0) & (out <= 1.0)))        # sigmoid range

    # validate against the exact PyTorch-semantics reference (bf16 operands -> loose tol)
    ref = reference_forward(torch_params, latent_A,
                            channels=CHANNELS, height=HEIGHT, width=WIDTH)
    max_err = float(jnp.max(jnp.abs(out - ref)))
    assert max_err < 5e-2, f"max abs error vs reference too large: {max_err}"

    print("KERNEL_OK")
</pallas_src>

<mosaic_0001>
module attributes {stable_mosaic.version = 11 : i64} {
  func.func @_decoder_kernel(%arg0: i32, %arg1: memref<1x1x32xf32, #tpu.memory_space<vmem>>, %arg2: memref<32x2048xbf16, #tpu.memory_space<vmem>>, %arg3: memref<1x2048xf32, #tpu.memory_space<vmem>>, %arg4: memref<1152x128xbf16, #tpu.memory_space<vmem>>, %arg5: memref<1x128xf32, #tpu.memory_space<vmem>>, %arg6: memref<1152x128xbf16, #tpu.memory_space<vmem>>, %arg7: memref<1x128xf32, #tpu.memory_space<vmem>>, %arg8: memref<1152x128xbf16, #tpu.memory_space<vmem>>, %arg9: memref<1x128xf32, #tpu.memory_space<vmem>>, %arg10: memref<1152x128xbf16, #tpu.memory_space<vmem>>, %arg11: memref<1x128xf32, #tpu.memory_space<vmem>>, %arg12: memref<1x3x256xf32, #tpu.memory_space<vmem>>, %arg13: memref<1x4x4x128xbf16, #tpu.memory_space<vmem>>, %arg14: memref<1x6x6x128xbf16, #tpu.memory_space<vmem>>, %arg15: memref<1x10x10x128xbf16, #tpu.memory_space<vmem>>, %arg16: memref<1x18x18x128xbf16, #tpu.memory_space<vmem>>) attributes {dimension_semantics = [#tpu.dimension_semantics<parallel>], iteration_bounds = array<i64: 2>, scalar_prefetch = 0 : i64, scratch_operands = 4 : i64, tpu.core_type = #tpu.core_type<tc>, window_params = [{transform_indices = @transform_0, window_bounds = array<i64: 1, 1, 32>}, {pipeline_mode = #tpu.pipeline_mode<synchronous>, transform_indices = @transform_1, window_bounds = array<i64: 32, 2048>}, {pipeline_mode = #tpu.pipeline_mode<synchronous>, transform_indices = @transform_2, window_bounds = array<i64: 1, 2048>}, {pipeline_mode = #tpu.pipeline_mode<synchronous>, transform_indices = @transform_3, window_bounds = array<i64: 1152, 128>}, {pipeline_mode = #tpu.pipeline_mode<synchronous>, transform_indices = @transform_4, window_bounds = array<i64: 1, 128>}, {pipeline_mode = #tpu.pipeline_mode<synchronous>, transform_indices = @transform_5, window_bounds = array<i64: 1152, 128>}, {pipeline_mode = #tpu.pipeline_mode<synchronous>, transform_indices = @transform_6, window_bounds = array<i64: 1, 128>}, {pipeline_mode = #tpu.pipeline_mode<synchronous>, transform_indices = @transform_7, window_bounds = array<i64: 1152, 128>}, {pipeline_mode = #tpu.pipeline_mode<synchronous>, transform_indices = @transform_8, window_bounds = array<i64: 1, 128>}, {pipeline_mode = #tpu.pipeline_mode<synchronous>, transform_indices = @transform_9, window_bounds = array<i64: 1152, 128>}, {pipeline_mode = #tpu.pipeline_mode<synchronous>, transform_indices = @transform_10, window_bounds = array<i64: 1, 128>}, {transform_indices = @transform_11, window_bounds = array<i64: 1, 3, 256>}]} {
    %c0 = arith.constant 0 : index
    %c0_0 = arith.constant 0 : index
    %c0_1 = arith.constant 0 : index
    %0 = vector.load %arg1[%c0, %c0_0, %c0_1] : memref<1x1x32xf32, #tpu.memory_space<vmem>>, vector<1x1x32xf32>
    %1 = vector.shape_cast %0 : vector<1x1x32xf32> to vector<1x32xf32>
    %2 = arith.truncf %1 : vector<1x32xf32> to vector<1x32xbf16>
    %c0_2 = arith.constant 0 : index
    %c0_3 = arith.constant 0 : index
    %3 = vector.load %arg2[%c0_2, %c0_3] : memref<32x2048xbf16, #tpu.memory_space<vmem>>, vector<32x2048xbf16>
    %cst = arith.constant dense<0.000000e+00> : vector<1x2048xf32>
    %4 = tpu.matmul %2, %3, %cst {dimension_numbers = #tpu.dot_dimension_numbers<[1], [0], [0], [1], [0, 0, 1, 1], [], []>} : vector<1x32xbf16>, vector<32x2048xbf16>, vector<1x2048xf32> -> vector<1x2048xf32>
    %c0_4 = arith.constant 0 : index
    %c0_5 = arith.constant 0 : index
    %5 = vector.load %arg3[%c0_4, %c0_5] : memref<1x2048xf32, #tpu.memory_space<vmem>>, vector<1x2048xf32>
    %6 = arith.addf %4, %5 : vector<1x2048xf32>
    %7 = vector.shape_cast %6 : vector<1x2048xf32> to vector<1x4x4x128xf32>
    %8 = arith.truncf %7 : vector<1x4x4x128xf32> to vector<1x4x4x128xbf16>
    %c0_6 = arith.constant 0 : index
    %c0_7 = arith.constant 0 : index
    %c0_8 = arith.constant 0 : index
    %c0_9 = arith.constant 0 : index
    %9 = vector.load %arg13[%c0_6, %c0_7, %c0_8, %c0_9] : memref<1x4x4x128xbf16, #tpu.memory_space<vmem>>, vector<1x4x4x128xbf16>
    tpu.vector_store %arg13[%c0_6, %c0_7, %c0_8, %c0_9], %8 {strides = array<i32>} : memref<1x4x4x128xbf16, #tpu.memory_space<vmem>>, vector<1x4x4x128xbf16>,
    %c0_10 = arith.constant 0 : index
    %c0_11 = arith.constant 0 : index
    %c0_12 = arith.constant 0 : index
    %c0_13 = arith.constant 0 : index
    %10 = vector.load %arg13[%c0_10, %c0_11, %c0_12, %c0_13] : memref<1x4x4x128xbf16, #tpu.memory_space<vmem>>, vector<1x4x4x128xbf16>
    %11 = vector.extract_strided_slice %10 {offsets = [0, 0, 0, 0], sizes = [1, 4, 2, 128], strides = [1, 1, 1, 1]} : vector<1x4x4x128xbf16> to vector<1x4x2x128xbf16>
    %12 = vector.extract_strided_slice %10 {offsets = [0, 0, 1, 0], sizes = [1, 4, 2, 128], strides = [1, 1, 1, 1]} : vector<1x4x4x128xbf16> to vector<1x4x2x128xbf16>
    %13 = vector.extract_strided_slice %10 {offsets = [0, 0, 2, 0], sizes = [1, 4, 2, 128], strides = [1, 1, 1, 1]} : vector<1x4x4x128xbf16> to vector<1x4x2x128xbf16>
    %14 = tpu.concatenate %11, %12, %13 in 3 : vector<1x4x2x128xbf16>, vector<1x4x2x128xbf16>, vector<1x4x2x128xbf16> -> vector<1x4x2x384xbf16>
    %15 = vector.extract_strided_slice %14 {offsets = [0, 0, 0, 0], sizes = [1, 2, 2, 384], strides = [1, 1, 1, 1]} : vector<1x4x2x384xbf16> to vector<1x2x2x384xbf16>
    %16 = vector.extract_strided_slice %14 {offsets = [0, 1, 0, 0], sizes = [1, 2, 2, 384], strides = [1, 1, 1, 1]} : vector<1x4x2x384xbf16> to vector<1x2x2x384xbf16>
    %17 = vector.extract_strided_slice %14 {offsets = [0, 2, 0, 0], sizes = [1, 2, 2, 384], strides = [1, 1, 1, 1]} : vector<1x4x2x384xbf16> to vector<1x2x2x384xbf16>
    %18 = tpu.concatenate %15, %16, %17 in 3 : vector<1x2x2x384xbf16>, vector<1x2x2x384xbf16>, vector<1x2x2x384xbf16> -> vector<1x2x2x1152xbf16>
    %19 = vector.shape_cast %18 : vector<1x2x2x1152xbf16> to vector<4x1152xbf16>
    %c0_14 = arith.constant 0 : index
    %c0_15 = arith.constant 0 : index
    %20 = vector.load %arg4[%c0_14, %c0_15] : memref<1152x128xbf16, #tpu.memory_space<vmem>>, vector<1152x128xbf16>
    %cst_16 = arith.constant dense<0.000000e+00> : vector<4x128xf32>
    %21 = tpu.matmul %19, %20, %cst_16 {dimension_numbers = #tpu.dot_dimension_numbers<[1], [0], [0], [1], [0, 0, 1, 1], [], []>} : vector<4x1152xbf16>, vector<1152x128xbf16>, vector<4x128xf32> -> vector<4x128xf32>
    %c0_17 = arith.constant 0 : index
    %c0_18 = arith.constant 0 : index
    %22 = vector.load %arg5[%c0_17, %c0_18] : memref<1x128xf32, #tpu.memory_space<vmem>>, vector<1x128xf32>
    %23 = vector.broadcast %22 : vector<1x128xf32> to vector<4x128xf32>
    %24 = arith.addf %21, %23 : vector<4x128xf32>
    %cst_19 = arith.constant 0.000000e+00 : f32
    %25 = vector.broadcast %cst_19 : f32 to vector<4x128xf32>
    %26 = arith.maximumf %24, %25 : vector<4x128xf32>
    %27 = vector.shape_cast %26 : vector<4x128xf32> to vector<1x2x2x128xf32>
    %28 = vector.shape_cast %27 : vector<1x2x2x128xf32> to vector<1x2x1x2x128xf32>
    %29 = vector.shape_cast %28 : vector<1x2x1x2x128xf32> to vector<1x2x1x2x128xf32>
    %30 = vector.broadcast %29 : vector<1x2x1x2x128xf32> to vector<1x2x2x2x128xf32>
    %31 = vector.shape_cast %30 : vector<1x2x2x2x128xf32> to vector<1x4x2x128xf32>
    %32 = vector.shape_cast %31 : vector<1x4x2x128xf32> to vector<1x4x2x1x128xf32>
    %33 = vector.shape_cast %32 : vector<1x4x2x1x128xf32> to vector<1x4x2x1x128xf32>
    %34 = vector.broadcast %33 : vector<1x4x2x1x128xf32> to vector<1x4x2x2x128xf32>
    %35 = vector.shape_cast %34 : vector<1x4x2x2x128xf32> to vector<1x4x4x128xf32>
    %cst_20 = arith.constant 0.000000e+00 : bf16
    %36 = vector.broadcast %cst_20 : bf16 to vector<1x1x6x128xbf16>
    %c0_21 = arith.constant 0 : index
    %c0_22 = arith.constant 0 : index
    %c0_23 = arith.constant 0 : index
    %c0_24 = arith.constant 0 : index
    %37 = vector.load %arg14[%c0_21, %c0_22, %c0_23, %c0_24] : memref<1x6x6x128xbf16, #tpu.memory_space<vmem>>, vector<1x1x6x128xbf16>
    tpu.vector_store %arg14[%c0_21, %c0_22, %c0_23, %c0_24], %36 {strides = array<i32>} : memref<1x6x6x128xbf16, #tpu.memory_space<vmem>>, vector<1x1x6x128xbf16>,
    %c0_25 = arith.constant 0 : index
    %c5 = arith.constant 5 : index
    %c0_26 = arith.constant 0 : index
    %c0_27 = arith.constant 0 : index
    %38 = vector.load %arg14[%c0_25, %c5, %c0_26, %c0_27] : memref<1x6x6x128xbf16, #tpu.memory_space<vmem>>, vector<1x1x6x128xbf16>
    tpu.vector_store %arg14[%c0_25, %c5, %c0_26, %c0_27], %36 {strides = array<i32>} : memref<1x6x6x128xbf16, #tpu.memory_space<vmem>>, vector<1x1x6x128xbf16>,
    %cst_28 = arith.constant 0.000000e+00 : bf16
    %39 = vector.broadcast %cst_28 : bf16 to vector<1x4x1x128xbf16>
    %c0_29 = arith.constant 0 : index
    %c1 = arith.constant 1 : index
    %c0_30 = arith.constant 0 : index
    %c0_31 = arith.constant 0 : index
    %40 = vector.load %arg14[%c0_29, %c1, %c0_30, %c0_31] : memref<1x6x6x128xbf16, #tpu.memory_space<vmem>>, vector<1x4x1x128xbf16>
    tpu.vector_store %arg14[%c0_29, %c1, %c0_30, %c0_31], %39 {strides = array<i32>} : memref<1x6x6x128xbf16, #tpu.memory_space<vmem>>, vector<1x4x1x128xbf16>,
    %c0_32 = arith.constant 0 : index
    %c1_33 = arith.constant 1 : index
    %c5_34 = arith.constant 5 : index
    %c0_35 = arith.constant 0 : index
    %41 = vector.load %arg14[%c0_32, %c1_33, %c5_34, %c0_35] : memref<1x6x6x128xbf16, #tpu.memory_space<vmem>>, vector<1x4x1x128xbf16>
    tpu.vector_store %arg14[%c0_32, %c1_33, %c5_34, %c0_35], %39 {strides = array<i32>} : memref<1x6x6x128xbf16, #tpu.memory_space<vmem>>, vector<1x4x1x128xbf16>,
    %42 = arith.truncf %35 : vector<1x4x4x128xf32> to vector<1x4x4x128xbf16>
    %c0_36 = arith.constant 0 : index
    %c1_37 = arith.constant 1 : index
    %c1_38 = arith.constant 1 : index
    %c0_39 = arith.constant 0 : index
    %43 = vector.load %arg14[%c0_36, %c1_37, %c1_38, %c0_39] : memref<1x6x6x128xbf16, #tpu.memory_space<vmem>>, vector<1x4x4x128xbf16>
    tpu.vector_store %arg14[%c0_36, %c1_37, %c1_38, %c0_39], %42 {strides = array<i32>} : memref<1x6x6x128xbf16, #tpu.memory_space<vmem>>, vector<1x4x4x128xbf16>,
    %c0_40 = arith.constant 0 : index
    %c0_41 = arith.constant 0 : index
    %c0_42 = arith.constant 0 : index
    %c0_43 = arith.constant 0 : index
    %44 = vector.load %arg14[%c0_40, %c0_41, %c0_42, %c0_43] : memref<1x6x6x128xbf16, #tpu.memory_space<vmem>>, vector<1x6x6x128xbf16>
    %45 = vector.extract_strided_slice %44 {offsets = [0, 0, 0, 0], sizes = [1, 6, 4, 128], strides = [1, 1, 1, 1]} : vector<1x6x6x128xbf16> to vector<1x6x4x128xbf16>
    %46 = vector.extract_strided_slice %44 {offsets = [0, 0, 1, 0], sizes = [1, 6, 4, 128], strides = [1, 1, 1, 1]} : vector<1x6x6x128xbf16> to vector<1x6x4x128xbf16>
    %47 = vector.extract_strided_slice %44 {offsets = [0, 0, 2, 0], sizes = [1, 6, 4, 128], strides = [1, 1, 1, 1]} : vector<1x6x6x128xbf16> to vector<1x6x4x128xbf16>
    %48 = tpu.concatenate %45, %46, %47 in 3 : vector<1x6x4x128xbf16>, vector<1x6x4x128xbf16>, vector<1x6x4x128xbf16> -> vector<1x6x4x384xbf16>
    %49 = vector.extract_strided_slice %48 {offsets = [0, 0, 0, 0], sizes = [1, 4, 4, 384], strides = [1, 1, 1, 1]} : vector<1x6x4x384xbf16> to vector<1x4x4x384xbf16>
    %50 = vector.extract_strided_slice %48 {offsets = [0, 1, 0, 0], sizes = [1, 4, 4, 384], strides = [1, 1, 1, 1]} : vector<1x6x4x384xbf16> to vector<1x4x4x384xbf16>
    %51 = vector.extract_strided_slice %48 {offsets = [0, 2, 0, 0], sizes = [1, 4, 4, 384], strides = [1, 1, 1, 1]} : vector<1x6x4x384xbf16> to vector<1x4x4x384xbf16>
    %52 = tpu.concatenate %49, %50, %51 in 3 : vector<1x4x4x384xbf16>, vector<1x4x4x384xbf16>, vector<1x4x4x384xbf16> -> vector<1x4x4x1152xbf16>
    %53 = vector.shape_cast %52 : vector<1x4x4x1152xbf16> to vector<16x1152xbf16>
    %c0_44 = arith.constant 0 : index
    %c0_45 = arith.constant 0 : index
    %54 = vector.load %arg6[%c0_44, %c0_45] : memref<1152x128xbf16, #tpu.memory_space<vmem>>, vector<1152x128xbf16>
    %cst_46 = arith.constant dense<0.000000e+00> : vector<16x128xf32>
    %55 = tpu.matmul %53, %54, %cst_46 {dimension_numbers = #tpu.dot_dimension_numbers<[1], [0], [0], [1], [0, 0, 1, 1], [], []>} : vector<16x1152xbf16>, vector<1152x128xbf16>, vector<16x128xf32> -> vector<16x128xf32>
    %c0_47 = arith.constant 0 : index
    %c0_48 = arith.constant 0 : index
    %56 = vector.load %arg7[%c0_47, %c0_48] : memref<1x128xf32, #tpu.memory_space<vmem>>, vector<1x128xf32>
    %57 = vector.broadcast %56 : vector<1x128xf32> to vector<16x128xf32>
    %58 = arith.addf %55, %57 : vector<16x128xf32>
    %cst_49 = arith.constant 0.000000e+00 : f32
    %59 = vector.broadcast %cst_49 : f32 to vector<16x128xf32>
    %60 = arith.maximumf %58, %59 : vector<16x128xf32>
    %61 = vector.shape_cast %60 : vector<16x128xf32> to vector<1x4x4x128xf32>
    %62 = vector.shape_cast %61 : vector<1x4x4x128xf32> to vector<1x4x1x4x128xf32>
    %63 = vector.shape_cast %62 : vector<1x4x1x4x128xf32> to vector<1x4x1x4x128xf32>
    %64 = vector.broadcast %63 : vector<1x4x1x4x128xf32> to vector<1x4x2x4x128xf32>
    %65 = vector.shape_cast %64 : vector<1x4x2x4x128xf32> to vector<1x8x4x128xf32>
    %66 = vector.shape_cast %65 : vector<1x8x4x128xf32> to vector<1x8x4x1x128xf32>
    %67 = vector.shape_cast %66 : vector<1x8x4x1x128xf32> to vector<1x8x4x1x128xf32>
    %68 = vector.broadcast %67 : vector<1x8x4x1x128xf32> to vector<1x8x4x2x128xf32>
    %69 = vector.shape_cast %68 : vector<1x8x4x2x128xf32> to vector<1x8x8x128xf32>
    %cst_50 = arith.constant 0.000000e+00 : bf16
    %70 = vector.broadcast %cst_50 : bf16 to vector<1x1x10x128xbf16>
    %c0_51 = arith.constant 0 : index
    %c0_52 = arith.constant 0 : index
    %c0_53 = arith.constant 0 : index
    %c0_54 = arith.constant 0 : index
    %71 = vector.load %arg15[%c0_51, %c0_52, %c0_53, %c0_54] : memref<1x10x10x128xbf16, #tpu.memory_space<vmem>>, vector<1x1x10x128xbf16>
    tpu.vector_store %arg15[%c0_51, %c0_52, %c0_53, %c0_54], %70 {strides = array<i32>} : memref<1x10x10x128xbf16, #tpu.memory_space<vmem>>, vector<1x1x10x128xbf16>,
    %c0_55 = arith.constant 0 : index
    %c9 = arith.constant 9 : index
    %c0_56 = arith.constant 0 : index
    %c0_57 = arith.constant 0 : index
    %72 = vector.load %arg15[%c0_55, %c9, %c0_56, %c0_57] : memref<1x10x10x128xbf16, #tpu.memory_space<vmem>>, vector<1x1x10x128xbf16>
    tpu.vector_store %arg15[%c0_55, %c9, %c0_56, %c0_57], %70 {strides = array<i32>} : memref<1x10x10x128xbf16, #tpu.memory_space<vmem>>, vector<1x1x10x128xbf16>,
    %cst_58 = arith.constant 0.000000e+00 : bf16
    %73 = vector.broadcast %cst_58 : bf16 to vector<1x8x1x128xbf16>
    %c0_59 = arith.constant 0 : index
    %c1_60 = arith.constant 1 : index
    %c0_61 = arith.constant 0 : index
    %c0_62 = arith.constant 0 : index
    %74 = vector.load %arg15[%c0_59, %c1_60, %c0_61, %c0_62] : memref<1x10x10x128xbf16, #tpu.memory_space<vmem>>, vector<1x8x1x128xbf16>
    tpu.vector_store %arg15[%c0_59, %c1_60, %c0_61, %c0_62], %73 {strides = array<i32>} : memref<1x10x10x128xbf16, #tpu.memory_space<vmem>>, vector<1x8x1x128xbf16>,
    %c0_63 = arith.constant 0 : index
    %c1_64 = arith.constant 1 : index
    %c9_65 = arith.constant 9 : index
    %c0_66 = arith.constant 0 : index
    %75 = vector.load %arg15[%c0_63, %c1_64, %c9_65, %c0_66] : memref<1x10x10x128xbf16, #tpu.memory_space<vmem>>, vector<1x8x1x128xbf16>
    tpu.vector_store %arg15[%c0_63, %c1_64, %c9_65, %c0_66], %73 {strides = array<i32>} : memref<1x10x10x128xbf16, #tpu.memory_space<vmem>>, vector<1x8x1x128xbf16>,
    %76 = arith.truncf %69 : vector<1x8x8x128xf32> to vector<1x8x8x128xbf16>
    %c0_67 = arith.constant 0 : index
    %c1_68 = arith.constant 1 : index
    %c1_69 = arith.constant 1 : index
    %c0_70 = arith.constant 0 : index
    %77 = vector.load %arg15[%c0_67, %c1_68, %c1_69, %c0_70] : memref<1x10x10x128xbf16, #tpu.memory_space<vmem>>, vector<1x8x8x128xbf16>
    tpu.vector_store %arg15[%c0_67, %c1_68, %c1_69, %c0_70], %76 {strides = array<i32>} : memref<1x10x10x128xbf16, #tpu.memory_space<vmem>>, vector<1x8x8x128xbf16>,
    %c0_71 = arith.constant 0 : index
    %c0_72 = arith.constant 0 : index
    %c0_73 = arith.constant 0 : index
    %c0_74 = arith.constant 0 : index
    %78 = vector.load %arg15[%c0_71, %c0_72, %c0_73, %c0_74] : memref<1x10x10x128xbf16, #tpu.memory_space<vmem>>, vector<1x10x10x128xbf16>
    %79 = vector.extract_strided_slice %78 {offsets = [0, 0, 0, 0], sizes = [1, 10, 8, 128], strides = [1, 1, 1, 1]} : vector<1x10x10x128xbf16> to vector<1x10x8x128xbf16>
    %80 = vector.extract_strided_slice %78 {offsets = [0, 0, 1, 0], sizes = [1, 10, 8, 128], strides = [1, 1, 1, 1]} : vector<1x10x10x128xbf16> to vector<1x10x8x128xbf16>
    %81 = vector.extract_strided_slice %78 {offsets = [0, 0, 2, 0], sizes = [1, 10, 8, 128], strides = [1, 1, 1, 1]} : vector<1x10x10x128xbf16> to vector<1x10x8x128xbf16>
    %82 = tpu.concatenate %79, %80, %81 in 3 : vector<1x10x8x128xbf16>, vector<1x10x8x128xbf16>, vector<1x10x8x128xbf16> -> vector<1x10x8x384xbf16>
    %83 = vector.extract_strided_slice %82 {offsets = [0, 0, 0, 0], sizes = [1, 8, 8, 384], strides = [1, 1, 1, 1]} : vector<1x10x8x384xbf16> to vector<1x8x8x384xbf16>
    %84 = vector.extract_strided_slice %82 {offsets = [0, 1, 0, 0], sizes = [1, 8, 8, 384], strides = [1, 1, 1, 1]} : vector<1x10x8x384xbf16> to vector<1x8x8x384xbf16>
    %85 = vector.extract_strided_slice %82 {offsets = [0, 2, 0, 0], sizes = [1, 8, 8, 384], strides = [1, 1, 1, 1]} : vector<1x10x8x384xbf16> to vector<1x8x8x384xbf16>
    %86 = tpu.concatenate %83, %84, %85 in 3 : vector<1x8x8x384xbf16>, vector<1x8x8x384xbf16>, vector<1x8x8x384xbf16> -> vector<1x8x8x1152xbf16>
    %87 = vector.shape_cast %86 : vector<1x8x8x1152xbf16> to vector<64x1152xbf16>
    %c0_75 = arith.constant 0 : index
    %c0_76 = arith.constant 0 : index
    %88 = vector.load %arg8[%c0_75, %c0_76] : memref<1152x128xbf16, #tpu.memory_space<vmem>>, vector<1152x128xbf16>
    %cst_77 = arith.constant dense<0.000000e+00> : vector<64x128xf32>
    %89 = tpu.matmul %87, %88, %cst_77 {dimension_numbers = #tpu.dot_dimension_numbers<[1], [0], [0], [1], [0, 0, 1, 1], [], []>} : vector<64x1152xbf16>, vector<1152x128xbf16>, vector<64x128xf32> -> vector<64x128xf32>
    %c0_78 = arith.constant 0 : index
    %c0_79 = arith.constant 0 : index
    %90 = vector.load %arg9[%c0_78, %c0_79] : memref<1x128xf32, #tpu.memory_space<vmem>>, vector<1x128xf32>
    %91 = vector.broadcast %90 : vector<1x128xf32> to vector<64x128xf32>
    %92 = arith.addf %89, %91 : vector<64x128xf32>
    %cst_80 = arith.constant 0.000000e+00 : f32
    %93 = vector.broadcast %cst_80 : f32 to vector<64x128xf32>
    %94 = arith.maximumf %92, %93 : vector<64x128xf32>
    %95 = vector.shape_cast %94 : vector<64x128xf32> to vector<1x8x8x128xf32>
    %96 = vector.shape_cast %95 : vector<1x8x8x128xf32> to vector<1x8x1x8x128xf32>
    %97 = vector.shape_cast %96 : vector<1x8x1x8x128xf32> to vector<1x8x1x8x128xf32>
    %98 = vector.broadcast %97 : vector<1x8x1x8x128xf32> to vector<1x8x2x8x128xf32>
    %99 = vector.shape_cast %98 : vector<1x8x2x8x128xf32> to vector<1x16x8x128xf32>
    %100 = vector.shape_cast %99 : vector<1x16x8x128xf32> to vector<1x16x8x1x128xf32>
    %101 = vector.shape_cast %100 : vector<1x16x8x1x128xf32> to vector<1x16x8x1x128xf32>
    %102 = vector.broadcast %101 : vector<1x16x8x1x128xf32> to vector<1x16x8x2x128xf32>
    %103 = vector.shape_cast %102 : vector<1x16x8x2x128xf32> to vector<1x16x16x128xf32>
    %cst_81 = arith.constant 0.000000e+00 : bf16
    %104 = vector.broadcast %cst_81 : bf16 to vector<1x1x18x128xbf16>
    %c0_82 = arith.constant 0 : index
    %c0_83 = arith.constant 0 : index
    %c0_84 = arith.constant 0 : index
    %c0_85 = arith.constant 0 : index
    %105 = vector.load %arg16[%c0_82, %c0_83, %c0_84, %c0_85] : memref<1x18x18x128xbf16, #tpu.memory_space<vmem>>, vector<1x1x18x128xbf16>
    tpu.vector_store %arg16[%c0_82, %c0_83, %c0_84, %c0_85], %104 {strides = array<i32>} : memref<1x18x18x128xbf16, #tpu.memory_space<vmem>>, vector<1x1x18x128xbf16>,
    %c0_86 = arith.constant 0 : index
    %c17 = arith.constant 17 : index
    %c0_87 = arith.constant 0 : index
    %c0_88 = arith.constant 0 : index
    %106 = vector.load %arg16[%c0_86, %c17, %c0_87, %c0_88] : memref<1x18x18x128xbf16, #tpu.memory_space<vmem>>, vector<1x1x18x128xbf16>
    tpu.vector_store %arg16[%c0_86, %c17, %c0_87, %c0_88], %104 {strides = array<i32>} : memref<1x18x18x128xbf16, #tpu.memory_space<vmem>>, vector<1x1x18x128xbf16>,
    %cst_89 = arith.constant 0.000000e+00 : bf16
    %107 = vector.broadcast %cst_89 : bf16 to vector<1x16x1x128xbf16>
    %c0_90 = arith.constant 0 : index
    %c1_91 = arith.constant 1 : index
    %c0_92 = arith.constant 0 : index
    %c0_93 = arith.constant 0 : index
    %108 = vector.load %arg16[%c0_90, %c1_91, %c0_92, %c0_93] : memref<1x18x18x128xbf16, #tpu.memory_space<vmem>>, vector<1x16x1x128xbf16>
    tpu.vector_store %arg16[%c0_90, %c1_91, %c0_92, %c0_93], %107 {strides = array<i32>} : memref<1x18x18x128xbf16, #tpu.memory_space<vmem>>, vector<1x16x1x128xbf16>,
    %c0_94 = arith.constant 0 : index
    %c1_95 = arith.constant 1 : index
    %c17_96 = arith.constant 17 : index
    %c0_97 = arith.constant 0 : index
    %109 = vector.load %arg16[%c0_94, %c1_95, %c17_96, %c0_97] : memref<1x18x18x128xbf16, #tpu.memory_space<vmem>>, vector<1x16x1x128xbf16>
    tpu.vector_store %arg16[%c0_94, %c1_95, %c17_96, %c0_97], %107 {strides = array<i32>} : memref<1x18x18x128xbf16, #tpu.memory_space<vmem>>, vector<1x16x1x128xbf16>,
    %110 = arith.truncf %103 : vector<1x16x16x128xf32> to vector<1x16x16x128xbf16>
    %c0_98 = arith.constant 0 : index
    %c1_99 = arith.constant 1 : index
    %c1_100 = arith.constant 1 : index
    %c0_101 = arith.constant 0 : index
    %111 = vector.load %arg16[%c0_98, %c1_99, %c1_100, %c0_101] : memref<1x18x18x128xbf16, #tpu.memory_space<vmem>>, vector<1x16x16x128xbf16>
    tpu.vector_store %arg16[%c0_98, %c1_99, %c1_100, %c0_101], %110 {strides = array<i32>} : memref<1x18x18x128xbf16, #tpu.memory_space<vmem>>, vector<1x16x16x128xbf16>,
    %c0_102 = arith.constant 0 : index
    %c0_103 = arith.constant 0 : index
    %c0_104 = arith.constant 0 : index
    %c0_105 = arith.constant 0 : index
    %112 = vector.load %arg16[%c0_102, %c0_103, %c0_104, %c0_105] : memref<1x18x18x128xbf16, #tpu.memory_space<vmem>>, vector<1x18x18x128xbf16>
    %113 = vector.extract_strided_slice %112 {offsets = [0, 0, 0, 0], sizes = [1, 18, 16, 128], strides = [1, 1, 1, 1]} : vector<1x18x18x128xbf16> to vector<1x18x16x128xbf16>
    %114 = vector.extract_strided_slice %112 {offsets = [0, 0, 1, 0], sizes = [1, 18, 16, 128], strides = [1, 1, 1, 1]} : vector<1x18x18x128xbf16> to vector<1x18x16x128xbf16>
    %115 = vector.extract_strided_slice %112 {offsets = [0, 0, 2, 0], sizes = [1, 18, 16, 128], strides = [1, 1, 1, 1]} : vector<1x18x18x128xbf16> to vector<1x18x16x128xbf16>
    %116 = tpu.concatenate %113, %114, %115 in 3 : vector<1x18x16x128xbf16>, vector<1x18x16x128xbf16>, vector<1x18x16x128xbf16> -> vector<1x18x16x384xbf16>
    %117 = vector.extract_strided_slice %116 {offsets = [0, 0, 0, 0], sizes = [1, 16, 16, 384], strides = [1, 1, 1, 1]} : vector<1x18x16x384xbf16> to vector<1x16x16x384xbf16>
    %118 = vector.shape_cast %117 : vector<1x16x16x384xbf16> to vector<256x384xbf16>
    %c0_106 = arith.constant 0 : index
    %c0_107 = arith.constant 0 : index
    %119 = vector.load %arg10[%c0_106, %c0_107] : memref<1152x128xbf16, #tpu.memory_space<vmem>>, vector<384x128xbf16>
    %cst_108 = arith.constant dense<0.000000e+00> : vector<256x128xf32>
    %120 = tpu.matmul %118, %119, %cst_108 {dimension_numbers = #tpu.dot_dimension_numbers<[1], [0], [0], [1], [0, 0, 1, 1], [], []>} : vector<256x384xbf16>, vector<384x128xbf16>, vector<256x128xf32> -> vector<256x128xf32>
    %c0_109 = arith.constant 0 : index
    %c0_110 = arith.constant 0 : index
    %121 = vector.load %arg11[%c0_109, %c0_110] : memref<1x128xf32, #tpu.memory_space<vmem>>, vector<1x128xf32>
    %122 = vector.broadcast %121 : vector<1x128xf32> to vector<256x128xf32>
    %123 = arith.addf %120, %122 : vector<256x128xf32>
    %124 = vector.extract_strided_slice %116 {offsets = [0, 1, 0, 0], sizes = [1, 16, 16, 384], strides = [1, 1, 1, 1]} : vector<1x18x16x384xbf16> to vector<1x16x16x384xbf16>
    %125 = vector.shape_cast %124 : vector<1x16x16x384xbf16> to vector<256x384xbf16>
    %c384 = arith.constant 384 : index
    %c0_111 = arith.constant 0 : index
    %126 = vector.load %arg10[%c384, %c0_111] : memref<1152x128xbf16, #tpu.memory_space<vmem>>, vector<384x128xbf16>
    %cst_112 = arith.constant dense<0.000000e+00> : vector<256x128xf32>
    %127 = tpu.matmul %125, %126, %cst_112 {dimension_numbers = #tpu.dot_dimension_numbers<[1], [0], [0], [1], [0, 0, 1, 1], [], []>} : vector<256x384xbf16>, vector<384x128xbf16>, vector<256x128xf32> -> vector<256x128xf32>
    %128 = arith.addf %123, %127 : vector<256x128xf32>
    %129 = vector.extract_strided_slice %116 {offsets = [0, 2, 0, 0], sizes = [1, 16, 16, 384], strides = [1, 1, 1, 1]} : vector<1x18x16x384xbf16> to vector<1x16x16x384xbf16>
    %130 = vector.shape_cast %129 : vector<1x16x16x384xbf16> to vector<256x384xbf16>
    %c768 = arith.constant 768 : index
    %c0_113 = arith.constant 0 : index
    %131 = vector.load %arg10[%c768, %c0_113] : memref<1152x128xbf16, #tpu.memory_space<vmem>>, vector<384x128xbf16>
    %cst_114 = arith.constant dense<0.000000e+00> : vector<256x128xf32>
    %132 = tpu.matmul %130, %131, %cst_114 {dimension_numbers = #tpu.dot_dimension_numbers<[1], [0], [0], [1], [0, 0, 1, 1], [], []>} : vector<256x384xbf16>, vector<384x128xbf16>, vector<256x128xf32> -> vector<256x128xf32>
    %133 = arith.addf %128, %132 : vector<256x128xf32>
    %134 = vector.shape_cast %133 : vector<256x128xf32> to vector<1x16x16x128xf32>
    %135 = vector.extract_strided_slice %134 {offsets = [0, 0, 0, 0], sizes = [1, 16, 16, 8], strides = [1, 1, 1, 1]} : vector<1x16x16x128xf32> to vector<1x16x16x8xf32>
    %136 = vector.shape_cast %135 : vector<1x16x16x8xf32> to vector<1x256x8xf32>
    %137 = vector.shape_cast %136 : vector<1x256x8xf32> to vector<256x8xf32>
    %138 = tpu.transpose %137, [1, 0] : vector<256x8xf32> -> vector<8x256xf32>
    %139 = vector.shape_cast %138 : vector<8x256xf32> to vector<1x8x256xf32>
    %140 = vector.extract_strided_slice %139 {offsets = [0, 0, 0], sizes = [1, 3, 256], strides = [1, 1, 1]} : vector<1x8x256xf32> to vector<1x3x256xf32>
    %141 = arith.negf %140 : vector<1x3x256xf32>
    %142 = math.exp %141 : vector<1x3x256xf32>
    %cst_115 = arith.constant 1.000000e+00 : f32
    %143 = vector.broadcast %cst_115 : f32 to vector<1x3x256xf32>
    %144 = arith.addf %143, %142 : vector<1x3x256xf32>
    %145 = arith.divf %143, %144 : vector<1x3x256xf32>
    %c0_116 = arith.constant 0 : index
    %c0_117 = arith.constant 0 : index
    %c0_118 = arith.constant 0 : index
    %146 = vector.load %arg12[%c0_116, %c0_117, %c0_118] : memref<1x3x256xf32, #tpu.memory_space<vmem>>, vector<1x3x256xf32>
    tpu.vector_store %arg12[%c0_116, %c0_117, %c0_118], %145 {strides = array<i32>} : memref<1x3x256xf32, #tpu.memory_space<vmem>>, vector<1x3x256xf32>,
    return
  }
  func.func @transform_0(%arg0: i32) -> (i32, i32, i32) {
    %c0_i32 = arith.constant 0 : i32
    %c0_i32_0 = arith.constant 0 : i32
    %c0_i32_1 = arith.constant 0 : i32
    return %arg0, %c0_i32, %c0_i32_0 : i32, i32, i32
  }
  func.func @transform_1(%arg0: i32) -> (i32, i32) {
    %c0_i32 = arith.constant 0 : i32
    %c0_i32_0 = arith.constant 0 : i32
    %c0_i32_1 = arith.constant 0 : i32
    return %c0_i32, %c0_i32_0 : i32, i32
  }
  func.func @transform_2(%arg0: i32) -> (i32, i32) {
    %c0_i32 = arith.constant 0 : i32
    %c0_i32_0 = arith.constant 0 : i32
    %c0_i32_1 = arith.constant 0 : i32
    return %c0_i32, %c0_i32_0 : i32, i32
  }
  func.func @transform_3(%arg0: i32) -> (i32, i32) {
    %c0_i32 = arith.constant 0 : i32
    %c0_i32_0 = arith.constant 0 : i32
    %c0_i32_1 = arith.constant 0 : i32
    return %c0_i32, %c0_i32_0 : i32, i32
  }
  func.func @transform_4(%arg0: i32) -> (i32, i32) {
    %c0_i32 = arith.constant 0 : i32
    %c0_i32_0 = arith.constant 0 : i32
    %c0_i32_1 = arith.constant 0 : i32
    return %c0_i32, %c0_i32_0 : i32, i32
  }
  func.func @transform_5(%arg0: i32) -> (i32, i32) {
    %c0_i32 = arith.constant 0 : i32
    %c0_i32_0 = arith.constant 0 : i32
    %c0_i32_1 = arith.constant 0 : i32
    return %c0_i32, %c0_i32_0 : i32, i32
  }
  func.func @transform_6(%arg0: i32) -> (i32, i32) {
    %c0_i32 = arith.constant 0 : i32
    %c0_i32_0 = arith.constant 0 : i32
    %c0_i32_1 = arith.constant 0 : i32
    return %c0_i32, %c0_i32_0 : i32, i32
  }
  func.func @transform_7(%arg0: i32) -> (i32, i32) {
    %c0_i32 = arith.constant 0 : i32
    %c0_i32_0 = arith.constant 0 : i32
    %c0_i32_1 = arith.constant 0 : i32
    return %c0_i32, %c0_i32_0 : i32, i32
  }
  func.func @transform_8(%arg0: i32) -> (i32, i32) {
    %c0_i32 = arith.constant 0 : i32
    %c0_i32_0 = arith.constant 0 : i32
    %c0_i32_1 = arith.constant 0 : i32
    return %c0_i32, %c0_i32_0 : i32, i32
  }
  func.func @transform_9(%arg0: i32) -> (i32, i32) {
    %c0_i32 = arith.constant 0 : i32
    %c0_i32_0 = arith.constant 0 : i32
    %c0_i32_1 = arith.constant 0 : i32
    return %c0_i32, %c0_i32_0 : i32, i32
  }
  func.func @transform_10(%arg0: i32) -> (i32, i32) {
    %c0_i32 = arith.constant 0 : i32
    %c0_i32_0 = arith.constant 0 : i32
    %c0_i32_1 = arith.constant 0 : i32
    return %c0_i32, %c0_i32_0 : i32, i32
  }
  func.func @transform_11(%arg0: i32) -> (i32, i32, i32) {
    %c0_i32 = arith.constant 0 : i32
    %c0_i32_0 = arith.constant 0 : i32
    %c0_i32_1 = arith.constant 0 : i32
    return %arg0, %c0_i32, %c0_i32_0 : i32, i32, i32
  }
}

</mosaic_0001>

<llo_original>
// kernel: position_decoder_forward.1
$region0: #{position_decoder_forward.1}
  #allocation0 [shape = 'u32[]', space=smem, size = 0x4, offset = 0x4, fixed_abs, tag = 'smem constant byte address 0x4 - core index']
  #allocation1 [shape = 'u32[72,128]{1,0:T(1,128)}', space=vmem, size = 0x9000, scoped, tag = 'internal scratch']
  #allocation2 [shape = 'bf16[1,4,4,128]{3,2,1,0:T(4,128)(2,1)}', space=vmem, size = 0x1000, scoped, tag = 'scratch operand']
  #allocation3 [shape = 'bf16[1,6,6,128]{3,2,1,0:T(8,128)(2,1)}', space=vmem, size = 0x3000, scoped, tag = 'scratch operand']
  #allocation4 [shape = 'bf16[1,10,10,128]{3,2,1,0:T(8,128)(2,1)}', space=vmem, size = 0xa000, scoped, tag = 'scratch operand']
  #allocation5 [shape = 'bf16[1,18,18,128]{3,2,1,0:T(8,128)(2,1)}', space=vmem, size = 0x1b000, scoped, tag = 'scratch operand']
  %s0 = inlined_call_operand.vmem [shape: f32[2,1,32], index: 0, kind: input, shape index: {}]
  %s1 = inlined_call_operand.hbm [shape: bf16[32,2048], index: 1, kind: input, shape index: {}]
  %s2 = inlined_call_operand.hbm [shape: f32[1,2048], index: 2, kind: input, shape index: {}]
  %s3 = inlined_call_operand.hbm [shape: bf16[1152,128], index: 3, kind: input, shape index: {}]
  %s4 = inlined_call_operand.hbm [shape: f32[1,128], index: 4, kind: input, shape index: {}]
  %s5 = inlined_call_operand.hbm [shape: bf16[1152,128], index: 5, kind: input, shape index: {}]
  %s6 = inlined_call_operand.vmem [shape: f32[1,128], index: 6, kind: input, shape index: {}]
  %s7 = inlined_call_operand.hbm [shape: bf16[1152,128], index: 7, kind: input, shape index: {}]
  %s8 = inlined_call_operand.hbm [shape: f32[1,128], index: 8, kind: input, shape index: {}]
  %s9 = inlined_call_operand.hbm [shape: bf16[1152,128], index: 9, kind: input, shape index: {}]
  %s10 = inlined_call_operand.hbm [shape: f32[1,128], index: 10, kind: input, shape index: {}]
  %s11 = inlined_call_operand.vmem [shape: f32[2,3,256], index: 11, kind: output, shape index: {}]
  %s12 = sld [smem:[#allocation0]]
  $region113: #{position_decoder_forward.1} parent=0
    _
  %s14 = ssub.s32 1, %s12
  %s15 = scalar_select 0, %s14, %s12
  $region1: #{position_decoder_forward.1} parent=0
    #allocation6 [shape = 'u8[131072]{0}', space=vmem, size = 0x20000, scoped, tag = 'input window, operand 1, single buffered']
    #allocation7 [shape = 's32[2]{0}', space=sflag, size = 0x8, scoped, tag = 'scoped memory for position_decoder_forward.1']
    #allocation8 [shape = 'u8[8192]{0}', space=vmem, size = 0x2000, scoped, tag = 'input window, operand 2, single buffered']
    #allocation9 [shape = 's32[1]{0}', space=sflag, size = 0x4, scoped, tag = 'scoped memory for position_decoder_forward.1']
    #allocation10 [shape = 'u8[294912]{0}', space=vmem, size = 0x48000, scoped, tag = 'input window, operand 3, single buffered']
    #allocation11 [shape = 'u8[512]{0}', space=vmem, size = 0x400, scoped, tag = 'input window, operand 4, single buffered']
    #allocation12 [shape = 's32[1]{0}', space=sflag, size = 0x4, scoped, tag = 'scoped memory for position_decoder_forward.1']
    #allocation13 [shape = 'u8[294912]{0}', space=vmem, size = 0x48000, scoped, tag = 'input window, operand 5, single buffered']
    #allocation14 [shape = 'u8[294912]{0}', space=vmem, size = 0x48000, scoped, tag = 'input window, operand 7, single buffered']
    #allocation15 [shape = 's32[1]{0}', space=sflag, size = 0x4, scoped, tag = 'scoped memory for position_decoder_forward.1']
    #allocation16 [shape = 'u8[512]{0}', space=vmem, size = 0x400, scoped, tag = 'input window, operand 8, single buffered']
    #allocation17 [shape = 'u8[294912]{0}', space=vmem, size = 0x48000, scoped, tag = 'input window, operand 9, single buffered']
    #allocation18 [shape = 's32[1]{0}', space=sflag, size = 0x4, scoped, tag = 'scoped memory for position_decoder_forward.1']
    #allocation19 [shape = 'u8[512]{0}', space=vmem, size = 0x400, scoped, tag = 'input window, operand 10, single buffered']
    %16 = vsyncpa [#allocation7], 0
    %17 = vsyncpa [#allocation9], 0
    %18 = vsyncpa [#allocation12], 0
    %19 = vsyncpa [#allocation15], 0
    %20 = vsyncpa [#allocation18], 0
    loop: start=0, step=1, limit=4
    $region2: #{position_decoder_forward.1} parent=1 // loop_pre_header
      _
    $region3: #{position_decoder_forward.1} parent=1 // loop_header
      %s22 = sphi 0, %s26
      %p23 = scmp.ge.s32.totalorder %s22, 4
      %s32 = sphi 0, %s34
      %s35 = sphi 0, %s32
      %s36 = sphi 0, %s35
      %s52 = sphi 0, %s36
      %s56 = sphi 0, %s56
      %s58 = sphi 0, %s56
      %s59 = sphi 0, %s58
      %s73 = sphi 0, %s59
      %s77 = sphi 0, %s77
      %s79 = sphi 0, %s77
      %s80 = sphi 0, %s79
      %s94 = sphi 0, %s80
      %s98 = sphi 0, %s98
      %s100 = sphi 0, %s98
      %s101 = sphi 0, %s100
      %s115 = sphi 0, %s101
      %s119 = sphi 0, %s119
      %s121 = sphi 0, %s119
      %s122 = sphi 0, %s121
      %s136 = sphi 0, %s122
      %s140 = sphi 0, %s140
      %s142 = sphi 0, %s140
      %s143 = sphi 0, %s142
      %s157 = sphi 0, %s143
      %s161 = sphi 0, %s161
      %s163 = sphi 0, %s161
      %s164 = sphi 0, %s163
      %s178 = sphi 0, %s164
      %s182 = sphi 0, %s182
      %s184 = sphi 0, %s182
      %s185 = sphi 0, %s184
      %s199 = sphi 0, %s185
      %s203 = sphi 0, %s203
      %s205 = sphi 0, %s203
      %s206 = sphi 0, %s205
      %s220 = sphi 0, %s206
      %s224 = sphi 0, %s224
      %s226 = sphi 0, %s224
      %s227 = sphi 0, %s226
      %s241 = sphi 0, %s227
      %s245 = sphi 0, %s245
      %s247 = sphi 0, %s245
      %s248 = sphi 0, %s247
      %s262 = sphi 0, %s248
      %s268 = sphi 0, %s270
      %s271 = sphi 0, %s268
      %s272 = sphi 0, %s271
      %s288 = sphi 0, %s272
    $region4: #{position_decoder_forward.1} parent=1 // loop_header_branch
      %25 = sbr.rel (%p23) target = $region8
    $region5: #{position_decoder_forward.1} parent=1 // loop_body
      %s27 = ssub.s32 %s22, 1
      %s28 = ssub.s32 %s22, 2
      %s29 = sadd.s32 %s22, 1
      %s30 = ssub.s32 %s22, %s29
      %p31 = scmp.eq.s32.totalorder %s30, 0
      %s33 = sadd.s32 %s32, 1
      %s34 = scalar_select %p31, %s32, %s33
      %p37 = pneg %p31
      %p38 = scmp.eq.s32.totalorder %s22, 1
      %p39 = por %p37, %p38
      %p40 = scmp.ne.s32.totalorder %s32, %s35
      %p41 = scmp.eq.s32.totalorder %s22, 0
      %p42 = por %p40, %p41
      %p43 = scmp.ne.s32.totalorder %s32, %s35
      %p44 = scmp.eq.s32.totalorder %s27, 1
      %p45 = por %p43, %p44
      %p46 = scmp.ne.s32.totalorder %s35, %s36
      %p47 = scmp.eq.s32.totalorder %s27, 0
      %p48 = por %p46, %p47
      %p49 = scmp.ne.s32.totalorder %s35, %s36
      %p50 = scmp.eq.s32.totalorder %s28, 1
      %p51 = por %p49, %p50
      %p53 = scmp.ne.s32.totalorder %s36, %s52
      %p54 = scmp.eq.s32.totalorder %s28, 0
      %p55 = por %p53, %p54
      %s57 = sadd.s32 %s56, 1
      %p60 = scmp.eq.s32.totalorder %s22, 1
      %p61 = scmp.ne.s32.totalorder %s56, %s58
      %p62 = scmp.eq.s32.totalorder %s22, 0
      %p63 = por %p61, %p62
      %p64 = scmp.ne.s32.totalorder %s56, %s58
      %p65 = scmp.eq.s32.totalorder %s27, 1
      %p66 = por %p64, %p65
      %p67 = scmp.ne.s32.totalorder %s58, %s59
      %p68 = scmp.eq.s32.totalorder %s27, 0
      %p69 = por %p67, %p68
      %p70 = scmp.ne.s32.totalorder %s58, %s59
      %p71 = scmp.eq.s32.totalorder %s28, 1
      %p72 = por %p70, %p71
      %p74 = scmp.ne.s32.totalorder %s59, %s73
      %p75 = scmp.eq.s32.totalorder %s28, 0
      %p76 = por %p74, %p75
      %s78 = sadd.s32 %s77, 1
      %p81 = scmp.eq.s32.totalorder %s22, 1
      %p82 = scmp.ne.s32.totalorder %s77, %s79
      %p83 = scmp.eq.s32.totalorder %s22, 0
      %p84 = por %p82, %p83
      %p85 = scmp.ne.s32.totalorder %s77, %s79
      %p86 = scmp.eq.s32.totalorder %s27, 1
      %p87 = por %p85, %p86
      %p88 = scmp.ne.s32.totalorder %s79, %s80
      %p89 = scmp.eq.s32.totalorder %s27, 0
      %p90 = por %p88, %p89
      %p91 = scmp.ne.s32.totalorder %s79, %s80
      %p92 = scmp.eq.s32.totalorder %s28, 1
      %p93 = por %p91, %p92
      %p95 = scmp.ne.s32.totalorder %s80, %s94
      %p96 = scmp.eq.s32.totalorder %s28, 0
      %p97 = por %p95, %p96
      %s99 = sadd.s32 %s98, 1
      %p102 = scmp.eq.s32.totalorder %s22, 1
      %p103 = scmp.ne.s32.totalorder %s98, %s100
      %p104 = scmp.eq.s32.totalorder %s22, 0
      %p105 = por %p103, %p104
      %p106 = scmp.ne.s32.totalorder %s98, %s100
      %p107 = scmp.eq.s32.totalorder %s27, 1
      %p108 = por %p106, %p107
      %p109 = scmp.ne.s32.totalorder %s100, %s101
      %p110 = scmp.eq.s32.totalorder %s27, 0
      %p111 = por %p109, %p110
      %p112 = scmp.ne.s32.totalorder %s100, %s101
      %p113 = scmp.eq.s32.totalorder %s28, 1
      %p114 = por %p112, %p113
      %p116 = scmp.ne.s32.totalorder %s101, %s115
      %p117 = scmp.eq.s32.totalorder %s28, 0
      %p118 = por %p116, %p117
      %s120 = sadd.s32 %s119, 1
      %p123 = scmp.eq.s32.totalorder %s22, 1
      %p124 = scmp.ne.s32.totalorder %s119, %s121
      %p125 = scmp.eq.s32.totalorder %s22, 0
      %p126 = por %p124, %p125
      %p127 = scmp.ne.s32.totalorder %s119, %s121
      %p128 = scmp.eq.s32.totalorder %s27, 1
      %p129 = por %p127, %p128
      %p130 = scmp.ne.s32.totalorder %s121, %s122
      %p131 = scmp.eq.s32.totalorder %s27, 0
      %p132 = por %p130, %p131
      %p133 = scmp.ne.s32.totalorder %s121, %s122
      %p134 = scmp.eq.s32.totalorder %s28, 1
      %p135 = por %p133, %p134
      %p137 = scmp.ne.s32.totalorder %s122, %s136
      %p138 = scmp.eq.s32.totalorder %s28, 0
      %p139 = por %p137, %p138
      %s141 = sadd.s32 %s140, 1
      %p144 = scmp.eq.s32.totalorder %s22, 1
      %p145 = scmp.ne.s32.totalorder %s140, %s142
      %p146 = scmp.eq.s32.totalorder %s22, 0
      %p147 = por %p145, %p146
      %p148 = scmp.ne.s32.totalorder %s140, %s142
      %p149 = scmp.eq.s32.totalorder %s27, 1
      %p150 = por %p148, %p149
      %p151 = scmp.ne.s32.totalorder %s142, %s143
      %p152 = scmp.eq.s32.totalorder %s27, 0
      %p153 = por %p151, %p152
      %p154 = scmp.ne.s32.totalorder %s142, %s143
      %p155 = scmp.eq.s32.totalorder %s28, 1
      %p156 = por %p154, %p155
      %p158 = scmp.ne.s32.totalorder %s143, %s157
      %p159 = scmp.eq.s32.totalorder %s28, 0
      %p160 = por %p158, %p159
      %s162 = sadd.s32 %s161, 1
      %p165 = scmp.eq.s32.totalorder %s22, 1
      %p166 = scmp.ne.s32.totalorder %s161, %s163
      %p167 = scmp.eq.s32.totalorder %s22, 0
      %p168 = por %p166, %p167
      %p169 = scmp.ne.s32.totalorder %s161, %s163
      %p170 = scmp.eq.s32.totalorder %s27, 1
      %p171 = por %p169, %p170
      %p172 = scmp.ne.s32.totalorder %s163, %s164
      %p173 = scmp.eq.s32.totalorder %s27, 0
      %p174 = por %p172, %p173
      %p175 = scmp.ne.s32.totalorder %s163, %s164
      %p176 = scmp.eq.s32.totalorder %s28, 1
      %p177 = por %p175, %p176
      %p179 = scmp.ne.s32.totalorder %s164, %s178
      %p180 = scmp.eq.s32.totalorder %s28, 0
      %p181 = por %p179, %p180
      %s183 = sadd.s32 %s182, 1
      %p186 = scmp.eq.s32.totalorder %s22, 1
      %p187 = scmp.ne.s32.totalorder %s182, %s184
      %p188 = scmp.eq.s32.totalorder %s22, 0
      %p189 = por %p187, %p188
      %p190 = scmp.ne.s32.totalorder %s182, %s184
      %p191 = scmp.eq.s32.totalorder %s27, 1
      %p192 = por %p190, %p191
      %p193 = scmp.ne.s32.totalorder %s184, %s185
      %p194 = scmp.eq.s32.totalorder %s27, 0
      %p195 = por %p193, %p194
      %p196 = scmp.ne.s32.totalorder %s184, %s185
      %p197 = scmp.eq.s32.totalorder %s28, 1
      %p198 = por %p196, %p197
      %p200 = scmp.ne.s32.totalorder %s185, %s199
      %p201 = scmp.eq.s32.totalorder %s28, 0
      %p202 = por %p200, %p201
      %s204 = sadd.s32 %s203, 1
      %p207 = scmp.eq.s32.totalorder %s22, 1
      %p208 = scmp.ne.s32.totalorder %s203, %s205
      %p209 = scmp.eq.s32.totalorder %s22, 0
      %p210 = por %p208, %p209
      %p211 = scmp.ne.s32.totalorder %s203, %s205
      %p212 = scmp.eq.s32.totalorder %s27, 1
      %p213 = por %p211, %p212
      %p214 = scmp.ne.s32.totalorder %s205, %s206
      %p215 = scmp.eq.s32.totalorder %s27, 0
      %p216 = por %p214, %p215
      %p217 = scmp.ne.s32.totalorder %s205, %s206
      %p218 = scmp.eq.s32.totalorder %s28, 1
      %p219 = por %p217, %p218
      %p221 = scmp.ne.s32.totalorder %s206, %s220
      %p222 = scmp.eq.s32.totalorder %s28, 0
      %p223 = por %p221, %p222
      %s225 = sadd.s32 %s224, 1
      %p228 = scmp.eq.s32.totalorder %s22, 1
      %p229 = scmp.ne.s32.totalorder %s224, %s226
      %p230 = scmp.eq.s32.totalorder %s22, 0
      %p231 = por %p229, %p230
      %p232 = scmp.ne.s32.totalorder %s224, %s226
      %p233 = scmp.eq.s32.totalorder %s27, 1
      %p234 = por %p232, %p233
      %p235 = scmp.ne.s32.totalorder %s226, %s227
      %p236 = scmp.eq.s32.totalorder %s27, 0
      %p237 = por %p235, %p236
      %p238 = scmp.ne.s32.totalorder %s226, %s227
      %p239 = scmp.eq.s32.totalorder %s28, 1
      %p240 = por %p238, %p239
      %p242 = scmp.ne.s32.totalorder %s227, %s241
      %p243 = scmp.eq.s32.totalorder %s28, 0
      %p244 = por %p242, %p243
      %s246 = sadd.s32 %s245, 1
      %p249 = scmp.eq.s32.totalorder %s22, 1
      %p250 = scmp.ne.s32.totalorder %s245, %s247
      %p251 = scmp.eq.s32.totalorder %s22, 0
      %p252 = por %p250, %p251
      %p253 = scmp.ne.s32.totalorder %s245, %s247
      %p254 = scmp.eq.s32.totalorder %s27, 1
      %p255 = por %p253, %p254
      %p256 = scmp.ne.s32.totalorder %s247, %s248
      %p257 = scmp.eq.s32.totalorder %s27, 0
      %p258 = por %p256, %p257
      %p259 = scmp.ne.s32.totalorder %s247, %s248
      %p260 = scmp.eq.s32.totalorder %s28, 1
      %p261 = por %p259, %p260
      %p263 = scmp.ne.s32.totalorder %s248, %s262
      %p264 = scmp.eq.s32.totalorder %s28, 0
      %p265 = por %p263, %p264
      %s266 = ssub.s32 %s22, %s29
      %p267 = scmp.eq.s32.totalorder %s266, 0
      %s269 = sadd.s32 %s268, 1
      %s270 = scalar_select %p267, %s268, %s269
      %p273 = pneg %p267
      %p274 = scmp.eq.s32.totalorder %s22, 1
      %p275 = por %p273, %p274
      %p276 = scmp.ne.s32.totalorder %s268, %s271
      %p277 = scmp.eq.s32.totalorder %s22, 0
      %p278 = por %p276, %p277
      %p279 = scmp.ne.s32.totalorder %s268, %s271
      %p280 = scmp.eq.s32.totalorder %s27, 1
      %p281 = por %p279, %p280
      %p282 = scmp.ne.s32.totalorder %s271, %s272
      %p283 = scmp.eq.s32.totalorder %s27, 0
      %p284 = por %p282, %p283
      %p285 = scmp.ne.s32.totalorder %s271, %s272
      %p286 = scmp.eq.s32.totalorder %s28, 1
      %p287 = por %p285, %p286
      %p289 = scmp.ne.s32.totalorder %s272, %s288
      %p290 = scmp.eq.s32.totalorder %s28, 0
      %p291 = por %p289, %p290
      %p292 = scmp.le.s32.totalorder 1, %s22
      %p293 = scmp.lt.s32.totalorder %s22, 3
      %p294 = pnand %p292, %p293
      %p295 = pneg %p294
      // Predicated region
      $region9: #{position_decoder_forward.1} parent=5 // pred_check
        _
      $region10: #{position_decoder_forward.1} parent=5 // pred_check_branch
        %297 = sbr.rel (%p294) target = $region12
      $region11: #{position_decoder_forward.1} parent=5 // pred_region
        %s298 = ssub.s32 %s22, 1
        // Predicated region
        $region13: #{position_decoder_forward.1} parent=11 // pred_check
          %p299 = pneg %p69
        $region14: #{position_decoder_forward.1} parent=11 // pred_check_branch
          %301 = sbr.rel (%p299) target = $region16
        $region15: #{position_decoder_forward.1} parent=11 // pred_region
          %303 = vsyncadd [#allocation7], 0
          %s304 = sshll.u32 %s1, 4
          %s305 = int_to_ptr.hbm [resolvable:$true] %s304
          %s306 = sshll.u32 [#allocation6], 4
          %s307 = int_to_ptr.vmem [resolvable:$true] %s306
          %312 = dma.hbm_to_vmem [thread:$0]  %s305, 4096, %s307, [#allocation7], 1024, 1024, 64
        $region16: #{position_decoder_forward.1} parent=11 // pred_fallthru
          _
        // Predicated region
        $region17: #{position_decoder_forward.1} parent=11 // pred_check
          %p313 = pneg %p90
        $region18: #{position_decoder_forward.1} parent=11 // pred_check_branch
          %315 = sbr.rel (%p313) target = $region20
        $region19: #{position_decoder_forward.1} parent=11 // pred_region
          %317 = vsyncadd [#allocation9], 0
          %s319 = sshll.u32 %s2, 4
          %s320 = int_to_ptr.hbm [resolvable:$true] %s319
          %s321 = sshll.u32 [#allocation8], 4
          %s322 = int_to_ptr.vmem [resolvable:$true] %s321
          %324 = dma.hbm_to_vmem [thread:$0]  %s320, 256, %s322, [#allocation9]
        $region20: #{position_decoder_forward.1} parent=11 // pred_fallthru
          _
        // Predicated region
        $region21: #{position_decoder_forward.1} parent=11 // pred_check
          %p325 = pneg %p111
        $region22: #{position_decoder_forward.1} parent=11 // pred_check_branch
          %327 = sbr.rel (%p325) target = $region24
        $region23: #{position_decoder_forward.1} parent=11 // pred_region
          %329 = vsyncadd [#allocation9], 0
          %s330 = sshll.u32 %s3, 4
          %s331 = int_to_ptr.hbm [resolvable:$true] %s330
          %s332 = sshll.u32 [#allocation10], 4
          %s333 = int_to_ptr.vmem [resolvable:$true] %s332
          %338 = dma.hbm_to_vmem [thread:$0]  %s331, 9216, %s333, [#allocation9], 64, 64, 4
        $region24: #{position_decoder_forward.1} parent=11 // pred_fallthru
          _
        // Predicated region
        $region25: #{position_decoder_forward.1} parent=11 // pred_check
          %p339 = pneg %p132
        $region26: #{position_decoder_forward.1} parent=11 // pred_check_branch
          %341 = sbr.rel (%p339) target = $region28
        $region27: #{position_decoder_forward.1} parent=11 // pred_region
          %343 = vsyncadd [#allocation12], 0
          %s345 = sshll.u32 %s4, 4
          %s346 = int_to_ptr.hbm [resolvable:$true] %s345
          %s347 = sshll.u32 [#allocation11], 4
          %s348 = int_to_ptr.vmem [resolvable:$true] %s347
          %350 = dma.hbm_to_vmem [thread:$0]  %s346, 16, %s348, [#allocation12]
        $region28: #{position_decoder_forward.1} parent=11 // pred_fallthru
          _
        // Predicated region
        $region29: #{position_decoder_forward.1} parent=11 // pred_check
          %p351 = pneg %p153
        $region30: #{position_decoder_forward.1} parent=11 // pred_check_branch
          %353 = sbr.rel (%p351) target = $region32
        $region31: #{position_decoder_forward.1} parent=11 // pred_region
          %355 = vsyncadd [#allocation12], 0
          %s356 = sshll.u32 %s5, 4
          %s357 = int_to_ptr.hbm [resolvable:$true] %s356
          %s358 = sshll.u32 [#allocation13], 4
          %s359 = int_to_ptr.vmem [resolvable:$true] %s358
          %364 = dma.hbm_to_vmem [thread:$0]  %s357, 9216, %s359, [#allocation12], 64, 64, 4
        $region32: #{position_decoder_forward.1} parent=11 // pred_fallthru
          _
        // Predicated region
        $region33: #{position_decoder_forward.1} parent=11 // pred_check
          %p365 = pneg %p174
        $region34: #{position_decoder_forward.1} parent=11 // pred_check_branch
          %367 = sbr.rel (%p365) target = $region36
        $region35: #{position_decoder_forward.1} parent=11 // pred_region
          _
        $region36: #{position_decoder_forward.1} parent=11 // pred_fallthru
          _
        // Predicated region
        $region37: #{position_decoder_forward.1} parent=11 // pred_check
          %p368 = pneg %p195
        $region38: #{position_decoder_forward.1} parent=11 // pred_check_branch
          %370 = sbr.rel (%p368) target = $region40
        $region39: #{position_decoder_forward.1} parent=11 // pred_region
          %372 = vsyncadd [#allocation15], 0
          %s373 = sshll.u32 %s7, 4
          %s374 = int_to_ptr.hbm [resolvable:$true] %s373
          %s375 = sshll.u32 [#allocation14], 4
          %s376 = int_to_ptr.vmem [resolvable:$true] %s375
          %381 = dma.hbm_to_vmem [thread:$0]  %s374, 9216, %s376, [#allocation15], 64, 64, 4
        $region40: #{position_decoder_forward.1} parent=11 // pred_fallthru
          _
        // Predicated region
        $region41: #{position_decoder_forward.1} parent=11 // pred_check
          %p382 = pneg %p216
        $region42: #{position_decoder_forward.1} parent=11 // pred_check_branch
          %384 = sbr.rel (%p382) target = $region44
        $region43: #{position_decoder_forward.1} parent=11 // pred_region
          %386 = vsyncadd [#allocation15], 0
          %s388 = sshll.u32 %s8, 4
          %s389 = int_to_ptr.hbm [resolvable:$true] %s388
          %s390 = sshll.u32 [#allocation16], 4
          %s391 = int_to_ptr.vmem [resolvable:$true] %s390
          %393 = dma.hbm_to_vmem [thread:$0]  %s389, 16, %s391, [#allocation15]
        $region44: #{position_decoder_forward.1} parent=11 // pred_fallthru
          _
        // Predicated region
        $region45: #{position_decoder_forward.1} parent=11 // pred_check
          %p394 = pneg %p237
        $region46: #{position_decoder_forward.1} parent=11 // pred_check_branch
          %396 = sbr.rel (%p394) target = $region48
        $region47: #{position_decoder_forward.1} parent=11 // pred_region
          %398 = vsyncadd [#allocation18], 0
          %s399 = sshll.u32 %s9, 4
          %s400 = int_to_ptr.hbm [resolvable:$true] %s399
          %s401 = sshll.u32 [#allocation17], 4
          %s402 = int_to_ptr.vmem [resolvable:$true] %s401
          %407 = dma.hbm_to_vmem [thread:$0]  %s400, 9216, %s402, [#allocation18], 64, 64, 4
        $region48: #{position_decoder_forward.1} parent=11 // pred_fallthru
          _
        // Predicated region
        $region49: #{position_decoder_forward.1} parent=11 // pred_check
          %p408 = pneg %p258
        $region50: #{position_decoder_forward.1} parent=11 // pred_check_branch
          %410 = sbr.rel (%p408) target = $region52
        $region51: #{position_decoder_forward.1} parent=11 // pred_region
          %412 = vsyncadd [#allocation18], 0
          %s414 = sshll.u32 %s10, 4
          %s415 = int_to_ptr.hbm [resolvable:$true] %s414
          %s416 = sshll.u32 [#allocation19], 4
          %s417 = int_to_ptr.vmem [resolvable:$true] %s416
          %419 = dma.hbm_to_vmem [thread:$0]  %s415, 16, %s417, [#allocation18]
        $region52: #{position_decoder_forward.1} parent=11 // pred_fallthru
          _
      $region12: #{position_decoder_forward.1} parent=5 // pred_fallthru
        _
      %p420 = scmp.lt.s32.totalorder %s22, 2
      // Predicated region
      $region53: #{position_decoder_forward.1} parent=5 // pred_check
        %p421 = pneg %p420
      $region54: #{position_decoder_forward.1} parent=5 // pred_check_branch
        %423 = sbr.rel (%p421) target = $region56
      $region55: #{position_decoder_forward.1} parent=5 // pred_region
        // Predicated region
        $region57: #{position_decoder_forward.1} parent=55 // pred_check
          %p424 = pneg %p42
        $region58: #{position_decoder_forward.1} parent=55 // pred_check_branch
          %426 = sbr.rel (%p424) target = $region60
        $region59: #{position_decoder_forward.1} parent=55 // pred_region
          %p427 = scmp.lt.s32.totalorder %s22, 1
          %s428 = scalar_select %p427, %s22, 1
          %s429 = scalar_lea.vmem %s0, %s428
        $region60: #{position_decoder_forward.1} parent=55 // pred_fallthru
          _
      $region56: #{position_decoder_forward.1} parent=5 // pred_fallthru
        _
      %p430 = scmp.le.s32.totalorder 1, %s22
      %p431 = scmp.lt.s32.totalorder %s22, 3
      %p432 = pnand %p430, %p431
      %p433 = pneg %p432
      // Predicated region
      $region61: #{position_decoder_forward.1} parent=5 // pred_check
        _
      $region62: #{position_decoder_forward.1} parent=5 // pred_check_branch
        %435 = sbr.rel (%p432) target = $region64
      $region63: #{position_decoder_forward.1} parent=5 // pred_region
        %s436 = ssub.s32 %s22, 1
        // Predicated region
        $region65: #{position_decoder_forward.1} parent=63 // pred_check
          %p437 = pneg %p69
        $region66: #{position_decoder_forward.1} parent=63 // pred_check_branch
          %439 = sbr.rel (%p437) target = $region68
        $region67: #{position_decoder_forward.1} parent=63 // pred_region
          %441 = dma.done [#allocation7], 4096
        $region68: #{position_decoder_forward.1} parent=63 // pred_fallthru
          _
        // Predicated region
        $region69: #{position_decoder_forward.1} parent=63 // pred_check
          %p442 = pneg %p90
        $region70: #{position_decoder_forward.1} parent=63 // pred_check_branch
          %444 = sbr.rel (%p442) target = $region72
        $region71: #{position_decoder_forward.1} parent=63 // pred_region
          %446 = dma.done [#allocation9], 256
        $region72: #{position_decoder_forward.1} parent=63 // pred_fallthru
          _
        // Predicated region
        $region73: #{position_decoder_forward.1} parent=63 // pred_check
          %p447 = pneg %p111
        $region74: #{position_decoder_forward.1} parent=63 // pred_check_branch
          %449 = sbr.rel (%p447) target = $region76
        $region75: #{position_decoder_forward.1} parent=63 // pred_region
          %451 = dma.done [#allocation9], 9216
        $region76: #{position_decoder_forward.1} parent=63 // pred_fallthru
          _
        // Predicated region
        $region77: #{position_decoder_forward.1} parent=63 // pred_check
          %p452 = pneg %p132
        $region78: #{position_decoder_forward.1} parent=63 // pred_check_branch
          %454 = sbr.rel (%p452) target = $region80
        $region79: #{position_decoder_forward.1} parent=63 // pred_region
          %456 = dma.done [#allocation12], 16
        $region80: #{position_decoder_forward.1} parent=63 // pred_fallthru
          _
        // Predicated region
        $region81: #{position_decoder_forward.1} parent=63 // pred_check
          %p457 = pneg %p153
        $region82: #{position_decoder_forward.1} parent=63 // pred_check_branch
          %459 = sbr.rel (%p457) target = $region84
        $region83: #{position_decoder_forward.1} parent=63 // pred_region
          %461 = dma.done [#allocation12], 9216
        $region84: #{position_decoder_forward.1} parent=63 // pred_fallthru
          _
        // Predicated region
        $region85: #{position_decoder_forward.1} parent=63 // pred_check
          %p462 = pneg %p195
        $region86: #{position_decoder_forward.1} parent=63 // pred_check_branch
          %464 = sbr.rel (%p462) target = $region88
        $region87: #{position_decoder_forward.1} parent=63 // pred_region
          %466 = dma.done [#allocation15], 9216
        $region88: #{position_decoder_forward.1} parent=63 // pred_fallthru
          _
        // Predicated region
        $region89: #{position_decoder_forward.1} parent=63 // pred_check
          %p467 = pneg %p216
        $region90: #{position_decoder_forward.1} parent=63 // pred_check_branch
          %469 = sbr.rel (%p467) target = $region92
        $region91: #{position_decoder_forward.1} parent=63 // pred_region
          %471 = dma.done [#allocation15], 16
        $region92: #{position_decoder_forward.1} parent=63 // pred_fallthru
          _
        // Predicated region
        $region93: #{position_decoder_forward.1} parent=63 // pred_check
          %p472 = pneg %p237
        $region94: #{position_decoder_forward.1} parent=63 // pred_check_branch
          %474 = sbr.rel (%p472) target = $region96
        $region95: #{position_decoder_forward.1} parent=63 // pred_region
          %476 = dma.done [#allocation18], 9216
        $region96: #{position_decoder_forward.1} parent=63 // pred_fallthru
          _
        // Predicated region
        $region97: #{position_decoder_forward.1} parent=63 // pred_check
          %p477 = pneg %p258
        $region98: #{position_decoder_forward.1} parent=63 // pred_check_branch
          %479 = sbr.rel (%p477) target = $region100
        $region99: #{position_decoder_forward.1} parent=63 // pred_region
          %481 = dma.done [#allocation18], 16
        $region100: #{position_decoder_forward.1} parent=63 // pred_fallthru
          _
        %p482 = scmp.lt.s32.totalorder %s27, 1
        %s483 = scalar_select %p482, %s27, 1
        %s484 = scalar_lea.vmem %s0, %s483
        %p485 = pneg %p48
        %p486 = pneg %p45
        %p487 = pneg %p69
        %p488 = pneg %p66
        %p489 = pneg %p90
        %p490 = pneg %p87
        %p491 = pneg %p111
        %p492 = pneg %p108
        %p493 = pneg %p132
        %p494 = pneg %p129
        %p495 = pneg %p153
        %p496 = pneg %p150
        %p497 = pneg %p174
        %p498 = pneg %p171
        %p499 = pneg %p195
        %p500 = pneg %p192
        %p501 = pneg %p216
        %p502 = pneg %p213
        %p503 = pneg %p237
        %p504 = pneg %p234
        %p505 = pneg %p258
        %p506 = pneg %p255
        %p507 = pneg %p284
        %p508 = pneg %p281
        %p509 = scmp.lt.s32.totalorder %s27, 1
        %s510 = scalar_select %p509, %s27, 1
        %s511 = smul.addr %s510, 2
        %s512 = smul.addr %s511, 4
        %s513 = scalar_lea.vmem %s11, %s512
        %p514 = scmp.lt.s32.totalorder %s27, 1
        %s515 = scalar_select %p514, %s27, 1
        %s516 = scalar_lea.vmem %s0, %s515
        %p517 = scmp.lt.s32.totalorder %s27, 1
        %s518 = scalar_select %p517, %s27, 1
        %s519 = smul.addr %s518, 2
        %s520 = smul.addr %s519, 4
        %s521 = scalar_lea.vmem %s11, %s520
        %v523 = vld [vmem:[%s516] sm:$0x1]
        %v524 = vpack.c.bf16 %v523, %v523
        %v525 = vld [vmem:[#allocation6] sm:$0xff]
        %v526 = vld [vmem:[#allocation6 + $0x8] sm:$0xff]
        %v527 = vld [vmem:[#allocation6 + $0x10] sm:$0xff]
        %v528 = vld [vmem:[#allocation6 + $0x18] sm:$0xff]
        %v529 = vld [vmem:[#allocation6 + $0x20] sm:$0xff]
        %v530 = vld [vmem:[#allocation6 + $0x28] sm:$0xff]
        %v531 = vld [vmem:[#allocation6 + $0x30] sm:$0xff]
        %v532 = vld [vmem:[#allocation6 + $0x38] sm:$0xff]
        %v533 = vld [vmem:[#allocation6 + $0x40] sm:$0xff]
        %v534 = vld [vmem:[#allocation6 + $0x48] sm:$0xff]
        %v535 = vld [vmem:[#allocation6 + $0x50] sm:$0xff]
        %v536 = vld [vmem:[#allocation6 + $0x58] sm:$0xff]
        %v537 = vld [vmem:[#allocation6 + $0x60] sm:$0xff]
        %v538 = vld [vmem:[#allocation6 + $0x68] sm:$0xff]
        %v539 = vld [vmem:[#allocation6 + $0x70] sm:$0xff]
        %v540 = vld [vmem:[#allocation6 + $0x78] sm:$0xff]
        %v541 = vld [vmem:[#allocation6 + $0x80] sm:$0xff]
        %v542 = vld [vmem:[#allocation6 + $0x88] sm:$0xff]
        %v543 = vld [vmem:[#allocation6 + $0x90] sm:$0xff]
        %v544 = vld [vmem:[#allocation6 + $0x98] sm:$0xff]
        %v545 = vld [vmem:[#allocation6 + $0xa0] sm:$0xff]
        %v546 = vld [vmem:[#allocation6 + $0xa8] sm:$0xff]
        %v547 = vld [vmem:[#allocation6 + $0xb0] sm:$0xff]
        %v548 = vld [vmem:[#allocation6 + $0xb8] sm:$0xff]
        %v549 = vld [vmem:[#allocation6 + $0xc0] sm:$0xff]
        %v550 = vld [vmem:[#allocation6 + $0xc8] sm:$0xff]
        %v551 = vld [vmem:[#allocation6 + $0xd0] sm:$0xff]
        %v552 = vld [vmem:[#allocation6 + $0xd8] sm:$0xff]
        %v553 = vld [vmem:[#allocation6 + $0xe0] sm:$0xff]
        %v554 = vld [vmem:[#allocation6 + $0xe8] sm:$0xff]
        %v555 = vld [vmem:[#allocation6 + $0xf0] sm:$0xff]
        %v556 = vld [vmem:[#allocation6 + $0xf8] sm:$0xff]
        %v557 = vld [vmem:[#allocation8] sm:$0xff]
        %v558 = vld [vmem:[#allocation8 + $0x8] sm:$0xff]
        %v591 = vunpack.c.l.b16 %v525
        %v592 = vunpack.c.h.b16 %v525
        %v593 = vunpack.c.l.b16 %v526
        %v594 = vunpack.c.h.b16 %v526
        %v595 = vunpack.c.l.b16 %v527
        %v596 = vunpack.c.h.b16 %v527
        %v597 = vunpack.c.l.b16 %v528
        %v598 = vunpack.c.h.b16 %v528
        %v599 = vunpack.c.l.b16 %v529
        %v600 = vunpack.c.h.b16 %v529
        %v601 = vunpack.c.l.b16 %v530
        %v602 = vunpack.c.h.b16 %v530
        %v603 = vunpack.c.l.b16 %v531
        %v604 = vunpack.c.h.b16 %v531
        %v605 = vunpack.c.l.b16 %v532
        %v606 = vunpack.c.h.b16 %v532
        %v607 = vunpack.c.l.b16 %v533
        %v608 = vunpack.c.h.b16 %v533
        %v609 = vunpack.c.l.b16 %v534
        %v610 = vunpack.c.h.b16 %v534
        %v611 = vunpack.c.l.b16 %v535
        %v612 = vunpack.c.h.b16 %v535
        %v613 = vunpack.c.l.b16 %v536
        %v614 = vunpack.c.h.b16 %v536
        %v615 = vunpack.c.l.b16 %v537
        %v616 = vunpack.c.h.b16 %v537
        %v617 = vunpack.c.l.b16 %v538
        %v618 = vunpack.c.h.b16 %v538
        %v619 = vunpack.c.l.b16 %v539
        %v620 = vunpack.c.h.b16 %v539
        %v621 = vunpack.c.l.b16 %v540
        %v622 = vunpack.c.h.b16 %v540
        %v623 = vunpack.c.l.b16 %v541
        %v624 = vunpack.c.h.b16 %v541
        %v625 = vunpack.c.l.b16 %v542
        %v626 = vunpack.c.h.b16 %v542
        %v627 = vunpack.c.l.b16 %v543
        %v628 = vunpack.c.h.b16 %v543
        %v629 = vunpack.c.l.b16 %v544
        %v630 = vunpack.c.h.b16 %v544
        %v631 = vunpack.c.l.b16 %v545
        %v632 = vunpack.c.h.b16 %v545
        %v633 = vunpack.c.l.b16 %v546
        %v634 = vunpack.c.h.b16 %v546
        %v635 = vunpack.c.l.b16 %v547
        %v636 = vunpack.c.h.b16 %v547
        %v637 = vunpack.c.l.b16 %v548
        %v638 = vunpack.c.h.b16 %v548
        %v639 = vunpack.c.l.b16 %v549
        %v640 = vunpack.c.h.b16 %v549
        %v641 = vunpack.c.l.b16 %v550
        %v642 = vunpack.c.h.b16 %v550
        %v643 = vunpack.c.l.b16 %v551
        %v644 = vunpack.c.h.b16 %v551
        %v645 = vunpack.c.l.b16 %v552
        %v646 = vunpack.c.h.b16 %v552
        %v647 = vunpack.c.l.b16 %v553
        %v648 = vunpack.c.h.b16 %v553
        %v649 = vunpack.c.l.b16 %v554
        %v650 = vunpack.c.h.b16 %v554
        %v651 = vunpack.c.l.b16 %v555
        %v652 = vunpack.c.h.b16 %v555
        %v653 = vunpack.c.l.b16 %v556
        %v654 = vunpack.c.h.b16 %v556
        %v655 = vpack.c.b16 %v607, %v591
        %v656 = vpack.c.b16 %v608, %v592
        %v657 = vpack.c.b16 %v609, %v593
        %v658 = vpack.c.b16 %v610, %v594
        %v659 = vpack.c.b16 %v611, %v595
        %v660 = vpack.c.b16 %v612, %v596
        %v661 = vpack.c.b16 %v613, %v597
        %v662 = vpack.c.b16 %v614, %v598
        %v663 = vpack.c.b16 %v615, %v599
        %v664 = vpack.c.b16 %v616, %v600
        %v665 = vpack.c.b16 %v617, %v601
        %v666 = vpack.c.b16 %v618, %v602
        %v667 = vpack.c.b16 %v619, %v603
        %v668 = vpack.c.b16 %v620, %v604
        %v669 = vpack.c.b16 %v621, %v605
        %v670 = vpack.c.b16 %v622, %v606
        %v671 = vpack.c.b16 %v639, %v623
        %v672 = vpack.c.b16 %v640, %v624
        %v673 = vpack.c.b16 %v641, %v625
        %v674 = vpack.c.b16 %v642, %v626
        %v675 = vpack.c.b16 %v643, %v627
        %v676 = vpack.c.b16 %v644, %v628
        %v677 = vpack.c.b16 %v645, %v629
        %v678 = vpack.c.b16 %v646, %v630
        %v679 = vpack.c.b16 %v647, %v631
        %v680 = vpack.c.b16 %v648, %v632
        %v681 = vpack.c.b16 %v649, %v633
        %v682 = vpack.c.b16 %v650, %v634
        %v683 = vpack.c.b16 %v651, %v635
        %v684 = vpack.c.b16 %v652, %v636
        %v685 = vpack.c.b16 %v653, %v637
        %v686 = vpack.c.b16 %v654, %v638
        %v721 = vperm.slane %v557, 0
        %v722 = vperm.slane %v557, 1
        %v723 = vperm.slane %v557, 2
        %v724 = vperm.slane %v557, 3
        %v725 = vperm.slane %v557, 4
        %v726 = vperm.slane %v557, 5
        %v727 = vperm.slane %v557, 6
        %v728 = vperm.slane %v557, 7
        %v729 = vperm.slane %v558, 0
        %v730 = vperm.slane %v558, 1
        %v731 = vperm.slane %v558, 2
        %v732 = vperm.slane %v558, 3
        %v733 = vperm.slane %v558, 4
        %v734 = vperm.slane %v558, 5
        %v735 = vperm.slane %v558, 6
        %v736 = vperm.slane %v558, 7
        %vm753 = vcmask 261120
        %v755 = vsel %vm753, %v524, 0
        %757 = vmatpush.bf16.msra.mxu0 0
        %758 = vmatpush.bf16.msra.mxu0 0
        %759 = vmatpush.bf16.msra.mxu0 0
        %760 = vmatpush.bf16.msra.mxu0 0
        %761 = vmatpush.bf16.msra.mxu0 0
        %762 = vmatpush.bf16.msra.mxu0 0
        %763 = vmatpush.bf16.msra.mxu0 %v671
        %764 = vmatpush.bf16.msra.mxu0 %v655
        %765 = vmatmul.bf16.gmra.mxu0 %v755
        %v766 = vpop.f32.mrf.mxu0
        %v767 = vadd.f32 %v721, %v766
        %v768 = vpop.f32.mrf.mxu0
        %769 = vdwg.mxu0
        %770 = vmatpush.bf16.msra.mxu0 0
        %771 = vmatpush.bf16.msra.mxu0 0
        %772 = vmatpush.bf16.msra.mxu0 0
        %773 = vmatpush.bf16.msra.mxu0 0
        %774 = vmatpush.bf16.msra.mxu0 0
        %775 = vmatpush.bf16.msra.mxu0 0
        %776 = vmatpush.bf16.msra.mxu0 %v672
        %777 = vmatpush.bf16.msra.mxu0 %v656
        %778 = vmatmul.bf16.gmra.mxu0 %v755
        %v779 = vpop.f32.mrf.mxu0
        %v780 = vadd.f32 %v722, %v779
        %v781 = vpop.f32.mrf.mxu0
        %782 = vdwg.mxu0
        %783 = vmatpush.bf16.msra.mxu0 0
        %784 = vmatpush.bf16.msra.mxu0 0
        %785 = vmatpush.bf16.msra.mxu0 0
        %786 = vmatpush.bf16.msra.mxu0 0
        %787 = vmatpush.bf16.msra.mxu0 0
        %788 = vmatpush.bf16.msra.mxu0 0
        %789 = vmatpush.bf16.msra.mxu0 %v673
        %790 = vmatpush.bf16.msra.mxu0 %v657
        %791 = vmatmul.bf16.gmra.mxu0 %v755
        %v792 = vpop.f32.mrf.mxu0
        %v793 = vadd.f32 %v723, %v792
        %v794 = vpop.f32.mrf.mxu0
        %795 = vdwg.mxu0
        %796 = vmatpush.bf16.msra.mxu0 0
        %797 = vmatpush.bf16.msra.mxu0 0
        %798 = vmatpush.bf16.msra.mxu0 0
        %799 = vmatpush.bf16.msra.mxu0 0
        %800 = vmatpush.bf16.msra.mxu0 0
        %801 = vmatpush.bf16.msra.mxu0 0
        %802 = vmatpush.bf16.msra.mxu0 %v674
        %803 = vmatpush.bf16.msra.mxu0 %v658
        %804 = vmatmul.bf16.gmra.mxu0 %v755
        %v805 = vpop.f32.mrf.mxu0
        %v806 = vadd.f32 %v724, %v805
        %v807 = vpop.f32.mrf.mxu0
        %808 = vdwg.mxu0
        %809 = vmatpush.bf16.msra.mxu0 0
        %810 = vmatpush.bf16.msra.mxu0 0
        %811 = vmatpush.bf16.msra.mxu0 0
        %812 = vmatpush.bf16.msra.mxu0 0
        %813 = vmatpush.bf16.msra.mxu0 0
        %814 = vmatpush.bf16.msra.mxu0 0
        %815 = vmatpush.bf16.msra.mxu0 %v675
        %816 = vmatpush.bf16.msra.mxu0 %v659
        %817 = vmatmul.bf16.gmra.mxu0 %v755
        %v818 = vpop.f32.mrf.mxu0
        %v819 = vadd.f32 %v725, %v818
        %v820 = vpop.f32.mrf.mxu0
        %821 = vdwg.mxu0
        %822 = vmatpush.bf16.msra.mxu0 0
        %823 = vmatpush.bf16.msra.mxu0 0
        %824 = vmatpush.bf16.msra.mxu0 0
        %825 = vmatpush.bf16.msra.mxu0 0
        %826 = vmatpush.bf16.msra.mxu0 0
        %827 = vmatpush.bf16.msra.mxu0 0
        %828 = vmatpush.bf16.msra.mxu0 %v676
        %829 = vmatpush.bf16.msra.mxu0 %v660
        %830 = vmatmul.bf16.gmra.mxu0 %v755
        %v831 = vpop.f32.mrf.mxu0
        %v832 = vadd.f32 %v726, %v831
        %v833 = vpop.f32.mrf.mxu0
        %834 = vdwg.mxu0
        %835 = vmatpush.bf16.msra.mxu0 0
        %836 = vmatpush.bf16.msra.mxu0 0
        %837 = vmatpush.bf16.msra.mxu0 0
        %838 = vmatpush.bf16.msra.mxu0 0
        %839 = vmatpush.bf16.msra.mxu0 0
        %840 = vmatpush.bf16.msra.mxu0 0
        %841 = vmatpush.bf16.msra.mxu0 %v677
        %842 = vmatpush.bf16.msra.mxu0 %v661
        %843 = vmatmul.bf16.gmra.mxu0 %v755
        %v844 = vpop.f32.mrf.mxu0
        %v845 = vadd.f32 %v727, %v844
        %v846 = vpop.f32.mrf.mxu0
        %847 = vdwg.mxu0
        %848 = vmatpush.bf16.msra.mxu0 0
        %849 = vmatpush.bf16.msra.mxu0 0
        %850 = vmatpush.bf16.msra.mxu0 0
        %851 = vmatpush.bf16.msra.mxu0 0
        %852 = vmatpush.bf16.msra.mxu0 0
        %853 = vmatpush.bf16.msra.mxu0 0
        %854 = vmatpush.bf16.msra.mxu0 %v678
        %855 = vmatpush.bf16.msra.mxu0 %v662
        %856 = vmatmul.bf16.gmra.mxu0 %v755
        %v857 = vpop.f32.mrf.mxu0
        %v858 = vadd.f32 %v728, %v857
        %v859 = vpop.f32.mrf.mxu0
        %860 = vdwg.mxu0
        %861 = vmatpush.bf16.msra.mxu0 0
        %862 = vmatpush.bf16.msra.mxu0 0
        %863 = vmatpush.bf16.msra.mxu0 0
        %864 = vmatpush.bf16.msra.mxu0 0
        %865 = vmatpush.bf16.msra.mxu0 0
        %866 = vmatpush.bf16.msra.mxu0 0
        %867 = vmatpush.bf16.msra.mxu0 %v679
        %868 = vmatpush.bf16.msra.mxu0 %v663
        %869 = vmatmul.bf16.gmra.mxu0 %v755
        %v870 = vpop.f32.mrf.mxu0
        %v871 = vadd.f32 %v729, %v870
        %v872 = vpop.f32.mrf.mxu0
        %873 = vdwg.mxu0
        %874 = vmatpush.bf16.msra.mxu0 0
        %875 = vmatpush.bf16.msra.mxu0 0
        %876 = vmatpush.bf16.msra.mxu0 0
        %877 = vmatpush.bf16.msra.mxu0 0
        %878 = vmatpush.bf16.msra.mxu0 0
        %879 = vmatpush.bf16.msra.mxu0 0
        %880 = vmatpush.bf16.msra.mxu0 %v680
        %881 = vmatpush.bf16.msra.mxu0 %v664
        %882 = vmatmul.bf16.gmra.mxu0 %v755
        %v883 = vpop.f32.mrf.mxu0
        %v884 = vadd.f32 %v730, %v883
        %v885 = vpop.f32.mrf.mxu0
        %886 = vdwg.mxu0
        %887 = vmatpush.bf16.msra.mxu0 0
        %888 = vmatpush.bf16.msra.mxu0 0
        %889 = vmatpush.bf16.msra.mxu0 0
        %890 = vmatpush.bf16.msra.mxu0 0
        %891 = vmatpush.bf16.msra.mxu0 0
        %892 = vmatpush.bf16.msra.mxu0 0
        %893 = vmatpush.bf16.msra.mxu0 %v681
        %894 = vmatpush.bf16.msra.mxu0 %v665
        %895 = vmatmul.bf16.gmra.mxu0 %v755
        %v896 = vpop.f32.mrf.mxu0
        %v897 = vadd.f32 %v731, %v896
        %v898 = vpop.f32.mrf.mxu0
        %899 = vdwg.mxu0
        %900 = vmatpush.bf16.msra.mxu0 0
        %901 = vmatpush.bf16.msra.mxu0 0
        %902 = vmatpush.bf16.msra.mxu0 0
        %903 = vmatpush.bf16.msra.mxu0 0
        %904 = vmatpush.bf16.msra.mxu0 0
        %905 = vmatpush.bf16.msra.mxu0 0
        %906 = vmatpush.bf16.msra.mxu0 %v682
        %907 = vmatpush.bf16.msra.mxu0 %v666
        %908 = vmatmul.bf16.gmra.mxu0 %v755
        %v909 = vpop.f32.mrf.mxu0
        %v910 = vadd.f32 %v732, %v909
        %v911 = vpop.f32.mrf.mxu0
        %912 = vdwg.mxu0
        %913 = vmatpush.bf16.msra.mxu0 0
        %914 = vmatpush.bf16.msra.mxu0 0
        %915 = vmatpush.bf16.msra.mxu0 0
        %916 = vmatpush.bf16.msra.mxu0 0
        %917 = vmatpush.bf16.msra.mxu0 0
        %918 = vmatpush.bf16.msra.mxu0 0
        %919 = vmatpush.bf16.msra.mxu0 %v683
        %920 = vmatpush.bf16.msra.mxu0 %v667
        %921 = vmatmul.bf16.gmra.mxu0 %v755
        %v922 = vpop.f32.mrf.mxu0
        %v923 = vadd.f32 %v733, %v922
        %v924 = vpop.f32.mrf.mxu0
        %925 = vdwg.mxu0
        %926 = vmatpush.bf16.msra.mxu0 0
        %927 = vmatpush.bf16.msra.mxu0 0
        %928 = vmatpush.bf16.msra.mxu0 0
        %929 = vmatpush.bf16.msra.mxu0 0
        %930 = vmatpush.bf16.msra.mxu0 0
        %931 = vmatpush.bf16.msra.mxu0 0
        %932 = vmatpush.bf16.msra.mxu0 %v684
        %933 = vmatpush.bf16.msra.mxu0 %v668
        %934 = vmatmul.bf16.gmra.mxu0 %v755
        %v935 = vpop.f32.mrf.mxu0
        %v936 = vadd.f32 %v734, %v935
        %v937 = vpop.f32.mrf.mxu0
        %938 = vdwg.mxu0
        %939 = vmatpush.bf16.msra.mxu0 0
        %940 = vmatpush.bf16.msra.mxu0 0
        %941 = vmatpush.bf16.msra.mxu0 0
        %942 = vmatpush.bf16.msra.mxu0 0
        %943 = vmatpush.bf16.msra.mxu0 0
        %944 = vmatpush.bf16.msra.mxu0 0
        %945 = vmatpush.bf16.msra.mxu0 %v685
        %946 = vmatpush.bf16.msra.mxu0 %v669
        %947 = vmatmul.bf16.gmra.mxu0 %v755
        %v948 = vpop.f32.mrf.mxu0
        %v949 = vadd.f32 %v735, %v948
        %v950 = vpop.f32.mrf.mxu0
        %951 = vdwg.mxu0
        %952 = vmatpush.bf16.msra.mxu0 0
        %953 = vmatpush.bf16.msra.mxu0 0
        %954 = vmatpush.bf16.msra.mxu0 0
        %955 = vmatpush.bf16.msra.mxu0 0
        %956 = vmatpush.bf16.msra.mxu0 0
        %957 = vmatpush.bf16.msra.mxu0 0
        %958 = vmatpush.bf16.msra.mxu0 %v686
        %959 = vmatpush.bf16.msra.mxu0 %v670
        %960 = vmatmul.bf16.gmra.mxu0 %v755
        %v961 = vpop.f32.mrf.mxu0
        %v962 = vadd.f32 %v736, %v961
        %v963 = vpop.f32.mrf.mxu0
        %964 = vdwg.mxu0
        %vm965 = vcmask 1040384
        %v966 = vsel %vm965, %v767, 0.0
        %v967 = vrot.slane %v780, 7
        %vm968 = vcmask 1041409
        %v969 = vsel %vm968, %v967, %v966
        %v970 = vrot.slane %v793, 6
        %vm971 = vcmask 1042434
        %v972 = vsel %vm971, %v970, %v969
        %v973 = vrot.slane %v806, 5
        %vm974 = vcmask 1043459
        %v975 = vsel %vm974, %v973, %v972
        %v976 = vsel %vm965, %v819, 0.0
        %v977 = vrot.slane %v832, 7
        %v978 = vsel %vm968, %v977, %v976
        %v979 = vrot.slane %v845, 6
        %v980 = vsel %vm971, %v979, %v978
        %v981 = vrot.slane %v858, 5
        %v982 = vsel %vm974, %v981, %v980
        %v983 = vsel %vm965, %v871, 0.0
        %v984 = vrot.slane %v884, 7
        %v985 = vsel %vm968, %v984, %v983
        %v986 = vrot.slane %v897, 6
        %v987 = vsel %vm971, %v986, %v985
        %v988 = vrot.slane %v910, 5
        %v989 = vsel %vm974, %v988, %v987
        %v990 = vsel %vm965, %v923, 0.0
        %v991 = vrot.slane %v936, 7
        %v992 = vsel %vm968, %v991, %v990
        %v993 = vrot.slane %v949, 6
        %v994 = vsel %vm971, %v993, %v992
        %v995 = vrot.slane %v962, 5
        %v996 = vsel %vm974, %v995, %v994
        %v997 = vpack.c.bf16 %v975, %v975
        %v998 = vpack.c.bf16 %v982, %v982
        %v999 = vpack.c.bf16 %v989, %v989
        %v1000 = vpack.c.bf16 %v996, %v996
        %1001 = vst [vmem:[#allocation2] sm:$0x3] %v997
        %1002 = vst [vmem:[#allocation2 + $0x2] sm:$0x3] %v998
        %1003 = vst [vmem:[#allocation2 + $0x4] sm:$0x3] %v999
        %1004 = vst [vmem:[#allocation2 + $0x6] sm:$0x3] %v1000
        %v1005 = vld [vmem:[#allocation2] sm:$0x3]
        %v1006 = vld [vmem:[#allocation2 + $0x2] sm:$0x3]
        %v1007 = vld [vmem:[#allocation2 + $0x4] sm:$0x3]
        %v1008 = vld [vmem:[#allocation2 + $0x6] sm:$0x3]
        %1010 = vst [vmem:[#allocation1] ss:$4 sm:$0xff] %v1005
        %v1011 = vld.sshfl [vmem:[#allocation1] sm:$0xff pattern:$0x73625140]
        %s1013 = scalar_lea.vmem [#allocation1], 32
        %1014 = vst [vmem:[%s1013] ss:$4 sm:$0xff] %v1006
        %v1015 = vld.sshfl [vmem:[#allocation1 + $0x20] sm:$0xff pattern:$0x73625140]
        %1017 = vst [vmem:[#allocation1] ss:$4 sm:$0xff] %v1007
        %v1018 = vld.sshfl [vmem:[#allocation1] sm:$0xff pattern:$0x73625140]
        %1020 = vst [vmem:[%s1013] ss:$4 sm:$0xff] %v1008
        %v1021 = vld.sshfl [vmem:[#allocation1 + $0x20] sm:$0xff pattern:$0x73625140]
        %v1022 = vshrl.u32 %v1011, 16
        %v1024 = vshll.u32 %v1011, 16
        %v1026 = vrot.slane %v1024, 1
        %v1027 = vor.u32 %v1022, %v1026
        %v1028 = vshrl.u32 %v1015, 16
        %v1030 = vshll.u32 %v1015, 16
        %v1032 = vrot.slane %v1030, 1
        %v1033 = vor.u32 %v1028, %v1032
        %v1034 = vshrl.u32 %v1018, 16
        %v1036 = vshll.u32 %v1018, 16
        %v1038 = vrot.slane %v1036, 1
        %v1039 = vor.u32 %v1034, %v1038
        %v1040 = vshrl.u32 %v1021, 16
        %v1042 = vshll.u32 %v1021, 16
        %v1044 = vrot.slane %v1042, 1
        %v1045 = vor.u32 %v1040, %v1044
        %1046 = vst [vmem:[#allocation1] ss:$4 sm:$0xff] %v1005
        %v1047 = vld.sshfl [vmem:[#allocation1] sm:$0xff pattern:$0x73625140]
        %s1049 = scalar_lea.vmem [#allocation1], 32
        %1050 = vst [vmem:[%s1049] ss:$4 sm:$0xff] %v1006
        %v1051 = vld.sshfl [vmem:[#allocation1 + $0x20] sm:$0xff pattern:$0x73625140]
        %1053 = vst [vmem:[#allocation1] ss:$4 sm:$0xff] %v1007
        %v1054 = vld.sshfl [vmem:[#allocation1] sm:$0xff pattern:$0x73625140]
        %1056 = vst [vmem:[%s1049] ss:$4 sm:$0xff] %v1008
        %v1057 = vld.sshfl [vmem:[#allocation1 + $0x20] sm:$0xff pattern:$0x73625140]
        %v1059 = vrot.slane %v1047, 1
        %v1060 = vrot.slane %v1051, 1
        %v1061 = vrot.slane %v1054, 1
        %v1062 = vrot.slane %v1057, 1
        %v1066 = vrot.slane %v1027, 7
        %v1067 = vrot.slane %v1059, 6
        %v1068 = vrot.slane %v1006, 5
        %v1069 = vrot.slane %v1033, 4
        %v1070 = vrot.slane %v1060, 3
        %v1071 = vrot.slane %v1007, 2
        %v1072 = vrot.slane %v1039, 1
        %v1073 = vrot.slane %v1033, 7
        %v1074 = vrot.slane %v1060, 6
        %v1075 = vrot.slane %v1007, 5
        %v1076 = vrot.slane %v1039, 4
        %v1077 = vrot.slane %v1061, 3
        %v1078 = vrot.slane %v1008, 2
        %v1079 = vrot.slane %v1045, 1
        %v1081 = vsel %vm965, %v1005, %v1066
        %v1084 = vsel %vm971, %v1067, %v1068
        %vm1085 = vcmask 1041408
        %v1086 = vsel %vm1085, %v1081, %v1084
        %vm1087 = vcmask 1044484
        %v1090 = vsel %vm1087, %v1069, %v1070
        %vm1091 = vcmask 1046534
        %v1094 = vsel %vm1091, %v1071, %v1072
        %vm1095 = vcmask 1045508
        %v1096 = vsel %vm1095, %v1090, %v1094
        %vm1097 = vcmask 1043456
        %v1098 = vsel %vm1097, %v1086, %v1096
        %v1100 = vsel %vm965, %v1006, %v1073
        %v1103 = vsel %vm971, %v1074, %v1075
        %v1104 = vsel %vm1085, %v1100, %v1103
        %v1107 = vsel %vm1087, %v1076, %v1077
        %v1110 = vsel %vm1091, %v1078, %v1079
        %v1111 = vsel %vm1095, %v1107, %v1110
        %v1112 = vsel %vm1097, %v1104, %v1111
        %v1113 = vld [vmem:[#allocation10] sm:$0xf]
        %v1114 = vld [vmem:[#allocation10 + $0x4] sm:$0xf]
        %v1115 = vld [vmem:[#allocation10 + $0x8] sm:$0xf]
        %v1116 = vld [vmem:[#allocation10 + $0xc] sm:$0xf]
        %v1117 = vld [vmem:[#allocation10 + $0x10] sm:$0xf]
        %v1118 = vld [vmem:[#allocation10 + $0x14] sm:$0xf]
        %v1119 = vld [vmem:[#allocation10 + $0x18] sm:$0xf]
        %v1120 = vld [vmem:[#allocation10 + $0x1c] sm:$0xf]
        %v1121 = vld [vmem:[#allocation10 + $0x20] sm:$0xf]
        %v1122 = vld [vmem:[#allocation10 + $0x24] sm:$0xf]
        %v1123 = vld [vmem:[#allocation10 + $0x28] sm:$0xf]
        %v1124 = vld [vmem:[#allocation10 + $0x2c] sm:$0xf]
        %v1125 = vld [vmem:[#allocation10 + $0x30] sm:$0xf]
        %v1126 = vld [vmem:[#allocation10 + $0x34] sm:$0xf]
        %v1127 = vld [vmem:[#allocation10 + $0x38] sm:$0xf]
        %v1128 = vld [vmem:[#allocation10 + $0x3c] sm:$0xf]
        %v1129 = vld [vmem:[#allocation10 + $0x40] sm:$0xf]
        %v1130 = vld [vmem:[#allocation10 + $0x44] sm:$0xf]
        %v1131 = vld [vmem:[#allocation10 + $0x48] sm:$0xf]
        %v1132 = vld [vmem:[#allocation10 + $0x4c] sm:$0xf]
        %v1133 = vld [vmem:[#allocation10 + $0x50] sm:$0xf]
        %v1134 = vld [vmem:[#allocation10 + $0x54] sm:$0xf]
        %v1135 = vld [vmem:[#allocation10 + $0x58] sm:$0xf]
        %v1136 = vld [vmem:[#allocation10 + $0x5c] sm:$0xf]
        %v1137 = vld [vmem:[#allocation10 + $0x60] sm:$0xf]
        %v1138 = vld [vmem:[#allocation10 + $0x64] sm:$0xf]
        %v1139 = vld [vmem:[#allocation10 + $0x68] sm:$0xf]
        %v1140 = vld [vmem:[#allocation10 + $0x6c] sm:$0xf]
        %v1141 = vld [vmem:[#allocation10 + $0x70] sm:$0xf]
        %v1142 = vld [vmem:[#allocation10 + $0x74] sm:$0xf]
        %v1143 = vld [vmem:[#allocation10 + $0x78] sm:$0xf]
        %v1144 = vld [vmem:[#allocation10 + $0x7c] sm:$0xf]
        %v1145 = vld [vmem:[#allocation10 + $0x80] sm:$0xf]
        %v1146 = vld [vmem:[#allocation10 + $0x84] sm:$0xf]
        %v1147 = vld [vmem:[#allocation10 + $0x88] sm:$0xf]
        %v1148 = vld [vmem:[#allocation10 + $0x8c] sm:$0xf]
        %v1149 = vld [vmem:[#allocation10 + $0x90] sm:$0xf]
        %v1150 = vld [vmem:[#allocation10 + $0x94] sm:$0xf]
        %v1151 = vld [vmem:[#allocation10 + $0x98] sm:$0xf]
        %v1152 = vld [vmem:[#allocation10 + $0x9c] sm:$0xf]
        %v1153 = vld [vmem:[#allocation10 + $0xa0] sm:$0xf]
        %v1154 = vld [vmem:[#allocation10 + $0xa4] sm:$0xf]
        %v1155 = vld [vmem:[#allocation10 + $0xa8] sm:$0xf]
        %v1156 = vld [vmem:[#allocation10 + $0xac] sm:$0xf]
        %v1157 = vld [vmem:[#allocation10 + $0xb0] sm:$0xf]
        %v1158 = vld [vmem:[#allocation10 + $0xb4] sm:$0xf]
        %v1159 = vld [vmem:[#allocation10 + $0xb8] sm:$0xf]
        %v1160 = vld [vmem:[#allocation10 + $0xbc] sm:$0xf]
        %v1161 = vld [vmem:[#allocation10 + $0xc0] sm:$0xf]
        %v1162 = vld [vmem:[#allocation10 + $0xc4] sm:$0xf]
        %v1163 = vld [vmem:[#allocation10 + $0xc8] sm:$0xf]
        %v1164 = vld [vmem:[#allocation10 + $0xcc] sm:$0xf]
        %v1165 = vld [vmem:[#allocation10 + $0xd0] sm:$0xf]
        %v1166 = vld [vmem:[#allocation10 + $0xd4] sm:$0xf]
        %v1167 = vld [vmem:[#allocation10 + $0xd8] sm:$0xf]
        %v1168 = vld [vmem:[#allocation10 + $0xdc] sm:$0xf]
        %v1169 = vld [vmem:[#allocation10 + $0xe0] sm:$0xf]
        %v1170 = vld [vmem:[#allocation10 + $0xe4] sm:$0xf]
        %v1171 = vld [vmem:[#allocation10 + $0xe8] sm:$0xf]
        %v1172 = vld [vmem:[#allocation10 + $0xec] sm:$0xf]
        %v1173 = vld [vmem:[#allocation10 + $0xf0] sm:$0xf]
        %v1174 = vld [vmem:[#allocation10 + $0xf4] sm:$0xf]
        %v1175 = vld [vmem:[#allocation10 + $0xf8] sm:$0xf]
        %v1176 = vld [vmem:[#allocation10 + $0xfc] sm:$0xf]
        %v1177 = vld [vmem:[#allocation10 + $0x100] sm:$0xf]
        %v1178 = vld [vmem:[#allocation10 + $0x104] sm:$0xf]
        %v1179 = vld [vmem:[#allocation10 + $0x108] sm:$0xf]
        %v1180 = vld [vmem:[#allocation10 + $0x10c] sm:$0xf]
        %v1181 = vld [vmem:[#allocation10 + $0x110] sm:$0xf]
        %v1182 = vld [vmem:[#allocation10 + $0x114] sm:$0xf]
        %v1183 = vld [vmem:[#allocation10 + $0x118] sm:$0xf]
        %v1184 = vld [vmem:[#allocation10 + $0x11c] sm:$0xf]
        %v1185 = vld [vmem:[#allocation10 + $0x120] sm:$0xf]
        %v1186 = vld [vmem:[#allocation10 + $0x124] sm:$0xf]
        %v1187 = vld [vmem:[#allocation10 + $0x128] sm:$0xf]
        %v1188 = vld [vmem:[#allocation10 + $0x12c] sm:$0xf]
        %v1189 = vld [vmem:[#allocation10 + $0x130] sm:$0xf]
        %v1190 = vld [vmem:[#allocation10 + $0x134] sm:$0xf]
        %v1191 = vld [vmem:[#allocation10 + $0x138] sm:$0xf]
        %v1192 = vld [vmem:[#allocation10 + $0x13c] sm:$0xf]
        %v1193 = vld [vmem:[#allocation10 + $0x140] sm:$0xf]
        %v1194 = vld [vmem:[#allocation10 + $0x144] sm:$0xf]
        %v1195 = vld [vmem:[#allocation10 + $0x148] sm:$0xf]
        %v1196 = vld [vmem:[#allocation10 + $0x14c] sm:$0xf]
        %v1197 = vld [vmem:[#allocation10 + $0x150] sm:$0xf]
        %v1198 = vld [vmem:[#allocation10 + $0x154] sm:$0xf]
        %v1199 = vld [vmem:[#allocation10 + $0x158] sm:$0xf]
        %v1200 = vld [vmem:[#allocation10 + $0x15c] sm:$0xf]
        %v1201 = vld [vmem:[#allocation10 + $0x160] sm:$0xf]
        %v1202 = vld [vmem:[#allocation10 + $0x164] sm:$0xf]
        %v1203 = vld [vmem:[#allocation10 + $0x168] sm:$0xf]
        %v1204 = vld [vmem:[#allocation10 + $0x16c] sm:$0xf]
        %v1205 = vld [vmem:[#allocation10 + $0x170] sm:$0xf]
        %v1206 = vld [vmem:[#allocation10 + $0x174] sm:$0xf]
        %v1207 = vld [vmem:[#allocation10 + $0x178] sm:$0xf]
        %v1208 = vld [vmem:[#allocation10 + $0x17c] sm:$0xf]
        %v1209 = vld [vmem:[#allocation10 + $0x180] sm:$0xf]
        %v1210 = vld [vmem:[#allocation10 + $0x184] sm:$0xf]
        %v1211 = vld [vmem:[#allocation10 + $0x188] sm:$0xf]
        %v1212 = vld [vmem:[#allocation10 + $0x18c] sm:$0xf]
        %v1213 = vld [vmem:[#allocation10 + $0x190] sm:$0xf]
        %v1214 = vld [vmem:[#allocation10 + $0x194] sm:$0xf]
        %v1215 = vld [vmem:[#allocation10 + $0x198] sm:$0xf]
        %v1216 = vld [vmem:[#allocation10 + $0x19c] sm:$0xf]
        %v1217 = vld [vmem:[#allocation10 + $0x1a0] sm:$0xf]
        %v1218 = vld [vmem:[#allocation10 + $0x1a4] sm:$0xf]
        %v1219 = vld [vmem:[#allocation10 + $0x1a8] sm:$0xf]
        %v1220 = vld [vmem:[#allocation10 + $0x1ac] sm:$0xf]
        %v1221 = vld [vmem:[#allocation10 + $0x1b0] sm:$0xf]
        %v1222 = vld [vmem:[#allocation10 + $0x1b4] sm:$0xf]
        %v1223 = vld [vmem:[#allocation10 + $0x1b8] sm:$0xf]
        %v1224 = vld [vmem:[#allocation10 + $0x1bc] sm:$0xf]
        %v1225 = vld [vmem:[#allocation10 + $0x1c0] sm:$0xf]
        %v1226 = vld [vmem:[#allocation10 + $0x1c4] sm:$0xf]
        %v1227 = vld [vmem:[#allocation10 + $0x1c8] sm:$0xf]
        %v1228 = vld [vmem:[#allocation10 + $0x1cc] sm:$0xf]
        %v1229 = vld [vmem:[#allocation10 + $0x1d0] sm:$0xf]
        %v1230 = vld [vmem:[#allocation10 + $0x1d4] sm:$0xf]
        %v1231 = vld [vmem:[#allocation10 + $0x1d8] sm:$0xf]
        %v1232 = vld [vmem:[#allocation10 + $0x1dc] sm:$0xf]
        %v1233 = vld [vmem:[#allocation10 + $0x1e0] sm:$0xf]
        %v1234 = vld [vmem:[#allocation10 + $0x1e4] sm:$0xf]
        %v1235 = vld [vmem:[#allocation10 + $0x1e8] sm:$0xf]
        %v1236 = vld [vmem:[#allocation10 + $0x1ec] sm:$0xf]
        %v1237 = vld [vmem:[#allocation10 + $0x1f0] sm:$0xf]
        %v1238 = vld [vmem:[#allocation10 + $0x1f4] sm:$0xf]
        %v1239 = vld [vmem:[#allocation10 + $0x1f8] sm:$0xf]
        %v1240 = vld [vmem:[#allocation10 + $0x1fc] sm:$0xf]
        %v1241 = vld [vmem:[#allocation10 + $0x200] sm:$0xf]
        %v1242 = vld [vmem:[#allocation10 + $0x204] sm:$0xf]
        %v1243 = vld [vmem:[#allocation10 + $0x208] sm:$0xf]
        %v1244 = vld [vmem:[#allocation10 + $0x20c] sm:$0xf]
        %v1245 = vld [vmem:[#allocation10 + $0x210] sm:$0xf]
        %v1246 = vld [vmem:[#allocation10 + $0x214] sm:$0xf]
        %v1247 = vld [vmem:[#allocation10 + $0x218] sm:$0xf]
        %v1248 = vld [vmem:[#allocation10 + $0x21c] sm:$0xf]
        %v1249 = vld [vmem:[#allocation10 + $0x220] sm:$0xf]
        %v1250 = vld [vmem:[#allocation10 + $0x224] sm:$0xf]
        %v1251 = vld [vmem:[#allocation10 + $0x228] sm:$0xf]
        %v1252 = vld [vmem:[#allocation10 + $0x22c] sm:$0xf]
        %v1253 = vld [vmem:[#allocation10 + $0x230] sm:$0xf]
        %v1254 = vld [vmem:[#allocation10 + $0x234] sm:$0xf]
        %v1255 = vld [vmem:[#allocation10 + $0x238] sm:$0xf]
        %v1256 = vld [vmem:[#allocation10 + $0x23c] sm:$0xf]
        %v1257 = vld [vmem:[#allocation11] sm:$0x1]
        %v1259 = vperm.slane %v1257, 0
        %1261 = vst [vmem:[#allocation1] ss:$9 sm:$0xff] %v1098
        %s1262 = scalar_lea.vmem [#allocation1], 1
        %1263 = vst [vmem:[%s1262] ss:$9 sm:$0xff] %v1112
        %v1264 = vld [vmem:[#allocation1] sm:$0xff]
        %v1265 = vld [vmem:[#allocation1 + $0x9] sm:$0xff]
        %v1266 = vld [vmem:[#allocation1 + $0x12] sm:$0xff]
        %v1267 = vld [vmem:[#allocation1 + $0x1b] sm:$0xff]
        %v1268 = vld [vmem:[#allocation1 + $0x24] sm:$0xff]
        %v1269 = vld [vmem:[#allocation1 + $0x2d] sm:$0xff]
        %v1270 = vld [vmem:[#allocation1 + $0x36] sm:$0xff]
        %v1271 = vld [vmem:[#allocation1 + $0x3f] sm:$0xff]
        %1273 = vst [vmem:[#allocation1] ss:$9 sm:$0xff] %v1061
        %1275 = vst [vmem:[%s1262] ss:$9 sm:$0xff] %v1062
        %v1276 = vld [vmem:[#allocation1] sm:$0xff]
        %v1430 = vunpack.c.l.b16 %v1113
        %v1431 = vunpack.c.l.b16 %v1114
        %v1432 = vunpack.c.l.b16 %v1115
        %v1433 = vunpack.c.l.b16 %v1116
        %v1434 = vunpack.c.l.b16 %v1117
        %v1435 = vunpack.c.l.b16 %v1118
        %v1436 = vunpack.c.l.b16 %v1119
        %v1437 = vunpack.c.l.b16 %v1120
        %v1438 = vunpack.c.l.b16 %v1121
        %v1439 = vunpack.c.l.b16 %v1122
        %v1440 = vunpack.c.l.b16 %v1123
        %v1441 = vunpack.c.l.b16 %v1124
        %v1442 = vunpack.c.l.b16 %v1125
        %v1443 = vunpack.c.l.b16 %v1126
        %v1444 = vunpack.c.l.b16 %v1127
        %v1445 = vunpack.c.l.b16 %v1128
        %v1446 = vunpack.c.l.b16 %v1129
        %v1447 = vunpack.c.l.b16 %v1130
        %v1448 = vunpack.c.l.b16 %v1131
        %v1449 = vunpack.c.l.b16 %v1132
        %v1450 = vunpack.c.l.b16 %v1133
        %v1451 = vunpack.c.l.b16 %v1134
        %v1452 = vunpack.c.l.b16 %v1135
        %v1453 = vunpack.c.l.b16 %v1136
        %v1454 = vunpack.c.l.b16 %v1137
        %v1455 = vunpack.c.l.b16 %v1138
        %v1456 = vunpack.c.l.b16 %v1139
        %v1457 = vunpack.c.l.b16 %v1140
        %v1458 = vunpack.c.l.b16 %v1141
        %v1459 = vunpack.c.l.b16 %v1142
        %v1460 = vunpack.c.l.b16 %v1143
        %v1461 = vunpack.c.l.b16 %v1144
        %v1462 = vunpack.c.l.b16 %v1145
        %v1463 = vunpack.c.l.b16 %v1146
        %v1464 = vunpack.c.l.b16 %v1147
        %v1465 = vunpack.c.l.b16 %v1148
        %v1466 = vunpack.c.l.b16 %v1149
        %v1467 = vunpack.c.l.b16 %v1150
        %v1468 = vunpack.c.l.b16 %v1151
        %v1469 = vunpack.c.l.b16 %v1152
        %v1470 = vunpack.c.l.b16 %v1153
        %v1471 = vunpack.c.l.b16 %v1154
        %v1472 = vunpack.c.l.b16 %v1155
        %v1473 = vunpack.c.l.b16 %v1156
        %v1474 = vunpack.c.l.b16 %v1157
        %v1475 = vunpack.c.l.b16 %v1158
        %v1476 = vunpack.c.l.b16 %v1159
        %v1477 = vunpack.c.l.b16 %v1160
        %v1478 = vunpack.c.l.b16 %v1161
        %v1479 = vunpack.c.l.b16 %v1162
        %v1480 = vunpack.c.l.b16 %v1163
        %v1481 = vunpack.c.l.b16 %v1164
        %v1482 = vunpack.c.l.b16 %v1165
        %v1483 = vunpack.c.l.b16 %v1166
        %v1484 = vunpack.c.l.b16 %v1167
        %v1485 = vunpack.c.l.b16 %v1168
        %v1486 = vunpack.c.l.b16 %v1169
        %v1487 = vunpack.c.l.b16 %v1170
        %v1488 = vunpack.c.l.b16 %v1171
        %v1489 = vunpack.c.l.b16 %v1172
        %v1490 = vunpack.c.l.b16 %v1173
        %v1491 = vunpack.c.l.b16 %v1174
        %v1492 = vunpack.c.l.b16 %v1175
        %v1493 = vunpack.c.l.b16 %v1176
        %v1494 = vunpack.c.l.b16 %v1177
        %v1495 = vunpack.c.l.b16 %v1178
        %v1496 = vunpack.c.l.b16 %v1179
        %v1497 = vunpack.c.l.b16 %v1180
        %v1498 = vunpack.c.l.b16 %v1181
        %v1499 = vunpack.c.l.b16 %v1182
        %v1500 = vunpack.c.l.b16 %v1183
        %v1501 = vunpack.c.l.b16 %v1184
        %v1502 = vunpack.c.l.b16 %v1185
        %v1503 = vunpack.c.l.b16 %v1186
        %v1504 = vunpack.c.l.b16 %v1187
        %v1505 = vunpack.c.l.b16 %v1188
        %v1506 = vunpack.c.l.b16 %v1189
        %v1507 = vunpack.c.l.b16 %v1190
        %v1508 = vunpack.c.l.b16 %v1191
        %v1509 = vunpack.c.l.b16 %v1192
        %v1510 = vunpack.c.l.b16 %v1193
        %v1511 = vunpack.c.l.b16 %v1194
        %v1512 = vunpack.c.l.b16 %v1195
        %v1513 = vunpack.c.l.b16 %v1196
        %v1514 = vunpack.c.l.b16 %v1197
        %v1515 = vunpack.c.l.b16 %v1198
        %v1516 = vunpack.c.l.b16 %v1199
        %v1517 = vunpack.c.l.b16 %v1200
        %v1518 = vunpack.c.l.b16 %v1201
        %v1519 = vunpack.c.l.b16 %v1202
        %v1520 = vunpack.c.l.b16 %v1203
        %v1521 = vunpack.c.l.b16 %v1204
        %v1522 = vunpack.c.l.b16 %v1205
        %v1523 = vunpack.c.l.b16 %v1206
        %v1524 = vunpack.c.l.b16 %v1207
        %v1525 = vunpack.c.l.b16 %v1208
        %v1526 = vunpack.c.l.b16 %v1209
        %v1527 = vunpack.c.l.b16 %v1210
        %v1528 = vunpack.c.l.b16 %v1211
        %v1529 = vunpack.c.l.b16 %v1212
        %v1530 = vunpack.c.l.b16 %v1213
        %v1531 = vunpack.c.l.b16 %v1214
        %v1532 = vunpack.c.l.b16 %v1215
        %v1533 = vunpack.c.l.b16 %v1216
        %v1534 = vunpack.c.l.b16 %v1217
        %v1535 = vunpack.c.l.b16 %v1218
        %v1536 = vunpack.c.l.b16 %v1219
        %v1537 = vunpack.c.l.b16 %v1220
        %v1538 = vunpack.c.l.b16 %v1221
        %v1539 = vunpack.c.l.b16 %v1222
        %v1540 = vunpack.c.l.b16 %v1223
        %v1541 = vunpack.c.l.b16 %v1224
        %v1542 = vunpack.c.l.b16 %v1225
        %v1543 = vunpack.c.l.b16 %v1226
        %v1544 = vunpack.c.l.b16 %v1227
        %v1545 = vunpack.c.l.b16 %v1228
        %v1546 = vunpack.c.l.b16 %v1229
        %v1547 = vunpack.c.l.b16 %v1230
        %v1548 = vunpack.c.l.b16 %v1231
        %v1549 = vunpack.c.l.b16 %v1232
        %v1550 = vunpack.c.l.b16 %v1233
        %v1551 = vunpack.c.l.b16 %v1234
        %v1552 = vunpack.c.l.b16 %v1235
        %v1553 = vunpack.c.l.b16 %v1236
        %v1554 = vunpack.c.l.b16 %v1237
        %v1555 = vunpack.c.l.b16 %v1238
        %v1556 = vunpack.c.l.b16 %v1239
        %v1557 = vunpack.c.l.b16 %v1240
        %v1558 = vunpack.c.l.b16 %v1241
        %v1559 = vunpack.c.l.b16 %v1242
        %v1560 = vunpack.c.l.b16 %v1243
        %v1561 = vunpack.c.l.b16 %v1244
        %v1562 = vunpack.c.l.b16 %v1245
        %v1563 = vunpack.c.l.b16 %v1246
        %v1564 = vunpack.c.l.b16 %v1247
        %v1565 = vunpack.c.l.b16 %v1248
        %v1566 = vunpack.c.l.b16 %v1249
        %v1567 = vunpack.c.l.b16 %v1250
        %v1568 = vunpack.c.l.b16 %v1251
        %v1569 = vunpack.c.l.b16 %v1252
        %v1570 = vunpack.c.l.b16 %v1253
        %v1571 = vunpack.c.l.b16 %v1254
        %v1572 = vunpack.c.l.b16 %v1255
        %v1573 = vunpack.c.l.b16 %v1256
        %v1574 = vpack.c.b16 %v1431, %v1430
        %v1575 = vpack.c.b16 %v1433, %v1432
        %v1576 = vpack.c.b16 %v1435, %v1434
        %v1577 = vpack.c.b16 %v1437, %v1436
        %v1578 = vpack.c.b16 %v1439, %v1438
        %v1579 = vpack.c.b16 %v1441, %v1440
        %v1580 = vpack.c.b16 %v1443, %v1442
        %v1581 = vpack.c.b16 %v1445, %v1444
        %v1582 = vpack.c.b16 %v1447, %v1446
        %v1583 = vpack.c.b16 %v1449, %v1448
        %v1584 = vpack.c.b16 %v1451, %v1450
        %v1585 = vpack.c.b16 %v1453, %v1452
        %v1586 = vpack.c.b16 %v1455, %v1454
        %v1587 = vpack.c.b16 %v1457, %v1456
        %v1588 = vpack.c.b16 %v1459, %v1458
        %v1589 = vpack.c.b16 %v1461, %v1460
        %v1590 = vpack.c.b16 %v1463, %v1462
        %v1591 = vpack.c.b16 %v1465, %v1464
        %v1592 = vpack.c.b16 %v1467, %v1466
        %v1593 = vpack.c.b16 %v1469, %v1468
        %v1594 = vpack.c.b16 %v1471, %v1470
        %v1595 = vpack.c.b16 %v1473, %v1472
        %v1596 = vpack.c.b16 %v1475, %v1474
        %v1597 = vpack.c.b16 %v1477, %v1476
        %v1598 = vpack.c.b16 %v1479, %v1478
        %v1599 = vpack.c.b16 %v1481, %v1480
        %v1600 = vpack.c.b16 %v1483, %v1482
        %v1601 = vpack.c.b16 %v1485, %v1484
        %v1602 = vpack.c.b16 %v1487, %v1486
        %v1603 = vpack.c.b16 %v1489, %v1488
        %v1604 = vpack.c.b16 %v1491, %v1490
        %v1605 = vpack.c.b16 %v1493, %v1492
        %v1606 = vpack.c.b16 %v1495, %v1494
        %v1607 = vpack.c.b16 %v1497, %v1496
        %v1608 = vpack.c.b16 %v1499, %v1498
        %v1609 = vpack.c.b16 %v1501, %v1500
        %v1610 = vpack.c.b16 %v1503, %v1502
        %v1611 = vpack.c.b16 %v1505, %v1504
        %v1612 = vpack.c.b16 %v1507, %v1506
        %v1613 = vpack.c.b16 %v1509, %v1508
        %v1614 = vpack.c.b16 %v1511, %v1510
        %v1615 = vpack.c.b16 %v1513, %v1512
        %v1616 = vpack.c.b16 %v1515, %v1514
        %v1617 = vpack.c.b16 %v1517, %v1516
        %v1618 = vpack.c.b16 %v1519, %v1518
        %v1619 = vpack.c.b16 %v1521, %v1520
        %v1620 = vpack.c.b16 %v1523, %v1522
        %v1621 = vpack.c.b16 %v1525, %v1524
        %v1622 = vpack.c.b16 %v1527, %v1526
        %v1623 = vpack.c.b16 %v1529, %v1528
        %v1624 = vpack.c.b16 %v1531, %v1530
        %v1625 = vpack.c.b16 %v1533, %v1532
        %v1626 = vpack.c.b16 %v1535, %v1534
        %v1627 = vpack.c.b16 %v1537, %v1536
        %v1628 = vpack.c.b16 %v1539, %v1538
        %v1629 = vpack.c.b16 %v1541, %v1540
        %v1630 = vpack.c.b16 %v1543, %v1542
        %v1631 = vpack.c.b16 %v1545, %v1544
        %v1632 = vpack.c.b16 %v1547, %v1546
        %v1633 = vpack.c.b16 %v1549, %v1548
        %v1634 = vpack.c.b16 %v1551, %v1550
        %v1635 = vpack.c.b16 %v1553, %v1552
        %v1636 = vpack.c.b16 %v1555, %v1554
        %v1637 = vpack.c.b16 %v1557, %v1556
        %v1638 = vpack.c.b16 %v1559, %v1558
        %v1639 = vpack.c.b16 %v1561, %v1560
        %v1640 = vpack.c.b16 %v1563, %v1562
        %v1641 = vpack.c.b16 %v1565, %v1564
        %v1642 = vpack.c.b16 %v1567, %v1566
        %v1643 = vpack.c.b16 %v1569, %v1568
        %v1644 = vpack.c.b16 %v1571, %v1570
        %v1645 = vpack.c.b16 %v1573, %v1572
        %1718 = vmatpush.bf16.msra.mxu0 %v1581
        %1719 = vmatpush.bf16.msra.mxu0 %v1580
        %1720 = vmatpush.bf16.msra.mxu0 %v1579
        %1721 = vmatpush.bf16.msra.mxu0 %v1578
        %1722 = vmatpush.bf16.msra.mxu0 %v1577
        %1723 = vmatpush.bf16.msra.mxu0 %v1576
        %1724 = vmatpush.bf16.msra.mxu0 %v1575
        %1725 = vmatpush.bf16.msra.mxu0 %v1574
        %1726 = vmatmul.bf16.gmra.mxu0 %v1264
        %v1727 = vpop.f32.mrf.mxu0
        %v1728 = vadd.f32 %v1259, %v1727
        %v1729 = vpop.f32.mrf.mxu0
        %1730 = vdwg.mxu0
        %1731 = vmatpush.bf16.msra.mxu0 %v1589
        %1732 = vmatpush.bf16.msra.mxu0 %v1588
        %1733 = vmatpush.bf16.msra.mxu0 %v1587
        %1734 = vmatpush.bf16.msra.mxu0 %v1586
        %1735 = vmatpush.bf16.msra.mxu0 %v1585
        %1736 = vmatpush.bf16.msra.mxu0 %v1584
        %1737 = vmatpush.bf16.msra.mxu0 %v1583
        %1738 = vmatpush.bf16.msra.mxu0 %v1582
        %1739 = vmatmul.bf16.gmra.mxu0 %v1265
        %v1740 = vpop.f32.mrf.mxu0
        %v1741 = vadd.f32 %v1728, %v1740
        %v1742 = vpop.f32.mrf.mxu0
        %1743 = vdwg.mxu0
        %1744 = vmatpush.bf16.msra.mxu0 %v1597
        %1745 = vmatpush.bf16.msra.mxu0 %v1596
        %1746 = vmatpush.bf16.msra.mxu0 %v1595
        %1747 = vmatpush.bf16.msra.mxu0 %v1594
        %1748 = vmatpush.bf16.msra.mxu0 %v1593
        %1749 = vmatpush.bf16.msra.mxu0 %v1592
        %1750 = vmatpush.bf16.msra.mxu0 %v1591
        %1751 = vmatpush.bf16.msra.mxu0 %v1590
        %1752 = vmatmul.bf16.gmra.mxu0 %v1266
        %v1753 = vpop.f32.mrf.mxu0
        %v1754 = vadd.f32 %v1741, %v1753
        %v1755 = vpop.f32.mrf.mxu0
        %1756 = vdwg.mxu0
        %1757 = vmatpush.bf16.msra.mxu0 %v1605
        %1758 = vmatpush.bf16.msra.mxu0 %v1604
        %1759 = vmatpush.bf16.msra.mxu0 %v1603
        %1760 = vmatpush.bf16.msra.mxu0 %v1602
        %1761 = vmatpush.bf16.msra.mxu0 %v1601
        %1762 = vmatpush.bf16.msra.mxu0 %v1600
        %1763 = vmatpush.bf16.msra.mxu0 %v1599
        %1764 = vmatpush.bf16.msra.mxu0 %v1598
        %1765 = vmatmul.bf16.gmra.mxu0 %v1267
        %v1766 = vpop.f32.mrf.mxu0
        %v1767 = vadd.f32 %v1754, %v1766
        %v1768 = vpop.f32.mrf.mxu0
        %1769 = vdwg.mxu0
        %1770 = vmatpush.bf16.msra.mxu0 %v1613
        %1771 = vmatpush.bf16.msra.mxu0 %v1612
        %1772 = vmatpush.bf16.msra.mxu0 %v1611
        %1773 = vmatpush.bf16.msra.mxu0 %v1610
        %1774 = vmatpush.bf16.msra.mxu0 %v1609
        %1775 = vmatpush.bf16.msra.mxu0 %v1608
        %1776 = vmatpush.bf16.msra.mxu0 %v1607
        %1777 = vmatpush.bf16.msra.mxu0 %v1606
        %1778 = vmatmul.bf16.gmra.mxu0 %v1268
        %v1779 = vpop.f32.mrf.mxu0
        %v1780 = vadd.f32 %v1767, %v1779
        %v1781 = vpop.f32.mrf.mxu0
        %1782 = vdwg.mxu0
        %1783 = vmatpush.bf16.msra.mxu0 %v1621
        %1784 = vmatpush.bf16.msra.mxu0 %v1620
        %1785 = vmatpush.bf16.msra.mxu0 %v1619
        %1786 = vmatpush.bf16.msra.mxu0 %v1618
        %1787 = vmatpush.bf16.msra.mxu0 %v1617
        %1788 = vmatpush.bf16.msra.mxu0 %v1616
        %1789 = vmatpush.bf16.msra.mxu0 %v1615
        %1790 = vmatpush.bf16.msra.mxu0 %v1614
        %1791 = vmatmul.bf16.gmra.mxu0 %v1269
        %v1792 = vpop.f32.mrf.mxu0
        %v1793 = vadd.f32 %v1780, %v1792
        %v1794 = vpop.f32.mrf.mxu0
        %1795 = vdwg.mxu0
        %1796 = vmatpush.bf16.msra.mxu0 %v1629
        %1797 = vmatpush.bf16.msra.mxu0 %v1628
        %1798 = vmatpush.bf16.msra.mxu0 %v1627
        %1799 = vmatpush.bf16.msra.mxu0 %v1626
        %1800 = vmatpush.bf16.msra.mxu0 %v1625
        %1801 = vmatpush.bf16.msra.mxu0 %v1624
        %1802 = vmatpush.bf16.msra.mxu0 %v1623
        %1803 = vmatpush.bf16.msra.mxu0 %v1622
        %1804 = vmatmul.bf16.gmra.mxu0 %v1270
        %v1805 = vpop.f32.mrf.mxu0
        %v1806 = vadd.f32 %v1793, %v1805
        %v1807 = vpop.f32.mrf.mxu0
        %1808 = vdwg.mxu0
        %1809 = vmatpush.bf16.msra.mxu0 %v1637
        %1810 = vmatpush.bf16.msra.mxu0 %v1636
        %1811 = vmatpush.bf16.msra.mxu0 %v1635
        %1812 = vmatpush.bf16.msra.mxu0 %v1634
        %1813 = vmatpush.bf16.msra.mxu0 %v1633
        %1814 = vmatpush.bf16.msra.mxu0 %v1632
        %1815 = vmatpush.bf16.msra.mxu0 %v1631
        %1816 = vmatpush.bf16.msra.mxu0 %v1630
        %1817 = vmatmul.bf16.gmra.mxu0 %v1271
        %v1818 = vpop.f32.mrf.mxu0
        %v1819 = vadd.f32 %v1806, %v1818
        %v1820 = vpop.f32.mrf.mxu0
        %1821 = vdwg.mxu0
        %1822 = vmatpush.bf16.msra.mxu0 %v1645
        %1823 = vmatpush.bf16.msra.mxu0 %v1644
        %1824 = vmatpush.bf16.msra.mxu0 %v1643
        %1825 = vmatpush.bf16.msra.mxu0 %v1642
        %1826 = vmatpush.bf16.msra.mxu0 %v1641
        %1827 = vmatpush.bf16.msra.mxu0 %v1640
        %1828 = vmatpush.bf16.msra.mxu0 %v1639
        %1829 = vmatpush.bf16.msra.mxu0 %v1638
        %1830 = vmatmul.bf16.gmra.mxu0 %v1276
        %v1831 = vpop.f32.mrf.mxu0
        %v1832 = vadd.f32 %v1819, %v1831
        %v1833 = vpop.f32.mrf.mxu0
        %1834 = vdwg.mxu0
        %v1835 = vmax.f32 %v1832, 0.0
        %v1837 = vrot.slane %v1835, 2
        %v1838 = vrot.slane %v1835, 1
        %v1839 = vrot.slane %v1835, 3
        %v1840 = vrot.slane %v1837, 1
        %v1841 = vrot.slane %v1837, 2
        %v1842 = vrot.slane %v1837, 3
        %v1843 = vsel %vm965, %v1835, %v1838
        %v1844 = vsel %vm971, %v1837, %v1839
        %v1845 = vsel %vm1085, %v1843, %v1844
        %v1846 = vsel %vm968, %v1835, %v1838
        %v1847 = vsel %vm974, %v1837, %v1839
        %vm1848 = vcmask 1042433
        %v1849 = vsel %vm1848, %v1846, %v1847
        %v1850 = vrot.slane %v1849, 1
        %v1851 = vsel %vm965, %v1837, %v1840
        %v1852 = vsel %vm971, %v1841, %v1842
        %v1853 = vsel %vm1085, %v1851, %v1852
        %v1854 = vsel %vm968, %v1837, %v1840
        %v1855 = vsel %vm974, %v1841, %v1842
        %v1856 = vsel %vm1848, %v1854, %v1855
        %v1857 = vrot.slane %v1856, 1
        %v1858 = vperm.slane %v1845, 0
        %v1859 = vperm.slane %v1850, 0
        %v1860 = vperm.slane %v1853, 0
        %v1861 = vperm.slane %v1857, 0
        %1862 = vst [vmem:[#allocation3] sm:$0x7] 0
        %s1863 = scalar_lea.vmem [#allocation3], 20
        %1864 = vst [vmem:[%s1863] sm:$0x7] 0
        %s1865 = scalar_lea.vmem [#allocation3], 4
        %vm1866 = vcmask 1040384
        %vm1867 = vsmask.f32 256
        %vm1868 = vmand %vm1866, %vm1867
        %v1869 = vld [vmem:[%s1865] sm:$0x1]
        %v1870 = vsel %vm1868, 0, %v1869
        %1871 = vst [vmem:[%s1865] sm:$0x1] %v1870
        %v1872 = vld [vmem:[%s1865 + $0x4] sm:$0x1]
        %v1873 = vsel %vm1868, 0, %v1872
        %1874 = vst [vmem:[%s1865 + $0x4] sm:$0x1] %v1873
        %v1875 = vld [vmem:[%s1865 + $0x8] sm:$0x1]
        %v1876 = vsel %vm1868, 0, %v1875
        %1877 = vst [vmem:[%s1865 + $0x8] sm:$0x1] %v1876
        %v1878 = vld [vmem:[%s1865 + $0xc] sm:$0x1]
        %v1879 = vsel %vm1868, 0, %v1878
        %1880 = vst [vmem:[%s1865 + $0xc] sm:$0x1] %v1879
        %vm1881 = vcmask 1042434
        %vm1882 = vsmask.f32 7946
        %vm1883 = vmand %vm1881, %vm1882
        %v1884 = vld [vmem:[%s1865] sm:$0x4]
        %v1885 = vsel %vm1883, 0, %v1884
        %1886 = vst [vmem:[%s1865] sm:$0x4] %v1885
        %v1887 = vld [vmem:[%s1865 + $0x4] sm:$0x4]
        %v1888 = vsel %vm1883, 0, %v1887
        %1889 = vst [vmem:[%s1865 + $0x4] sm:$0x4] %v1888
        %v1890 = vld [vmem:[%s1865 + $0x8] sm:$0x4]
        %v1891 = vsel %vm1883, 0, %v1890
        %1892 = vst [vmem:[%s1865 + $0x8] sm:$0x4] %v1891
        %v1893 = vld [vmem:[%s1865 + $0xc] sm:$0x4]
        %v1894 = vsel %vm1883, 0, %v1893
        %1895 = vst [vmem:[%s1865 + $0xc] sm:$0x4] %v1894
        %1896 = vst [vmem:[#allocation1] ss:$4 sm:$0xff] %v1858
        %s1897 = scalar_lea.vmem [#allocation1], 1
        %1898 = vst [vmem:[%s1897] ss:$4 sm:$0xff] %v1859
        %v1899 = vld.sshfl [vmem:[#allocation1] sm:$0xff pattern:$0x73625140]
        %s1900 = scalar_lea.vmem [#allocation1], 32
        %1901 = vst [vmem:[%s1900] ss:$4 sm:$0xff] %v1858
        %s1902 = scalar_lea.vmem [#allocation1], 33
        %1903 = vst [vmem:[%s1902] ss:$4 sm:$0xff] %v1859
        %v1904 = vld.sshfl [vmem:[#allocation1 + $0x20] sm:$0xff pattern:$0x73625140]
        %1905 = vst [vmem:[#allocation1] ss:$4 sm:$0xff] %v1860
        %1906 = vst [vmem:[%s1897] ss:$4 sm:$0xff] %v1861
        %v1907 = vld.sshfl [vmem:[#allocation1] sm:$0xff pattern:$0x73625140]
        %1908 = vst [vmem:[%s1900] ss:$4 sm:$0xff] %v1860
        %1909 = vst [vmem:[%s1902] ss:$4 sm:$0xff] %v1861
        %v1910 = vld.sshfl [vmem:[#allocation1 + $0x20] sm:$0xff pattern:$0x73625140]
        %v1915 = vpack.c.bf16 %v1899, %v1899
        %v1916 = vpack.c.bf16 %v1904, %v1904
        %v1917 = vpack.c.bf16 %v1907, %v1907
        %v1918 = vpack.c.bf16 %v1910, %v1910
        %v1920 = vshrl.u32 %v1915, 16
        %v1922 = vrot.slane %v1920, 7
        %v1923 = vshll.u32 %v1915, 16
        %v1925 = vor.u32 %v1922, %v1923
        %v1927 = vshrl.u32 %v1916, 16
        %v1929 = vrot.slane %v1927, 7
        %v1930 = vshll.u32 %v1916, 16
        %v1932 = vor.u32 %v1929, %v1930
        %v1934 = vshrl.u32 %v1917, 16
        %v1936 = vrot.slane %v1934, 7
        %v1937 = vshll.u32 %v1917, 16
        %v1939 = vor.u32 %v1936, %v1937
        %v1941 = vshrl.u32 %v1918, 16
        %v1943 = vrot.slane %v1941, 7
        %v1944 = vshll.u32 %v1918, 16
        %v1946 = vor.u32 %v1943, %v1944
        %vm1951 = vcmask 1042432
        %vm1952 = vsmask.f32 2306
        %vm1953 = vmand %vm1951, %vm1952
        %v1954 = vld [vmem:[%s1865] sm:$0x7]
        %v1955 = vsel %vm1953, %v1925, %v1954
        %1956 = vst [vmem:[%s1865] sm:$0x7] %v1955
        %v1957 = vld [vmem:[%s1865 + $0x4] sm:$0x7]
        %v1958 = vsel %vm1953, %v1932, %v1957
        %1959 = vst [vmem:[%s1865 + $0x4] sm:$0x7] %v1958
        %v1960 = vld [vmem:[%s1865 + $0x8] sm:$0x7]
        %v1961 = vsel %vm1953, %v1939, %v1960
        %1962 = vst [vmem:[%s1865 + $0x8] sm:$0x7] %v1961
        %v1963 = vld [vmem:[%s1865 + $0xc] sm:$0x7]
        %v1964 = vsel %vm1953, %v1946, %v1963
        %1965 = vst [vmem:[%s1865 + $0xc] sm:$0x7] %v1964
        %v1966 = vld [vmem:[#allocation3] sm:$0x7]
        %v1967 = vld [vmem:[#allocation3 + $0x4] sm:$0x7]
        %v1968 = vld [vmem:[#allocation3 + $0x8] sm:$0x7]
        %v1969 = vld [vmem:[#allocation3 + $0xc] sm:$0x7]
        %v1970 = vld [vmem:[#allocation3 + $0x10] sm:$0x7]
        %v1971 = vld [vmem:[#allocation3 + $0x14] sm:$0x7]
        %v1978 = vunpack.c.l.b16 %v1966
        %v1979 = vunpack.c.l.b16 %v1967
        %v1980 = vunpack.c.l.b16 %v1968
        %v1981 = vunpack.c.l.b16 %v1969
        %v1982 = vunpack.c.l.b16 %v1970
        %v1983 = vunpack.c.l.b16 %v1971
        %v1984 = vpack.c.b16 %v1978, %v1978
        %v1985 = vpack.c.b16 %v1979, %v1979
        %v1986 = vpack.c.b16 %v1980, %v1980
        %v1987 = vpack.c.b16 %v1981, %v1981
        %v1988 = vpack.c.b16 %v1982, %v1982
        %v1989 = vpack.c.b16 %v1983, %v1983
        %v1991 = vshrl.u32 %v1984, 16
        %v1993 = vshll.u32 %v1984, 16
        %v1995 = vrot.slane %v1993, 1
        %v1996 = vor.u32 %v1991, %v1995
        %v1998 = vshrl.u32 %v1985, 16
        %v2000 = vshll.u32 %v1985, 16
        %v2002 = vrot.slane %v2000, 1
        %v2003 = vor.u32 %v1998, %v2002
        %v2005 = vshrl.u32 %v1986, 16
        %v2007 = vshll.u32 %v1986, 16
        %v2009 = vrot.slane %v2007, 1
        %v2010 = vor.u32 %v2005, %v2009
        %v2012 = vshrl.u32 %v1987, 16
        %v2014 = vshll.u32 %v1987, 16
        %v2016 = vrot.slane %v2014, 1
        %v2017 = vor.u32 %v2012, %v2016
        %v2019 = vshrl.u32 %v1988, 16
        %v2021 = vshll.u32 %v1988, 16
        %v2023 = vrot.slane %v2021, 1
        %v2024 = vor.u32 %v2019, %v2023
        %v2026 = vshrl.u32 %v1989, 16
        %v2028 = vshll.u32 %v1989, 16
        %v2030 = vrot.slane %v2028, 1
        %v2031 = vor.u32 %v2026, %v2030
        %v2032 = vrot.slane %v1984, 1
        %v2033 = vrot.slane %v1985, 1
        %v2034 = vrot.slane %v1986, 1
        %v2035 = vrot.slane %v1987, 1
        %v2036 = vrot.slane %v1988, 1
        %v2037 = vrot.slane %v1989, 1
        %v2038 = vrot.slane %v1996, 6
        %v2039 = vrot.slane %v2032, 4
        %v2040 = vrot.slane %v1967, 2
        %v2041 = vrot.slane %v2033, 6
        %v2042 = vrot.slane %v1968, 4
        %v2043 = vrot.slane %v2010, 2
        %v2044 = vrot.slane %v2003, 6
        %v2045 = vrot.slane %v2033, 4
        %v2046 = vrot.slane %v1968, 2
        %v2047 = vrot.slane %v2034, 6
        %v2048 = vrot.slane %v1969, 4
        %v2049 = vrot.slane %v2017, 2
        %v2050 = vrot.slane %v2010, 6
        %v2051 = vrot.slane %v2034, 4
        %v2052 = vrot.slane %v1969, 2
        %v2053 = vrot.slane %v2035, 6
        %v2054 = vrot.slane %v1970, 4
        %v2055 = vrot.slane %v2024, 2
        %v2056 = vrot.slane %v2017, 6
        %v2057 = vrot.slane %v2035, 4
        %v2058 = vrot.slane %v1970, 2
        %v2059 = vrot.slane %v2036, 6
        %v2060 = vrot.slane %v1971, 4
        %v2061 = vrot.slane %v2031, 2
        %v2064 = vsel %vm1085, %v1966, %v2038
        %v2067 = vsel %vm1095, %v2039, %v2040
        %v2068 = vsel %vm1097, %v2064, %v2067
        %v2071 = vsel %vm1085, %v2003, %v2041
        %v2074 = vsel %vm1095, %v2042, %v2043
        %v2075 = vsel %vm1097, %v2071, %v2074
        %v2078 = vsel %vm1085, %v1967, %v2044
        %v2081 = vsel %vm1095, %v2045, %v2046
        %v2082 = vsel %vm1097, %v2078, %v2081
        %v2085 = vsel %vm1085, %v2010, %v2047
        %v2088 = vsel %vm1095, %v2048, %v2049
        %v2089 = vsel %vm1097, %v2085, %v2088
        %v2092 = vsel %vm1085, %v1968, %v2050
        %v2095 = vsel %vm1095, %v2051, %v2052
        %v2096 = vsel %vm1097, %v2092, %v2095
        %v2099 = vsel %vm1085, %v2017, %v2053
        %v2102 = vsel %vm1095, %v2054, %v2055
        %v2103 = vsel %vm1097, %v2099, %v2102
        %v2106 = vsel %vm1085, %v1969, %v2056
        %v2109 = vsel %vm1095, %v2057, %v2058
        %v2110 = vsel %vm1097, %v2106, %v2109
        %v2113 = vsel %vm1085, %v2024, %v2059
        %v2116 = vsel %vm1095, %v2060, %v2061
        %v2117 = vsel %vm1097, %v2113, %v2116
        %v2118 = vld [vmem:[#allocation13] sm:$0xf]
        %v2119 = vld [vmem:[#allocation13 + $0x4] sm:$0xf]
        %v2120 = vld [vmem:[#allocation13 + $0x8] sm:$0xf]
        %v2121 = vld [vmem:[#allocation13 + $0xc] sm:$0xf]
        %v2122 = vld [vmem:[#allocation13 + $0x10] sm:$0xf]
        %v2123 = vld [vmem:[#allocation13 + $0x14] sm:$0xf]
        %v2124 = vld [vmem:[#allocation13 + $0x18] sm:$0xf]
        %v2125 = vld [vmem:[#allocation13 + $0x1c] sm:$0xf]
        %v2126 = vld [vmem:[#allocation13 + $0x20] sm:$0xf]
        %v2127 = vld [vmem:[#allocation13 + $0x24] sm:$0xf]
        %v2128 = vld [vmem:[#allocation13 + $0x28] sm:$0xf]
        %v2129 = vld [vmem:[#allocation13 + $0x2c] sm:$0xf]
        %v2130 = vld [vmem:[#allocation13 + $0x30] sm:$0xf]
        %v2131 = vld [vmem:[#allocation13 + $0x34] sm:$0xf]
        %v2132 = vld [vmem:[#allocation13 + $0x38] sm:$0xf]
        %v2133 = vld [vmem:[#allocation13 + $0x3c] sm:$0xf]
        %v2134 = vld [vmem:[#allocation13 + $0x40] sm:$0xf]
        %v2135 = vld [vmem:[#allocation13 + $0x44] sm:$0xf]
        %v2136 = vld [vmem:[#allocation13 + $0x48] sm:$0xf]
        %v2137 = vld [vmem:[#allocation13 + $0x4c] sm:$0xf]
        %v2138 = vld [vmem:[#allocation13 + $0x50] sm:$0xf]
        %v2139 = vld [vmem:[#allocation13 + $0x54] sm:$0xf]
        %v2140 = vld [vmem:[#allocation13 + $0x58] sm:$0xf]
        %v2141 = vld [vmem:[#allocation13 + $0x5c] sm:$0xf]
        %v2142 = vld [vmem:[#allocation13 + $0x60] sm:$0xf]
        %v2143 = vld [vmem:[#allocation13 + $0x64] sm:$0xf]
        %v2144 = vld [vmem:[#allocation13 + $0x68] sm:$0xf]
        %v2145 = vld [vmem:[#allocation13 + $0x6c] sm:$0xf]
        %v2146 = vld [vmem:[#allocation13 + $0x70] sm:$0xf]
        %v2147 = vld [vmem:[#allocation13 + $0x74] sm:$0xf]
        %v2148 = vld [vmem:[#allocation13 + $0x78] sm:$0xf]
        %v2149 = vld [vmem:[#allocation13 + $0x7c] sm:$0xf]
        %v2150 = vld [vmem:[#allocation13 + $0x80] sm:$0xf]
        %v2151 = vld [vmem:[#allocation13 + $0x84] sm:$0xf]
        %v2152 = vld [vmem:[#allocation13 + $0x88] sm:$0xf]
        %v2153 = vld [vmem:[#allocation13 + $0x8c] sm:$0xf]
        %v2154 = vld [vmem:[#allocation13 + $0x90] sm:$0xf]
        %v2155 = vld [vmem:[#allocation13 + $0x94] sm:$0xf]
        %v2156 = vld [vmem:[#allocation13 + $0x98] sm:$0xf]
        %v2157 = vld [vmem:[#allocation13 + $0x9c] sm:$0xf]
        %v2158 = vld [vmem:[#allocation13 + $0xa0] sm:$0xf]
        %v2159 = vld [vmem:[#allocation13 + $0xa4] sm:$0xf]
        %v2160 = vld [vmem:[#allocation13 + $0xa8] sm:$0xf]
        %v2161 = vld [vmem:[#allocation13 + $0xac] sm:$0xf]
        %v2162 = vld [vmem:[#allocation13 + $0xb0] sm:$0xf]
        %v2163 = vld [vmem:[#allocation13 + $0xb4] sm:$0xf]
        %v2164 = vld [vmem:[#allocation13 + $0xb8] sm:$0xf]
        %v2165 = vld [vmem:[#allocation13 + $0xbc] sm:$0xf]
        %v2166 = vld [vmem:[#allocation13 + $0xc0] sm:$0xf]
        %v2167 = vld [vmem:[#allocation13 + $0xc4] sm:$0xf]
        %v2168 = vld [vmem:[#allocation13 + $0xc8] sm:$0xf]
        %v2169 = vld [vmem:[#allocation13 + $0xcc] sm:$0xf]
        %v2170 = vld [vmem:[#allocation13 + $0xd0] sm:$0xf]
        %v2171 = vld [vmem:[#allocation13 + $0xd4] sm:$0xf]
        %v2172 = vld [vmem:[#allocation13 + $0xd8] sm:$0xf]
        %v2173 = vld [vmem:[#allocation13 + $0xdc] sm:$0xf]
        %v2174 = vld [vmem:[#allocation13 + $0xe0] sm:$0xf]
        %v2175 = vld [vmem:[#allocation13 + $0xe4] sm:$0xf]
        %v2176 = vld [vmem:[#allocation13 + $0xe8] sm:$0xf]
        %v2177 = vld [vmem:[#allocation13 + $0xec] sm:$0xf]
        %v2178 = vld [vmem:[#allocation13 + $0xf0] sm:$0xf]
        %v2179 = vld [vmem:[#allocation13 + $0xf4] sm:$0xf]
        %v2180 = vld [vmem:[#allocation13 + $0xf8] sm:$0xf]
        %v2181 = vld [vmem:[#allocation13 + $0xfc] sm:$0xf]
        %v2182 = vld [vmem:[#allocation13 + $0x100] sm:$0xf]
        %v2183 = vld [vmem:[#allocation13 + $0x104] sm:$0xf]
        %v2184 = vld [vmem:[#allocation13 + $0x108] sm:$0xf]
        %v2185 = vld [vmem:[#allocation13 + $0x10c] sm:$0xf]
        %v2186 = vld [vmem:[#allocation13 + $0x110] sm:$0xf]
        %v2187 = vld [vmem:[#allocation13 + $0x114] sm:$0xf]
        %v2188 = vld [vmem:[#allocation13 + $0x118] sm:$0xf]
        %v2189 = vld [vmem:[#allocation13 + $0x11c] sm:$0xf]
        %v2190 = vld [vmem:[#allocation13 + $0x120] sm:$0xf]
        %v2191 = vld [vmem:[#allocation13 + $0x124] sm:$0xf]
        %v2192 = vld [vmem:[#allocation13 + $0x128] sm:$0xf]
        %v2193 = vld [vmem:[#allocation13 + $0x12c] sm:$0xf]
        %v2194 = vld [vmem:[#allocation13 + $0x130] sm:$0xf]
        %v2195 = vld [vmem:[#allocation13 + $0x134] sm:$0xf]
        %v2196 = vld [vmem:[#allocation13 + $0x138] sm:$0xf]
        %v2197 = vld [vmem:[#allocation13 + $0x13c] sm:$0xf]
        %v2198 = vld [vmem:[#allocation13 + $0x140] sm:$0xf]
        %v2199 = vld [vmem:[#allocation13 + $0x144] sm:$0xf]
        %v2200 = vld [vmem:[#allocation13 + $0x148] sm:$0xf]
        %v2201 = vld [vmem:[#allocation13 + $0x14c] sm:$0xf]
        %v2202 = vld [vmem:[#allocation13 + $0x150] sm:$0xf]
        %v2203 = vld [vmem:[#allocation13 + $0x154] sm:$0xf]
        %v2204 = vld [vmem:[#allocation13 + $0x158] sm:$0xf]
        %v2205 = vld [vmem:[#allocation13 + $0x15c] sm:$0xf]
        %v2206 = vld [vmem:[#allocation13 + $0x160] sm:$0xf]
        %v2207 = vld [vmem:[#allocation13 + $0x164] sm:$0xf]
        %v2208 = vld [vmem:[#allocation13 + $0x168] sm:$0xf]
        %v2209 = vld [vmem:[#allocation13 + $0x16c] sm:$0xf]
        %v2210 = vld [vmem:[#allocation13 + $0x170] sm:$0xf]
        %v2211 = vld [vmem:[#allocation13 + $0x174] sm:$0xf]
        %v2212 = vld [vmem:[#allocation13 + $0x178] sm:$0xf]
        %v2213 = vld [vmem:[#allocation13 + $0x17c] sm:$0xf]
        %v2214 = vld [vmem:[#allocation13 + $0x180] sm:$0xf]
        %v2215 = vld [vmem:[#allocation13 + $0x184] sm:$0xf]
        %v2216 = vld [vmem:[#allocation13 + $0x188] sm:$0xf]
        %v2217 = vld [vmem:[#allocation13 + $0x18c] sm:$0xf]
        %v2218 = vld [vmem:[#allocation13 + $0x190] sm:$0xf]
        %v2219 = vld [vmem:[#allocation13 + $0x194] sm:$0xf]
        %v2220 = vld [vmem:[#allocation13 + $0x198] sm:$0xf]
        %v2221 = vld [vmem:[#allocation13 + $0x19c] sm:$0xf]
        %v2222 = vld [vmem:[#allocation13 + $0x1a0] sm:$0xf]
        %v2223 = vld [vmem:[#allocation13 + $0x1a4] sm:$0xf]
        %v2224 = vld [vmem:[#allocation13 + $0x1a8] sm:$0xf]
        %v2225 = vld [vmem:[#allocation13 + $0x1ac] sm:$0xf]
        %v2226 = vld [vmem:[#allocation13 + $0x1b0] sm:$0xf]
        %v2227 = vld [vmem:[#allocation13 + $0x1b4] sm:$0xf]
        %v2228 = vld [vmem:[#allocation13 + $0x1b8] sm:$0xf]
        %v2229 = vld [vmem:[#allocation13 + $0x1bc] sm:$0xf]
        %v2230 = vld [vmem:[#allocation13 + $0x1c0] sm:$0xf]
        %v2231 = vld [vmem:[#allocation13 + $0x1c4] sm:$0xf]
        %v2232 = vld [vmem:[#allocation13 + $0x1c8] sm:$0xf]
        %v2233 = vld [vmem:[#allocation13 + $0x1cc] sm:$0xf]
        %v2234 = vld [vmem:[#allocation13 + $0x1d0] sm:$0xf]
        %v2235 = vld [vmem:[#allocation13 + $0x1d4] sm:$0xf]
        %v2236 = vld [vmem:[#allocation13 + $0x1d8] sm:$0xf]
        %v2237 = vld [vmem:[#allocation13 + $0x1dc] sm:$0xf]
        %v2238 = vld [vmem:[#allocation13 + $0x1e0] sm:$0xf]
        %v2239 = vld [vmem:[#allocation13 + $0x1e4] sm:$0xf]
        %v2240 = vld [vmem:[#allocation13 + $0x1e8] sm:$0xf]
        %v2241 = vld [vmem:[#allocation13 + $0x1ec] sm:$0xf]
        %v2242 = vld [vmem:[#allocation13 + $0x1f0] sm:$0xf]
        %v2243 = vld [vmem:[#allocation13 + $0x1f4] sm:$0xf]
        %v2244 = vld [vmem:[#allocation13 + $0x1f8] sm:$0xf]
        %v2245 = vld [vmem:[#allocation13 + $0x1fc] sm:$0xf]
        %v2246 = vld [vmem:[#allocation13 + $0x200] sm:$0xf]
        %v2247 = vld [vmem:[#allocation13 + $0x204] sm:$0xf]
        %v2248 = vld [vmem:[#allocation13 + $0x208] sm:$0xf]
        %v2249 = vld [vmem:[#allocation13 + $0x20c] sm:$0xf]
        %v2250 = vld [vmem:[#allocation13 + $0x210] sm:$0xf]
        %v2251 = vld [vmem:[#allocation13 + $0x214] sm:$0xf]
        %v2252 = vld [vmem:[#allocation13 + $0x218] sm:$0xf]
        %v2253 = vld [vmem:[#allocation13 + $0x21c] sm:$0xf]
        %v2254 = vld [vmem:[#allocation13 + $0x220] sm:$0xf]
        %v2255 = vld [vmem:[#allocation13 + $0x224] sm:$0xf]
        %v2256 = vld [vmem:[#allocation13 + $0x228] sm:$0xf]
        %v2257 = vld [vmem:[#allocation13 + $0x22c] sm:$0xf]
        %v2258 = vld [vmem:[#allocation13 + $0x230] sm:$0xf]
        %v2259 = vld [vmem:[#allocation13 + $0x234] sm:$0xf]
        %v2260 = vld [vmem:[#allocation13 + $0x238] sm:$0xf]
        %v2261 = vld [vmem:[#allocation13 + $0x23c] sm:$0xf]
        %v2262 = vld [vmem:[%s6] sm:$0x1]
        %v2264 = vperm.slane %v2262, 0
        %2266 = vst [vmem:[#allocation1] ss:$4 sm:$0xff] %v2068
        %s2267 = scalar_lea.vmem [#allocation1], 1
        %2268 = vst [vmem:[%s2267] ss:$4 sm:$0xff] %v2082
        %s2269 = scalar_lea.vmem [#allocation1], 2
        %2270 = vst [vmem:[%s2269] ss:$4 sm:$0xff] %v2096
        %s2271 = scalar_lea.vmem [#allocation1], 3
        %2272 = vst [vmem:[%s2271] ss:$4 sm:$0xff] %v2110
        %s2273 = scalar_lea.vmem [#allocation1], 32
        %2274 = vst [vmem:[%s2273] ss:$4 sm:$0xff] %v2075
        %s2275 = scalar_lea.vmem [#allocation1], 33
        %2276 = vst [vmem:[%s2275] ss:$4 sm:$0xff] %v2089
        %s2277 = scalar_lea.vmem [#allocation1], 34
        %2278 = vst [vmem:[%s2277] ss:$4 sm:$0xff] %v2103
        %s2279 = scalar_lea.vmem [#allocation1], 35
        %2280 = vst [vmem:[%s2279] ss:$4 sm:$0xff] %v2117
        %v2281 = vld.sshfl [vmem:[#allocation1] sm:$0xff pattern:$0x73625140]
        %v2282 = vld.sshfl [vmem:[#allocation1 + $0x8] sm:$0xff pattern:$0x73625140]
        %v2283 = vld.sshfl [vmem:[#allocation1 + $0x10] sm:$0xff pattern:$0x73625140]
        %v2284 = vld.sshfl [vmem:[#allocation1 + $0x18] sm:$0xff pattern:$0x73625140]
        %v2285 = vld.sshfl [vmem:[#allocation1 + $0x20] sm:$0xff pattern:$0x73625140]
        %v2286 = vld.sshfl [vmem:[#allocation1 + $0x28] sm:$0xff pattern:$0x73625140]
        %v2287 = vld.sshfl [vmem:[#allocation1 + $0x30] sm:$0xff pattern:$0x73625140]
        %v2288 = vld.sshfl [vmem:[#allocation1 + $0x38] sm:$0xff pattern:$0x73625140]
        %2290 = vst [vmem:[#allocation1] ss:$4 sm:$0xff] %v2034
        %2292 = vst [vmem:[%s2267] ss:$4 sm:$0xff] %v2035
        %2294 = vst [vmem:[%s2269] ss:$4 sm:$0xff] %v2036
        %2296 = vst [vmem:[%s2271] ss:$4 sm:$0xff] %v2037
        %v2297 = vld.sshfl [vmem:[#allocation1] sm:$0xff pattern:$0x73625140]
        %v2451 = vunpack.c.l.b16 %v2118
        %v2452 = vunpack.c.l.b16 %v2119
        %v2453 = vunpack.c.l.b16 %v2120
        %v2454 = vunpack.c.l.b16 %v2121
        %v2455 = vunpack.c.l.b16 %v2122
        %v2456 = vunpack.c.l.b16 %v2123
        %v2457 = vunpack.c.l.b16 %v2124
        %v2458 = vunpack.c.l.b16 %v2125
        %v2459 = vunpack.c.l.b16 %v2126
        %v2460 = vunpack.c.l.b16 %v2127
        %v2461 = vunpack.c.l.b16 %v2128
        %v2462 = vunpack.c.l.b16 %v2129
        %v2463 = vunpack.c.l.b16 %v2130
        %v2464 = vunpack.c.l.b16 %v2131
        %v2465 = vunpack.c.l.b16 %v2132
        %v2466 = vunpack.c.l.b16 %v2133
        %v2467 = vunpack.c.l.b16 %v2134
        %v2468 = vunpack.c.l.b16 %v2135
        %v2469 = vunpack.c.l.b16 %v2136
        %v2470 = vunpack.c.l.b16 %v2137
        %v2471 = vunpack.c.l.b16 %v2138
        %v2472 = vunpack.c.l.b16 %v2139
        %v2473 = vunpack.c.l.b16 %v2140
        %v2474 = vunpack.c.l.b16 %v2141
        %v2475 = vunpack.c.l.b16 %v2142
        %v2476 = vunpack.c.l.b16 %v2143
        %v2477 = vunpack.c.l.b16 %v2144
        %v2478 = vunpack.c.l.b16 %v2145
        %v2479 = vunpack.c.l.b16 %v2146
        %v2480 = vunpack.c.l.b16 %v2147
        %v2481 = vunpack.c.l.b16 %v2148
        %v2482 = vunpack.c.l.b16 %v2149
        %v2483 = vunpack.c.l.b16 %v2150
        %v2484 = vunpack.c.l.b16 %v2151
        %v2485 = vunpack.c.l.b16 %v2152
        %v2486 = vunpack.c.l.b16 %v2153
        %v2487 = vunpack.c.l.b16 %v2154
        %v2488 = vunpack.c.l.b16 %v2155
        %v2489 = vunpack.c.l.b16 %v2156
        %v2490 = vunpack.c.l.b16 %v2157
        %v2491 = vunpack.c.l.b16 %v2158
        %v2492 = vunpack.c.l.b16 %v2159
        %v2493 = vunpack.c.l.b16 %v2160
        %v2494 = vunpack.c.l.b16 %v2161
        %v2495 = vunpack.c.l.b16 %v2162
        %v2496 = vunpack.c.l.b16 %v2163
        %v2497 = vunpack.c.l.b16 %v2164
        %v2498 = vunpack.c.l.b16 %v2165
        %v2499 = vunpack.c.l.b16 %v2166
        %v2500 = vunpack.c.l.b16 %v2167
        %v2501 = vunpack.c.l.b16 %v2168
        %v2502 = vunpack.c.l.b16 %v2169
        %v2503 = vunpack.c.l.b16 %v2170
        %v2504 = vunpack.c.l.b16 %v2171
        %v2505 = vunpack.c.l.b16 %v2172
        %v2506 = vunpack.c.l.b16 %v2173
        %v2507 = vunpack.c.l.b16 %v2174
        %v2508 = vunpack.c.l.b16 %v2175
        %v2509 = vunpack.c.l.b16 %v2176
        %v2510 = vunpack.c.l.b16 %v2177
        %v2511 = vunpack.c.l.b16 %v2178
        %v2512 = vunpack.c.l.b16 %v2179
        %v2513 = vunpack.c.l.b16 %v2180
        %v2514 = vunpack.c.l.b16 %v2181
        %v2515 = vunpack.c.l.b16 %v2182
        %v2516 = vunpack.c.l.b16 %v2183
        %v2517 = vunpack.c.l.b16 %v2184
        %v2518 = vunpack.c.l.b16 %v2185
        %v2519 = vunpack.c.l.b16 %v2186
        %v2520 = vunpack.c.l.b16 %v2187
        %v2521 = vunpack.c.l.b16 %v2188
        %v2522 = vunpack.c.l.b16 %v2189
        %v2523 = vunpack.c.l.b16 %v2190
        %v2524 = vunpack.c.l.b16 %v2191
        %v2525 = vunpack.c.l.b16 %v2192
        %v2526 = vunpack.c.l.b16 %v2193
        %v2527 = vunpack.c.l.b16 %v2194
        %v2528 = vunpack.c.l.b16 %v2195
        %v2529 = vunpack.c.l.b16 %v2196
        %v2530 = vunpack.c.l.b16 %v2197
        %v2531 = vunpack.c.l.b16 %v2198
        %v2532 = vunpack.c.l.b16 %v2199
        %v2533 = vunpack.c.l.b16 %v2200
        %v2534 = vunpack.c.l.b16 %v2201
        %v2535 = vunpack.c.l.b16 %v2202
        %v2536 = vunpack.c.l.b16 %v2203
        %v2537 = vunpack.c.l.b16 %v2204
        %v2538 = vunpack.c.l.b16 %v2205
        %v2539 = vunpack.c.l.b16 %v2206
        %v2540 = vunpack.c.l.b16 %v2207
        %v2541 = vunpack.c.l.b16 %v2208
        %v2542 = vunpack.c.l.b16 %v2209
        %v2543 = vunpack.c.l.b16 %v2210
        %v2544 = vunpack.c.l.b16 %v2211
        %v2545 = vunpack.c.l.b16 %v2212
        %v2546 = vunpack.c.l.b16 %v2213
        %v2547 = vunpack.c.l.b16 %v2214
        %v2548 = vunpack.c.l.b16 %v2215
        %v2549 = vunpack.c.l.b16 %v2216
        %v2550 = vunpack.c.l.b16 %v2217
        %v2551 = vunpack.c.l.b16 %v2218
        %v2552 = vunpack.c.l.b16 %v2219
        %v2553 = vunpack.c.l.b16 %v2220
        %v2554 = vunpack.c.l.b16 %v2221
        %v2555 = vunpack.c.l.b16 %v2222
        %v2556 = vunpack.c.l.b16 %v2223
        %v2557 = vunpack.c.l.b16 %v2224
        %v2558 = vunpack.c.l.b16 %v2225
        %v2559 = vunpack.c.l.b16 %v2226
        %v2560 = vunpack.c.l.b16 %v2227
        %v2561 = vunpack.c.l.b16 %v2228
        %v2562 = vunpack.c.l.b16 %v2229
        %v2563 = vunpack.c.l.b16 %v2230
        %v2564 = vunpack.c.l.b16 %v2231
        %v2565 = vunpack.c.l.b16 %v2232
        %v2566 = vunpack.c.l.b16 %v2233
        %v2567 = vunpack.c.l.b16 %v2234
        %v2568 = vunpack.c.l.b16 %v2235
        %v2569 = vunpack.c.l.b16 %v2236
        %v2570 = vunpack.c.l.b16 %v2237
        %v2571 = vunpack.c.l.b16 %v2238
        %v2572 = vunpack.c.l.b16 %v2239
        %v2573 = vunpack.c.l.b16 %v2240
        %v2574 = vunpack.c.l.b16 %v2241
        %v2575 = vunpack.c.l.b16 %v2242
        %v2576 = vunpack.c.l.b16 %v2243
        %v2577 = vunpack.c.l.b16 %v2244
        %v2578 = vunpack.c.l.b16 %v2245
        %v2579 = vunpack.c.l.b16 %v2246
        %v2580 = vunpack.c.l.b16 %v2247
        %v2581 = vunpack.c.l.b16 %v2248
        %v2582 = vunpack.c.l.b16 %v2249
        %v2583 = vunpack.c.l.b16 %v2250
        %v2584 = vunpack.c.l.b16 %v2251
        %v2585 = vunpack.c.l.b16 %v2252
        %v2586 = vunpack.c.l.b16 %v2253
        %v2587 = vunpack.c.l.b16 %v2254
        %v2588 = vunpack.c.l.b16 %v2255
        %v2589 = vunpack.c.l.b16 %v2256
        %v2590 = vunpack.c.l.b16 %v2257
        %v2591 = vunpack.c.l.b16 %v2258
        %v2592 = vunpack.c.l.b16 %v2259
        %v2593 = vunpack.c.l.b16 %v2260
        %v2594 = vunpack.c.l.b16 %v2261
        %v2595 = vpack.c.b16 %v2452, %v2451
        %v2596 = vpack.c.b16 %v2454, %v2453
        %v2597 = vpack.c.b16 %v2456, %v2455
        %v2598 = vpack.c.b16 %v2458, %v2457
        %v2599 = vpack.c.b16 %v2460, %v2459
        %v2600 = vpack.c.b16 %v2462, %v2461
        %v2601 = vpack.c.b16 %v2464, %v2463
        %v2602 = vpack.c.b16 %v2466, %v2465
        %v2603 = vpack.c.b16 %v2468, %v2467
        %v2604 = vpack.c.b16 %v2470, %v2469
        %v2605 = vpack.c.b16 %v2472, %v2471
        %v2606 = vpack.c.b16 %v2474, %v2473
        %v2607 = vpack.c.b16 %v2476, %v2475
        %v2608 = vpack.c.b16 %v2478, %v2477
        %v2609 = vpack.c.b16 %v2480, %v2479
        %v2610 = vpack.c.b16 %v2482, %v2481
        %v2611 = vpack.c.b16 %v2484, %v2483
        %v2612 = vpack.c.b16 %v2486, %v2485
        %v2613 = vpack.c.b16 %v2488, %v2487
        %v2614 = vpack.c.b16 %v2490, %v2489
        %v2615 = vpack.c.b16 %v2492, %v2491
        %v2616 = vpack.c.b16 %v2494, %v2493
        %v2617 = vpack.c.b16 %v2496, %v2495
        %v2618 = vpack.c.b16 %v2498, %v2497
        %v2619 = vpack.c.b16 %v2500, %v2499
        %v2620 = vpack.c.b16 %v2502, %v2501
        %v2621 = vpack.c.b16 %v2504, %v2503
        %v2622 = vpack.c.b16 %v2506, %v2505
        %v2623 = vpack.c.b16 %v2508, %v2507
        %v2624 = vpack.c.b16 %v2510, %v2509
        %v2625 = vpack.c.b16 %v2512, %v2511
        %v2626 = vpack.c.b16 %v2514, %v2513
        %v2627 = vpack.c.b16 %v2516, %v2515
        %v2628 = vpack.c.b16 %v2518, %v2517
        %v2629 = vpack.c.b16 %v2520, %v2519
        %v2630 = vpack.c.b16 %v2522, %v2521
        %v2631 = vpack.c.b16 %v2524, %v2523
        %v2632 = vpack.c.b16 %v2526, %v2525
        %v2633 = vpack.c.b16 %v2528, %v2527
        %v2634 = vpack.c.b16 %v2530, %v2529
        %v2635 = vpack.c.b16 %v2532, %v2531
        %v2636 = vpack.c.b16 %v2534, %v2533
        %v2637 = vpack.c.b16 %v2536, %v2535
        %v2638 = vpack.c.b16 %v2538, %v2537
        %v2639 = vpack.c.b16 %v2540, %v2539
        %v2640 = vpack.c.b16 %v2542, %v2541
        %v2641 = vpack.c.b16 %v2544, %v2543
        %v2642 = vpack.c.b16 %v2546, %v2545
        %v2643 = vpack.c.b16 %v2548, %v2547
        %v2644 = vpack.c.b16 %v2550, %v2549
        %v2645 = vpack.c.b16 %v2552, %v2551
        %v2646 = vpack.c.b16 %v2554, %v2553
        %v2647 = vpack.c.b16 %v2556, %v2555
        %v2648 = vpack.c.b16 %v2558, %v2557
        %v2649 = vpack.c.b16 %v2560, %v2559
        %v2650 = vpack.c.b16 %v2562, %v2561
        %v2651 = vpack.c.b16 %v2564, %v2563
        %v2652 = vpack.c.b16 %v2566, %v2565
        %v2653 = vpack.c.b16 %v2568, %v2567
        %v2654 = vpack.c.b16 %v2570, %v2569
        %v2655 = vpack.c.b16 %v2572, %v2571
        %v2656 = vpack.c.b16 %v2574, %v2573
        %v2657 = vpack.c.b16 %v2576, %v2575
        %v2658 = vpack.c.b16 %v2578, %v2577
        %v2659 = vpack.c.b16 %v2580, %v2579
        %v2660 = vpack.c.b16 %v2582, %v2581
        %v2661 = vpack.c.b16 %v2584, %v2583
        %v2662 = vpack.c.b16 %v2586, %v2585
        %v2663 = vpack.c.b16 %v2588, %v2587
        %v2664 = vpack.c.b16 %v2590, %v2589
        %v2665 = vpack.c.b16 %v2592, %v2591
        %v2666 = vpack.c.b16 %v2594, %v2593
        %2739 = vmatpush.bf16.msra.mxu0 %v2602
        %2740 = vmatpush.bf16.msra.mxu0 %v2601
        %2741 = vmatpush.bf16.msra.mxu0 %v2600
        %2742 = vmatpush.bf16.msra.mxu0 %v2599
        %2743 = vmatpush.bf16.msra.mxu0 %v2598
        %2744 = vmatpush.bf16.msra.mxu0 %v2597
        %2745 = vmatpush.bf16.msra.mxu0 %v2596
        %2746 = vmatpush.bf16.msra.mxu0 %v2595
        %2747 = vmatmul.bf16.gmra.mxu0 %v2281
        %v2748 = vpop.f32.mrf.mxu0
        %v2749 = vadd.f32 %v2264, %v2748
        %v2750 = vpop.f32.mrf.mxu0
        %v2751 = vadd.f32 %v2264, %v2750
        %2752 = vdwg.mxu0
        %2753 = vmatpush.bf16.msra.mxu0 %v2610
        %2754 = vmatpush.bf16.msra.mxu0 %v2609
        %2755 = vmatpush.bf16.msra.mxu0 %v2608
        %2756 = vmatpush.bf16.msra.mxu0 %v2607
        %2757 = vmatpush.bf16.msra.mxu0 %v2606
        %2758 = vmatpush.bf16.msra.mxu0 %v2605
        %2759 = vmatpush.bf16.msra.mxu0 %v2604
        %2760 = vmatpush.bf16.msra.mxu0 %v2603
        %2761 = vmatmul.bf16.gmra.mxu0 %v2282
        %v2762 = vpop.f32.mrf.mxu0
        %v2763 = vadd.f32 %v2749, %v2762
        %v2764 = vpop.f32.mrf.mxu0
        %v2765 = vadd.f32 %v2751, %v2764
        %2766 = vdwg.mxu0
        %2767 = vmatpush.bf16.msra.mxu0 %v2618
        %2768 = vmatpush.bf16.msra.mxu0 %v2617
        %2769 = vmatpush.bf16.msra.mxu0 %v2616
        %2770 = vmatpush.bf16.msra.mxu0 %v2615
        %2771 = vmatpush.bf16.msra.mxu0 %v2614
        %2772 = vmatpush.bf16.msra.mxu0 %v2613
        %2773 = vmatpush.bf16.msra.mxu0 %v2612
        %2774 = vmatpush.bf16.msra.mxu0 %v2611
        %2775 = vmatmul.bf16.gmra.mxu0 %v2283
        %v2776 = vpop.f32.mrf.mxu0
        %v2777 = vadd.f32 %v2763, %v2776
        %v2778 = vpop.f32.mrf.mxu0
        %v2779 = vadd.f32 %v2765, %v2778
        %2780 = vdwg.mxu0
        %2781 = vmatpush.bf16.msra.mxu0 %v2626
        %2782 = vmatpush.bf16.msra.mxu0 %v2625
        %2783 = vmatpush.bf16.msra.mxu0 %v2624
        %2784 = vmatpush.bf16.msra.mxu0 %v2623
        %2785 = vmatpush.bf16.msra.mxu0 %v2622
        %2786 = vmatpush.bf16.msra.mxu0 %v2621
        %2787 = vmatpush.bf16.msra.mxu0 %v2620
        %2788 = vmatpush.bf16.msra.mxu0 %v2619
        %2789 = vmatmul.bf16.gmra.mxu0 %v2284
        %v2790 = vpop.f32.mrf.mxu0
        %v2791 = vadd.f32 %v2777, %v2790
        %v2792 = vpop.f32.mrf.mxu0
        %v2793 = vadd.f32 %v2779, %v2792
        %2794 = vdwg.mxu0
        %2795 = vmatpush.bf16.msra.mxu0 %v2634
        %2796 = vmatpush.bf16.msra.mxu0 %v2633
        %2797 = vmatpush.bf16.msra.mxu0 %v2632
        %2798 = vmatpush.bf16.msra.mxu0 %v2631
        %2799 = vmatpush.bf16.msra.mxu0 %v2630
        %2800 = vmatpush.bf16.msra.mxu0 %v2629
        %2801 = vmatpush.bf16.msra.mxu0 %v2628
        %2802 = vmatpush.bf16.msra.mxu0 %v2627
        %2803 = vmatmul.bf16.gmra.mxu0 %v2285
        %v2804 = vpop.f32.mrf.mxu0
        %v2805 = vadd.f32 %v2791, %v2804
        %v2806 = vpop.f32.mrf.mxu0
        %v2807 = vadd.f32 %v2793, %v2806
        %2808 = vdwg.mxu0
        %2809 = vmatpush.bf16.msra.mxu0 %v2642
        %2810 = vmatpush.bf16.msra.mxu0 %v2641
        %2811 = vmatpush.bf16.msra.mxu0 %v2640
        %2812 = vmatpush.bf16.msra.mxu0 %v2639
        %2813 = vmatpush.bf16.msra.mxu0 %v2638
        %2814 = vmatpush.bf16.msra.mxu0 %v2637
        %2815 = vmatpush.bf16.msra.mxu0 %v2636
        %2816 = vmatpush.bf16.msra.mxu0 %v2635
        %2817 = vmatmul.bf16.gmra.mxu0 %v2286
        %v2818 = vpop.f32.mrf.mxu0
        %v2819 = vadd.f32 %v2805, %v2818
        %v2820 = vpop.f32.mrf.mxu0
        %v2821 = vadd.f32 %v2807, %v2820
        %2822 = vdwg.mxu0
        %2823 = vmatpush.bf16.msra.mxu0 %v2650
        %2824 = vmatpush.bf16.msra.mxu0 %v2649
        %2825 = vmatpush.bf16.msra.mxu0 %v2648
        %2826 = vmatpush.bf16.msra.mxu0 %v2647
        %2827 = vmatpush.bf16.msra.mxu0 %v2646
        %2828 = vmatpush.bf16.msra.mxu0 %v2645
        %2829 = vmatpush.bf16.msra.mxu0 %v2644
        %2830 = vmatpush.bf16.msra.mxu0 %v2643
        %2831 = vmatmul.bf16.gmra.mxu0 %v2287
        %v2832 = vpop.f32.mrf.mxu0
        %v2833 = vadd.f32 %v2819, %v2832
        %v2834 = vpop.f32.mrf.mxu0
        %v2835 = vadd.f32 %v2821, %v2834
        %2836 = vdwg.mxu0
        %2837 = vmatpush.bf16.msra.mxu0 %v2658
        %2838 = vmatpush.bf16.msra.mxu0 %v2657
        %2839 = vmatpush.bf16.msra.mxu0 %v2656
        %2840 = vmatpush.bf16.msra.mxu0 %v2655
        %2841 = vmatpush.bf16.msra.mxu0 %v2654
        %2842 = vmatpush.bf16.msra.mxu0 %v2653
        %2843 = vmatpush.bf16.msra.mxu0 %v2652
        %2844 = vmatpush.bf16.msra.mxu0 %v2651
        %2845 = vmatmul.bf16.gmra.mxu0 %v2288
        %v2846 = vpop.f32.mrf.mxu0
        %v2847 = vadd.f32 %v2833, %v2846
        %v2848 = vpop.f32.mrf.mxu0
        %v2849 = vadd.f32 %v2835, %v2848
        %2850 = vdwg.mxu0
        %2851 = vmatpush.bf16.msra.mxu0 %v2666
        %2852 = vmatpush.bf16.msra.mxu0 %v2665
        %2853 = vmatpush.bf16.msra.mxu0 %v2664
        %2854 = vmatpush.bf16.msra.mxu0 %v2663
        %2855 = vmatpush.bf16.msra.mxu0 %v2662
        %2856 = vmatpush.bf16.msra.mxu0 %v2661
        %2857 = vmatpush.bf16.msra.mxu0 %v2660
        %2858 = vmatpush.bf16.msra.mxu0 %v2659
        %2859 = vmatmul.bf16.gmra.mxu0 %v2297
        %v2860 = vpop.f32.mrf.mxu0
        %v2861 = vadd.f32 %v2847, %v2860
        %v2862 = vpop.f32.mrf.mxu0
        %v2863 = vadd.f32 %v2849, %v2862
        %2864 = vdwg.mxu0
        %v2865 = vmax.f32 %v2861, 0.0
        %v2866 = vmax.f32 %v2863, 0.0
        %v2869 = vrot.slane %v2865, 4
        %v2870 = vrot.slane %v2866, 4
        %v2871 = vrot.slane %v2865, 3
        %v2872 = vrot.slane %v2869, 3
        %v2873 = vrot.slane %v2866, 3
        %v2874 = vrot.slane %v2870, 3
        %v2875 = vsel %vm965, %v2865, %v2871
        %v2876 = vsel %vm968, %v2865, %v2871
        %v2877 = vrot.slane %v2876, 1
        %v2878 = vsel %vm971, %v2865, %v2871
        %v2879 = vrot.slane %v2878, 2
        %v2880 = vsel %vm974, %v2865, %v2871
        %v2881 = vrot.slane %v2880, 3
        %v2882 = vsel %vm965, %v2869, %v2872
        %v2883 = vsel %vm968, %v2869, %v2872
        %v2884 = vrot.slane %v2883, 1
        %v2885 = vsel %vm971, %v2869, %v2872
        %v2886 = vrot.slane %v2885, 2
        %v2887 = vsel %vm974, %v2869, %v2872
        %v2888 = vrot.slane %v2887, 3
        %v2889 = vsel %vm965, %v2866, %v2873
        %v2890 = vsel %vm968, %v2866, %v2873
        %v2891 = vrot.slane %v2890, 1
        %v2892 = vsel %vm971, %v2866, %v2873
        %v2893 = vrot.slane %v2892, 2
        %v2894 = vsel %vm974, %v2866, %v2873
        %v2895 = vrot.slane %v2894, 3
        %v2896 = vsel %vm965, %v2870, %v2874
        %v2897 = vsel %vm968, %v2870, %v2874
        %v2898 = vrot.slane %v2897, 1
        %v2899 = vsel %vm971, %v2870, %v2874
        %v2900 = vrot.slane %v2899, 2
        %v2901 = vsel %vm974, %v2870, %v2874
        %v2902 = vrot.slane %v2901, 3
        %v2903 = vperm.slane %v2875, 0
        %v2904 = vperm.slane %v2877, 0
        %v2905 = vperm.slane %v2879, 0
        %v2906 = vperm.slane %v2881, 0
        %v2907 = vperm.slane %v2882, 0
        %v2908 = vperm.slane %v2884, 0
        %v2909 = vperm.slane %v2886, 0
        %v2910 = vperm.slane %v2888, 0
        %v2911 = vperm.slane %v2889, 0
        %v2912 = vperm.slane %v2891, 0
        %v2913 = vperm.slane %v2893, 0
        %v2914 = vperm.slane %v2895, 0
        %v2915 = vperm.slane %v2896, 0
        %v2916 = vperm.slane %v2898, 0
        %v2917 = vperm.slane %v2900, 0
        %v2918 = vperm.slane %v2902, 0
        %2919 = vst [vmem:[#allocation4] sm:$0xf] 0
        %2920 = vst [vmem:[#allocation4 + $0x4] sm:$0x1] 0
        %s2921 = scalar_lea.vmem [#allocation4], 72
        %2922 = vst [vmem:[%s2921] sm:$0xf] 0
        %2923 = vst [vmem:[%s2921 + $0x4] sm:$0x1] 0
        %s2924 = scalar_lea.vmem [#allocation4], 8
        %v2925 = vld [vmem:[%s2924] sm:$0x1]
        %v2926 = vsel %vm1868, 0, %v2925
        %2927 = vst [vmem:[%s2924] sm:$0x1] %v2926
        %v2928 = vld [vmem:[%s2924 + $0x8] sm:$0x1]
        %v2929 = vsel %vm1868, 0, %v2928
        %2930 = vst [vmem:[%s2924 + $0x8] sm:$0x1] %v2929
        %v2931 = vld [vmem:[%s2924 + $0x10] sm:$0x1]
        %v2932 = vsel %vm1868, 0, %v2931
        %2933 = vst [vmem:[%s2924 + $0x10] sm:$0x1] %v2932
        %v2934 = vld [vmem:[%s2924 + $0x18] sm:$0x1]
        %v2935 = vsel %vm1868, 0, %v2934
        %2936 = vst [vmem:[%s2924 + $0x18] sm:$0x1] %v2935
        %v2937 = vld [vmem:[%s2924 + $0x20] sm:$0x1]
        %v2938 = vsel %vm1868, 0, %v2937
        %2939 = vst [vmem:[%s2924 + $0x20] sm:$0x1] %v2938
        %v2940 = vld [vmem:[%s2924 + $0x28] sm:$0x1]
        %v2941 = vsel %vm1868, 0, %v2940
        %2942 = vst [vmem:[%s2924 + $0x28] sm:$0x1] %v2941
        %v2943 = vld [vmem:[%s2924 + $0x30] sm:$0x1]
        %v2944 = vsel %vm1868, 0, %v2943
        %2945 = vst [vmem:[%s2924 + $0x30] sm:$0x1] %v2944
        %v2946 = vld [vmem:[%s2924 + $0x38] sm:$0x1]
        %v2947 = vsel %vm1868, 0, %v2946
        %2948 = vst [vmem:[%s2924 + $0x38] sm:$0x1] %v2947
        %vm2949 = vsmask.f32 7938
        %vm2950 = vmand %vm1866, %vm2949
        %v2951 = vld [vmem:[%s2924 + $0x4] sm:$0x1]
        %v2952 = vsel %vm2950, 0, %v2951
        %2953 = vst [vmem:[%s2924 + $0x4] sm:$0x1] %v2952
        %v2954 = vld [vmem:[%s2924 + $0xc] sm:$0x1]
        %v2955 = vsel %vm2950, 0, %v2954
        %2956 = vst [vmem:[%s2924 + $0xc] sm:$0x1] %v2955
        %v2957 = vld [vmem:[%s2924 + $0x14] sm:$0x1]
        %v2958 = vsel %vm2950, 0, %v2957
        %2959 = vst [vmem:[%s2924 + $0x14] sm:$0x1] %v2958
        %v2960 = vld [vmem:[%s2924 + $0x1c] sm:$0x1]
        %v2961 = vsel %vm2950, 0, %v2960
        %2962 = vst [vmem:[%s2924 + $0x1c] sm:$0x1] %v2961
        %v2963 = vld [vmem:[%s2924 + $0x24] sm:$0x1]
        %v2964 = vsel %vm2950, 0, %v2963
        %2965 = vst [vmem:[%s2924 + $0x24] sm:$0x1] %v2964
        %v2966 = vld [vmem:[%s2924 + $0x2c] sm:$0x1]
        %v2967 = vsel %vm2950, 0, %v2966
        %2968 = vst [vmem:[%s2924 + $0x2c] sm:$0x1] %v2967
        %v2969 = vld [vmem:[%s2924 + $0x34] sm:$0x1]
        %v2970 = vsel %vm2950, 0, %v2969
        %2971 = vst [vmem:[%s2924 + $0x34] sm:$0x1] %v2970
        %v2972 = vld [vmem:[%s2924 + $0x3c] sm:$0x1]
        %v2973 = vsel %vm2950, 0, %v2972
        %2974 = vst [vmem:[%s2924 + $0x3c] sm:$0x1] %v2973
        %2975 = vst [vmem:[#allocation1] ss:$4 sm:$0xff] %v2903
        %s2976 = scalar_lea.vmem [#allocation1], 1
        %2977 = vst [vmem:[%s2976] ss:$4 sm:$0xff] %v2904
        %s2978 = scalar_lea.vmem [#allocation1], 2
        %2979 = vst [vmem:[%s2978] ss:$4 sm:$0xff] %v2905
        %s2980 = scalar_lea.vmem [#allocation1], 3
        %2981 = vst [vmem:[%s2980] ss:$4 sm:$0xff] %v2906
        %v2982 = vld.sshfl [vmem:[#allocation1] sm:$0xff pattern:$0x73625140]
        %s2983 = scalar_lea.vmem [#allocation1], 32
        %2984 = vst [vmem:[%s2983] ss:$4 sm:$0xff] %v2903
        %s2985 = scalar_lea.vmem [#allocation1], 33
        %2986 = vst [vmem:[%s2985] ss:$4 sm:$0xff] %v2904
        %s2987 = scalar_lea.vmem [#allocation1], 34
        %2988 = vst [vmem:[%s2987] ss:$4 sm:$0xff] %v2905
        %s2989 = scalar_lea.vmem [#allocation1], 35
        %2990 = vst [vmem:[%s2989] ss:$4 sm:$0xff] %v2906
        %v2991 = vld.sshfl [vmem:[#allocation1 + $0x20] sm:$0xff pattern:$0x73625140]
        %2992 = vst [vmem:[#allocation1] ss:$4 sm:$0xff] %v2907
        %2993 = vst [vmem:[%s2976] ss:$4 sm:$0xff] %v2908
        %2994 = vst [vmem:[%s2978] ss:$4 sm:$0xff] %v2909
        %2995 = vst [vmem:[%s2980] ss:$4 sm:$0xff] %v2910
        %v2996 = vld.sshfl [vmem:[#allocation1] sm:$0xff pattern:$0x73625140]
        %2997 = vst [vmem:[%s2983] ss:$4 sm:$0xff] %v2907
        %2998 = vst [vmem:[%s2985] ss:$4 sm:$0xff] %v2908
        %2999 = vst [vmem:[%s2987] ss:$4 sm:$0xff] %v2909
        %3000 = vst [vmem:[%s2989] ss:$4 sm:$0xff] %v2910
        %v3001 = vld.sshfl [vmem:[#allocation1 + $0x20] sm:$0xff pattern:$0x73625140]
        %3002 = vst [vmem:[#allocation1] ss:$4 sm:$0xff] %v2911
        %3003 = vst [vmem:[%s2976] ss:$4 sm:$0xff] %v2912
        %3004 = vst [vmem:[%s2978] ss:$4 sm:$0xff] %v2913
        %3005 = vst [vmem:[%s2980] ss:$4 sm:$0xff] %v2914
        %v3006 = vld.sshfl [vmem:[#allocation1] sm:$0xff pattern:$0x73625140]
        %3007 = vst [vmem:[%s2983] ss:$4 sm:$0xff] %v2911
        %3008 = vst [vmem:[%s2985] ss:$4 sm:$0xff] %v2912
        %3009 = vst [vmem:[%s2987] ss:$4 sm:$0xff] %v2913
        %3010 = vst [vmem:[%s2989] ss:$4 sm:$0xff] %v2914
        %v3011 = vld.sshfl [vmem:[#allocation1 + $0x20] sm:$0xff pattern:$0x73625140]
        %3012 = vst [vmem:[#allocation1] ss:$4 sm:$0xff] %v2915
        %3013 = vst [vmem:[%s2976] ss:$4 sm:$0xff] %v2916
        %3014 = vst [vmem:[%s2978] ss:$4 sm:$0xff] %v2917
        %3015 = vst [vmem:[%s2980] ss:$4 sm:$0xff] %v2918
        %v3016 = vld.sshfl [vmem:[#allocation1] sm:$0xff pattern:$0x73625140]
        %3017 = vst [vmem:[%s2983] ss:$4 sm:$0xff] %v2915
        %3018 = vst [vmem:[%s2985] ss:$4 sm:$0xff] %v2916
        %3019 = vst [vmem:[%s2987] ss:$4 sm:$0xff] %v2917
        %3020 = vst [vmem:[%s2989] ss:$4 sm:$0xff] %v2918
        %v3021 = vld.sshfl [vmem:[#allocation1 + $0x20] sm:$0xff pattern:$0x73625140]
        %v3030 = vpack.c.bf16 %v2982, %v2982
        %v3031 = vpack.c.bf16 %v2991, %v2991
        %v3032 = vpack.c.bf16 %v2996, %v2996
        %v3033 = vpack.c.bf16 %v3001, %v3001
        %v3034 = vpack.c.bf16 %v3006, %v3006
        %v3035 = vpack.c.bf16 %v3011, %v3011
        %v3036 = vpack.c.bf16 %v3016, %v3016
        %v3037 = vpack.c.bf16 %v3021, %v3021
        %v3039 = vshrl.u32 %v3030, 16
        %v3041 = vrot.slane %v3039, 7
        %v3042 = vshll.u32 %v3030, 16
        %v3044 = vor.u32 %v3041, %v3042
        %v3045 = vrot.slane %v3041, 4
        %v3047 = vshrl.u32 %v3031, 16
        %v3049 = vrot.slane %v3047, 7
        %v3050 = vshll.u32 %v3031, 16
        %v3052 = vor.u32 %v3049, %v3050
        %v3053 = vrot.slane %v3049, 4
        %v3055 = vshrl.u32 %v3032, 16
        %v3057 = vrot.slane %v3055, 7
        %v3058 = vshll.u32 %v3032, 16
        %v3060 = vor.u32 %v3057, %v3058
        %v3061 = vrot.slane %v3057, 4
        %v3063 = vshrl.u32 %v3033, 16
        %v3065 = vrot.slane %v3063, 7
        %v3066 = vshll.u32 %v3033, 16
        %v3068 = vor.u32 %v3065, %v3066
        %v3069 = vrot.slane %v3065, 4
        %v3071 = vshrl.u32 %v3034, 16
        %v3073 = vrot.slane %v3071, 7
        %v3074 = vshll.u32 %v3034, 16
        %v3076 = vor.u32 %v3073, %v3074
        %v3077 = vrot.slane %v3073, 4
        %v3079 = vshrl.u32 %v3035, 16
        %v3081 = vrot.slane %v3079, 7
        %v3082 = vshll.u32 %v3035, 16
        %v3084 = vor.u32 %v3081, %v3082
        %v3085 = vrot.slane %v3081, 4
        %v3087 = vshrl.u32 %v3036, 16
        %v3089 = vrot.slane %v3087, 7
        %v3090 = vshll.u32 %v3036, 16
        %v3092 = vor.u32 %v3089, %v3090
        %v3093 = vrot.slane %v3089, 4
        %v3095 = vshrl.u32 %v3037, 16
        %v3097 = vrot.slane %v3095, 7
        %v3098 = vshll.u32 %v3037, 16
        %v3100 = vor.u32 %v3097, %v3098
        %v3101 = vrot.slane %v3097, 4
        %vm3118 = vcmask 1043456
        %vm3119 = vmand %vm3118, %vm2949
        %v3120 = vld [vmem:[%s2924] sm:$0xf]
        %v3121 = vsel %vm3119, %v3044, %v3120
        %3122 = vst [vmem:[%s2924] sm:$0xf] %v3121
        %v3123 = vld [vmem:[%s2924 + $0x4] sm:$0x1]
        %v3124 = vsel %vm1868, %v3045, %v3123
        %3125 = vst [vmem:[%s2924 + $0x4] sm:$0x1] %v3124
        %v3126 = vld [vmem:[%s2924 + $0x8] sm:$0xf]
        %v3127 = vsel %vm3119, %v3052, %v3126
        %3128 = vst [vmem:[%s2924 + $0x8] sm:$0xf] %v3127
        %v3129 = vld [vmem:[%s2924 + $0xc] sm:$0x1]
        %v3130 = vsel %vm1868, %v3053, %v3129
        %3131 = vst [vmem:[%s2924 + $0xc] sm:$0x1] %v3130
        %v3132 = vld [vmem:[%s2924 + $0x10] sm:$0xf]
        %v3133 = vsel %vm3119, %v3060, %v3132
        %3134 = vst [vmem:[%s2924 + $0x10] sm:$0xf] %v3133
        %v3135 = vld [vmem:[%s2924 + $0x14] sm:$0x1]
        %v3136 = vsel %vm1868, %v3061, %v3135
        %3137 = vst [vmem:[%s2924 + $0x14] sm:$0x1] %v3136
        %v3138 = vld [vmem:[%s2924 + $0x18] sm:$0xf]
        %v3139 = vsel %vm3119, %v3068, %v3138
        %3140 = vst [vmem:[%s2924 + $0x18] sm:$0xf] %v3139
        %v3141 = vld [vmem:[%s2924 + $0x1c] sm:$0x1]
        %v3142 = vsel %vm1868, %v3069, %v3141
        %3143 = vst [vmem:[%s2924 + $0x1c] sm:$0x1] %v3142
        %v3144 = vld [vmem:[%s2924 + $0x20] sm:$0xf]
        %v3145 = vsel %vm3119, %v3076, %v3144
        %3146 = vst [vmem:[%s2924 + $0x20] sm:$0xf] %v3145
        %v3147 = vld [vmem:[%s2924 + $0x24] sm:$0x1]
        %v3148 = vsel %vm1868, %v3077, %v3147
        %3149 = vst [vmem:[%s2924 + $0x24] sm:$0x1] %v3148
        %v3150 = vld [vmem:[%s2924 + $0x28] sm:$0xf]
        %v3151 = vsel %vm3119, %v3084, %v3150
        %3152 = vst [vmem:[%s2924 + $0x28] sm:$0xf] %v3151
        %v3153 = vld [vmem:[%s2924 + $0x2c] sm:$0x1]
        %v3154 = vsel %vm1868, %v3085, %v3153
        %3155 = vst [vmem:[%s2924 + $0x2c] sm:$0x1] %v3154
        %v3156 = vld [vmem:[%s2924 + $0x30] sm:$0xf]
        %v3157 = vsel %vm3119, %v3092, %v3156
        %3158 = vst [vmem:[%s2924 + $0x30] sm:$0xf] %v3157
        %v3159 = vld [vmem:[%s2924 + $0x34] sm:$0x1]
        %v3160 = vsel %vm1868, %v3093, %v3159
        %3161 = vst [vmem:[%s2924 + $0x34] sm:$0x1] %v3160
        %v3162 = vld [vmem:[%s2924 + $0x38] sm:$0xf]
        %v3163 = vsel %vm3119, %v3100, %v3162
        %3164 = vst [vmem:[%s2924 + $0x38] sm:$0xf] %v3163
        %v3165 = vld [vmem:[%s2924 + $0x3c] sm:$0x1]
        %v3166 = vsel %vm1868, %v3101, %v3165
        %3167 = vst [vmem:[%s2924 + $0x3c] sm:$0x1] %v3166
        %v3168 = vld [vmem:[#allocation4] sm:$0xf]
        %v3169 = vld [vmem:[#allocation4 + $0x4] sm:$0x1]
        %v3170 = vld [vmem:[#allocation4 + $0x8] sm:$0xf]
        %v3171 = vld [vmem:[#allocation4 + $0xc] sm:$0x1]
        %v3172 = vld [vmem:[#allocation4 + $0x10] sm:$0xf]
        %v3173 = vld [vmem:[#allocation4 + $0x14] sm:$0x1]
        %v3174 = vld [vmem:[#allocation4 + $0x18] sm:$0xf]
        %v3175 = vld [vmem:[#allocation4 + $0x1c] sm:$0x1]
        %v3176 = vld [vmem:[#allocation4 + $0x20] sm:$0xf]
        %v3177 = vld [vmem:[#allocation4 + $0x24] sm:$0x1]
        %v3178 = vld [vmem:[#allocation4 + $0x28] sm:$0xf]
        %v3179 = vld [vmem:[#allocation4 + $0x2c] sm:$0x1]
        %v3180 = vld [vmem:[#allocation4 + $0x30] sm:$0xf]
        %v3181 = vld [vmem:[#allocation4 + $0x34] sm:$0x1]
        %v3182 = vld [vmem:[#allocation4 + $0x38] sm:$0xf]
        %v3183 = vld [vmem:[#allocation4 + $0x3c] sm:$0x1]
        %v3184 = vld [vmem:[#allocation4 + $0x40] sm:$0xf]
        %v3185 = vld [vmem:[#allocation4 + $0x44] sm:$0x1]
        %v3186 = vld [vmem:[#allocation4 + $0x48] sm:$0xf]
        %v3187 = vld [vmem:[#allocation4 + $0x4c] sm:$0x1]
        %v3208 = vunpack.c.l.b16 %v3168
        %v3209 = vunpack.c.l.b16 %v3169
        %v3210 = vunpack.c.l.b16 %v3170
        %v3211 = vunpack.c.l.b16 %v3171
        %v3212 = vunpack.c.l.b16 %v3172
        %v3213 = vunpack.c.l.b16 %v3173
        %v3214 = vunpack.c.l.b16 %v3174
        %v3215 = vunpack.c.l.b16 %v3175
        %v3216 = vunpack.c.l.b16 %v3176
        %v3217 = vunpack.c.l.b16 %v3177
        %v3218 = vunpack.c.l.b16 %v3178
        %v3219 = vunpack.c.l.b16 %v3179
        %v3220 = vunpack.c.l.b16 %v3180
        %v3221 = vunpack.c.l.b16 %v3181
        %v3222 = vunpack.c.l.b16 %v3182
        %v3223 = vunpack.c.l.b16 %v3183
        %v3224 = vunpack.c.l.b16 %v3184
        %v3225 = vunpack.c.l.b16 %v3185
        %v3226 = vunpack.c.l.b16 %v3186
        %v3227 = vunpack.c.l.b16 %v3187
        %v3228 = vpack.c.b16 %v3209, %v3208
        %v3229 = vpack.c.b16 %v3211, %v3210
        %v3230 = vpack.c.b16 %v3213, %v3212
        %v3231 = vpack.c.b16 %v3215, %v3214
        %v3232 = vpack.c.b16 %v3217, %v3216
        %v3233 = vpack.c.b16 %v3219, %v3218
        %v3234 = vpack.c.b16 %v3221, %v3220
        %v3235 = vpack.c.b16 %v3223, %v3222
        %v3236 = vpack.c.b16 %v3225, %v3224
        %v3237 = vpack.c.b16 %v3227, %v3226
        %v3239 = vshrl.u32 %v3228, 16
        %v3241 = vshll.u32 %v3228, 16
        %v3243 = vrot.slane %v3241, 1
        %v3244 = vor.u32 %v3239, %v3243
        %v3246 = vshrl.u32 %v3229, 16
        %v3248 = vshll.u32 %v3229, 16
        %v3250 = vrot.slane %v3248, 1
        %v3251 = vor.u32 %v3246, %v3250
        %v3253 = vshrl.u32 %v3230, 16
        %v3255 = vshll.u32 %v3230, 16
        %v3257 = vrot.slane %v3255, 1
        %v3258 = vor.u32 %v3253, %v3257
        %v3260 = vshrl.u32 %v3231, 16
        %v3262 = vshll.u32 %v3231, 16
        %v3264 = vrot.slane %v3262, 1
        %v3265 = vor.u32 %v3260, %v3264
        %v3267 = vshrl.u32 %v3232, 16
        %v3269 = vshll.u32 %v3232, 16
        %v3271 = vrot.slane %v3269, 1
        %v3272 = vor.u32 %v3267, %v3271
        %v3274 = vshrl.u32 %v3233, 16
        %v3276 = vshll.u32 %v3233, 16
        %v3278 = vrot.slane %v3276, 1
        %v3279 = vor.u32 %v3274, %v3278
        %v3281 = vshrl.u32 %v3234, 16
        %v3283 = vshll.u32 %v3234, 16
        %v3285 = vrot.slane %v3283, 1
        %v3286 = vor.u32 %v3281, %v3285
        %v3288 = vshrl.u32 %v3235, 16
        %v3290 = vshll.u32 %v3235, 16
        %v3292 = vrot.slane %v3290, 1
        %v3293 = vor.u32 %v3288, %v3292
        %v3295 = vshrl.u32 %v3236, 16
        %v3297 = vshll.u32 %v3236, 16
        %v3299 = vrot.slane %v3297, 1
        %v3300 = vor.u32 %v3295, %v3299
        %v3302 = vshrl.u32 %v3237, 16
        %v3304 = vshll.u32 %v3237, 16
        %v3306 = vrot.slane %v3304, 1
        %v3307 = vor.u32 %v3302, %v3306
        %v3308 = vrot.slane %v3228, 1
        %v3309 = vrot.slane %v3229, 1
        %v3310 = vrot.slane %v3230, 1
        %v3311 = vrot.slane %v3231, 1
        %v3312 = vrot.slane %v3232, 1
        %v3313 = vrot.slane %v3233, 1
        %v3314 = vrot.slane %v3234, 1
        %v3315 = vrot.slane %v3235, 1
        %v3316 = vrot.slane %v3236, 1
        %v3317 = vrot.slane %v3237, 1
        %v3318 = vunpack.c.l.b16 %v3244
        %v3319 = vunpack.c.l.b16 %v3308
        %v3320 = vunpack.c.l.b16 %v3251
        %v3321 = vunpack.c.l.b16 %v3309
        %v3322 = vunpack.c.l.b16 %v3258
        %v3323 = vunpack.c.l.b16 %v3310
        %v3324 = vunpack.c.l.b16 %v3265
        %v3325 = vunpack.c.l.b16 %v3311
        %v3326 = vunpack.c.l.b16 %v3272
        %v3327 = vunpack.c.l.b16 %v3312
        %v3328 = vunpack.c.l.b16 %v3279
        %v3329 = vunpack.c.l.b16 %v3313
        %v3330 = vunpack.c.l.b16 %v3286
        %v3331 = vunpack.c.l.b16 %v3314
        %v3332 = vunpack.c.l.b16 %v3293
        %v3333 = vunpack.c.l.b16 %v3315
        %v3334 = vunpack.c.l.b16 %v3300
        %v3335 = vunpack.c.l.b16 %v3316
        %v3336 = vunpack.c.l.b16 %v3307
        %v3337 = vunpack.c.l.b16 %v3317
        %v3338 = vld [vmem:[#allocation14] sm:$0xf]
        %v3339 = vld [vmem:[#allocation14 + $0x4] sm:$0xf]
        %v3340 = vld [vmem:[#allocation14 + $0x8] sm:$0xf]
        %v3341 = vld [vmem:[#allocation14 + $0xc] sm:$0xf]
        %v3342 = vld [vmem:[#allocation14 + $0x10] sm:$0xf]
        %v3343 = vld [vmem:[#allocation14 + $0x14] sm:$0xf]
        %v3344 = vld [vmem:[#allocation14 + $0x18] sm:$0xf]
        %v3345 = vld [vmem:[#allocation14 + $0x1c] sm:$0xf]
        %v3346 = vld [vmem:[#allocation14 + $0x20] sm:$0xf]
        %v3347 = vld [vmem:[#allocation14 + $0x24] sm:$0xf]
        %v3348 = vld [vmem:[#allocation14 + $0x28] sm:$0xf]
        %v3349 = vld [vmem:[#allocation14 + $0x2c] sm:$0xf]
        %v3350 = vld [vmem:[#allocation14 + $0x30] sm:$0xf]
        %v3351 = vld [vmem:[#allocation14 + $0x34] sm:$0xf]
        %v3352 = vld [vmem:[#allocation14 + $0x38] sm:$0xf]
        %v3353 = vld [vmem:[#allocation14 + $0x3c] sm:$0xf]
        %v3354 = vld [vmem:[#allocation14 + $0x40] sm:$0xf]
        %v3355 = vld [vmem:[#allocation14 + $0x44] sm:$0xf]
        %v3356 = vld [vmem:[#allocation14 + $0x48] sm:$0xf]
        %v3357 = vld [vmem:[#allocation14 + $0x4c] sm:$0xf]
        %v3358 = vld [vmem:[#allocation14 + $0x50] sm:$0xf]
        %v3359 = vld [vmem:[#allocation14 + $0x54] sm:$0xf]
        %v3360 = vld [vmem:[#allocation14 + $0x58] sm:$0xf]
        %v3361 = vld [vmem:[#allocation14 + $0x5c] sm:$0xf]
        %v3362 = vld [vmem:[#allocation14 + $0x60] sm:$0xf]
        %v3363 = vld [vmem:[#allocation14 + $0x64] sm:$0xf]
        %v3364 = vld [vmem:[#allocation14 + $0x68] sm:$0xf]
        %v3365 = vld [vmem:[#allocation14 + $0x6c] sm:$0xf]
        %v3366 = vld [vmem:[#allocation14 + $0x70] sm:$0xf]
        %v3367 = vld [vmem:[#allocation14 + $0x74] sm:$0xf]
        %v3368 = vld [vmem:[#allocation14 + $0x78] sm:$0xf]
        %v3369 = vld [vmem:[#allocation14 + $0x7c] sm:$0xf]
        %v3370 = vld [vmem:[#allocation14 + $0x80] sm:$0xf]
        %v3371 = vld [vmem:[#allocation14 + $0x84] sm:$0xf]
        %v3372 = vld [vmem:[#allocation14 + $0x88] sm:$0xf]
        %v3373 = vld [vmem:[#allocation14 + $0x8c] sm:$0xf]
        %v3374 = vld [vmem:[#allocation14 + $0x90] sm:$0xf]
        %v3375 = vld [vmem:[#allocation14 + $0x94] sm:$0xf]
        %v3376 = vld [vmem:[#allocation14 + $0x98] sm:$0xf]
        %v3377 = vld [vmem:[#allocation14 + $0x9c] sm:$0xf]
        %v3378 = vld [vmem:[#allocation14 + $0xa0] sm:$0xf]
        %v3379 = vld [vmem:[#allocation14 + $0xa4] sm:$0xf]
        %v3380 = vld [vmem:[#allocation14 + $0xa8] sm:$0xf]
        %v3381 = vld [vmem:[#allocation14 + $0xac] sm:$0xf]
        %v3382 = vld [vmem:[#allocation14 + $0xb0] sm:$0xf]
        %v3383 = vld [vmem:[#allocation14 + $0xb4] sm:$0xf]
        %v3384 = vld [vmem:[#allocation14 + $0xb8] sm:$0xf]
        %v3385 = vld [vmem:[#allocation14 + $0xbc] sm:$0xf]
        %v3386 = vld [vmem:[#allocation14 + $0xc0] sm:$0xf]
        %v3387 = vld [vmem:[#allocation14 + $0xc4] sm:$0xf]
        %v3388 = vld [vmem:[#allocation14 + $0xc8] sm:$0xf]
        %v3389 = vld [vmem:[#allocation14 + $0xcc] sm:$0xf]
        %v3390 = vld [vmem:[#allocation14 + $0xd0] sm:$0xf]
        %v3391 = vld [vmem:[#allocation14 + $0xd4] sm:$0xf]
        %v3392 = vld [vmem:[#allocation14 + $0xd8] sm:$0xf]
        %v3393 = vld [vmem:[#allocation14 + $0xdc] sm:$0xf]
        %v3394 = vld [vmem:[#allocation14 + $0xe0] sm:$0xf]
        %v3395 = vld [vmem:[#allocation14 + $0xe4] sm:$0xf]
        %v3396 = vld [vmem:[#allocation14 + $0xe8] sm:$0xf]
        %v3397 = vld [vmem:[#allocation14 + $0xec] sm:$0xf]
        %v3398 = vld [vmem:[#allocation14 + $0xf0] sm:$0xf]
        %v3399 = vld [vmem:[#allocation14 + $0xf4] sm:$0xf]
        %v3400 = vld [vmem:[#allocation14 + $0xf8] sm:$0xf]
        %v3401 = vld [vmem:[#allocation14 + $0xfc] sm:$0xf]
        %v3402 = vld [vmem:[#allocation14 + $0x100] sm:$0xf]
        %v3403 = vld [vmem:[#allocation14 + $0x104] sm:$0xf]
        %v3404 = vld [vmem:[#allocation14 + $0x108] sm:$0xf]
        %v3405 = vld [vmem:[#allocation14 + $0x10c] sm:$0xf]
        %v3406 = vld [vmem:[#allocation14 + $0x110] sm:$0xf]
        %v3407 = vld [vmem:[#allocation14 + $0x114] sm:$0xf]
        %v3408 = vld [vmem:[#allocation14 + $0x118] sm:$0xf]
        %v3409 = vld [vmem:[#allocation14 + $0x11c] sm:$0xf]
        %v3410 = vld [vmem:[#allocation14 + $0x120] sm:$0xf]
        %v3411 = vld [vmem:[#allocation14 + $0x124] sm:$0xf]
        %v3412 = vld [vmem:[#allocation14 + $0x128] sm:$0xf]
        %v3413 = vld [vmem:[#allocation14 + $0x12c] sm:$0xf]
        %v3414 = vld [vmem:[#allocation14 + $0x130] sm:$0xf]
        %v3415 = vld [vmem:[#allocation14 + $0x134] sm:$0xf]
        %v3416 = vld [vmem:[#allocation14 + $0x138] sm:$0xf]
        %v3417 = vld [vmem:[#allocation14 + $0x13c] sm:$0xf]
        %v3418 = vld [vmem:[#allocation14 + $0x140] sm:$0xf]
        %v3419 = vld [vmem:[#allocation14 + $0x144] sm:$0xf]
        %v3420 = vld [vmem:[#allocation14 + $0x148] sm:$0xf]
        %v3421 = vld [vmem:[#allocation14 + $0x14c] sm:$0xf]
        %v3422 = vld [vmem:[#allocation14 + $0x150] sm:$0xf]
        %v3423 = vld [vmem:[#allocation14 + $0x154] sm:$0xf]
        %v3424 = vld [vmem:[#allocation14 + $0x158] sm:$0xf]
        %v3425 = vld [vmem:[#allocation14 + $0x15c] sm:$0xf]
        %v3426 = vld [vmem:[#allocation14 + $0x160] sm:$0xf]
        %v3427 = vld [vmem:[#allocation14 + $0x164] sm:$0xf]
        %v3428 = vld [vmem:[#allocation14 + $0x168] sm:$0xf]
        %v3429 = vld [vmem:[#allocation14 + $0x16c] sm:$0xf]
        %v3430 = vld [vmem:[#allocation14 + $0x170] sm:$0xf]
        %v3431 = vld [vmem:[#allocation14 + $0x174] sm:$0xf]
        %v3432 = vld [vmem:[#allocation14 + $0x178] sm:$0xf]
        %v3433 = vld [vmem:[#allocation14 + $0x17c] sm:$0xf]
        %v3434 = vld [vmem:[#allocation14 + $0x180] sm:$0xf]
        %v3435 = vld [vmem:[#allocation14 + $0x184] sm:$0xf]
        %v3436 = vld [vmem:[#allocation14 + $0x188] sm:$0xf]
        %v3437 = vld [vmem:[#allocation14 + $0x18c] sm:$0xf]
        %v3438 = vld [vmem:[#allocation14 + $0x190] sm:$0xf]
        %v3439 = vld [vmem:[#allocation14 + $0x194] sm:$0xf]
        %v3440 = vld [vmem:[#allocation14 + $0x198] sm:$0xf]
        %v3441 = vld [vmem:[#allocation14 + $0x19c] sm:$0xf]
        %v3442 = vld [vmem:[#allocation14 + $0x1a0] sm:$0xf]
        %v3443 = vld [vmem:[#allocation14 + $0x1a4] sm:$0xf]
        %v3444 = vld [vmem:[#allocation14 + $0x1a8] sm:$0xf]
        %v3445 = vld [vmem:[#allocation14 + $0x1ac] sm:$0xf]
        %v3446 = vld [vmem:[#allocation14 + $0x1b0] sm:$0xf]
        %v3447 = vld [vmem:[#allocation14 + $0x1b4] sm:$0xf]
        %v3448 = vld [vmem:[#allocation14 + $0x1b8] sm:$0xf]
        %v3449 = vld [vmem:[#allocation14 + $0x1bc] sm:$0xf]
        %v3450 = vld [vmem:[#allocation14 + $0x1c0] sm:$0xf]
        %v3451 = vld [vmem:[#allocation14 + $0x1c4] sm:$0xf]
        %v3452 = vld [vmem:[#allocation14 + $0x1c8] sm:$0xf]
        %v3453 = vld [vmem:[#allocation14 + $0x1cc] sm:$0xf]
        %v3454 = vld [vmem:[#allocation14 + $0x1d0] sm:$0xf]
        %v3455 = vld [vmem:[#allocation14 + $0x1d4] sm:$0xf]
        %v3456 = vld [vmem:[#allocation14 + $0x1d8] sm:$0xf]
        %v3457 = vld [vmem:[#allocation14 + $0x1dc] sm:$0xf]
        %v3458 = vld [vmem:[#allocation14 + $0x1e0] sm:$0xf]
        %v3459 = vld [vmem:[#allocation14 + $0x1e4] sm:$0xf]
        %v3460 = vld [vmem:[#allocation14 + $0x1e8] sm:$0xf]
        %v3461 = vld [vmem:[#allocation14 + $0x1ec] sm:$0xf]
        %v3462 = vld [vmem:[#allocation14 + $0x1f0] sm:$0xf]
        %v3463 = vld [vmem:[#allocation14 + $0x1f4] sm:$0xf]
        %v3464 = vld [vmem:[#allocation14 + $0x1f8] sm:$0xf]
        %v3465 = vld [vmem:[#allocation14 + $0x1fc] sm:$0xf]
        %v3466 = vld [vmem:[#allocation14 + $0x200] sm:$0xf]
        %v3467 = vld [vmem:[#allocation14 + $0x204] sm:$0xf]
        %v3468 = vld [vmem:[#allocation14 + $0x208] sm:$0xf]
        %v3469 = vld [vmem:[#allocation14 + $0x20c] sm:$0xf]
        %v3470 = vld [vmem:[#allocation14 + $0x210] sm:$0xf]
        %v3471 = vld [vmem:[#allocation14 + $0x214] sm:$0xf]
        %v3472 = vld [vmem:[#allocation14 + $0x218] sm:$0xf]
        %v3473 = vld [vmem:[#allocation14 + $0x21c] sm:$0xf]
        %v3474 = vld [vmem:[#allocation14 + $0x220] sm:$0xf]
        %v3475 = vld [vmem:[#allocation14 + $0x224] sm:$0xf]
        %v3476 = vld [vmem:[#allocation14 + $0x228] sm:$0xf]
        %v3477 = vld [vmem:[#allocation14 + $0x22c] sm:$0xf]
        %v3478 = vld [vmem:[#allocation14 + $0x230] sm:$0xf]
        %v3479 = vld [vmem:[#allocation14 + $0x234] sm:$0xf]
        %v3480 = vld [vmem:[#allocation14 + $0x238] sm:$0xf]
        %v3481 = vld [vmem:[#allocation14 + $0x23c] sm:$0xf]
        %v3482 = vld [vmem:[#allocation16] sm:$0x1]
        %v3484 = vperm.slane %v3482, 0
        %v3486 = vpack.c.b16 %v3210, %v3208
        %v3487 = vpack.c.b16 %v3320, %v3318
        %v3488 = vpack.c.b16 %v3321, %v3319
        %v3489 = vpack.c.b16 %v3212, %v3210
        %v3490 = vpack.c.b16 %v3322, %v3320
        %v3491 = vpack.c.b16 %v3323, %v3321
        %v3492 = vpack.c.b16 %v3214, %v3212
        %v3493 = vpack.c.b16 %v3324, %v3322
        %v3494 = vpack.c.b16 %v3325, %v3323
        %v3495 = vpack.c.b16 %v3216, %v3214
        %v3496 = vpack.c.b16 %v3326, %v3324
        %v3497 = vpack.c.b16 %v3327, %v3325
        %v3498 = vpack.c.b16 %v3218, %v3216
        %v3499 = vpack.c.b16 %v3328, %v3326
        %v3500 = vpack.c.b16 %v3329, %v3327
        %v3501 = vpack.c.b16 %v3220, %v3218
        %v3502 = vpack.c.b16 %v3330, %v3328
        %v3503 = vpack.c.b16 %v3331, %v3329
        %v3504 = vpack.c.b16 %v3222, %v3220
        %v3505 = vpack.c.b16 %v3332, %v3330
        %v3506 = vpack.c.b16 %v3333, %v3331
        %v3507 = vpack.c.b16 %v3224, %v3222
        %v3508 = vpack.c.b16 %v3334, %v3332
        %v3509 = vpack.c.b16 %v3335, %v3333
        %v3510 = vpack.c.b16 %v3226, %v3224
        %v3511 = vpack.c.b16 %v3336, %v3334
        %v3512 = vpack.c.b16 %v3337, %v3335
        %v3684 = vunpack.c.l.b16 %v3338
        %v3685 = vunpack.c.l.b16 %v3339
        %v3686 = vunpack.c.l.b16 %v3340
        %v3687 = vunpack.c.l.b16 %v3341
        %v3688 = vunpack.c.l.b16 %v3342
        %v3689 = vunpack.c.l.b16 %v3343
        %v3690 = vunpack.c.l.b16 %v3344
        %v3691 = vunpack.c.l.b16 %v3345
        %v3692 = vunpack.c.l.b16 %v3346
        %v3693 = vunpack.c.l.b16 %v3347
        %v3694 = vunpack.c.l.b16 %v3348
        %v3695 = vunpack.c.l.b16 %v3349
        %v3696 = vunpack.c.l.b16 %v3350
        %v3697 = vunpack.c.l.b16 %v3351
        %v3698 = vunpack.c.l.b16 %v3352
        %v3699 = vunpack.c.l.b16 %v3353
        %v3700 = vunpack.c.l.b16 %v3354
        %v3701 = vunpack.c.l.b16 %v3355
        %v3702 = vunpack.c.l.b16 %v3356
        %v3703 = vunpack.c.l.b16 %v3357
        %v3704 = vunpack.c.l.b16 %v3358
        %v3705 = vunpack.c.l.b16 %v3359
        %v3706 = vunpack.c.l.b16 %v3360
        %v3707 = vunpack.c.l.b16 %v3361
        %v3708 = vunpack.c.l.b16 %v3362
        %v3709 = vunpack.c.l.b16 %v3363
        %v3710 = vunpack.c.l.b16 %v3364
        %v3711 = vunpack.c.l.b16 %v3365
        %v3712 = vunpack.c.l.b16 %v3366
        %v3713 = vunpack.c.l.b16 %v3367
        %v3714 = vunpack.c.l.b16 %v3368
        %v3715 = vunpack.c.l.b16 %v3369
        %v3716 = vunpack.c.l.b16 %v3370
        %v3717 = vunpack.c.l.b16 %v3371
        %v3718 = vunpack.c.l.b16 %v3372
        %v3719 = vunpack.c.l.b16 %v3373
        %v3720 = vunpack.c.l.b16 %v3374
        %v3721 = vunpack.c.l.b16 %v3375
        %v3722 = vunpack.c.l.b16 %v3376
        %v3723 = vunpack.c.l.b16 %v3377
        %v3724 = vunpack.c.l.b16 %v3378
        %v3725 = vunpack.c.l.b16 %v3379
        %v3726 = vunpack.c.l.b16 %v3380
        %v3727 = vunpack.c.l.b16 %v3381
        %v3728 = vunpack.c.l.b16 %v3382
        %v3729 = vunpack.c.l.b16 %v3383
        %v3730 = vunpack.c.l.b16 %v3384
        %v3731 = vunpack.c.l.b16 %v3385
        %v3732 = vunpack.c.l.b16 %v3386
        %v3733 = vunpack.c.l.b16 %v3387
        %v3734 = vunpack.c.l.b16 %v3388
        %v3735 = vunpack.c.l.b16 %v3389
        %v3736 = vunpack.c.l.b16 %v3390
        %v3737 = vunpack.c.l.b16 %v3391
        %v3738 = vunpack.c.l.b16 %v3392
        %v3739 = vunpack.c.l.b16 %v3393
        %v3740 = vunpack.c.l.b16 %v3394
        %v3741 = vunpack.c.l.b16 %v3395
        %v3742 = vunpack.c.l.b16 %v3396
        %v3743 = vunpack.c.l.b16 %v3397
        %v3744 = vunpack.c.l.b16 %v3398
        %v3745 = vunpack.c.l.b16 %v3399
        %v3746 = vunpack.c.l.b16 %v3400
        %v3747 = vunpack.c.l.b16 %v3401
        %v3748 = vunpack.c.l.b16 %v3402
        %v3749 = vunpack.c.l.b16 %v3403
        %v3750 = vunpack.c.l.b16 %v3404
        %v3751 = vunpack.c.l.b16 %v3405
        %v3752 = vunpack.c.l.b16 %v3406
        %v3753 = vunpack.c.l.b16 %v3407
        %v3754 = vunpack.c.l.b16 %v3408
        %v3755 = vunpack.c.l.b16 %v3409
        %v3756 = vunpack.c.l.b16 %v3410
        %v3757 = vunpack.c.l.b16 %v3411
        %v3758 = vunpack.c.l.b16 %v3412
        %v3759 = vunpack.c.l.b16 %v3413
        %v3760 = vunpack.c.l.b16 %v3414
        %v3761 = vunpack.c.l.b16 %v3415
        %v3762 = vunpack.c.l.b16 %v3416
        %v3763 = vunpack.c.l.b16 %v3417
        %v3764 = vunpack.c.l.b16 %v3418
        %v3765 = vunpack.c.l.b16 %v3419
        %v3766 = vunpack.c.l.b16 %v3420
        %v3767 = vunpack.c.l.b16 %v3421
        %v3768 = vunpack.c.l.b16 %v3422
        %v3769 = vunpack.c.l.b16 %v3423
        %v3770 = vunpack.c.l.b16 %v3424
        %v3771 = vunpack.c.l.b16 %v3425
        %v3772 = vunpack.c.l.b16 %v3426
        %v3773 = vunpack.c.l.b16 %v3427
        %v3774 = vunpack.c.l.b16 %v3428
        %v3775 = vunpack.c.l.b16 %v3429
        %v3776 = vunpack.c.l.b16 %v3430
        %v3777 = vunpack.c.l.b16 %v3431
        %v3778 = vunpack.c.l.b16 %v3432
        %v3779 = vunpack.c.l.b16 %v3433
        %v3780 = vunpack.c.l.b16 %v3434
        %v3781 = vunpack.c.l.b16 %v3435
        %v3782 = vunpack.c.l.b16 %v3436
        %v3783 = vunpack.c.l.b16 %v3437
        %v3784 = vunpack.c.l.b16 %v3438
        %v3785 = vunpack.c.l.b16 %v3439
        %v3786 = vunpack.c.l.b16 %v3440
        %v3787 = vunpack.c.l.b16 %v3441
        %v3788 = vunpack.c.l.b16 %v3442
        %v3789 = vunpack.c.l.b16 %v3443
        %v3790 = vunpack.c.l.b16 %v3444
        %v3791 = vunpack.c.l.b16 %v3445
        %v3792 = vunpack.c.l.b16 %v3446
        %v3793 = vunpack.c.l.b16 %v3447
        %v3794 = vunpack.c.l.b16 %v3448
        %v3795 = vunpack.c.l.b16 %v3449
        %v3796 = vunpack.c.l.b16 %v3450
        %v3797 = vunpack.c.l.b16 %v3451
        %v3798 = vunpack.c.l.b16 %v3452
        %v3799 = vunpack.c.l.b16 %v3453
        %v3800 = vunpack.c.l.b16 %v3454
        %v3801 = vunpack.c.l.b16 %v3455
        %v3802 = vunpack.c.l.b16 %v3456
        %v3803 = vunpack.c.l.b16 %v3457
        %v3804 = vunpack.c.l.b16 %v3458
        %v3805 = vunpack.c.l.b16 %v3459
        %v3806 = vunpack.c.l.b16 %v3460
        %v3807 = vunpack.c.l.b16 %v3461
        %v3808 = vunpack.c.l.b16 %v3462
        %v3809 = vunpack.c.l.b16 %v3463
        %v3810 = vunpack.c.l.b16 %v3464
        %v3811 = vunpack.c.l.b16 %v3465
        %v3812 = vunpack.c.l.b16 %v3466
        %v3813 = vunpack.c.l.b16 %v3467
        %v3814 = vunpack.c.l.b16 %v3468
        %v3815 = vunpack.c.l.b16 %v3469
        %v3816 = vunpack.c.l.b16 %v3470
        %v3817 = vunpack.c.l.b16 %v3471
        %v3818 = vunpack.c.l.b16 %v3472
        %v3819 = vunpack.c.l.b16 %v3473
        %v3820 = vunpack.c.l.b16 %v3474
        %v3821 = vunpack.c.l.b16 %v3475
        %v3822 = vunpack.c.l.b16 %v3476
        %v3823 = vunpack.c.l.b16 %v3477
        %v3824 = vunpack.c.l.b16 %v3478
        %v3825 = vunpack.c.l.b16 %v3479
        %v3826 = vunpack.c.l.b16 %v3480
        %v3827 = vunpack.c.l.b16 %v3481
        %v3828 = vpack.c.b16 %v3685, %v3684
        %v3829 = vpack.c.b16 %v3687, %v3686
        %v3830 = vpack.c.b16 %v3689, %v3688
        %v3831 = vpack.c.b16 %v3691, %v3690
        %v3832 = vpack.c.b16 %v3693, %v3692
        %v3833 = vpack.c.b16 %v3695, %v3694
        %v3834 = vpack.c.b16 %v3697, %v3696
        %v3835 = vpack.c.b16 %v3699, %v3698
        %v3836 = vpack.c.b16 %v3701, %v3700
        %v3837 = vpack.c.b16 %v3703, %v3702
        %v3838 = vpack.c.b16 %v3705, %v3704
        %v3839 = vpack.c.b16 %v3707, %v3706
        %v3840 = vpack.c.b16 %v3709, %v3708
        %v3841 = vpack.c.b16 %v3711, %v3710
        %v3842 = vpack.c.b16 %v3713, %v3712
        %v3843 = vpack.c.b16 %v3715, %v3714
        %v3844 = vpack.c.b16 %v3717, %v3716
        %v3845 = vpack.c.b16 %v3719, %v3718
        %v3846 = vpack.c.b16 %v3721, %v3720
        %v3847 = vpack.c.b16 %v3723, %v3722
        %v3848 = vpack.c.b16 %v3725, %v3724
        %v3849 = vpack.c.b16 %v3727, %v3726
        %v3850 = vpack.c.b16 %v3729, %v3728
        %v3851 = vpack.c.b16 %v3731, %v3730
        %v3852 = vpack.c.b16 %v3733, %v3732
        %v3853 = vpack.c.b16 %v3735, %v3734
        %v3854 = vpack.c.b16 %v3737, %v3736
        %v3855 = vpack.c.b16 %v3739, %v3738
        %v3856 = vpack.c.b16 %v3741, %v3740
        %v3857 = vpack.c.b16 %v3743, %v3742
        %v3858 = vpack.c.b16 %v3745, %v3744
        %v3859 = vpack.c.b16 %v3747, %v3746
        %v3860 = vpack.c.b16 %v3749, %v3748
        %v3861 = vpack.c.b16 %v3751, %v3750
        %v3862 = vpack.c.b16 %v3753, %v3752
        %v3863 = vpack.c.b16 %v3755, %v3754
        %v3864 = vpack.c.b16 %v3757, %v3756
        %v3865 = vpack.c.b16 %v3759, %v3758
        %v3866 = vpack.c.b16 %v3761, %v3760
        %v3867 = vpack.c.b16 %v3763, %v3762
        %v3868 = vpack.c.b16 %v3765, %v3764
        %v3869 = vpack.c.b16 %v3767, %v3766
        %v3870 = vpack.c.b16 %v3769, %v3768
        %v3871 = vpack.c.b16 %v3771, %v3770
        %v3872 = vpack.c.b16 %v3773, %v3772
        %v3873 = vpack.c.b16 %v3775, %v3774
        %v3874 = vpack.c.b16 %v3777, %v3776
        %v3875 = vpack.c.b16 %v3779, %v3778
        %v3876 = vpack.c.b16 %v3781, %v3780
        %v3877 = vpack.c.b16 %v3783, %v3782
        %v3878 = vpack.c.b16 %v3785, %v3784
        %v3879 = vpack.c.b16 %v3787, %v3786
        %v3880 = vpack.c.b16 %v3789, %v3788
        %v3881 = vpack.c.b16 %v3791, %v3790
        %v3882 = vpack.c.b16 %v3793, %v3792
        %v3883 = vpack.c.b16 %v3795, %v3794
        %v3884 = vpack.c.b16 %v3797, %v3796
        %v3885 = vpack.c.b16 %v3799, %v3798
        %v3886 = vpack.c.b16 %v3801, %v3800
        %v3887 = vpack.c.b16 %v3803, %v3802
        %v3888 = vpack.c.b16 %v3805, %v3804
        %v3889 = vpack.c.b16 %v3807, %v3806
        %v3890 = vpack.c.b16 %v3809, %v3808
        %v3891 = vpack.c.b16 %v3811, %v3810
        %v3892 = vpack.c.b16 %v3813, %v3812
        %v3893 = vpack.c.b16 %v3815, %v3814
        %v3894 = vpack.c.b16 %v3817, %v3816
        %v3895 = vpack.c.b16 %v3819, %v3818
        %v3896 = vpack.c.b16 %v3821, %v3820
        %v3897 = vpack.c.b16 %v3823, %v3822
        %v3898 = vpack.c.b16 %v3825, %v3824
        %v3899 = vpack.c.b16 %v3827, %v3826
        %3972 = vmatpush.bf16.msra.mxu0 %v3835
        %3973 = vmatpush.bf16.msra.mxu0 %v3834
        %3974 = vmatpush.bf16.msra.mxu0 %v3833
        %3975 = vmatpush.bf16.msra.mxu0 %v3832
        %3976 = vmatpush.bf16.msra.mxu0 %v3831
        %3977 = vmatpush.bf16.msra.mxu0 %v3830
        %3978 = vmatpush.bf16.msra.mxu0 %v3829
        %3979 = vmatpush.bf16.msra.mxu0 %v3828
        %3980 = vmatmul.bf16.gmra.mxu0 %v3486
        %v3981 = vpop.f32.mrf.mxu0
        %v3982 = vadd.f32 %v3484, %v3981
        %v3983 = vpop.f32.mrf.mxu0
        %v3984 = vadd.f32 %v3484, %v3983
        %3985 = vmatmul.bf16.gmra.mxu0 %v3492
        %v3986 = vpop.f32.mrf.mxu0
        %v3987 = vadd.f32 %v3484, %v3986
        %v3988 = vpop.f32.mrf.mxu0
        %v3989 = vadd.f32 %v3484, %v3988
        %3990 = vmatmul.bf16.gmra.mxu0 %v3498
        %v3991 = vpop.f32.mrf.mxu0
        %v3992 = vadd.f32 %v3484, %v3991
        %v3993 = vpop.f32.mrf.mxu0
        %v3994 = vadd.f32 %v3484, %v3993
        %3995 = vmatmul.bf16.gmra.mxu0 %v3504
        %v3996 = vpop.f32.mrf.mxu0
        %v3997 = vadd.f32 %v3484, %v3996
        %v3998 = vpop.f32.mrf.mxu0
        %v3999 = vadd.f32 %v3484, %v3998
        %4000 = vdwg.mxu0
        %4001 = vmatpush.bf16.msra.mxu0 %v3843
        %4002 = vmatpush.bf16.msra.mxu0 %v3842
        %4003 = vmatpush.bf16.msra.mxu0 %v3841
        %4004 = vmatpush.bf16.msra.mxu0 %v3840
        %4005 = vmatpush.bf16.msra.mxu0 %v3839
        %4006 = vmatpush.bf16.msra.mxu0 %v3838
        %4007 = vmatpush.bf16.msra.mxu0 %v3837
        %4008 = vmatpush.bf16.msra.mxu0 %v3836
        %4009 = vmatmul.bf16.gmra.mxu0 %v3487
        %v4010 = vpop.f32.mrf.mxu0
        %v4011 = vadd.f32 %v3982, %v4010
        %v4012 = vpop.f32.mrf.mxu0
        %v4013 = vadd.f32 %v3984, %v4012
        %4014 = vmatmul.bf16.gmra.mxu0 %v3493
        %v4015 = vpop.f32.mrf.mxu0
        %v4016 = vadd.f32 %v3987, %v4015
        %v4017 = vpop.f32.mrf.mxu0
        %v4018 = vadd.f32 %v3989, %v4017
        %4019 = vmatmul.bf16.gmra.mxu0 %v3499
        %v4020 = vpop.f32.mrf.mxu0
        %v4021 = vadd.f32 %v3992, %v4020
        %v4022 = vpop.f32.mrf.mxu0
        %v4023 = vadd.f32 %v3994, %v4022
        %4024 = vmatmul.bf16.gmra.mxu0 %v3505
        %v4025 = vpop.f32.mrf.mxu0
        %v4026 = vadd.f32 %v3997, %v4025
        %v4027 = vpop.f32.mrf.mxu0
        %v4028 = vadd.f32 %v3999, %v4027
        %4029 = vdwg.mxu0
        %4030 = vmatpush.bf16.msra.mxu0 %v3851
        %4031 = vmatpush.bf16.msra.mxu0 %v3850
        %4032 = vmatpush.bf16.msra.mxu0 %v3849
        %4033 = vmatpush.bf16.msra.mxu0 %v3848
        %4034 = vmatpush.bf16.msra.mxu0 %v3847
        %4035 = vmatpush.bf16.msra.mxu0 %v3846
        %4036 = vmatpush.bf16.msra.mxu0 %v3845
        %4037 = vmatpush.bf16.msra.mxu0 %v3844
        %4038 = vmatmul.bf16.gmra.mxu0 %v3488
        %v4039 = vpop.f32.mrf.mxu0
        %v4040 = vadd.f32 %v4011, %v4039
        %v4041 = vpop.f32.mrf.mxu0
        %v4042 = vadd.f32 %v4013, %v4041
        %4043 = vmatmul.bf16.gmra.mxu0 %v3494
        %v4044 = vpop.f32.mrf.mxu0
        %v4045 = vadd.f32 %v4016, %v4044
        %v4046 = vpop.f32.mrf.mxu0
        %v4047 = vadd.f32 %v4018, %v4046
        %4048 = vmatmul.bf16.gmra.mxu0 %v3500
        %v4049 = vpop.f32.mrf.mxu0
        %v4050 = vadd.f32 %v4021, %v4049
        %v4051 = vpop.f32.mrf.mxu0
        %v4052 = vadd.f32 %v4023, %v4051
        %4053 = vmatmul.bf16.gmra.mxu0 %v3506
        %v4054 = vpop.f32.mrf.mxu0
        %v4055 = vadd.f32 %v4026, %v4054
        %v4056 = vpop.f32.mrf.mxu0
        %v4057 = vadd.f32 %v4028, %v4056
        %4058 = vdwg.mxu0
        %4059 = vmatpush.bf16.msra.mxu0 %v3859
        %4060 = vmatpush.bf16.msra.mxu0 %v3858
        %4061 = vmatpush.bf16.msra.mxu0 %v3857
        %4062 = vmatpush.bf16.msra.mxu0 %v3856
        %4063 = vmatpush.bf16.msra.mxu0 %v3855
        %4064 = vmatpush.bf16.msra.mxu0 %v3854
        %4065 = vmatpush.bf16.msra.mxu0 %v3853
        %4066 = vmatpush.bf16.msra.mxu0 %v3852
        %4067 = vmatmul.bf16.gmra.mxu0 %v3489
        %v4068 = vpop.f32.mrf.mxu0
        %v4069 = vadd.f32 %v4040, %v4068
        %v4070 = vpop.f32.mrf.mxu0
        %v4071 = vadd.f32 %v4042, %v4070
        %4072 = vmatmul.bf16.gmra.mxu0 %v3495
        %v4073 = vpop.f32.mrf.mxu0
        %v4074 = vadd.f32 %v4045, %v4073
        %v4075 = vpop.f32.mrf.mxu0
        %v4076 = vadd.f32 %v4047, %v4075
        %4077 = vmatmul.bf16.gmra.mxu0 %v3501
        %v4078 = vpop.f32.mrf.mxu0
        %v4079 = vadd.f32 %v4050, %v4078
        %v4080 = vpop.f32.mrf.mxu0
        %v4081 = vadd.f32 %v4052, %v4080
        %4082 = vmatmul.bf16.gmra.mxu0 %v3507
        %v4083 = vpop.f32.mrf.mxu0
        %v4084 = vadd.f32 %v4055, %v4083
        %v4085 = vpop.f32.mrf.mxu0
        %v4086 = vadd.f32 %v4057, %v4085
        %4087 = vdwg.mxu0
        %4088 = vmatpush.bf16.msra.mxu0 %v3867
        %4089 = vmatpush.bf16.msra.mxu0 %v3866
        %4090 = vmatpush.bf16.msra.mxu0 %v3865
        %4091 = vmatpush.bf16.msra.mxu0 %v3864
        %4092 = vmatpush.bf16.msra.mxu0 %v3863
        %4093 = vmatpush.bf16.msra.mxu0 %v3862
        %4094 = vmatpush.bf16.msra.mxu0 %v3861
        %4095 = vmatpush.bf16.msra.mxu0 %v3860
        %4096 = vmatmul.bf16.gmra.mxu0 %v3490
        %v4097 = vpop.f32.mrf.mxu0
        %v4098 = vadd.f32 %v4069, %v4097
        %v4099 = vpop.f32.mrf.mxu0
        %v4100 = vadd.f32 %v4071, %v4099
        %4101 = vmatmul.bf16.gmra.mxu0 %v3496
        %v4102 = vpop.f32.mrf.mxu0
        %v4103 = vadd.f32 %v4074, %v4102
        %v4104 = vpop.f32.mrf.mxu0
        %v4105 = vadd.f32 %v4076, %v4104
        %4106 = vmatmul.bf16.gmra.mxu0 %v3502
        %v4107 = vpop.f32.mrf.mxu0
        %v4108 = vadd.f32 %v4079, %v4107
        %v4109 = vpop.f32.mrf.mxu0
        %v4110 = vadd.f32 %v4081, %v4109
        %4111 = vmatmul.bf16.gmra.mxu0 %v3508
        %v4112 = vpop.f32.mrf.mxu0
        %v4113 = vadd.f32 %v4084, %v4112
        %v4114 = vpop.f32.mrf.mxu0
        %v4115 = vadd.f32 %v4086, %v4114
        %4116 = vdwg.mxu0
        %4117 = vmatpush.bf16.msra.mxu0 %v3875
        %4118 = vmatpush.bf16.msra.mxu0 %v3874
        %4119 = vmatpush.bf16.msra.mxu0 %v3873
        %4120 = vmatpush.bf16.msra.mxu0 %v3872
        %4121 = vmatpush.bf16.msra.mxu0 %v3871
        %4122 = vmatpush.bf16.msra.mxu0 %v3870
        %4123 = vmatpush.bf16.msra.mxu0 %v3869
        %4124 = vmatpush.bf16.msra.mxu0 %v3868
        %4125 = vmatmul.bf16.gmra.mxu0 %v3491
        %v4126 = vpop.f32.mrf.mxu0
        %v4127 = vadd.f32 %v4098, %v4126
        %v4128 = vpop.f32.mrf.mxu0
        %v4129 = vadd.f32 %v4100, %v4128
        %4130 = vmatmul.bf16.gmra.mxu0 %v3497
        %v4131 = vpop.f32.mrf.mxu0
        %v4132 = vadd.f32 %v4103, %v4131
        %v4133 = vpop.f32.mrf.mxu0
        %v4134 = vadd.f32 %v4105, %v4133
        %4135 = vmatmul.bf16.gmra.mxu0 %v3503
        %v4136 = vpop.f32.mrf.mxu0
        %v4137 = vadd.f32 %v4108, %v4136
        %v4138 = vpop.f32.mrf.mxu0
        %v4139 = vadd.f32 %v4110, %v4138
        %4140 = vmatmul.bf16.gmra.mxu0 %v3509
        %v4141 = vpop.f32.mrf.mxu0
        %v4142 = vadd.f32 %v4113, %v4141
        %v4143 = vpop.f32.mrf.mxu0
        %v4144 = vadd.f32 %v4115, %v4143
        %4145 = vdwg.mxu0
        %4146 = vmatpush.bf16.msra.mxu0 %v3883
        %4147 = vmatpush.bf16.msra.mxu0 %v3882
        %4148 = vmatpush.bf16.msra.mxu0 %v3881
        %4149 = vmatpush.bf16.msra.mxu0 %v3880
        %4150 = vmatpush.bf16.msra.mxu0 %v3879
        %4151 = vmatpush.bf16.msra.mxu0 %v3878
        %4152 = vmatpush.bf16.msra.mxu0 %v3877
        %4153 = vmatpush.bf16.msra.mxu0 %v3876
        %4154 = vmatmul.bf16.gmra.mxu0 %v3492
        %v4155 = vpop.f32.mrf.mxu0
        %v4156 = vadd.f32 %v4127, %v4155
        %v4157 = vpop.f32.mrf.mxu0
        %v4158 = vadd.f32 %v4129, %v4157
        %4159 = vmatmul.bf16.gmra.mxu0 %v3498
        %v4160 = vpop.f32.mrf.mxu0
        %v4161 = vadd.f32 %v4132, %v4160
        %v4162 = vpop.f32.mrf.mxu0
        %v4163 = vadd.f32 %v4134, %v4162
        %4164 = vmatmul.bf16.gmra.mxu0 %v3504
        %v4165 = vpop.f32.mrf.mxu0
        %v4166 = vadd.f32 %v4137, %v4165
        %v4167 = vpop.f32.mrf.mxu0
        %v4168 = vadd.f32 %v4139, %v4167
        %4169 = vmatmul.bf16.gmra.mxu0 %v3510
        %v4170 = vpop.f32.mrf.mxu0
        %v4171 = vadd.f32 %v4142, %v4170
        %v4172 = vpop.f32.mrf.mxu0
        %v4173 = vadd.f32 %v4144, %v4172
        %4174 = vdwg.mxu0
        %4175 = vmatpush.bf16.msra.mxu0 %v3891
        %4176 = vmatpush.bf16.msra.mxu0 %v3890
        %4177 = vmatpush.bf16.msra.mxu0 %v3889
        %4178 = vmatpush.bf16.msra.mxu0 %v3888
        %4179 = vmatpush.bf16.msra.mxu0 %v3887
        %4180 = vmatpush.bf16.msra.mxu0 %v3886
        %4181 = vmatpush.bf16.msra.mxu0 %v3885
        %4182 = vmatpush.bf16.msra.mxu0 %v3884
        %4183 = vmatmul.bf16.gmra.mxu0 %v3493
        %v4184 = vpop.f32.mrf.mxu0
        %v4185 = vadd.f32 %v4156, %v4184
        %v4186 = vpop.f32.mrf.mxu0
        %v4187 = vadd.f32 %v4158, %v4186
        %4188 = vmatmul.bf16.gmra.mxu0 %v3499
        %v4189 = vpop.f32.mrf.mxu0
        %v4190 = vadd.f32 %v4161, %v4189
        %v4191 = vpop.f32.mrf.mxu0
        %v4192 = vadd.f32 %v4163, %v4191
        %4193 = vmatmul.bf16.gmra.mxu0 %v3505
        %v4194 = vpop.f32.mrf.mxu0
        %v4195 = vadd.f32 %v4166, %v4194
        %v4196 = vpop.f32.mrf.mxu0
        %v4197 = vadd.f32 %v4168, %v4196
        %4198 = vmatmul.bf16.gmra.mxu0 %v3511
        %v4199 = vpop.f32.mrf.mxu0
        %v4200 = vadd.f32 %v4171, %v4199
        %v4201 = vpop.f32.mrf.mxu0
        %v4202 = vadd.f32 %v4173, %v4201
        %4203 = vdwg.mxu0
        %4204 = vmatpush.bf16.msra.mxu0 %v3899
        %4205 = vmatpush.bf16.msra.mxu0 %v3898
        %4206 = vmatpush.bf16.msra.mxu0 %v3897
        %4207 = vmatpush.bf16.msra.mxu0 %v3896
        %4208 = vmatpush.bf16.msra.mxu0 %v3895
        %4209 = vmatpush.bf16.msra.mxu0 %v3894
        %4210 = vmatpush.bf16.msra.mxu0 %v3893
        %4211 = vmatpush.bf16.msra.mxu0 %v3892
        %4212 = vmatmul.bf16.gmra.mxu0 %v3494
        %v4213 = vpop.f32.mrf.mxu0
        %v4214 = vadd.f32 %v4185, %v4213
        %v4215 = vpop.f32.mrf.mxu0
        %v4216 = vadd.f32 %v4187, %v4215
        %4217 = vmatmul.bf16.gmra.mxu0 %v3500
        %v4218 = vpop.f32.mrf.mxu0
        %v4219 = vadd.f32 %v4190, %v4218
        %v4220 = vpop.f32.mrf.mxu0
        %v4221 = vadd.f32 %v4192, %v4220
        %4222 = vmatmul.bf16.gmra.mxu0 %v3506
        %v4223 = vpop.f32.mrf.mxu0
        %v4224 = vadd.f32 %v4195, %v4223
        %v4225 = vpop.f32.mrf.mxu0
        %v4226 = vadd.f32 %v4197, %v4225
        %4227 = vmatmul.bf16.gmra.mxu0 %v3512
        %v4228 = vpop.f32.mrf.mxu0
        %v4229 = vadd.f32 %v4200, %v4228
        %v4230 = vpop.f32.mrf.mxu0
        %v4231 = vadd.f32 %v4202, %v4230
        %4232 = vdwg.mxu0
        %v4233 = vmax.f32 %v4214, 0.0
        %v4234 = vmax.f32 %v4216, 0.0
        %v4235 = vmax.f32 %v4219, 0.0
        %v4236 = vmax.f32 %v4221, 0.0
        %v4237 = vmax.f32 %v4224, 0.0
        %v4238 = vmax.f32 %v4226, 0.0
        %v4239 = vmax.f32 %v4229, 0.0
        %v4240 = vmax.f32 %v4231, 0.0
        %v4249 = vrot.slane %v4233, 1
        %v4250 = vrot.slane %v4233, 2
        %v4251 = vrot.slane %v4233, 3
        %v4252 = vrot.slane %v4233, 4
        %v4253 = vrot.slane %v4233, 5
        %v4254 = vrot.slane %v4233, 6
        %v4255 = vrot.slane %v4233, 7
        %v4256 = vrot.slane %v4234, 1
        %v4257 = vrot.slane %v4234, 2
        %v4258 = vrot.slane %v4234, 3
        %v4259 = vrot.slane %v4234, 4
        %v4260 = vrot.slane %v4234, 5
        %v4261 = vrot.slane %v4234, 6
        %v4262 = vrot.slane %v4234, 7
        %v4263 = vrot.slane %v4235, 1
        %v4264 = vrot.slane %v4235, 2
        %v4265 = vrot.slane %v4235, 3
        %v4266 = vrot.slane %v4235, 4
        %v4267 = vrot.slane %v4235, 5
        %v4268 = vrot.slane %v4235, 6
        %v4269 = vrot.slane %v4235, 7
        %v4270 = vrot.slane %v4236, 1
        %v4271 = vrot.slane %v4236, 2
        %v4272 = vrot.slane %v4236, 3
        %v4273 = vrot.slane %v4236, 4
        %v4274 = vrot.slane %v4236, 5
        %v4275 = vrot.slane %v4236, 6
        %v4276 = vrot.slane %v4236, 7
        %v4277 = vrot.slane %v4237, 1
        %v4278 = vrot.slane %v4237, 2
        %v4279 = vrot.slane %v4237, 3
        %v4280 = vrot.slane %v4237, 4
        %v4281 = vrot.slane %v4237, 5
        %v4282 = vrot.slane %v4237, 6
        %v4283 = vrot.slane %v4237, 7
        %v4284 = vrot.slane %v4238, 1
        %v4285 = vrot.slane %v4238, 2
        %v4286 = vrot.slane %v4238, 3
        %v4287 = vrot.slane %v4238, 4
        %v4288 = vrot.slane %v4238, 5
        %v4289 = vrot.slane %v4238, 6
        %v4290 = vrot.slane %v4238, 7
        %v4291 = vrot.slane %v4239, 1
        %v4292 = vrot.slane %v4239, 2
        %v4293 = vrot.slane %v4239, 3
        %v4294 = vrot.slane %v4239, 4
        %v4295 = vrot.slane %v4239, 5
        %v4296 = vrot.slane %v4239, 6
        %v4297 = vrot.slane %v4239, 7
        %v4298 = vrot.slane %v4240, 1
        %v4299 = vrot.slane %v4240, 2
        %v4300 = vrot.slane %v4240, 3
        %v4301 = vrot.slane %v4240, 4
        %v4302 = vrot.slane %v4240, 5
        %v4303 = vrot.slane %v4240, 6
        %v4304 = vrot.slane %v4240, 7
        %v4305 = vperm.slane %v4233, 0
        %v4306 = vperm.slane %v4249, 0
        %v4307 = vperm.slane %v4250, 0
        %v4308 = vperm.slane %v4251, 0
        %v4309 = vperm.slane %v4252, 0
        %v4310 = vperm.slane %v4253, 0
        %v4311 = vperm.slane %v4254, 0
        %v4312 = vperm.slane %v4255, 0
        %v4313 = vperm.slane %v4234, 0
        %v4314 = vperm.slane %v4256, 0
        %v4315 = vperm.slane %v4257, 0
        %v4316 = vperm.slane %v4258, 0
        %v4317 = vperm.slane %v4259, 0
        %v4318 = vperm.slane %v4260, 0
        %v4319 = vperm.slane %v4261, 0
        %v4320 = vperm.slane %v4262, 0
        %v4321 = vperm.slane %v4235, 0
        %v4322 = vperm.slane %v4263, 0
        %v4323 = vperm.slane %v4264, 0
        %v4324 = vperm.slane %v4265, 0
        %v4325 = vperm.slane %v4266, 0
        %v4326 = vperm.slane %v4267, 0
        %v4327 = vperm.slane %v4268, 0
        %v4328 = vperm.slane %v4269, 0
        %v4329 = vperm.slane %v4236, 0
        %v4330 = vperm.slane %v4270, 0
        %v4331 = vperm.slane %v4271, 0
        %v4332 = vperm.slane %v4272, 0
        %v4333 = vperm.slane %v4273, 0
        %v4334 = vperm.slane %v4274, 0
        %v4335 = vperm.slane %v4275, 0
        %v4336 = vperm.slane %v4276, 0
        %v4337 = vperm.slane %v4237, 0
        %v4338 = vperm.slane %v4277, 0
        %v4339 = vperm.slane %v4278, 0
        %v4340 = vperm.slane %v4279, 0
        %v4341 = vperm.slane %v4280, 0
        %v4342 = vperm.slane %v4281, 0
        %v4343 = vperm.slane %v4282, 0
        %v4344 = vperm.slane %v4283, 0
        %v4345 = vperm.slane %v4238, 0
        %v4346 = vperm.slane %v4284, 0
        %v4347 = vperm.slane %v4285, 0
        %v4348 = vperm.slane %v4286, 0
        %v4349 = vperm.slane %v4287, 0
        %v4350 = vperm.slane %v4288, 0
        %v4351 = vperm.slane %v4289, 0
        %v4352 = vperm.slane %v4290, 0
        %v4353 = vperm.slane %v4239, 0
        %v4354 = vperm.slane %v4291, 0
        %v4355 = vperm.slane %v4292, 0
        %v4356 = vperm.slane %v4293, 0
        %v4357 = vperm.slane %v4294, 0
        %v4358 = vperm.slane %v4295, 0
        %v4359 = vperm.slane %v4296, 0
        %v4360 = vperm.slane %v4297, 0
        %v4361 = vperm.slane %v4240, 0
        %v4362 = vperm.slane %v4298, 0
        %v4363 = vperm.slane %v4299, 0
        %v4364 = vperm.slane %v4300, 0
        %v4365 = vperm.slane %v4301, 0
        %v4366 = vperm.slane %v4302, 0
        %v4367 = vperm.slane %v4303, 0
        %v4368 = vperm.slane %v4304, 0
        %4369 = vst [vmem:[#allocation5] sm:$0xf] 0
        %4370 = vst [vmem:[#allocation5 + $0x4] sm:$0xf] 0
        %4371 = vst [vmem:[#allocation5 + $0x8] sm:$0x1] 0
        %s4372 = scalar_lea.vmem [#allocation5], 204
        %4373 = vst [vmem:[%s4372] sm:$0xf] 0
        %4374 = vst [vmem:[%s4372 + $0x4] sm:$0xf] 0
        %4375 = vst [vmem:[%s4372 + $0x8] sm:$0x1] 0
        %s4376 = scalar_lea.vmem [#allocation5], 12
        %v4377 = vld [vmem:[%s4376] sm:$0x1]
        %v4378 = vsel %vm1868, 0, %v4377
        %4379 = vst [vmem:[%s4376] sm:$0x1] %v4378
        %v4380 = vld [vmem:[%s4376 + $0xc] sm:$0x1]
        %v4381 = vsel %vm1868, 0, %v4380
        %4382 = vst [vmem:[%s4376 + $0xc] sm:$0x1] %v4381
        %v4383 = vld [vmem:[%s4376 + $0x18] sm:$0x1]
        %v4384 = vsel %vm1868, 0, %v4383
        %4385 = vst [vmem:[%s4376 + $0x18] sm:$0x1] %v4384
        %v4386 = vld [vmem:[%s4376 + $0x24] sm:$0x1]
        %v4387 = vsel %vm1868, 0, %v4386
        %4388 = vst [vmem:[%s4376 + $0x24] sm:$0x1] %v4387
        %v4389 = vld [vmem:[%s4376 + $0x30] sm:$0x1]
        %v4390 = vsel %vm1868, 0, %v4389
        %4391 = vst [vmem:[%s4376 + $0x30] sm:$0x1] %v4390
        %v4392 = vld [vmem:[%s4376 + $0x3c] sm:$0x1]
        %v4393 = vsel %vm1868, 0, %v4392
        %4394 = vst [vmem:[%s4376 + $0x3c] sm:$0x1] %v4393
        %v4395 = vld [vmem:[%s4376 + $0x48] sm:$0x1]
        %v4396 = vsel %vm1868, 0, %v4395
        %4397 = vst [vmem:[%s4376 + $0x48] sm:$0x1] %v4396
        %v4398 = vld [vmem:[%s4376 + $0x54] sm:$0x1]
        %v4399 = vsel %vm1868, 0, %v4398
        %4400 = vst [vmem:[%s4376 + $0x54] sm:$0x1] %v4399
        %v4401 = vld [vmem:[%s4376 + $0x60] sm:$0x1]
        %v4402 = vsel %vm1868, 0, %v4401
        %4403 = vst [vmem:[%s4376 + $0x60] sm:$0x1] %v4402
        %v4404 = vld [vmem:[%s4376 + $0x6c] sm:$0x1]
        %v4405 = vsel %vm1868, 0, %v4404
        %4406 = vst [vmem:[%s4376 + $0x6c] sm:$0x1] %v4405
        %v4407 = vld [vmem:[%s4376 + $0x78] sm:$0x1]
        %v4408 = vsel %vm1868, 0, %v4407
        %4409 = vst [vmem:[%s4376 + $0x78] sm:$0x1] %v4408
        %v4410 = vld [vmem:[%s4376 + $0x84] sm:$0x1]
        %v4411 = vsel %vm1868, 0, %v4410
        %4412 = vst [vmem:[%s4376 + $0x84] sm:$0x1] %v4411
        %v4413 = vld [vmem:[%s4376 + $0x90] sm:$0x1]
        %v4414 = vsel %vm1868, 0, %v4413
        %4415 = vst [vmem:[%s4376 + $0x90] sm:$0x1] %v4414
        %v4416 = vld [vmem:[%s4376 + $0x9c] sm:$0x1]
        %v4417 = vsel %vm1868, 0, %v4416
        %4418 = vst [vmem:[%s4376 + $0x9c] sm:$0x1] %v4417
        %v4419 = vld [vmem:[%s4376 + $0xa8] sm:$0x1]
        %v4420 = vsel %vm1868, 0, %v4419
        %4421 = vst [vmem:[%s4376 + $0xa8] sm:$0x1] %v4420
        %v4422 = vld [vmem:[%s4376 + $0xb4] sm:$0x1]
        %v4423 = vsel %vm1868, 0, %v4422
        %4424 = vst [vmem:[%s4376 + $0xb4] sm:$0x1] %v4423
        %v4425 = vld [vmem:[%s4376 + $0x8] sm:$0x1]
        %v4426 = vsel %vm2950, 0, %v4425
        %4427 = vst [vmem:[%s4376 + $0x8] sm:$0x1] %v4426
        %v4428 = vld [vmem:[%s4376 + $0x14] sm:$0x1]
        %v4429 = vsel %vm2950, 0, %v4428
        %4430 = vst [vmem:[%s4376 + $0x14] sm:$0x1] %v4429
        %v4431 = vld [vmem:[%s4376 + $0x20] sm:$0x1]
        %v4432 = vsel %vm2950, 0, %v4431
        %4433 = vst [vmem:[%s4376 + $0x20] sm:$0x1] %v4432
        %v4434 = vld [vmem:[%s4376 + $0x2c] sm:$0x1]
        %v4435 = vsel %vm2950, 0, %v4434
        %4436 = vst [vmem:[%s4376 + $0x2c] sm:$0x1] %v4435
        %v4437 = vld [vmem:[%s4376 + $0x38] sm:$0x1]
        %v4438 = vsel %vm2950, 0, %v4437
        %4439 = vst [vmem:[%s4376 + $0x38] sm:$0x1] %v4438
        %v4440 = vld [vmem:[%s4376 + $0x44] sm:$0x1]
        %v4441 = vsel %vm2950, 0, %v4440
        %4442 = vst [vmem:[%s4376 + $0x44] sm:$0x1] %v4441
        %v4443 = vld [vmem:[%s4376 + $0x50] sm:$0x1]
        %v4444 = vsel %vm2950, 0, %v4443
        %4445 = vst [vmem:[%s4376 + $0x50] sm:$0x1] %v4444
        %v4446 = vld [vmem:[%s4376 + $0x5c] sm:$0x1]
        %v4447 = vsel %vm2950, 0, %v4446
        %4448 = vst [vmem:[%s4376 + $0x5c] sm:$0x1] %v4447
        %v4449 = vld [vmem:[%s4376 + $0x68] sm:$0x1]
        %v4450 = vsel %vm2950, 0, %v4449
        %4451 = vst [vmem:[%s4376 + $0x68] sm:$0x1] %v4450
        %v4452 = vld [vmem:[%s4376 + $0x74] sm:$0x1]
        %v4453 = vsel %vm2950, 0, %v4452
        %4454 = vst [vmem:[%s4376 + $0x74] sm:$0x1] %v4453
        %v4455 = vld [vmem:[%s4376 + $0x80] sm:$0x1]
        %v4456 = vsel %vm2950, 0, %v4455
        %4457 = vst [vmem:[%s4376 + $0x80] sm:$0x1] %v4456
        %v4458 = vld [vmem:[%s4376 + $0x8c] sm:$0x1]
        %v4459 = vsel %vm2950, 0, %v4458
        %4460 = vst [vmem:[%s4376 + $0x8c] sm:$0x1] %v4459
        %v4461 = vld [vmem:[%s4376 + $0x98] sm:$0x1]
        %v4462 = vsel %vm2950, 0, %v4461
        %4463 = vst [vmem:[%s4376 + $0x98] sm:$0x1] %v4462
        %v4464 = vld [vmem:[%s4376 + $0xa4] sm:$0x1]
        %v4465 = vsel %vm2950, 0, %v4464
        %4466 = vst [vmem:[%s4376 + $0xa4] sm:$0x1] %v4465
        %v4467 = vld [vmem:[%s4376 + $0xb0] sm:$0x1]
        %v4468 = vsel %vm2950, 0, %v4467
        %4469 = vst [vmem:[%s4376 + $0xb0] sm:$0x1] %v4468
        %v4470 = vld [vmem:[%s4376 + $0xbc] sm:$0x1]
        %v4471 = vsel %vm2950, 0, %v4470
        %4472 = vst [vmem:[%s4376 + $0xbc] sm:$0x1] %v4471
        %4473 = vst [vmem:[#allocation1] ss:$4 sm:$0xff] %v4305
        %s4474 = scalar_lea.vmem [#allocation1], 1
        %4475 = vst [vmem:[%s4474] ss:$4 sm:$0xff] %v4306
        %s4476 = scalar_lea.vmem [#allocation1], 2
        %4477 = vst [vmem:[%s4476] ss:$4 sm:$0xff] %v4307
        %s4478 = scalar_lea.vmem [#allocation1], 3
        %4479 = vst [vmem:[%s4478] ss:$4 sm:$0xff] %v4308
        %s4480 = scalar_lea.vmem [#allocation1], 32
        %4481 = vst [vmem:[%s4480] ss:$4 sm:$0xff] %v4309
        %s4482 = scalar_lea.vmem [#allocation1], 33
        %4483 = vst [vmem:[%s4482] ss:$4 sm:$0xff] %v4310
        %s4484 = scalar_lea.vmem [#allocation1], 34
        %4485 = vst [vmem:[%s4484] ss:$4 sm:$0xff] %v4311
        %s4486 = scalar_lea.vmem [#allocation1], 35
        %4487 = vst [vmem:[%s4486] ss:$4 sm:$0xff] %v4312
        %v4488 = vld.sshfl [vmem:[#allocation1] sm:$0xff pattern:$0x73625140]
        %v4489 = vld.sshfl [vmem:[#allocation1 + $0x20] sm:$0xff pattern:$0x73625140]
        %4490 = vst [vmem:[#allocation1] ss:$4 sm:$0xff] %v4305
        %4491 = vst [vmem:[%s4474] ss:$4 sm:$0xff] %v4306
        %4492 = vst [vmem:[%s4476] ss:$4 sm:$0xff] %v4307
        %4493 = vst [vmem:[%s4478] ss:$4 sm:$0xff] %v4308
        %4494 = vst [vmem:[%s4480] ss:$4 sm:$0xff] %v4309
        %4495 = vst [vmem:[%s4482] ss:$4 sm:$0xff] %v4310
        %4496 = vst [vmem:[%s4484] ss:$4 sm:$0xff] %v4311
        %4497 = vst [vmem:[%s4486] ss:$4 sm:$0xff] %v4312
        %v4498 = vld.sshfl [vmem:[#allocation1] sm:$0xff pattern:$0x73625140]
        %v4499 = vld.sshfl [vmem:[#allocation1 + $0x20] sm:$0xff pattern:$0x73625140]
        %4500 = vst [vmem:[#allocation1] ss:$4 sm:$0xff] %v4313
        %4501 = vst [vmem:[%s4474] ss:$4 sm:$0xff] %v4314
        %4502 = vst [vmem:[%s4476] ss:$4 sm:$0xff] %v4315
        %4503 = vst [vmem:[%s4478] ss:$4 sm:$0xff] %v4316
        %4504 = vst [vmem:[%s4480] ss:$4 sm:$0xff] %v4317
        %4505 = vst [vmem:[%s4482] ss:$4 sm:$0xff] %v4318
        %4506 = vst [vmem:[%s4484] ss:$4 sm:$0xff] %v4319
        %4507 = vst [vmem:[%s4486] ss:$4 sm:$0xff] %v4320
        %v4508 = vld.sshfl [vmem:[#allocation1] sm:$0xff pattern:$0x73625140]
        %v4509 = vld.sshfl [vmem:[#allocation1 + $0x20] sm:$0xff pattern:$0x73625140]
        %4510 = vst [vmem:[#allocation1] ss:$4 sm:$0xff] %v4313
        %4511 = vst [vmem:[%s4474] ss:$4 sm:$0xff] %v4314
        %4512 = vst [vmem:[%s4476] ss:$4 sm:$0xff] %v4315
        %4513 = vst [vmem:[%s4478] ss:$4 sm:$0xff] %v4316
        %4514 = vst [vmem:[%s4480] ss:$4 sm:$0xff] %v4317
        %4515 = vst [vmem:[%s4482] ss:$4 sm:$0xff] %v4318
        %4516 = vst [vmem:[%s4484] ss:$4 sm:$0xff] %v4319
        %4517 = vst [vmem:[%s4486] ss:$4 sm:$0xff] %v4320
        %v4518 = vld.sshfl [vmem:[#allocation1] sm:$0xff pattern:$0x73625140]
        %v4519 = vld.sshfl [vmem:[#allocation1 + $0x20] sm:$0xff pattern:$0x73625140]
        %4520 = vst [vmem:[#allocation1] ss:$4 sm:$0xff] %v4321
        %4521 = vst [vmem:[%s4474] ss:$4 sm:$0xff] %v4322
        %4522 = vst [vmem:[%s4476] ss:$4 sm:$0xff] %v4323
        %4523 = vst [vmem:[%s4478] ss:$4 sm:$0xff] %v4324
        %4524 = vst [vmem:[%s4480] ss:$4 sm:$0xff] %v4325
        %4525 = vst [vmem:[%s4482] ss:$4 sm:$0xff] %v4326
        %4526 = vst [vmem:[%s4484] ss:$4 sm:$0xff] %v4327
        %4527 = vst [vmem:[%s4486] ss:$4 sm:$0xff] %v4328
        %v4528 = vld.sshfl [vmem:[#allocation1] sm:$0xff pattern:$0x73625140]
        %v4529 = vld.sshfl [vmem:[#allocation1 + $0x20] sm:$0xff pattern:$0x73625140]
        %4530 = vst [vmem:[#allocation1] ss:$4 sm:$0xff] %v4321
        %4531 = vst [vmem:[%s4474] ss:$4 sm:$0xff] %v4322
        %4532 = vst [vmem:[%s4476] ss:$4 sm:$0xff] %v4323
        %4533 = vst [vmem:[%s4478] ss:$4 sm:$0xff] %v4324
        %4534 = vst [vmem:[%s4480] ss:$4 sm:$0xff] %v4325
        %4535 = vst [vmem:[%s4482] ss:$4 sm:$0xff] %v4326
        %4536 = vst [vmem:[%s4484] ss:$4 sm:$0xff] %v4327
        %4537 = vst [vmem:[%s4486] ss:$4 sm:$0xff] %v4328
        %v4538 = vld.sshfl [vmem:[#allocation1] sm:$0xff pattern:$0x73625140]
        %v4539 = vld.sshfl [vmem:[#allocation1 + $0x20] sm:$0xff pattern:$0x73625140]
        %4540 = vst [vmem:[#allocation1] ss:$4 sm:$0xff] %v4329
        %4541 = vst [vmem:[%s4474] ss:$4 sm:$0xff] %v4330
        %4542 = vst [vmem:[%s4476] ss:$4 sm:$0xff] %v4331
        %4543 = vst [vmem:[%s4478] ss:$4 sm:$0xff] %v4332
        %4544 = vst [vmem:[%s4480] ss:$4 sm:$0xff] %v4333
        %4545 = vst [vmem:[%s4482] ss:$4 sm:$0xff] %v4334
        %4546 = vst [vmem:[%s4484] ss:$4 sm:$0xff] %v4335
        %4547 = vst [vmem:[%s4486] ss:$4 sm:$0xff] %v4336
        %v4548 = vld.sshfl [vmem:[#allocation1] sm:$0xff pattern:$0x73625140]
        %v4549 = vld.sshfl [vmem:[#allocation1 + $0x20] sm:$0xff pattern:$0x73625140]
        %4550 = vst [vmem:[#allocation1] ss:$4 sm:$0xff] %v4329
        %4551 = vst [vmem:[%s4474] ss:$4 sm:$0xff] %v4330
        %4552 = vst [vmem:[%s4476] ss:$4 sm:$0xff] %v4331
        %4553 = vst [vmem:[%s4478] ss:$4 sm:$0xff] %v4332
        %4554 = vst [vmem:[%s4480] ss:$4 sm:$0xff] %v4333
        %4555 = vst [vmem:[%s4482] ss:$4 sm:$0xff] %v4334
        %4556 = vst [vmem:[%s4484] ss:$4 sm:$0xff] %v4335
        %4557 = vst [vmem:[%s4486] ss:$4 sm:$0xff] %v4336
        %v4558 = vld.sshfl [vmem:[#allocation1] sm:$0xff pattern:$0x73625140]
        %v4559 = vld.sshfl [vmem:[#allocation1 + $0x20] sm:$0xff pattern:$0x73625140]
        %4560 = vst [vmem:[#allocation1] ss:$4 sm:$0xff] %v4337
        %4561 = vst [vmem:[%s4474] ss:$4 sm:$0xff] %v4338
        %4562 = vst [vmem:[%s4476] ss:$4 sm:$0xff] %v4339
        %4563 = vst [vmem:[%s4478] ss:$4 sm:$0xff] %v4340
        %4564 = vst [vmem:[%s4480] ss:$4 sm:$0xff] %v4341
        %4565 = vst [vmem:[%s4482] ss:$4 sm:$0xff] %v4342
        %4566 = vst [vmem:[%s4484] ss:$4 sm:$0xff] %v4343
        %4567 = vst [vmem:[%s4486] ss:$4 sm:$0xff] %v4344
        %v4568 = vld.sshfl [vmem:[#allocation1] sm:$0xff pattern:$0x73625140]
        %v4569 = vld.sshfl [vmem:[#allocation1 + $0x20] sm:$0xff pattern:$0x73625140]
        %4570 = vst [vmem:[#allocation1] ss:$4 sm:$0xff] %v4337
        %4571 = vst [vmem:[%s4474] ss:$4 sm:$0xff] %v4338
        %4572 = vst [vmem:[%s4476] ss:$4 sm:$0xff] %v4339
        %4573 = vst [vmem:[%s4478] ss:$4 sm:$0xff] %v4340
        %4574 = vst [vmem:[%s4480] ss:$4 sm:$0xff] %v4341
        %4575 = vst [vmem:[%s4482] ss:$4 sm:$0xff] %v4342
        %4576 = vst [vmem:[%s4484] ss:$4 sm:$0xff] %v4343
        %4577 = vst [vmem:[%s4486] ss:$4 sm:$0xff] %v4344
        %v4578 = vld.sshfl [vmem:[#allocation1] sm:$0xff pattern:$0x73625140]
        %v4579 = vld.sshfl [vmem:[#allocation1 + $0x20] sm:$0xff pattern:$0x73625140]
        %4580 = vst [vmem:[#allocation1] ss:$4 sm:$0xff] %v4345
        %4581 = vst [vmem:[%s4474] ss:$4 sm:$0xff] %v4346
        %4582 = vst [vmem:[%s4476] ss:$4 sm:$0xff] %v4347
        %4583 = vst [vmem:[%s4478] ss:$4 sm:$0xff] %v4348
        %4584 = vst [vmem:[%s4480] ss:$4 sm:$0xff] %v4349
        %4585 = vst [vmem:[%s4482] ss:$4 sm:$0xff] %v4350
        %4586 = vst [vmem:[%s4484] ss:$4 sm:$0xff] %v4351
        %4587 = vst [vmem:[%s4486] ss:$4 sm:$0xff] %v4352
        %v4588 = vld.sshfl [vmem:[#allocation1] sm:$0xff pattern:$0x73625140]
        %v4589 = vld.sshfl [vmem:[#allocation1 + $0x20] sm:$0xff pattern:$0x73625140]
        %4590 = vst [vmem:[#allocation1] ss:$4 sm:$0xff] %v4345
        %4591 = vst [vmem:[%s4474] ss:$4 sm:$0xff] %v4346
        %4592 = vst [vmem:[%s4476] ss:$4 sm:$0xff] %v4347
        %4593 = vst [vmem:[%s4478] ss:$4 sm:$0xff] %v4348
        %4594 = vst [vmem:[%s4480] ss:$4 sm:$0xff] %v4349
        %4595 = vst [vmem:[%s4482] ss:$4 sm:$0xff] %v4350
        %4596 = vst [vmem:[%s4484] ss:$4 sm:$0xff] %v4351
        %4597 = vst [vmem:[%s4486] ss:$4 sm:$0xff] %v4352
        %v4598 = vld.sshfl [vmem:[#allocation1] sm:$0xff pattern:$0x73625140]
        %v4599 = vld.sshfl [vmem:[#allocation1 + $0x20] sm:$0xff pattern:$0x73625140]
        %4600 = vst [vmem:[#allocation1] ss:$4 sm:$0xff] %v4353
        %4601 = vst [vmem:[%s4474] ss:$4 sm:$0xff] %v4354
        %4602 = vst [vmem:[%s4476] ss:$4 sm:$0xff] %v4355
        %4603 = vst [vmem:[%s4478] ss:$4 sm:$0xff] %v4356
        %4604 = vst [vmem:[%s4480] ss:$4 sm:$0xff] %v4357
        %4605 = vst [vmem:[%s4482] ss:$4 sm:$0xff] %v4358
        %4606 = vst [vmem:[%s4484] ss:$4 sm:$0xff] %v4359
        %4607 = vst [vmem:[%s4486] ss:$4 sm:$0xff] %v4360
        %v4608 = vld.sshfl [vmem:[#allocation1] sm:$0xff pattern:$0x73625140]
        %v4609 = vld.sshfl [vmem:[#allocation1 + $0x20] sm:$0xff pattern:$0x73625140]
        %4610 = vst [vmem:[#allocation1] ss:$4 sm:$0xff] %v4353
        %4611 = vst [vmem:[%s4474] ss:$4 sm:$0xff] %v4354
        %4612 = vst [vmem:[%s4476] ss:$4 sm:$0xff] %v4355
        %4613 = vst [vmem:[%s4478] ss:$4 sm:$0xff] %v4356
        %4614 = vst [vmem:[%s4480] ss:$4 sm:$0xff] %v4357
        %4615 = vst [vmem:[%s4482] ss:$4 sm:$0xff] %v4358
        %4616 = vst [vmem:[%s4484] ss:$4 sm:$0xff] %v4359
        %4617 = vst [vmem:[%s4486] ss:$4 sm:$0xff] %v4360
        %v4618 = vld.sshfl [vmem:[#allocation1] sm:$0xff pattern:$0x73625140]
        %v4619 = vld.sshfl [vmem:[#allocation1 + $0x20] sm:$0xff pattern:$0x73625140]
        %4620 = vst [vmem:[#allocation1] ss:$4 sm:$0xff] %v4361
        %4621 = vst [vmem:[%s4474] ss:$4 sm:$0xff] %v4362
        %4622 = vst [vmem:[%s4476] ss:$4 sm:$0xff] %v4363
        %4623 = vst [vmem:[%s4478] ss:$4 sm:$0xff] %v4364
        %4624 = vst [vmem:[%s4480] ss:$4 sm:$0xff] %v4365
        %4625 = vst [vmem:[%s4482] ss:$4 sm:$0xff] %v4366
        %4626 = vst [vmem:[%s4484] ss:$4 sm:$0xff] %v4367
        %4627 = vst [vmem:[%s4486] ss:$4 sm:$0xff] %v4368
        %v4628 = vld.sshfl [vmem:[#allocation1] sm:$0xff pattern:$0x73625140]
        %v4629 = vld.sshfl [vmem:[#allocation1 + $0x20] sm:$0xff pattern:$0x73625140]
        %4630 = vst [vmem:[#allocation1] ss:$4 sm:$0xff] %v4361
        %4631 = vst [vmem:[%s4474] ss:$4 sm:$0xff] %v4362
        %4632 = vst [vmem:[%s4476] ss:$4 sm:$0xff] %v4363
        %4633 = vst [vmem:[%s4478] ss:$4 sm:$0xff] %v4364
        %4634 = vst [vmem:[%s4480] ss:$4 sm:$0xff] %v4365
        %4635 = vst [vmem:[%s4482] ss:$4 sm:$0xff] %v4366
        %4636 = vst [vmem:[%s4484] ss:$4 sm:$0xff] %v4367
        %4637 = vst [vmem:[%s4486] ss:$4 sm:$0xff] %v4368
        %v4638 = vld.sshfl [vmem:[#allocation1] sm:$0xff pattern:$0x73625140]
        %v4639 = vld.sshfl [vmem:[#allocation1 + $0x20] sm:$0xff pattern:$0x73625140]
        %v4672 = vpack.c.bf16 %v4488, %v4488
        %v4673 = vpack.c.bf16 %v4489, %v4489
        %v4674 = vpack.c.bf16 %v4498, %v4498
        %v4675 = vpack.c.bf16 %v4499, %v4499
        %v4676 = vpack.c.bf16 %v4508, %v4508
        %v4677 = vpack.c.bf16 %v4509, %v4509
        %v4678 = vpack.c.bf16 %v4518, %v4518
        %v4679 = vpack.c.bf16 %v4519, %v4519
        %v4680 = vpack.c.bf16 %v4528, %v4528
        %v4681 = vpack.c.bf16 %v4529, %v4529
        %v4682 = vpack.c.bf16 %v4538, %v4538
        %v4683 = vpack.c.bf16 %v4539, %v4539
        %v4684 = vpack.c.bf16 %v4548, %v4548
        %v4685 = vpack.c.bf16 %v4549, %v4549
        %v4686 = vpack.c.bf16 %v4558, %v4558
        %v4687 = vpack.c.bf16 %v4559, %v4559
        %v4688 = vpack.c.bf16 %v4568, %v4568
        %v4689 = vpack.c.bf16 %v4569, %v4569
        %v4690 = vpack.c.bf16 %v4578, %v4578
        %v4691 = vpack.c.bf16 %v4579, %v4579
        %v4692 = vpack.c.bf16 %v4588, %v4588
        %v4693 = vpack.c.bf16 %v4589, %v4589
        %v4694 = vpack.c.bf16 %v4598, %v4598
        %v4695 = vpack.c.bf16 %v4599, %v4599
        %v4696 = vpack.c.bf16 %v4608, %v4608
        %v4697 = vpack.c.bf16 %v4609, %v4609
        %v4698 = vpack.c.bf16 %v4618, %v4618
        %v4699 = vpack.c.bf16 %v4619, %v4619
        %v4700 = vpack.c.bf16 %v4628, %v4628
        %v4701 = vpack.c.bf16 %v4629, %v4629
        %v4702 = vpack.c.bf16 %v4638, %v4638
        %v4703 = vpack.c.bf16 %v4639, %v4639
        %vm4704 = vsmask.f32 4368
        %vm4705 = vmor %vm1867, %vm4704
        %v4707 = vshrl.u32 %v4672, 16
        %v4709 = vrot.slane %v4707, 7
        %v4710 = vshll.u32 %v4672, 16
        %v4712 = vor.u32 %v4709, %v4710
        %v4713 = vrot.slane %v4709, 4
        %v4715 = vshrl.u32 %v4673, 16
        %v4717 = vrot.slane %v4715, 7
        %v4718 = vshll.u32 %v4673, 16
        %v4720 = vor.u32 %v4717, %v4718
        %v4721 = vsel %vm4705, %v4713, %v4720
        %v4722 = vrot.slane %v4717, 4
        %v4724 = vshrl.u32 %v4674, 16
        %v4726 = vrot.slane %v4724, 7
        %v4727 = vshll.u32 %v4674, 16
        %v4729 = vor.u32 %v4726, %v4727
        %v4730 = vrot.slane %v4726, 4
        %v4732 = vshrl.u32 %v4675, 16
        %v4734 = vrot.slane %v4732, 7
        %v4735 = vshll.u32 %v4675, 16
        %v4737 = vor.u32 %v4734, %v4735
        %v4738 = vsel %vm4705, %v4730, %v4737
        %v4739 = vrot.slane %v4734, 4
        %v4741 = vshrl.u32 %v4676, 16
        %v4743 = vrot.slane %v4741, 7
        %v4744 = vshll.u32 %v4676, 16
        %v4746 = vor.u32 %v4743, %v4744
        %v4747 = vrot.slane %v4743, 4
        %v4749 = vshrl.u32 %v4677, 16
        %v4751 = vrot.slane %v4749, 7
        %v4752 = vshll.u32 %v4677, 16
        %v4754 = vor.u32 %v4751, %v4752
        %v4755 = vsel %vm4705, %v4747, %v4754
        %v4756 = vrot.slane %v4751, 4
        %v4758 = vshrl.u32 %v4678, 16
        %v4760 = vrot.slane %v4758, 7
        %v4761 = vshll.u32 %v4678, 16
        %v4763 = vor.u32 %v4760, %v4761
        %v4764 = vrot.slane %v4760, 4
        %v4766 = vshrl.u32 %v4679, 16
        %v4768 = vrot.slane %v4766, 7
        %v4769 = vshll.u32 %v4679, 16
        %v4771 = vor.u32 %v4768, %v4769
        %v4772 = vsel %vm4705, %v4764, %v4771
        %v4773 = vrot.slane %v4768, 4
        %v4775 = vshrl.u32 %v4680, 16
        %v4777 = vrot.slane %v4775, 7
        %v4778 = vshll.u32 %v4680, 16
        %v4780 = vor.u32 %v4777, %v4778
        %v4781 = vrot.slane %v4777, 4
        %v4783 = vshrl.u32 %v4681, 16
        %v4785 = vrot.slane %v4783, 7
        %v4786 = vshll.u32 %v4681, 16
        %v4788 = vor.u32 %v4785, %v4786
        %v4789 = vsel %vm4705, %v4781, %v4788
        %v4790 = vrot.slane %v4785, 4
        %v4792 = vshrl.u32 %v4682, 16
        %v4794 = vrot.slane %v4792, 7
        %v4795 = vshll.u32 %v4682, 16
        %v4797 = vor.u32 %v4794, %v4795
        %v4798 = vrot.slane %v4794, 4
        %v4800 = vshrl.u32 %v4683, 16
        %v4802 = vrot.slane %v4800, 7
        %v4803 = vshll.u32 %v4683, 16
        %v4805 = vor.u32 %v4802, %v4803
        %v4806 = vsel %vm4705, %v4798, %v4805
        %v4807 = vrot.slane %v4802, 4
        %v4809 = vshrl.u32 %v4684, 16
        %v4811 = vrot.slane %v4809, 7
        %v4812 = vshll.u32 %v4684, 16
        %v4814 = vor.u32 %v4811, %v4812
        %v4815 = vrot.slane %v4811, 4
        %v4817 = vshrl.u32 %v4685, 16
        %v4819 = vrot.slane %v4817, 7
        %v4820 = vshll.u32 %v4685, 16
        %v4822 = vor.u32 %v4819, %v4820
        %v4823 = vsel %vm4705, %v4815, %v4822
        %v4824 = vrot.slane %v4819, 4
        %v4826 = vshrl.u32 %v4686, 16
        %v4828 = vrot.slane %v4826, 7
        %v4829 = vshll.u32 %v4686, 16
        %v4831 = vor.u32 %v4828, %v4829
        %v4832 = vrot.slane %v4828, 4
        %v4834 = vshrl.u32 %v4687, 16
        %v4836 = vrot.slane %v4834, 7
        %v4837 = vshll.u32 %v4687, 16
        %v4839 = vor.u32 %v4836, %v4837
        %v4840 = vsel %vm4705, %v4832, %v4839
        %v4841 = vrot.slane %v4836, 4
        %v4843 = vshrl.u32 %v4688, 16
        %v4845 = vrot.slane %v4843, 7
        %v4846 = vshll.u32 %v4688, 16
        %v4848 = vor.u32 %v4845, %v4846
        %v4849 = vrot.slane %v4845, 4
        %v4851 = vshrl.u32 %v4689, 16
        %v4853 = vrot.slane %v4851, 7
        %v4854 = vshll.u32 %v4689, 16
        %v4856 = vor.u32 %v4853, %v4854
        %v4857 = vsel %vm4705, %v4849, %v4856
        %v4858 = vrot.slane %v4853, 4
        %v4860 = vshrl.u32 %v4690, 16
        %v4862 = vrot.slane %v4860, 7
        %v4863 = vshll.u32 %v4690, 16
        %v4865 = vor.u32 %v4862, %v4863
        %v4866 = vrot.slane %v4862, 4
        %v4868 = vshrl.u32 %v4691, 16
        %v4870 = vrot.slane %v4868, 7
        %v4871 = vshll.u32 %v4691, 16
        %v4873 = vor.u32 %v4870, %v4871
        %v4874 = vsel %vm4705, %v4866, %v4873
        %v4875 = vrot.slane %v4870, 4
        %v4877 = vshrl.u32 %v4692, 16
        %v4879 = vrot.slane %v4877, 7
        %v4880 = vshll.u32 %v4692, 16
        %v4882 = vor.u32 %v4879, %v4880
        %v4883 = vrot.slane %v4879, 4
        %v4885 = vshrl.u32 %v4693, 16
        %v4887 = vrot.slane %v4885, 7
        %v4888 = vshll.u32 %v4693, 16
        %v4890 = vor.u32 %v4887, %v4888
        %v4891 = vsel %vm4705, %v4883, %v4890
        %v4892 = vrot.slane %v4887, 4
        %v4894 = vshrl.u32 %v4694, 16
        %v4896 = vrot.slane %v4894, 7
        %v4897 = vshll.u32 %v4694, 16
        %v4899 = vor.u32 %v4896, %v4897
        %v4900 = vrot.slane %v4896, 4
        %v4902 = vshrl.u32 %v4695, 16
        %v4904 = vrot.slane %v4902, 7
        %v4905 = vshll.u32 %v4695, 16
        %v4907 = vor.u32 %v4904, %v4905
        %v4908 = vsel %vm4705, %v4900, %v4907
        %v4909 = vrot.slane %v4904, 4
        %v4911 = vshrl.u32 %v4696, 16
        %v4913 = vrot.slane %v4911, 7
        %v4914 = vshll.u32 %v4696, 16
        %v4916 = vor.u32 %v4913, %v4914
        %v4917 = vrot.slane %v4913, 4
        %v4919 = vshrl.u32 %v4697, 16
        %v4921 = vrot.slane %v4919, 7
        %v4922 = vshll.u32 %v4697, 16
        %v4924 = vor.u32 %v4921, %v4922
        %v4925 = vsel %vm4705, %v4917, %v4924
        %v4926 = vrot.slane %v4921, 4
        %v4928 = vshrl.u32 %v4698, 16
        %v4930 = vrot.slane %v4928, 7
        %v4931 = vshll.u32 %v4698, 16
        %v4933 = vor.u32 %v4930, %v4931
        %v4934 = vrot.slane %v4930, 4
        %v4936 = vshrl.u32 %v4699, 16
        %v4938 = vrot.slane %v4936, 7
        %v4939 = vshll.u32 %v4699, 16
        %v4941 = vor.u32 %v4938, %v4939
        %v4942 = vsel %vm4705, %v4934, %v4941
        %v4943 = vrot.slane %v4938, 4
        %v4945 = vshrl.u32 %v4700, 16
        %v4947 = vrot.slane %v4945, 7
        %v4948 = vshll.u32 %v4700, 16
        %v4950 = vor.u32 %v4947, %v4948
        %v4951 = vrot.slane %v4947, 4
        %v4953 = vshrl.u32 %v4701, 16
        %v4955 = vrot.slane %v4953, 7
        %v4956 = vshll.u32 %v4701, 16
        %v4958 = vor.u32 %v4955, %v4956
        %v4959 = vsel %vm4705, %v4951, %v4958
        %v4960 = vrot.slane %v4955, 4
        %v4962 = vshrl.u32 %v4702, 16
        %v4964 = vrot.slane %v4962, 7
        %v4965 = vshll.u32 %v4702, 16
        %v4967 = vor.u32 %v4964, %v4965
        %v4968 = vrot.slane %v4964, 4
        %v4970 = vshrl.u32 %v4703, 16
        %v4972 = vrot.slane %v4970, 7
        %v4973 = vshll.u32 %v4703, 16
        %v4975 = vor.u32 %v4972, %v4973
        %v4976 = vsel %vm4705, %v4968, %v4975
        %v4977 = vrot.slane %v4972, 4
        %v5026 = vld [vmem:[%s4376] sm:$0xf]
        %v5027 = vsel %vm3119, %v4712, %v5026
        %5028 = vst [vmem:[%s4376] sm:$0xf] %v5027
        %5029 = vst [vmem:[%s4376 + $0x4] sm:$0xf] %v4721
        %v5030 = vld [vmem:[%s4376 + $0x8] sm:$0x1]
        %v5031 = vsel %vm1868, %v4722, %v5030
        %5032 = vst [vmem:[%s4376 + $0x8] sm:$0x1] %v5031
        %v5033 = vld [vmem:[%s4376 + $0xc] sm:$0xf]
        %v5034 = vsel %vm3119, %v4729, %v5033
        %5035 = vst [vmem:[%s4376 + $0xc] sm:$0xf] %v5034
        %5036 = vst [vmem:[%s4376 + $0x10] sm:$0xf] %v4738
        %v5037 = vld [vmem:[%s4376 + $0x14] sm:$0x1]
        %v5038 = vsel %vm1868, %v4739, %v5037
        %5039 = vst [vmem:[%s4376 + $0x14] sm:$0x1] %v5038
        %v5040 = vld [vmem:[%s4376 + $0x18] sm:$0xf]
        %v5041 = vsel %vm3119, %v4746, %v5040
        %5042 = vst [vmem:[%s4376 + $0x18] sm:$0xf] %v5041
        %5043 = vst [vmem:[%s4376 + $0x1c] sm:$0xf] %v4755
        %v5044 = vld [vmem:[%s4376 + $0x20] sm:$0x1]
        %v5045 = vsel %vm1868, %v4756, %v5044
        %5046 = vst [vmem:[%s4376 + $0x20] sm:$0x1] %v5045
        %v5047 = vld [vmem:[%s4376 + $0x24] sm:$0xf]
        %v5048 = vsel %vm3119, %v4763, %v5047
        %5049 = vst [vmem:[%s4376 + $0x24] sm:$0xf] %v5048
        %5050 = vst [vmem:[%s4376 + $0x28] sm:$0xf] %v4772
        %v5051 = vld [vmem:[%s4376 + $0x2c] sm:$0x1]
        %v5052 = vsel %vm1868, %v4773, %v5051
        %5053 = vst [vmem:[%s4376 + $0x2c] sm:$0x1] %v5052
        %v5054 = vld [vmem:[%s4376 + $0x30] sm:$0xf]
        %v5055 = vsel %vm3119, %v4780, %v5054
        %5056 = vst [vmem:[%s4376 + $0x30] sm:$0xf] %v5055
        %5057 = vst [vmem:[%s4376 + $0x34] sm:$0xf] %v4789
        %v5058 = vld [vmem:[%s4376 + $0x38] sm:$0x1]
        %v5059 = vsel %vm1868, %v4790, %v5058
        %5060 = vst [vmem:[%s4376 + $0x38] sm:$0x1] %v5059
        %v5061 = vld [vmem:[%s4376 + $0x3c] sm:$0xf]
        %v5062 = vsel %vm3119, %v4797, %v5061
        %5063 = vst [vmem:[%s4376 + $0x3c] sm:$0xf] %v5062
        %5064 = vst [vmem:[%s4376 + $0x40] sm:$0xf] %v4806
        %v5065 = vld [vmem:[%s4376 + $0x44] sm:$0x1]
        %v5066 = vsel %vm1868, %v4807, %v5065
        %5067 = vst [vmem:[%s4376 + $0x44] sm:$0x1] %v5066
        %v5068 = vld [vmem:[%s4376 + $0x48] sm:$0xf]
        %v5069 = vsel %vm3119, %v4814, %v5068
        %5070 = vst [vmem:[%s4376 + $0x48] sm:$0xf] %v5069
        %5071 = vst [vmem:[%s4376 + $0x4c] sm:$0xf] %v4823
        %v5072 = vld [vmem:[%s4376 + $0x50] sm:$0x1]
        %v5073 = vsel %vm1868, %v4824, %v5072
        %5074 = vst [vmem:[%s4376 + $0x50] sm:$0x1] %v5073
        %v5075 = vld [vmem:[%s4376 + $0x54] sm:$0xf]
        %v5076 = vsel %vm3119, %v4831, %v5075
        %5077 = vst [vmem:[%s4376 + $0x54] sm:$0xf] %v5076
        %5078 = vst [vmem:[%s4376 + $0x58] sm:$0xf] %v4840
        %v5079 = vld [vmem:[%s4376 + $0x5c] sm:$0x1]
        %v5080 = vsel %vm1868, %v4841, %v5079
        %5081 = vst [vmem:[%s4376 + $0x5c] sm:$0x1] %v5080
        %v5082 = vld [vmem:[%s4376 + $0x60] sm:$0xf]
        %v5083 = vsel %vm3119, %v4848, %v5082
        %5084 = vst [vmem:[%s4376 + $0x60] sm:$0xf] %v5083
        %5085 = vst [vmem:[%s4376 + $0x64] sm:$0xf] %v4857
        %v5086 = vld [vmem:[%s4376 + $0x68] sm:$0x1]
        %v5087 = vsel %vm1868, %v4858, %v5086
        %5088 = vst [vmem:[%s4376 + $0x68] sm:$0x1] %v5087
        %v5089 = vld [vmem:[%s4376 + $0x6c] sm:$0xf]
        %v5090 = vsel %vm3119, %v4865, %v5089
        %5091 = vst [vmem:[%s4376 + $0x6c] sm:$0xf] %v5090
        %5092 = vst [vmem:[%s4376 + $0x70] sm:$0xf] %v4874
        %v5093 = vld [vmem:[%s4376 + $0x74] sm:$0x1]
        %v5094 = vsel %vm1868, %v4875, %v5093
        %5095 = vst [vmem:[%s4376 + $0x74] sm:$0x1] %v5094
        %v5096 = vld [vmem:[%s4376 + $0x78] sm:$0xf]
        %v5097 = vsel %vm3119, %v4882, %v5096
        %5098 = vst [vmem:[%s4376 + $0x78] sm:$0xf] %v5097
        %5099 = vst [vmem:[%s4376 + $0x7c] sm:$0xf] %v4891
        %v5100 = vld [vmem:[%s4376 + $0x80] sm:$0x1]
        %v5101 = vsel %vm1868, %v4892, %v5100
        %5102 = vst [vmem:[%s4376 + $0x80] sm:$0x1] %v5101
        %v5103 = vld [vmem:[%s4376 + $0x84] sm:$0xf]
        %v5104 = vsel %vm3119, %v4899, %v5103
        %5105 = vst [vmem:[%s4376 + $0x84] sm:$0xf] %v5104
        %5106 = vst [vmem:[%s4376 + $0x88] sm:$0xf] %v4908
        %v5107 = vld [vmem:[%s4376 + $0x8c] sm:$0x1]
        %v5108 = vsel %vm1868, %v4909, %v5107
        %5109 = vst [vmem:[%s4376 + $0x8c] sm:$0x1] %v5108
        %v5110 = vld [vmem:[%s4376 + $0x90] sm:$0xf]
        %v5111 = vsel %vm3119, %v4916, %v5110
        %5112 = vst [vmem:[%s4376 + $0x90] sm:$0xf] %v5111
        %5113 = vst [vmem:[%s4376 + $0x94] sm:$0xf] %v4925
        %v5114 = vld [vmem:[%s4376 + $0x98] sm:$0x1]
        %v5115 = vsel %vm1868, %v4926, %v5114
        %5116 = vst [vmem:[%s4376 + $0x98] sm:$0x1] %v5115
        %v5117 = vld [vmem:[%s4376 + $0x9c] sm:$0xf]
        %v5118 = vsel %vm3119, %v4933, %v5117
        %5119 = vst [vmem:[%s4376 + $0x9c] sm:$0xf] %v5118
        %5120 = vst [vmem:[%s4376 + $0xa0] sm:$0xf] %v4942
        %v5121 = vld [vmem:[%s4376 + $0xa4] sm:$0x1]
        %v5122 = vsel %vm1868, %v4943, %v5121
        %5123 = vst [vmem:[%s4376 + $0xa4] sm:$0x1] %v5122
        %v5124 = vld [vmem:[%s4376 + $0xa8] sm:$0xf]
        %v5125 = vsel %vm3119, %v4950, %v5124
        %5126 = vst [vmem:[%s4376 + $0xa8] sm:$0xf] %v5125
        %5127 = vst [vmem:[%s4376 + $0xac] sm:$0xf] %v4959
        %v5128 = vld [vmem:[%s4376 + $0xb0] sm:$0x1]
        %v5129 = vsel %vm1868, %v4960, %v5128
        %5130 = vst [vmem:[%s4376 + $0xb0] sm:$0x1] %v5129
        %v5131 = vld [vmem:[%s4376 + $0xb4] sm:$0xf]
        %v5132 = vsel %vm3119, %v4967, %v5131
        %5133 = vst [vmem:[%s4376 + $0xb4] sm:$0xf] %v5132
        %5134 = vst [vmem:[%s4376 + $0xb8] sm:$0xf] %v4976
        %v5135 = vld [vmem:[%s4376 + $0xbc] sm:$0x1]
        %v5136 = vsel %vm1868, %v4977, %v5135
        %5137 = vst [vmem:[%s4376 + $0xbc] sm:$0x1] %v5136
        %v5138 = vld [vmem:[#allocation5] sm:$0xf]
        %v5139 = vld [vmem:[#allocation5 + $0x4] sm:$0xf]
        %v5140 = vld [vmem:[#allocation5 + $0x8] sm:$0x1]
        %v5141 = vld [vmem:[#allocation5 + $0xc] sm:$0xf]
        %v5142 = vld [vmem:[#allocation5 + $0x10] sm:$0xf]
        %v5143 = vld [vmem:[#allocation5 + $0x14] sm:$0x1]
        %v5144 = vld [vmem:[#allocation5 + $0x18] sm:$0xf]
        %v5145 = vld [vmem:[#allocation5 + $0x1c] sm:$0xf]
        %v5146 = vld [vmem:[#allocation5 + $0x20] sm:$0x1]
        %v5147 = vld [vmem:[#allocation5 + $0x24] sm:$0xf]
        %v5148 = vld [vmem:[#allocation5 + $0x28] sm:$0xf]
        %v5149 = vld [vmem:[#allocation5 + $0x2c] sm:$0x1]
        %v5150 = vld [vmem:[#allocation5 + $0x30] sm:$0xf]
        %v5151 = vld [vmem:[#allocation5 + $0x34] sm:$0xf]
        %v5152 = vld [vmem:[#allocation5 + $0x38] sm:$0x1]
        %v5153 = vld [vmem:[#allocation5 + $0x3c] sm:$0xf]
        %v5154 = vld [vmem:[#allocation5 + $0x40] sm:$0xf]
        %v5155 = vld [vmem:[#allocation5 + $0x44] sm:$0x1]
        %v5156 = vld [vmem:[#allocation5 + $0x48] sm:$0xf]
        %v5157 = vld [vmem:[#allocation5 + $0x4c] sm:$0xf]
        %v5158 = vld [vmem:[#allocation5 + $0x50] sm:$0x1]
        %v5159 = vld [vmem:[#allocation5 + $0x54] sm:$0xf]
        %v5160 = vld [vmem:[#allocation5 + $0x58] sm:$0xf]
        %v5161 = vld [vmem:[#allocation5 + $0x5c] sm:$0x1]
        %v5162 = vld [vmem:[#allocation5 + $0x60] sm:$0xf]
        %v5163 = vld [vmem:[#allocation5 + $0x64] sm:$0xf]
        %v5164 = vld [vmem:[#allocation5 + $0x68] sm:$0x1]
        %v5165 = vld [vmem:[#allocation5 + $0x6c] sm:$0xf]
        %v5166 = vld [vmem:[#allocation5 + $0x70] sm:$0xf]
        %v5167 = vld [vmem:[#allocation5 + $0x74] sm:$0x1]
        %v5168 = vld [vmem:[#allocation5 + $0x78] sm:$0xf]
        %v5169 = vld [vmem:[#allocation5 + $0x7c] sm:$0xf]
        %v5170 = vld [vmem:[#allocation5 + $0x80] sm:$0x1]
        %v5171 = vld [vmem:[#allocation5 + $0x84] sm:$0xf]
        %v5172 = vld [vmem:[#allocation5 + $0x88] sm:$0xf]
        %v5173 = vld [vmem:[#allocation5 + $0x8c] sm:$0x1]
        %v5174 = vld [vmem:[#allocation5 + $0x90] sm:$0xf]
        %v5175 = vld [vmem:[#allocation5 + $0x94] sm:$0xf]
        %v5176 = vld [vmem:[#allocation5 + $0x98] sm:$0x1]
        %v5177 = vld [vmem:[#allocation5 + $0x9c] sm:$0xf]
        %v5178 = vld [vmem:[#allocation5 + $0xa0] sm:$0xf]
        %v5179 = vld [vmem:[#allocation5 + $0xa4] sm:$0x1]
        %v5180 = vld [vmem:[#allocation5 + $0xa8] sm:$0xf]
        %v5181 = vld [vmem:[#allocation5 + $0xac] sm:$0xf]
        %v5182 = vld [vmem:[#allocation5 + $0xb0] sm:$0x1]
        %v5183 = vld [vmem:[#allocation5 + $0xb4] sm:$0xf]
        %v5184 = vld [vmem:[#allocation5 + $0xb8] sm:$0xf]
        %v5185 = vld [vmem:[#allocation5 + $0xbc] sm:$0x1]
        %v5186 = vld [vmem:[#allocation5 + $0xc0] sm:$0xf]
        %v5187 = vld [vmem:[#allocation5 + $0xc4] sm:$0xf]
        %v5188 = vld [vmem:[#allocation5 + $0xc8] sm:$0x1]
        %v5189 = vld [vmem:[#allocation5 + $0xcc] sm:$0xf]
        %v5190 = vld [vmem:[#allocation5 + $0xd0] sm:$0xf]
        %v5191 = vld [vmem:[#allocation5 + $0xd4] sm:$0x1]
        %v5228 = vunpack.c.l.b16 %v5138
        %v5229 = vunpack.c.l.b16 %v5139
        %v5230 = vunpack.c.l.b16 %v5141
        %v5231 = vunpack.c.l.b16 %v5142
        %v5232 = vunpack.c.l.b16 %v5144
        %v5233 = vunpack.c.l.b16 %v5145
        %v5234 = vunpack.c.l.b16 %v5147
        %v5235 = vunpack.c.l.b16 %v5148
        %v5236 = vunpack.c.l.b16 %v5150
        %v5237 = vunpack.c.l.b16 %v5151
        %v5238 = vunpack.c.l.b16 %v5153
        %v5239 = vunpack.c.l.b16 %v5154
        %v5240 = vunpack.c.l.b16 %v5156
        %v5241 = vunpack.c.l.b16 %v5157
        %v5242 = vunpack.c.l.b16 %v5159
        %v5243 = vunpack.c.l.b16 %v5160
        %v5244 = vunpack.c.l.b16 %v5162
        %v5245 = vunpack.c.l.b16 %v5163
        %v5246 = vunpack.c.l.b16 %v5165
        %v5247 = vunpack.c.l.b16 %v5166
        %v5248 = vunpack.c.l.b16 %v5168
        %v5249 = vunpack.c.l.b16 %v5169
        %v5250 = vunpack.c.l.b16 %v5171
        %v5251 = vunpack.c.l.b16 %v5172
        %v5252 = vunpack.c.l.b16 %v5174
        %v5253 = vunpack.c.l.b16 %v5175
        %v5254 = vunpack.c.l.b16 %v5177
        %v5255 = vunpack.c.l.b16 %v5178
        %v5256 = vunpack.c.l.b16 %v5180
        %v5257 = vunpack.c.l.b16 %v5181
        %v5258 = vunpack.c.l.b16 %v5183
        %v5259 = vunpack.c.l.b16 %v5184
        %v5260 = vunpack.c.l.b16 %v5186
        %v5261 = vunpack.c.l.b16 %v5187
        %v5262 = vunpack.c.l.b16 %v5189
        %v5263 = vunpack.c.l.b16 %v5190
        %v5264 = vpack.c.b16 %v5229, %v5228
        %v5265 = vpack.c.b16 %v5231, %v5230
        %v5266 = vpack.c.b16 %v5233, %v5232
        %v5267 = vpack.c.b16 %v5235, %v5234
        %v5268 = vpack.c.b16 %v5237, %v5236
        %v5269 = vpack.c.b16 %v5239, %v5238
        %v5270 = vpack.c.b16 %v5241, %v5240
        %v5271 = vpack.c.b16 %v5243, %v5242
        %v5272 = vpack.c.b16 %v5245, %v5244
        %v5273 = vpack.c.b16 %v5247, %v5246
        %v5274 = vpack.c.b16 %v5249, %v5248
        %v5275 = vpack.c.b16 %v5251, %v5250
        %v5276 = vpack.c.b16 %v5253, %v5252
        %v5277 = vpack.c.b16 %v5255, %v5254
        %v5278 = vpack.c.b16 %v5257, %v5256
        %v5279 = vpack.c.b16 %v5259, %v5258
        %v5280 = vpack.c.b16 %v5261, %v5260
        %v5281 = vpack.c.b16 %v5263, %v5262
        %v5318 = vunpack.c.l.b16 %v5140
        %v5319 = vunpack.c.l.b16 %v5143
        %v5320 = vunpack.c.l.b16 %v5146
        %v5321 = vunpack.c.l.b16 %v5149
        %v5322 = vunpack.c.l.b16 %v5152
        %v5323 = vunpack.c.l.b16 %v5155
        %v5324 = vunpack.c.l.b16 %v5158
        %v5325 = vunpack.c.l.b16 %v5161
        %v5326 = vunpack.c.l.b16 %v5164
        %v5327 = vunpack.c.l.b16 %v5167
        %v5328 = vunpack.c.l.b16 %v5170
        %v5329 = vunpack.c.l.b16 %v5173
        %v5330 = vunpack.c.l.b16 %v5176
        %v5331 = vunpack.c.l.b16 %v5179
        %v5332 = vunpack.c.l.b16 %v5182
        %v5333 = vunpack.c.l.b16 %v5185
        %v5334 = vunpack.c.l.b16 %v5188
        %v5335 = vunpack.c.l.b16 %v5191
        %v5336 = vpack.c.b16 %v5318, %v5318
        %v5337 = vpack.c.b16 %v5319, %v5319
        %v5338 = vpack.c.b16 %v5320, %v5320
        %v5339 = vpack.c.b16 %v5321, %v5321
        %v5340 = vpack.c.b16 %v5322, %v5322
        %v5341 = vpack.c.b16 %v5323, %v5323
        %v5342 = vpack.c.b16 %v5324, %v5324
        %v5343 = vpack.c.b16 %v5325, %v5325
        %v5344 = vpack.c.b16 %v5326, %v5326
        %v5345 = vpack.c.b16 %v5327, %v5327
        %v5346 = vpack.c.b16 %v5328, %v5328
        %v5347 = vpack.c.b16 %v5329, %v5329
        %v5348 = vpack.c.b16 %v5330, %v5330
        %v5349 = vpack.c.b16 %v5331, %v5331
        %v5350 = vpack.c.b16 %v5332, %v5332
        %v5351 = vpack.c.b16 %v5333, %v5333
        %v5352 = vpack.c.b16 %v5334, %v5334
        %v5353 = vpack.c.b16 %v5335, %v5335
        %vm5354 = vsmask.f32 7424
        %v5356 = vshrl.u32 %v5264, 16
        %v5358 = vshll.u32 %v5264, 16
        %v5360 = vrot.slane %v5358, 1
        %v5361 = vor.u32 %v5356, %v5360
        %v5363 = vshll.u32 %v5336, 16
        %v5365 = vrot.slane %v5363, 1
        %v5366 = vsel %vm5354, %v5361, %v5365
        %v5368 = vshrl.u32 %v5265, 16
        %v5370 = vshll.u32 %v5265, 16
        %v5372 = vrot.slane %v5370, 1
        %v5373 = vor.u32 %v5368, %v5372
        %v5375 = vshll.u32 %v5337, 16
        %v5377 = vrot.slane %v5375, 1
        %v5378 = vsel %vm5354, %v5373, %v5377
        %v5380 = vshrl.u32 %v5266, 16
        %v5382 = vshll.u32 %v5266, 16
        %v5384 = vrot.slane %v5382, 1
        %v5385 = vor.u32 %v5380, %v5384
        %v5387 = vshll.u32 %v5338, 16
        %v5389 = vrot.slane %v5387, 1
        %v5390 = vsel %vm5354, %v5385, %v5389
        %v5392 = vshrl.u32 %v5267, 16
        %v5394 = vshll.u32 %v5267, 16
        %v5396 = vrot.slane %v5394, 1
        %v5397 = vor.u32 %v5392, %v5396
        %v5399 = vshll.u32 %v5339, 16
        %v5401 = vrot.slane %v5399, 1
        %v5402 = vsel %vm5354, %v5397, %v5401
        %v5404 = vshrl.u32 %v5268, 16
        %v5406 = vshll.u32 %v5268, 16
        %v5408 = vrot.slane %v5406, 1
        %v5409 = vor.u32 %v5404, %v5408
        %v5411 = vshll.u32 %v5340, 16
        %v5413 = vrot.slane %v5411, 1
        %v5414 = vsel %vm5354, %v5409, %v5413
        %v5416 = vshrl.u32 %v5269, 16
        %v5418 = vshll.u32 %v5269, 16
        %v5420 = vrot.slane %v5418, 1
        %v5421 = vor.u32 %v5416, %v5420
        %v5423 = vshll.u32 %v5341, 16
        %v5425 = vrot.slane %v5423, 1
        %v5426 = vsel %vm5354, %v5421, %v5425
        %v5428 = vshrl.u32 %v5270, 16
        %v5430 = vshll.u32 %v5270, 16
        %v5432 = vrot.slane %v5430, 1
        %v5433 = vor.u32 %v5428, %v5432
        %v5435 = vshll.u32 %v5342, 16
        %v5437 = vrot.slane %v5435, 1
        %v5438 = vsel %vm5354, %v5433, %v5437
        %v5440 = vshrl.u32 %v5271, 16
        %v5442 = vshll.u32 %v5271, 16
        %v5444 = vrot.slane %v5442, 1
        %v5445 = vor.u32 %v5440, %v5444
        %v5447 = vshll.u32 %v5343, 16
        %v5449 = vrot.slane %v5447, 1
        %v5450 = vsel %vm5354, %v5445, %v5449
        %v5452 = vshrl.u32 %v5272, 16
        %v5454 = vshll.u32 %v5272, 16
        %v5456 = vrot.slane %v5454, 1
        %v5457 = vor.u32 %v5452, %v5456
        %v5459 = vshll.u32 %v5344, 16
        %v5461 = vrot.slane %v5459, 1
        %v5462 = vsel %vm5354, %v5457, %v5461
        %v5464 = vshrl.u32 %v5273, 16
        %v5466 = vshll.u32 %v5273, 16
        %v5468 = vrot.slane %v5466, 1
        %v5469 = vor.u32 %v5464, %v5468
        %v5471 = vshll.u32 %v5345, 16
        %v5473 = vrot.slane %v5471, 1
        %v5474 = vsel %vm5354, %v5469, %v5473
        %v5476 = vshrl.u32 %v5274, 16
        %v5478 = vshll.u32 %v5274, 16
        %v5480 = vrot.slane %v5478, 1
        %v5481 = vor.u32 %v5476, %v5480
        %v5483 = vshll.u32 %v5346, 16
        %v5485 = vrot.slane %v5483, 1
        %v5486 = vsel %vm5354, %v5481, %v5485
        %v5488 = vshrl.u32 %v5275, 16
        %v5490 = vshll.u32 %v5275, 16
        %v5492 = vrot.slane %v5490, 1
        %v5493 = vor.u32 %v5488, %v5492
        %v5495 = vshll.u32 %v5347, 16
        %v5497 = vrot.slane %v5495, 1
        %v5498 = vsel %vm5354, %v5493, %v5497
        %v5500 = vshrl.u32 %v5276, 16
        %v5502 = vshll.u32 %v5276, 16
        %v5504 = vrot.slane %v5502, 1
        %v5505 = vor.u32 %v5500, %v5504
        %v5507 = vshll.u32 %v5348, 16
        %v5509 = vrot.slane %v5507, 1
        %v5510 = vsel %vm5354, %v5505, %v5509
        %v5512 = vshrl.u32 %v5277, 16
        %v5514 = vshll.u32 %v5277, 16
        %v5516 = vrot.slane %v5514, 1
        %v5517 = vor.u32 %v5512, %v5516
        %v5519 = vshll.u32 %v5349, 16
        %v5521 = vrot.slane %v5519, 1
        %v5522 = vsel %vm5354, %v5517, %v5521
        %v5524 = vshrl.u32 %v5278, 16
        %v5526 = vshll.u32 %v5278, 16
        %v5528 = vrot.slane %v5526, 1
        %v5529 = vor.u32 %v5524, %v5528
        %v5531 = vshll.u32 %v5350, 16
        %v5533 = vrot.slane %v5531, 1
        %v5534 = vsel %vm5354, %v5529, %v5533
        %v5536 = vshrl.u32 %v5279, 16
        %v5538 = vshll.u32 %v5279, 16
        %v5540 = vrot.slane %v5538, 1
        %v5541 = vor.u32 %v5536, %v5540
        %v5543 = vshll.u32 %v5351, 16
        %v5545 = vrot.slane %v5543, 1
        %v5546 = vsel %vm5354, %v5541, %v5545
        %v5548 = vshrl.u32 %v5280, 16
        %v5550 = vshll.u32 %v5280, 16
        %v5552 = vrot.slane %v5550, 1
        %v5553 = vor.u32 %v5548, %v5552
        %v5555 = vshll.u32 %v5352, 16
        %v5557 = vrot.slane %v5555, 1
        %v5558 = vsel %vm5354, %v5553, %v5557
        %v5560 = vshrl.u32 %v5281, 16
        %v5562 = vshll.u32 %v5281, 16
        %v5564 = vrot.slane %v5562, 1
        %v5565 = vor.u32 %v5560, %v5564
        %v5567 = vshll.u32 %v5353, 16
        %v5569 = vrot.slane %v5567, 1
        %v5570 = vsel %vm5354, %v5565, %v5569
        %vm5589 = vcmask 1046528
        %v5590 = vrot.slane %v5264, 1
        %v5591 = vrot.slane %v5336, 1
        %v5592 = vsel %vm5589, %v5590, %v5591
        %v5593 = vrot.slane %v5265, 1
        %v5594 = vrot.slane %v5337, 1
        %v5595 = vsel %vm5589, %v5593, %v5594
        %v5596 = vrot.slane %v5266, 1
        %v5597 = vrot.slane %v5338, 1
        %v5598 = vsel %vm5589, %v5596, %v5597
        %v5599 = vrot.slane %v5267, 1
        %v5600 = vrot.slane %v5339, 1
        %v5601 = vsel %vm5589, %v5599, %v5600
        %v5602 = vrot.slane %v5268, 1
        %v5603 = vrot.slane %v5340, 1
        %v5604 = vsel %vm5589, %v5602, %v5603
        %v5605 = vrot.slane %v5269, 1
        %v5606 = vrot.slane %v5341, 1
        %v5607 = vsel %vm5589, %v5605, %v5606
        %v5608 = vrot.slane %v5270, 1
        %v5609 = vrot.slane %v5342, 1
        %v5610 = vsel %vm5589, %v5608, %v5609
        %v5611 = vrot.slane %v5271, 1
        %v5612 = vrot.slane %v5343, 1
        %v5613 = vsel %vm5589, %v5611, %v5612
        %v5614 = vrot.slane %v5272, 1
        %v5615 = vrot.slane %v5344, 1
        %v5616 = vsel %vm5589, %v5614, %v5615
        %v5617 = vrot.slane %v5273, 1
        %v5618 = vrot.slane %v5345, 1
        %v5619 = vsel %vm5589, %v5617, %v5618
        %v5620 = vrot.slane %v5274, 1
        %v5621 = vrot.slane %v5346, 1
        %v5622 = vsel %vm5589, %v5620, %v5621
        %v5623 = vrot.slane %v5275, 1
        %v5624 = vrot.slane %v5347, 1
        %v5625 = vsel %vm5589, %v5623, %v5624
        %v5626 = vrot.slane %v5276, 1
        %v5627 = vrot.slane %v5348, 1
        %v5628 = vsel %vm5589, %v5626, %v5627
        %v5629 = vrot.slane %v5277, 1
        %v5630 = vrot.slane %v5349, 1
        %v5631 = vsel %vm5589, %v5629, %v5630
        %v5632 = vrot.slane %v5278, 1
        %v5633 = vrot.slane %v5350, 1
        %v5634 = vsel %vm5589, %v5632, %v5633
        %v5635 = vrot.slane %v5279, 1
        %v5636 = vrot.slane %v5351, 1
        %v5637 = vsel %vm5589, %v5635, %v5636
        %v5638 = vrot.slane %v5280, 1
        %v5639 = vrot.slane %v5352, 1
        %v5640 = vsel %vm5589, %v5638, %v5639
        %v5641 = vrot.slane %v5281, 1
        %v5642 = vrot.slane %v5353, 1
        %v5643 = vsel %vm5589, %v5641, %v5642
        %v5662 = vld [vmem:[#allocation17] sm:$0xf]
        %v5663 = vld [vmem:[#allocation17 + $0x4] sm:$0xf]
        %v5664 = vld [vmem:[#allocation17 + $0x8] sm:$0xf]
        %v5665 = vld [vmem:[#allocation17 + $0xc] sm:$0xf]
        %v5666 = vld [vmem:[#allocation17 + $0x10] sm:$0xf]
        %v5667 = vld [vmem:[#allocation17 + $0x14] sm:$0xf]
        %v5668 = vld [vmem:[#allocation17 + $0x18] sm:$0xf]
        %v5669 = vld [vmem:[#allocation17 + $0x1c] sm:$0xf]
        %v5670 = vld [vmem:[#allocation17 + $0x20] sm:$0xf]
        %v5671 = vld [vmem:[#allocation17 + $0x24] sm:$0xf]
        %v5672 = vld [vmem:[#allocation17 + $0x28] sm:$0xf]
        %v5673 = vld [vmem:[#allocation17 + $0x2c] sm:$0xf]
        %v5674 = vld [vmem:[#allocation17 + $0x30] sm:$0xf]
        %v5675 = vld [vmem:[#allocation17 + $0x34] sm:$0xf]
        %v5676 = vld [vmem:[#allocation17 + $0x38] sm:$0xf]
        %v5677 = vld [vmem:[#allocation17 + $0x3c] sm:$0xf]
        %v5678 = vld [vmem:[#allocation17 + $0x40] sm:$0xf]
        %v5679 = vld [vmem:[#allocation17 + $0x44] sm:$0xf]
        %v5680 = vld [vmem:[#allocation17 + $0x48] sm:$0xf]
        %v5681 = vld [vmem:[#allocation17 + $0x4c] sm:$0xf]
        %v5682 = vld [vmem:[#allocation17 + $0x50] sm:$0xf]
        %v5683 = vld [vmem:[#allocation17 + $0x54] sm:$0xf]
        %v5684 = vld [vmem:[#allocation17 + $0x58] sm:$0xf]
        %v5685 = vld [vmem:[#allocation17 + $0x5c] sm:$0xf]
        %v5686 = vld [vmem:[#allocation17 + $0x60] sm:$0xf]
        %v5687 = vld [vmem:[#allocation17 + $0x64] sm:$0xf]
        %v5688 = vld [vmem:[#allocation17 + $0x68] sm:$0xf]
        %v5689 = vld [vmem:[#allocation17 + $0x6c] sm:$0xf]
        %v5690 = vld [vmem:[#allocation17 + $0x70] sm:$0xf]
        %v5691 = vld [vmem:[#allocation17 + $0x74] sm:$0xf]
        %v5692 = vld [vmem:[#allocation17 + $0x78] sm:$0xf]
        %v5693 = vld [vmem:[#allocation17 + $0x7c] sm:$0xf]
        %v5694 = vld [vmem:[#allocation17 + $0x80] sm:$0xf]
        %v5695 = vld [vmem:[#allocation17 + $0x84] sm:$0xf]
        %v5696 = vld [vmem:[#allocation17 + $0x88] sm:$0xf]
        %v5697 = vld [vmem:[#allocation17 + $0x8c] sm:$0xf]
        %v5698 = vld [vmem:[#allocation17 + $0x90] sm:$0xf]
        %v5699 = vld [vmem:[#allocation17 + $0x94] sm:$0xf]
        %v5700 = vld [vmem:[#allocation17 + $0x98] sm:$0xf]
        %v5701 = vld [vmem:[#allocation17 + $0x9c] sm:$0xf]
        %v5702 = vld [vmem:[#allocation17 + $0xa0] sm:$0xf]
        %v5703 = vld [vmem:[#allocation17 + $0xa4] sm:$0xf]
        %v5704 = vld [vmem:[#allocation17 + $0xa8] sm:$0xf]
        %v5705 = vld [vmem:[#allocation17 + $0xac] sm:$0xf]
        %v5706 = vld [vmem:[#allocation17 + $0xb0] sm:$0xf]
        %v5707 = vld [vmem:[#allocation17 + $0xb4] sm:$0xf]
        %v5708 = vld [vmem:[#allocation17 + $0xb8] sm:$0xf]
        %v5709 = vld [vmem:[#allocation17 + $0xbc] sm:$0xf]
        %v5710 = vld [vmem:[#allocation19] sm:$0x1]
        %v5712 = vperm.slane %v5710, 0
        %v5762 = vunpack.c.l.b16 %v5662
        %v5763 = vunpack.c.l.b16 %v5663
        %v5764 = vunpack.c.l.b16 %v5664
        %v5765 = vunpack.c.l.b16 %v5665
        %v5766 = vunpack.c.l.b16 %v5666
        %v5767 = vunpack.c.l.b16 %v5667
        %v5768 = vunpack.c.l.b16 %v5668
        %v5769 = vunpack.c.l.b16 %v5669
        %v5770 = vunpack.c.l.b16 %v5670
        %v5771 = vunpack.c.l.b16 %v5671
        %v5772 = vunpack.c.l.b16 %v5672
        %v5773 = vunpack.c.l.b16 %v5673
        %v5774 = vunpack.c.l.b16 %v5674
        %v5775 = vunpack.c.l.b16 %v5675
        %v5776 = vunpack.c.l.b16 %v5676
        %v5777 = vunpack.c.l.b16 %v5677
        %v5778 = vunpack.c.l.b16 %v5678
        %v5779 = vunpack.c.l.b16 %v5679
        %v5780 = vunpack.c.l.b16 %v5680
        %v5781 = vunpack.c.l.b16 %v5681
        %v5782 = vunpack.c.l.b16 %v5682
        %v5783 = vunpack.c.l.b16 %v5683
        %v5784 = vunpack.c.l.b16 %v5684
        %v5785 = vunpack.c.l.b16 %v5685
        %v5786 = vunpack.c.l.b16 %v5686
        %v5787 = vunpack.c.l.b16 %v5687
        %v5788 = vunpack.c.l.b16 %v5688
        %v5789 = vunpack.c.l.b16 %v5689
        %v5790 = vunpack.c.l.b16 %v5690
        %v5791 = vunpack.c.l.b16 %v5691
        %v5792 = vunpack.c.l.b16 %v5692
        %v5793 = vunpack.c.l.b16 %v5693
        %v5794 = vunpack.c.l.b16 %v5694
        %v5795 = vunpack.c.l.b16 %v5695
        %v5796 = vunpack.c.l.b16 %v5696
        %v5797 = vunpack.c.l.b16 %v5697
        %v5798 = vunpack.c.l.b16 %v5698
        %v5799 = vunpack.c.l.b16 %v5699
        %v5800 = vunpack.c.l.b16 %v5700
        %v5801 = vunpack.c.l.b16 %v5701
        %v5802 = vunpack.c.l.b16 %v5702
        %v5803 = vunpack.c.l.b16 %v5703
        %v5804 = vunpack.c.l.b16 %v5704
        %v5805 = vunpack.c.l.b16 %v5705
        %v5806 = vunpack.c.l.b16 %v5706
        %v5807 = vunpack.c.l.b16 %v5707
        %v5808 = vunpack.c.l.b16 %v5708
        %v5809 = vunpack.c.l.b16 %v5709
        %v5810 = vpack.c.b16 %v5763, %v5762
        %v5811 = vpack.c.b16 %v5765, %v5764
        %v5812 = vpack.c.b16 %v5767, %v5766
        %v5813 = vpack.c.b16 %v5769, %v5768
        %v5814 = vpack.c.b16 %v5771, %v5770
        %v5815 = vpack.c.b16 %v5773, %v5772
        %v5816 = vpack.c.b16 %v5775, %v5774
        %v5817 = vpack.c.b16 %v5777, %v5776
        %v5818 = vpack.c.b16 %v5779, %v5778
        %v5819 = vpack.c.b16 %v5781, %v5780
        %v5820 = vpack.c.b16 %v5783, %v5782
        %v5821 = vpack.c.b16 %v5785, %v5784
        %v5822 = vpack.c.b16 %v5787, %v5786
        %v5823 = vpack.c.b16 %v5789, %v5788
        %v5824 = vpack.c.b16 %v5791, %v5790
        %v5825 = vpack.c.b16 %v5793, %v5792
        %v5826 = vpack.c.b16 %v5795, %v5794
        %v5827 = vpack.c.b16 %v5797, %v5796
        %v5828 = vpack.c.b16 %v5799, %v5798
        %v5829 = vpack.c.b16 %v5801, %v5800
        %v5830 = vpack.c.b16 %v5803, %v5802
        %v5831 = vpack.c.b16 %v5805, %v5804
        %v5832 = vpack.c.b16 %v5807, %v5806
        %v5833 = vpack.c.b16 %v5809, %v5808
        %5858 = vmatpush.bf16.msra.mxu0 %v5817
        %5859 = vmatpush.bf16.msra.mxu0 %v5816
        %5860 = vmatpush.bf16.msra.mxu0 %v5815
        %5861 = vmatpush.bf16.msra.mxu0 %v5814
        %5862 = vmatpush.bf16.msra.mxu0 %v5813
        %5863 = vmatpush.bf16.msra.mxu0 %v5812
        %5864 = vmatpush.bf16.msra.mxu0 %v5811
        %5865 = vmatpush.bf16.msra.mxu0 %v5810
        %5866 = vmatmul.bf16.gmra.mxu0 %v5264
        %v5867 = vpop.f32.mrf.mxu0
        %v5868 = vadd.f32 %v5712, %v5867
        %v5869 = vpop.f32.mrf.mxu0
        %v5870 = vadd.f32 %v5712, %v5869
        %5871 = vmatmul.bf16.gmra.mxu0 %v5265
        %v5872 = vpop.f32.mrf.mxu0
        %v5873 = vadd.f32 %v5712, %v5872
        %v5874 = vpop.f32.mrf.mxu0
        %v5875 = vadd.f32 %v5712, %v5874
        %5876 = vmatmul.bf16.gmra.mxu0 %v5266
        %v5877 = vpop.f32.mrf.mxu0
        %v5878 = vadd.f32 %v5712, %v5877
        %v5879 = vpop.f32.mrf.mxu0
        %v5880 = vadd.f32 %v5712, %v5879
        %5881 = vmatmul.bf16.gmra.mxu0 %v5267
        %v5882 = vpop.f32.mrf.mxu0
        %v5883 = vadd.f32 %v5712, %v5882
        %v5884 = vpop.f32.mrf.mxu0
        %v5885 = vadd.f32 %v5712, %v5884
        %5886 = vmatmul.bf16.gmra.mxu0 %v5268
        %v5887 = vpop.f32.mrf.mxu0
        %v5888 = vadd.f32 %v5712, %v5887
        %v5889 = vpop.f32.mrf.mxu0
        %v5890 = vadd.f32 %v5712, %v5889
        %5891 = vmatmul.bf16.gmra.mxu0 %v5269
        %v5892 = vpop.f32.mrf.mxu0
        %v5893 = vadd.f32 %v5712, %v5892
        %v5894 = vpop.f32.mrf.mxu0
        %v5895 = vadd.f32 %v5712, %v5894
        %5896 = vmatmul.bf16.gmra.mxu0 %v5270
        %v5897 = vpop.f32.mrf.mxu0
        %v5898 = vadd.f32 %v5712, %v5897
        %v5899 = vpop.f32.mrf.mxu0
        %v5900 = vadd.f32 %v5712, %v5899
        %5901 = vmatmul.bf16.gmra.mxu0 %v5271
        %v5902 = vpop.f32.mrf.mxu0
        %v5903 = vadd.f32 %v5712, %v5902
        %v5904 = vpop.f32.mrf.mxu0
        %v5905 = vadd.f32 %v5712, %v5904
        %5906 = vmatmul.bf16.gmra.mxu0 %v5272
        %v5907 = vpop.f32.mrf.mxu0
        %v5908 = vadd.f32 %v5712, %v5907
        %v5909 = vpop.f32.mrf.mxu0
        %v5910 = vadd.f32 %v5712, %v5909
        %5911 = vmatmul.bf16.gmra.mxu0 %v5273
        %v5912 = vpop.f32.mrf.mxu0
        %v5913 = vadd.f32 %v5712, %v5912
        %v5914 = vpop.f32.mrf.mxu0
        %v5915 = vadd.f32 %v5712, %v5914
        %5916 = vmatmul.bf16.gmra.mxu0 %v5274
        %v5917 = vpop.f32.mrf.mxu0
        %v5918 = vadd.f32 %v5712, %v5917
        %v5919 = vpop.f32.mrf.mxu0
        %v5920 = vadd.f32 %v5712, %v5919
        %5921 = vmatmul.bf16.gmra.mxu0 %v5275
        %v5922 = vpop.f32.mrf.mxu0
        %v5923 = vadd.f32 %v5712, %v5922
        %v5924 = vpop.f32.mrf.mxu0
        %v5925 = vadd.f32 %v5712, %v5924
        %5926 = vmatmul.bf16.gmra.mxu0 %v5276
        %v5927 = vpop.f32.mrf.mxu0
        %v5928 = vadd.f32 %v5712, %v5927
        %v5929 = vpop.f32.mrf.mxu0
        %v5930 = vadd.f32 %v5712, %v5929
        %5931 = vmatmul.bf16.gmra.mxu0 %v5277
        %v5932 = vpop.f32.mrf.mxu0
        %v5933 = vadd.f32 %v5712, %v5932
        %v5934 = vpop.f32.mrf.mxu0
        %v5935 = vadd.f32 %v5712, %v5934
        %5936 = vmatmul.bf16.gmra.mxu0 %v5278
        %v5937 = vpop.f32.mrf.mxu0
        %v5938 = vadd.f32 %v5712, %v5937
        %v5939 = vpop.f32.mrf.mxu0
        %v5940 = vadd.f32 %v5712, %v5939
        %5941 = vmatmul.bf16.gmra.mxu0 %v5279
        %v5942 = vpop.f32.mrf.mxu0
        %v5943 = vadd.f32 %v5712, %v5942
        %v5944 = vpop.f32.mrf.mxu0
        %v5945 = vadd.f32 %v5712, %v5944
        %5946 = vdwg.mxu0
        %5947 = vmatpush.bf16.msra.mxu0 %v5825
        %5948 = vmatpush.bf16.msra.mxu0 %v5824
        %5949 = vmatpush.bf16.msra.mxu0 %v5823
        %5950 = vmatpush.bf16.msra.mxu0 %v5822
        %5951 = vmatpush.bf16.msra.mxu0 %v5821
        %5952 = vmatpush.bf16.msra.mxu0 %v5820
        %5953 = vmatpush.bf16.msra.mxu0 %v5819
        %5954 = vmatpush.bf16.msra.mxu0 %v5818
        %5955 = vmatmul.bf16.gmra.mxu0 %v5366
        %v5956 = vpop.f32.mrf.mxu0
        %v5957 = vadd.f32 %v5868, %v5956
        %v5958 = vpop.f32.mrf.mxu0
        %v5959 = vadd.f32 %v5870, %v5958
        %5960 = vmatmul.bf16.gmra.mxu0 %v5378
        %v5961 = vpop.f32.mrf.mxu0
        %v5962 = vadd.f32 %v5873, %v5961
        %v5963 = vpop.f32.mrf.mxu0
        %v5964 = vadd.f32 %v5875, %v5963
        %5965 = vmatmul.bf16.gmra.mxu0 %v5390
        %v5966 = vpop.f32.mrf.mxu0
        %v5967 = vadd.f32 %v5878, %v5966
        %v5968 = vpop.f32.mrf.mxu0
        %v5969 = vadd.f32 %v5880, %v5968
        %5970 = vmatmul.bf16.gmra.mxu0 %v5402
        %v5971 = vpop.f32.mrf.mxu0
        %v5972 = vadd.f32 %v5883, %v5971
        %v5973 = vpop.f32.mrf.mxu0
        %v5974 = vadd.f32 %v5885, %v5973
        %5975 = vmatmul.bf16.gmra.mxu0 %v5414
        %v5976 = vpop.f32.mrf.mxu0
        %v5977 = vadd.f32 %v5888, %v5976
        %v5978 = vpop.f32.mrf.mxu0
        %v5979 = vadd.f32 %v5890, %v5978
        %5980 = vmatmul.bf16.gmra.mxu0 %v5426
        %v5981 = vpop.f32.mrf.mxu0
        %v5982 = vadd.f32 %v5893, %v5981
        %v5983 = vpop.f32.mrf.mxu0
        %v5984 = vadd.f32 %v5895, %v5983
        %5985 = vmatmul.bf16.gmra.mxu0 %v5438
        %v5986 = vpop.f32.mrf.mxu0
        %v5987 = vadd.f32 %v5898, %v5986
        %v5988 = vpop.f32.mrf.mxu0
        %v5989 = vadd.f32 %v5900, %v5988
        %5990 = vmatmul.bf16.gmra.mxu0 %v5450
        %v5991 = vpop.f32.mrf.mxu0
        %v5992 = vadd.f32 %v5903, %v5991
        %v5993 = vpop.f32.mrf.mxu0
        %v5994 = vadd.f32 %v5905, %v5993
        %5995 = vmatmul.bf16.gmra.mxu0 %v5462
        %v5996 = vpop.f32.mrf.mxu0
        %v5997 = vadd.f32 %v5908, %v5996
        %v5998 = vpop.f32.mrf.mxu0
        %v5999 = vadd.f32 %v5910, %v5998
        %6000 = vmatmul.bf16.gmra.mxu0 %v5474
        %v6001 = vpop.f32.mrf.mxu0
        %v6002 = vadd.f32 %v5913, %v6001
        %v6003 = vpop.f32.mrf.mxu0
        %v6004 = vadd.f32 %v5915, %v6003
        %6005 = vmatmul.bf16.gmra.mxu0 %v5486
        %v6006 = vpop.f32.mrf.mxu0
        %v6007 = vadd.f32 %v5918, %v6006
        %v6008 = vpop.f32.mrf.mxu0
        %v6009 = vadd.f32 %v5920, %v6008
        %6010 = vmatmul.bf16.gmra.mxu0 %v5498
        %v6011 = vpop.f32.mrf.mxu0
        %v6012 = vadd.f32 %v5923, %v6011
        %v6013 = vpop.f32.mrf.mxu0
        %v6014 = vadd.f32 %v5925, %v6013
        %6015 = vmatmul.bf16.gmra.mxu0 %v5510
        %v6016 = vpop.f32.mrf.mxu0
        %v6017 = vadd.f32 %v5928, %v6016
        %v6018 = vpop.f32.mrf.mxu0
        %v6019 = vadd.f32 %v5930, %v6018
        %6020 = vmatmul.bf16.gmra.mxu0 %v5522
        %v6021 = vpop.f32.mrf.mxu0
        %v6022 = vadd.f32 %v5933, %v6021
        %v6023 = vpop.f32.mrf.mxu0
        %v6024 = vadd.f32 %v5935, %v6023
        %6025 = vmatmul.bf16.gmra.mxu0 %v5534
        %v6026 = vpop.f32.mrf.mxu0
        %v6027 = vadd.f32 %v5938, %v6026
        %v6028 = vpop.f32.mrf.mxu0
        %v6029 = vadd.f32 %v5940, %v6028
        %6030 = vmatmul.bf16.gmra.mxu0 %v5546
        %v6031 = vpop.f32.mrf.mxu0
        %v6032 = vadd.f32 %v5943, %v6031
        %v6033 = vpop.f32.mrf.mxu0
        %v6034 = vadd.f32 %v5945, %v6033
        %6035 = vdwg.mxu0
        %6036 = vmatpush.bf16.msra.mxu0 %v5833
        %6037 = vmatpush.bf16.msra.mxu0 %v5832
        %6038 = vmatpush.bf16.msra.mxu0 %v5831
        %6039 = vmatpush.bf16.msra.mxu0 %v5830
        %6040 = vmatpush.bf16.msra.mxu0 %v5829
        %6041 = vmatpush.bf16.msra.mxu0 %v5828
        %6042 = vmatpush.bf16.msra.mxu0 %v5827
        %6043 = vmatpush.bf16.msra.mxu0 %v5826
        %6044 = vmatmul.bf16.gmra.mxu0 %v5592
        %v6045 = vpop.f32.mrf.mxu0
        %v6046 = vadd.f32 %v5957, %v6045
        %v6047 = vpop.f32.mrf.mxu0
        %v6048 = vadd.f32 %v5959, %v6047
        %6049 = vmatmul.bf16.gmra.mxu0 %v5595
        %v6050 = vpop.f32.mrf.mxu0
        %v6051 = vadd.f32 %v5962, %v6050
        %v6052 = vpop.f32.mrf.mxu0
        %v6053 = vadd.f32 %v5964, %v6052
        %6054 = vmatmul.bf16.gmra.mxu0 %v5598
        %v6055 = vpop.f32.mrf.mxu0
        %v6056 = vadd.f32 %v5967, %v6055
        %v6057 = vpop.f32.mrf.mxu0
        %v6058 = vadd.f32 %v5969, %v6057
        %6059 = vmatmul.bf16.gmra.mxu0 %v5601
        %v6060 = vpop.f32.mrf.mxu0
        %v6061 = vadd.f32 %v5972, %v6060
        %v6062 = vpop.f32.mrf.mxu0
        %v6063 = vadd.f32 %v5974, %v6062
        %6064 = vmatmul.bf16.gmra.mxu0 %v5604
        %v6065 = vpop.f32.mrf.mxu0
        %v6066 = vadd.f32 %v5977, %v6065
        %v6067 = vpop.f32.mrf.mxu0
        %v6068 = vadd.f32 %v5979, %v6067
        %6069 = vmatmul.bf16.gmra.mxu0 %v5607
        %v6070 = vpop.f32.mrf.mxu0
        %v6071 = vadd.f32 %v5982, %v6070
        %v6072 = vpop.f32.mrf.mxu0
        %v6073 = vadd.f32 %v5984, %v6072
        %6074 = vmatmul.bf16.gmra.mxu0 %v5610
        %v6075 = vpop.f32.mrf.mxu0
        %v6076 = vadd.f32 %v5987, %v6075
        %v6077 = vpop.f32.mrf.mxu0
        %v6078 = vadd.f32 %v5989, %v6077
        %6079 = vmatmul.bf16.gmra.mxu0 %v5613
        %v6080 = vpop.f32.mrf.mxu0
        %v6081 = vadd.f32 %v5992, %v6080
        %v6082 = vpop.f32.mrf.mxu0
        %v6083 = vadd.f32 %v5994, %v6082
        %6084 = vmatmul.bf16.gmra.mxu0 %v5616
        %v6085 = vpop.f32.mrf.mxu0
        %v6086 = vadd.f32 %v5997, %v6085
        %v6087 = vpop.f32.mrf.mxu0
        %v6088 = vadd.f32 %v5999, %v6087
        %6089 = vmatmul.bf16.gmra.mxu0 %v5619
        %v6090 = vpop.f32.mrf.mxu0
        %v6091 = vadd.f32 %v6002, %v6090
        %v6092 = vpop.f32.mrf.mxu0
        %v6093 = vadd.f32 %v6004, %v6092
        %6094 = vmatmul.bf16.gmra.mxu0 %v5622
        %v6095 = vpop.f32.mrf.mxu0
        %v6096 = vadd.f32 %v6007, %v6095
        %v6097 = vpop.f32.mrf.mxu0
        %v6098 = vadd.f32 %v6009, %v6097
        %6099 = vmatmul.bf16.gmra.mxu0 %v5625
        %v6100 = vpop.f32.mrf.mxu0
        %v6101 = vadd.f32 %v6012, %v6100
        %v6102 = vpop.f32.mrf.mxu0
        %v6103 = vadd.f32 %v6014, %v6102
        %6104 = vmatmul.bf16.gmra.mxu0 %v5628
        %v6105 = vpop.f32.mrf.mxu0
        %v6106 = vadd.f32 %v6017, %v6105
        %v6107 = vpop.f32.mrf.mxu0
        %v6108 = vadd.f32 %v6019, %v6107
        %6109 = vmatmul.bf16.gmra.mxu0 %v5631
        %v6110 = vpop.f32.mrf.mxu0
        %v6111 = vadd.f32 %v6022, %v6110
        %v6112 = vpop.f32.mrf.mxu0
        %v6113 = vadd.f32 %v6024, %v6112
        %6114 = vmatmul.bf16.gmra.mxu0 %v5634
        %v6115 = vpop.f32.mrf.mxu0
        %v6116 = vadd.f32 %v6027, %v6115
        %v6117 = vpop.f32.mrf.mxu0
        %v6118 = vadd.f32 %v6029, %v6117
        %6119 = vmatmul.bf16.gmra.mxu0 %v5637
        %v6120 = vpop.f32.mrf.mxu0
        %v6121 = vadd.f32 %v6032, %v6120
        %v6122 = vpop.f32.mrf.mxu0
        %v6123 = vadd.f32 %v6034, %v6122
        %6124 = vdwg.mxu0
        %v6125 = vld [vmem:[#allocation17 + $0xc0] sm:$0xf]
        %v6126 = vld [vmem:[#allocation17 + $0xc4] sm:$0xf]
        %v6127 = vld [vmem:[#allocation17 + $0xc8] sm:$0xf]
        %v6128 = vld [vmem:[#allocation17 + $0xcc] sm:$0xf]
        %v6129 = vld [vmem:[#allocation17 + $0xd0] sm:$0xf]
        %v6130 = vld [vmem:[#allocation17 + $0xd4] sm:$0xf]
        %v6131 = vld [vmem:[#allocation17 + $0xd8] sm:$0xf]
        %v6132 = vld [vmem:[#allocation17 + $0xdc] sm:$0xf]
        %v6133 = vld [vmem:[#allocation17 + $0xe0] sm:$0xf]
        %v6134 = vld [vmem:[#allocation17 + $0xe4] sm:$0xf]
        %v6135 = vld [vmem:[#allocation17 + $0xe8] sm:$0xf]
        %v6136 = vld [vmem:[#allocation17 + $0xec] sm:$0xf]
        %v6137 = vld [vmem:[#allocation17 + $0xf0] sm:$0xf]
        %v6138 = vld [vmem:[#allocation17 + $0xf4] sm:$0xf]
        %v6139 = vld [vmem:[#allocation17 + $0xf8] sm:$0xf]
        %v6140 = vld [vmem:[#allocation17 + $0xfc] sm:$0xf]
        %v6141 = vld [vmem:[#allocation17 + $0x100] sm:$0xf]
        %v6142 = vld [vmem:[#allocation17 + $0x104] sm:$0xf]
        %v6143 = vld [vmem:[#allocation17 + $0x108] sm:$0xf]
        %v6144 = vld [vmem:[#allocation17 + $0x10c] sm:$0xf]
        %v6145 = vld [vmem:[#allocation17 + $0x110] sm:$0xf]
        %v6146 = vld [vmem:[#allocation17 + $0x114] sm:$0xf]
        %v6147 = vld [vmem:[#allocation17 + $0x118] sm:$0xf]
        %v6148 = vld [vmem:[#allocation17 + $0x11c] sm:$0xf]
        %v6149 = vld [vmem:[#allocation17 + $0x120] sm:$0xf]
        %v6150 = vld [vmem:[#allocation17 + $0x124] sm:$0xf]
        %v6151 = vld [vmem:[#allocation17 + $0x128] sm:$0xf]
        %v6152 = vld [vmem:[#allocation17 + $0x12c] sm:$0xf]
        %v6153 = vld [vmem:[#allocation17 + $0x130] sm:$0xf]
        %v6154 = vld [vmem:[#allocation17 + $0x134] sm:$0xf]
        %v6155 = vld [vmem:[#allocation17 + $0x138] sm:$0xf]
        %v6156 = vld [vmem:[#allocation17 + $0x13c] sm:$0xf]
        %v6157 = vld [vmem:[#allocation17 + $0x140] sm:$0xf]
        %v6158 = vld [vmem:[#allocation17 + $0x144] sm:$0xf]
        %v6159 = vld [vmem:[#allocation17 + $0x148] sm:$0xf]
        %v6160 = vld [vmem:[#allocation17 + $0x14c] sm:$0xf]
        %v6161 = vld [vmem:[#allocation17 + $0x150] sm:$0xf]
        %v6162 = vld [vmem:[#allocation17 + $0x154] sm:$0xf]
        %v6163 = vld [vmem:[#allocation17 + $0x158] sm:$0xf]
        %v6164 = vld [vmem:[#allocation17 + $0x15c] sm:$0xf]
        %v6165 = vld [vmem:[#allocation17 + $0x160] sm:$0xf]
        %v6166 = vld [vmem:[#allocation17 + $0x164] sm:$0xf]
        %v6167 = vld [vmem:[#allocation17 + $0x168] sm:$0xf]
        %v6168 = vld [vmem:[#allocation17 + $0x16c] sm:$0xf]
        %v6169 = vld [vmem:[#allocation17 + $0x170] sm:$0xf]
        %v6170 = vld [vmem:[#allocation17 + $0x174] sm:$0xf]
        %v6171 = vld [vmem:[#allocation17 + $0x178] sm:$0xf]
        %v6172 = vld [vmem:[#allocation17 + $0x17c] sm:$0xf]
        %v6221 = vunpack.c.l.b16 %v6125
        %v6222 = vunpack.c.l.b16 %v6126
        %v6223 = vunpack.c.l.b16 %v6127
        %v6224 = vunpack.c.l.b16 %v6128
        %v6225 = vunpack.c.l.b16 %v6129
        %v6226 = vunpack.c.l.b16 %v6130
        %v6227 = vunpack.c.l.b16 %v6131
        %v6228 = vunpack.c.l.b16 %v6132
        %v6229 = vunpack.c.l.b16 %v6133
        %v6230 = vunpack.c.l.b16 %v6134
        %v6231 = vunpack.c.l.b16 %v6135
        %v6232 = vunpack.c.l.b16 %v6136
        %v6233 = vunpack.c.l.b16 %v6137
        %v6234 = vunpack.c.l.b16 %v6138
        %v6235 = vunpack.c.l.b16 %v6139
        %v6236 = vunpack.c.l.b16 %v6140
        %v6237 = vunpack.c.l.b16 %v6141
        %v6238 = vunpack.c.l.b16 %v6142
        %v6239 = vunpack.c.l.b16 %v6143
        %v6240 = vunpack.c.l.b16 %v6144
        %v6241 = vunpack.c.l.b16 %v6145
        %v6242 = vunpack.c.l.b16 %v6146
        %v6243 = vunpack.c.l.b16 %v6147
        %v6244 = vunpack.c.l.b16 %v6148
        %v6245 = vunpack.c.l.b16 %v6149
        %v6246 = vunpack.c.l.b16 %v6150
        %v6247 = vunpack.c.l.b16 %v6151
        %v6248 = vunpack.c.l.b16 %v6152
        %v6249 = vunpack.c.l.b16 %v6153
        %v6250 = vunpack.c.l.b16 %v6154
        %v6251 = vunpack.c.l.b16 %v6155
        %v6252 = vunpack.c.l.b16 %v6156
        %v6253 = vunpack.c.l.b16 %v6157
        %v6254 = vunpack.c.l.b16 %v6158
        %v6255 = vunpack.c.l.b16 %v6159
        %v6256 = vunpack.c.l.b16 %v6160
        %v6257 = vunpack.c.l.b16 %v6161
        %v6258 = vunpack.c.l.b16 %v6162
        %v6259 = vunpack.c.l.b16 %v6163
        %v6260 = vunpack.c.l.b16 %v6164
        %v6261 = vunpack.c.l.b16 %v6165
        %v6262 = vunpack.c.l.b16 %v6166
        %v6263 = vunpack.c.l.b16 %v6167
        %v6264 = vunpack.c.l.b16 %v6168
        %v6265 = vunpack.c.l.b16 %v6169
        %v6266 = vunpack.c.l.b16 %v6170
        %v6267 = vunpack.c.l.b16 %v6171
        %v6268 = vunpack.c.l.b16 %v6172
        %v6269 = vpack.c.b16 %v6222, %v6221
        %v6270 = vpack.c.b16 %v6224, %v6223
        %v6271 = vpack.c.b16 %v6226, %v6225
        %v6272 = vpack.c.b16 %v6228, %v6227
        %v6273 = vpack.c.b16 %v6230, %v6229
        %v6274 = vpack.c.b16 %v6232, %v6231
        %v6275 = vpack.c.b16 %v6234, %v6233
        %v6276 = vpack.c.b16 %v6236, %v6235
        %v6277 = vpack.c.b16 %v6238, %v6237
        %v6278 = vpack.c.b16 %v6240, %v6239
        %v6279 = vpack.c.b16 %v6242, %v6241
        %v6280 = vpack.c.b16 %v6244, %v6243
        %v6281 = vpack.c.b16 %v6246, %v6245
        %v6282 = vpack.c.b16 %v6248, %v6247
        %v6283 = vpack.c.b16 %v6250, %v6249
        %v6284 = vpack.c.b16 %v6252, %v6251
        %v6285 = vpack.c.b16 %v6254, %v6253
        %v6286 = vpack.c.b16 %v6256, %v6255
        %v6287 = vpack.c.b16 %v6258, %v6257
        %v6288 = vpack.c.b16 %v6260, %v6259
        %v6289 = vpack.c.b16 %v6262, %v6261
        %v6290 = vpack.c.b16 %v6264, %v6263
        %v6291 = vpack.c.b16 %v6266, %v6265
        %v6292 = vpack.c.b16 %v6268, %v6267
        %6317 = vmatpush.bf16.msra.mxu0 %v6276
        %6318 = vmatpush.bf16.msra.mxu0 %v6275
        %6319 = vmatpush.bf16.msra.mxu0 %v6274
        %6320 = vmatpush.bf16.msra.mxu0 %v6273
        %6321 = vmatpush.bf16.msra.mxu0 %v6272
        %6322 = vmatpush.bf16.msra.mxu0 %v6271
        %6323 = vmatpush.bf16.msra.mxu0 %v6270
        %6324 = vmatpush.bf16.msra.mxu0 %v6269
        %6325 = vmatmul.bf16.gmra.mxu0 %v5265
        %v6326 = vpop.f32.mrf.mxu0
        %v6327 = vadd.f32 0.0, %v6326
        %v6328 = vpop.f32.mrf.mxu0
        %v6329 = vadd.f32 0.0, %v6328
        %6330 = vmatmul.bf16.gmra.mxu0 %v5266
        %v6331 = vpop.f32.mrf.mxu0
        %v6332 = vadd.f32 0.0, %v6331
        %v6333 = vpop.f32.mrf.mxu0
        %v6334 = vadd.f32 0.0, %v6333
        %6335 = vmatmul.bf16.gmra.mxu0 %v5267
        %v6336 = vpop.f32.mrf.mxu0
        %v6337 = vadd.f32 0.0, %v6336
        %v6338 = vpop.f32.mrf.mxu0
        %v6339 = vadd.f32 0.0, %v6338
        %6340 = vmatmul.bf16.gmra.mxu0 %v5268
        %v6341 = vpop.f32.mrf.mxu0
        %v6342 = vadd.f32 0.0, %v6341
        %v6343 = vpop.f32.mrf.mxu0
        %v6344 = vadd.f32 0.0, %v6343
        %6345 = vmatmul.bf16.gmra.mxu0 %v5269
        %v6346 = vpop.f32.mrf.mxu0
        %v6347 = vadd.f32 0.0, %v6346
        %v6348 = vpop.f32.mrf.mxu0
        %v6349 = vadd.f32 0.0, %v6348
        %6350 = vmatmul.bf16.gmra.mxu0 %v5270
        %v6351 = vpop.f32.mrf.mxu0
        %v6352 = vadd.f32 0.0, %v6351
        %v6353 = vpop.f32.mrf.mxu0
        %v6354 = vadd.f32 0.0, %v6353
        %6355 = vmatmul.bf16.gmra.mxu0 %v5271
        %v6356 = vpop.f32.mrf.mxu0
        %v6357 = vadd.f32 0.0, %v6356
        %v6358 = vpop.f32.mrf.mxu0
        %v6359 = vadd.f32 0.0, %v6358
        %6360 = vmatmul.bf16.gmra.mxu0 %v5272
        %v6361 = vpop.f32.mrf.mxu0
        %v6362 = vadd.f32 0.0, %v6361
        %v6363 = vpop.f32.mrf.mxu0
        %v6364 = vadd.f32 0.0, %v6363
        %6365 = vmatmul.bf16.gmra.mxu0 %v5273
        %v6366 = vpop.f32.mrf.mxu0
        %v6367 = vadd.f32 0.0, %v6366
        %v6368 = vpop.f32.mrf.mxu0
        %v6369 = vadd.f32 0.0, %v6368
        %6370 = vmatmul.bf16.gmra.mxu0 %v5274
        %v6371 = vpop.f32.mrf.mxu0
        %v6372 = vadd.f32 0.0, %v6371
        %v6373 = vpop.f32.mrf.mxu0
        %v6374 = vadd.f32 0.0, %v6373
        %6375 = vmatmul.bf16.gmra.mxu0 %v5275
        %v6376 = vpop.f32.mrf.mxu0
        %v6377 = vadd.f32 0.0, %v6376
        %v6378 = vpop.f32.mrf.mxu0
        %v6379 = vadd.f32 0.0, %v6378
        %6380 = vmatmul.bf16.gmra.mxu0 %v5276
        %v6381 = vpop.f32.mrf.mxu0
        %v6382 = vadd.f32 0.0, %v6381
        %v6383 = vpop.f32.mrf.mxu0
        %v6384 = vadd.f32 0.0, %v6383
        %6385 = vmatmul.bf16.gmra.mxu0 %v5277
        %v6386 = vpop.f32.mrf.mxu0
        %v6387 = vadd.f32 0.0, %v6386
        %v6388 = vpop.f32.mrf.mxu0
        %v6389 = vadd.f32 0.0, %v6388
        %6390 = vmatmul.bf16.gmra.mxu0 %v5278
        %v6391 = vpop.f32.mrf.mxu0
        %v6392 = vadd.f32 0.0, %v6391
        %v6393 = vpop.f32.mrf.mxu0
        %v6394 = vadd.f32 0.0, %v6393
        %6395 = vmatmul.bf16.gmra.mxu0 %v5279
        %v6396 = vpop.f32.mrf.mxu0
        %v6397 = vadd.f32 0.0, %v6396
        %v6398 = vpop.f32.mrf.mxu0
        %v6399 = vadd.f32 0.0, %v6398
        %6400 = vmatmul.bf16.gmra.mxu0 %v5280
        %v6401 = vpop.f32.mrf.mxu0
        %v6402 = vadd.f32 0.0, %v6401
        %v6403 = vpop.f32.mrf.mxu0
        %v6404 = vadd.f32 0.0, %v6403
        %6405 = vdwg.mxu0
        %6406 = vmatpush.bf16.msra.mxu0 %v6284
        %6407 = vmatpush.bf16.msra.mxu0 %v6283
        %6408 = vmatpush.bf16.msra.mxu0 %v6282
        %6409 = vmatpush.bf16.msra.mxu0 %v6281
        %6410 = vmatpush.bf16.msra.mxu0 %v6280
        %6411 = vmatpush.bf16.msra.mxu0 %v6279
        %6412 = vmatpush.bf16.msra.mxu0 %v6278
        %6413 = vmatpush.bf16.msra.mxu0 %v6277
        %6414 = vmatmul.bf16.gmra.mxu0 %v5378
        %v6415 = vpop.f32.mrf.mxu0
        %v6416 = vadd.f32 %v6327, %v6415
        %v6417 = vpop.f32.mrf.mxu0
        %v6418 = vadd.f32 %v6329, %v6417
        %6419 = vmatmul.bf16.gmra.mxu0 %v5390
        %v6420 = vpop.f32.mrf.mxu0
        %v6421 = vadd.f32 %v6332, %v6420
        %v6422 = vpop.f32.mrf.mxu0
        %v6423 = vadd.f32 %v6334, %v6422
        %6424 = vmatmul.bf16.gmra.mxu0 %v5402
        %v6425 = vpop.f32.mrf.mxu0
        %v6426 = vadd.f32 %v6337, %v6425
        %v6427 = vpop.f32.mrf.mxu0
        %v6428 = vadd.f32 %v6339, %v6427
        %6429 = vmatmul.bf16.gmra.mxu0 %v5414
        %v6430 = vpop.f32.mrf.mxu0
        %v6431 = vadd.f32 %v6342, %v6430
        %v6432 = vpop.f32.mrf.mxu0
        %v6433 = vadd.f32 %v6344, %v6432
        %6434 = vmatmul.bf16.gmra.mxu0 %v5426
        %v6435 = vpop.f32.mrf.mxu0
        %v6436 = vadd.f32 %v6347, %v6435
        %v6437 = vpop.f32.mrf.mxu0
        %v6438 = vadd.f32 %v6349, %v6437
        %6439 = vmatmul.bf16.gmra.mxu0 %v5438
        %v6440 = vpop.f32.mrf.mxu0
        %v6441 = vadd.f32 %v6352, %v6440
        %v6442 = vpop.f32.mrf.mxu0
        %v6443 = vadd.f32 %v6354, %v6442
        %6444 = vmatmul.bf16.gmra.mxu0 %v5450
        %v6445 = vpop.f32.mrf.mxu0
        %v6446 = vadd.f32 %v6357, %v6445
        %v6447 = vpop.f32.mrf.mxu0
        %v6448 = vadd.f32 %v6359, %v6447
        %6449 = vmatmul.bf16.gmra.mxu0 %v5462
        %v6450 = vpop.f32.mrf.mxu0
        %v6451 = vadd.f32 %v6362, %v6450
        %v6452 = vpop.f32.mrf.mxu0
        %v6453 = vadd.f32 %v6364, %v6452
        %6454 = vmatmul.bf16.gmra.mxu0 %v5474
        %v6455 = vpop.f32.mrf.mxu0
        %v6456 = vadd.f32 %v6367, %v6455
        %v6457 = vpop.f32.mrf.mxu0
        %v6458 = vadd.f32 %v6369, %v6457
        %6459 = vmatmul.bf16.gmra.mxu0 %v5486
        %v6460 = vpop.f32.mrf.mxu0
        %v6461 = vadd.f32 %v6372, %v6460
        %v6462 = vpop.f32.mrf.mxu0
        %v6463 = vadd.f32 %v6374, %v6462
        %6464 = vmatmul.bf16.gmra.mxu0 %v5498
        %v6465 = vpop.f32.mrf.mxu0
        %v6466 = vadd.f32 %v6377, %v6465
        %v6467 = vpop.f32.mrf.mxu0
        %v6468 = vadd.f32 %v6379, %v6467
        %6469 = vmatmul.bf16.gmra.mxu0 %v5510
        %v6470 = vpop.f32.mrf.mxu0
        %v6471 = vadd.f32 %v6382, %v6470
        %v6472 = vpop.f32.mrf.mxu0
        %v6473 = vadd.f32 %v6384, %v6472
        %6474 = vmatmul.bf16.gmra.mxu0 %v5522
        %v6475 = vpop.f32.mrf.mxu0
        %v6476 = vadd.f32 %v6387, %v6475
        %v6477 = vpop.f32.mrf.mxu0
        %v6478 = vadd.f32 %v6389, %v6477
        %6479 = vmatmul.bf16.gmra.mxu0 %v5534
        %v6480 = vpop.f32.mrf.mxu0
        %v6481 = vadd.f32 %v6392, %v6480
        %v6482 = vpop.f32.mrf.mxu0
        %v6483 = vadd.f32 %v6394, %v6482
        %6484 = vmatmul.bf16.gmra.mxu0 %v5546
        %v6485 = vpop.f32.mrf.mxu0
        %v6486 = vadd.f32 %v6397, %v6485
        %v6487 = vpop.f32.mrf.mxu0
        %v6488 = vadd.f32 %v6399, %v6487
        %6489 = vmatmul.bf16.gmra.mxu0 %v5558
        %v6490 = vpop.f32.mrf.mxu0
        %v6491 = vadd.f32 %v6402, %v6490
        %v6492 = vpop.f32.mrf.mxu0
        %v6493 = vadd.f32 %v6404, %v6492
        %6494 = vdwg.mxu0
        %6495 = vmatpush.bf16.msra.mxu0 %v6292
        %6496 = vmatpush.bf16.msra.mxu0 %v6291
        %6497 = vmatpush.bf16.msra.mxu0 %v6290
        %6498 = vmatpush.bf16.msra.mxu0 %v6289
        %6499 = vmatpush.bf16.msra.mxu0 %v6288
        %6500 = vmatpush.bf16.msra.mxu0 %v6287
        %6501 = vmatpush.bf16.msra.mxu0 %v6286
        %6502 = vmatpush.bf16.msra.mxu0 %v6285
        %6503 = vmatmul.bf16.gmra.mxu0 %v5595
        %v6504 = vpop.f32.mrf.mxu0
        %v6505 = vadd.f32 %v6416, %v6504
        %v6506 = vpop.f32.mrf.mxu0
        %v6507 = vadd.f32 %v6418, %v6506
        %6508 = vmatmul.bf16.gmra.mxu0 %v5598
        %v6509 = vpop.f32.mrf.mxu0
        %v6510 = vadd.f32 %v6421, %v6509
        %v6511 = vpop.f32.mrf.mxu0
        %v6512 = vadd.f32 %v6423, %v6511
        %6513 = vmatmul.bf16.gmra.mxu0 %v5601
        %v6514 = vpop.f32.mrf.mxu0
        %v6515 = vadd.f32 %v6426, %v6514
        %v6516 = vpop.f32.mrf.mxu0
        %v6517 = vadd.f32 %v6428, %v6516
        %6518 = vmatmul.bf16.gmra.mxu0 %v5604
        %v6519 = vpop.f32.mrf.mxu0
        %v6520 = vadd.f32 %v6431, %v6519
        %v6521 = vpop.f32.mrf.mxu0
        %v6522 = vadd.f32 %v6433, %v6521
        %6523 = vmatmul.bf16.gmra.mxu0 %v5607
        %v6524 = vpop.f32.mrf.mxu0
        %v6525 = vadd.f32 %v6436, %v6524
        %v6526 = vpop.f32.mrf.mxu0
        %v6527 = vadd.f32 %v6438, %v6526
        %6528 = vmatmul.bf16.gmra.mxu0 %v5610
        %v6529 = vpop.f32.mrf.mxu0
        %v6530 = vadd.f32 %v6441, %v6529
        %v6531 = vpop.f32.mrf.mxu0
        %v6532 = vadd.f32 %v6443, %v6531
        %6533 = vmatmul.bf16.gmra.mxu0 %v5613
        %v6534 = vpop.f32.mrf.mxu0
        %v6535 = vadd.f32 %v6446, %v6534
        %v6536 = vpop.f32.mrf.mxu0
        %v6537 = vadd.f32 %v6448, %v6536
        %6538 = vmatmul.bf16.gmra.mxu0 %v5616
        %v6539 = vpop.f32.mrf.mxu0
        %v6540 = vadd.f32 %v6451, %v6539
        %v6541 = vpop.f32.mrf.mxu0
        %v6542 = vadd.f32 %v6453, %v6541
        %6543 = vmatmul.bf16.gmra.mxu0 %v5619
        %v6544 = vpop.f32.mrf.mxu0
        %v6545 = vadd.f32 %v6456, %v6544
        %v6546 = vpop.f32.mrf.mxu0
        %v6547 = vadd.f32 %v6458, %v6546
        %6548 = vmatmul.bf16.gmra.mxu0 %v5622
        %v6549 = vpop.f32.mrf.mxu0
        %v6550 = vadd.f32 %v6461, %v6549
        %v6551 = vpop.f32.mrf.mxu0
        %v6552 = vadd.f32 %v6463, %v6551
        %6553 = vmatmul.bf16.gmra.mxu0 %v5625
        %v6554 = vpop.f32.mrf.mxu0
        %v6555 = vadd.f32 %v6466, %v6554
        %v6556 = vpop.f32.mrf.mxu0
        %v6557 = vadd.f32 %v6468, %v6556
        %6558 = vmatmul.bf16.gmra.mxu0 %v5628
        %v6559 = vpop.f32.mrf.mxu0
        %v6560 = vadd.f32 %v6471, %v6559
        %v6561 = vpop.f32.mrf.mxu0
        %v6562 = vadd.f32 %v6473, %v6561
        %6563 = vmatmul.bf16.gmra.mxu0 %v5631
        %v6564 = vpop.f32.mrf.mxu0
        %v6565 = vadd.f32 %v6476, %v6564
        %v6566 = vpop.f32.mrf.mxu0
        %v6567 = vadd.f32 %v6478, %v6566
        %6568 = vmatmul.bf16.gmra.mxu0 %v5634
        %v6569 = vpop.f32.mrf.mxu0
        %v6570 = vadd.f32 %v6481, %v6569
        %v6571 = vpop.f32.mrf.mxu0
        %v6572 = vadd.f32 %v6483, %v6571
        %6573 = vmatmul.bf16.gmra.mxu0 %v5637
        %v6574 = vpop.f32.mrf.mxu0
        %v6575 = vadd.f32 %v6486, %v6574
        %v6576 = vpop.f32.mrf.mxu0
        %v6577 = vadd.f32 %v6488, %v6576
        %6578 = vmatmul.bf16.gmra.mxu0 %v5640
        %v6579 = vpop.f32.mrf.mxu0
        %v6580 = vadd.f32 %v6491, %v6579
        %v6581 = vpop.f32.mrf.mxu0
        %v6582 = vadd.f32 %v6493, %v6581
        %6583 = vdwg.mxu0
        %v6584 = vadd.f32 %v6046, %v6505
        %v6585 = vadd.f32 %v6048, %v6507
        %v6586 = vadd.f32 %v6051, %v6510
        %v6587 = vadd.f32 %v6053, %v6512
        %v6588 = vadd.f32 %v6056, %v6515
        %v6589 = vadd.f32 %v6058, %v6517
        %v6590 = vadd.f32 %v6061, %v6520
        %v6591 = vadd.f32 %v6063, %v6522
        %v6592 = vadd.f32 %v6066, %v6525
        %v6593 = vadd.f32 %v6068, %v6527
        %v6594 = vadd.f32 %v6071, %v6530
        %v6595 = vadd.f32 %v6073, %v6532
        %v6596 = vadd.f32 %v6076, %v6535
        %v6597 = vadd.f32 %v6078, %v6537
        %v6598 = vadd.f32 %v6081, %v6540
        %v6599 = vadd.f32 %v6083, %v6542
        %v6600 = vadd.f32 %v6086, %v6545
        %v6601 = vadd.f32 %v6088, %v6547
        %v6602 = vadd.f32 %v6091, %v6550
        %v6603 = vadd.f32 %v6093, %v6552
        %v6604 = vadd.f32 %v6096, %v6555
        %v6605 = vadd.f32 %v6098, %v6557
        %v6606 = vadd.f32 %v6101, %v6560
        %v6607 = vadd.f32 %v6103, %v6562
        %v6608 = vadd.f32 %v6106, %v6565
        %v6609 = vadd.f32 %v6108, %v6567
        %v6610 = vadd.f32 %v6111, %v6570
        %v6611 = vadd.f32 %v6113, %v6572
        %v6612 = vadd.f32 %v6116, %v6575
        %v6613 = vadd.f32 %v6118, %v6577
        %v6614 = vadd.f32 %v6121, %v6580
        %v6615 = vadd.f32 %v6123, %v6582
        %v6616 = vld [vmem:[#allocation17 + $0x180] sm:$0xf]
        %v6617 = vld [vmem:[#allocation17 + $0x184] sm:$0xf]
        %v6618 = vld [vmem:[#allocation17 + $0x188] sm:$0xf]
        %v6619 = vld [vmem:[#allocation17 + $0x18c] sm:$0xf]
        %v6620 = vld [vmem:[#allocation17 + $0x190] sm:$0xf]
        %v6621 = vld [vmem:[#allocation17 + $0x194] sm:$0xf]
        %v6622 = vld [vmem:[#allocation17 + $0x198] sm:$0xf]
        %v6623 = vld [vmem:[#allocation17 + $0x19c] sm:$0xf]
        %v6624 = vld [vmem:[#allocation17 + $0x1a0] sm:$0xf]
        %v6625 = vld [vmem:[#allocation17 + $0x1a4] sm:$0xf]
        %v6626 = vld [vmem:[#allocation17 + $0x1a8] sm:$0xf]
        %v6627 = vld [vmem:[#allocation17 + $0x1ac] sm:$0xf]
        %v6628 = vld [vmem:[#allocation17 + $0x1b0] sm:$0xf]
        %v6629 = vld [vmem:[#allocation17 + $0x1b4] sm:$0xf]
        %v6630 = vld [vmem:[#allocation17 + $0x1b8] sm:$0xf]
        %v6631 = vld [vmem:[#allocation17 + $0x1bc] sm:$0xf]
        %v6632 = vld [vmem:[#allocation17 + $0x1c0] sm:$0xf]
        %v6633 = vld [vmem:[#allocation17 + $0x1c4] sm:$0xf]
        %v6634 = vld [vmem:[#allocation17 + $0x1c8] sm:$0xf]
        %v6635 = vld [vmem:[#allocation17 + $0x1cc] sm:$0xf]
        %v6636 = vld [vmem:[#allocation17 + $0x1d0] sm:$0xf]
        %v6637 = vld [vmem:[#allocation17 + $0x1d4] sm:$0xf]
        %v6638 = vld [vmem:[#allocation17 + $0x1d8] sm:$0xf]
        %v6639 = vld [vmem:[#allocation17 + $0x1dc] sm:$0xf]
        %v6640 = vld [vmem:[#allocation17 + $0x1e0] sm:$0xf]
        %v6641 = vld [vmem:[#allocation17 + $0x1e4] sm:$0xf]
        %v6642 = vld [vmem:[#allocation17 + $0x1e8] sm:$0xf]
        %v6643 = vld [vmem:[#allocation17 + $0x1ec] sm:$0xf]
        %v6644 = vld [vmem:[#allocation17 + $0x1f0] sm:$0xf]
        %v6645 = vld [vmem:[#allocation17 + $0x1f4] sm:$0xf]
        %v6646 = vld [vmem:[#allocation17 + $0x1f8] sm:$0xf]
        %v6647 = vld [vmem:[#allocation17 + $0x1fc] sm:$0xf]
        %v6648 = vld [vmem:[#allocation17 + $0x200] sm:$0xf]
        %v6649 = vld [vmem:[#allocation17 + $0x204] sm:$0xf]
        %v6650 = vld [vmem:[#allocation17 + $0x208] sm:$0xf]
        %v6651 = vld [vmem:[#allocation17 + $0x20c] sm:$0xf]
        %v6652 = vld [vmem:[#allocation17 + $0x210] sm:$0xf]
        %v6653 = vld [vmem:[#allocation17 + $0x214] sm:$0xf]
        %v6654 = vld [vmem:[#allocation17 + $0x218] sm:$0xf]
        %v6655 = vld [vmem:[#allocation17 + $0x21c] sm:$0xf]
        %v6656 = vld [vmem:[#allocation17 + $0x220] sm:$0xf]
        %v6657 = vld [vmem:[#allocation17 + $0x224] sm:$0xf]
        %v6658 = vld [vmem:[#allocation17 + $0x228] sm:$0xf]
        %v6659 = vld [vmem:[#allocation17 + $0x22c] sm:$0xf]
        %v6660 = vld [vmem:[#allocation17 + $0x230] sm:$0xf]
        %v6661 = vld [vmem:[#allocation17 + $0x234] sm:$0xf]
        %v6662 = vld [vmem:[#allocation17 + $0x238] sm:$0xf]
        %v6663 = vld [vmem:[#allocation17 + $0x23c] sm:$0xf]
        %v6712 = vunpack.c.l.b16 %v6616
        %v6713 = vunpack.c.l.b16 %v6617
        %v6714 = vunpack.c.l.b16 %v6618
        %v6715 = vunpack.c.l.b16 %v6619
        %v6716 = vunpack.c.l.b16 %v6620
        %v6717 = vunpack.c.l.b16 %v6621
        %v6718 = vunpack.c.l.b16 %v6622
        %v6719 = vunpack.c.l.b16 %v6623
        %v6720 = vunpack.c.l.b16 %v6624
        %v6721 = vunpack.c.l.b16 %v6625
        %v6722 = vunpack.c.l.b16 %v6626
        %v6723 = vunpack.c.l.b16 %v6627
        %v6724 = vunpack.c.l.b16 %v6628
        %v6725 = vunpack.c.l.b16 %v6629
        %v6726 = vunpack.c.l.b16 %v6630
        %v6727 = vunpack.c.l.b16 %v6631
        %v6728 = vunpack.c.l.b16 %v6632
        %v6729 = vunpack.c.l.b16 %v6633
        %v6730 = vunpack.c.l.b16 %v6634
        %v6731 = vunpack.c.l.b16 %v6635
        %v6732 = vunpack.c.l.b16 %v6636
        %v6733 = vunpack.c.l.b16 %v6637
        %v6734 = vunpack.c.l.b16 %v6638
        %v6735 = vunpack.c.l.b16 %v6639
        %v6736 = vunpack.c.l.b16 %v6640
        %v6737 = vunpack.c.l.b16 %v6641
        %v6738 = vunpack.c.l.b16 %v6642
        %v6739 = vunpack.c.l.b16 %v6643
        %v6740 = vunpack.c.l.b16 %v6644
        %v6741 = vunpack.c.l.b16 %v6645
        %v6742 = vunpack.c.l.b16 %v6646
        %v6743 = vunpack.c.l.b16 %v6647
        %v6744 = vunpack.c.l.b16 %v6648
        %v6745 = vunpack.c.l.b16 %v6649
        %v6746 = vunpack.c.l.b16 %v6650
        %v6747 = vunpack.c.l.b16 %v6651
        %v6748 = vunpack.c.l.b16 %v6652
        %v6749 = vunpack.c.l.b16 %v6653
        %v6750 = vunpack.c.l.b16 %v6654
        %v6751 = vunpack.c.l.b16 %v6655
        %v6752 = vunpack.c.l.b16 %v6656
        %v6753 = vunpack.c.l.b16 %v6657
        %v6754 = vunpack.c.l.b16 %v6658
        %v6755 = vunpack.c.l.b16 %v6659
        %v6756 = vunpack.c.l.b16 %v6660
        %v6757 = vunpack.c.l.b16 %v6661
        %v6758 = vunpack.c.l.b16 %v6662
        %v6759 = vunpack.c.l.b16 %v6663
        %v6760 = vpack.c.b16 %v6713, %v6712
        %v6761 = vpack.c.b16 %v6715, %v6714
        %v6762 = vpack.c.b16 %v6717, %v6716
        %v6763 = vpack.c.b16 %v6719, %v6718
        %v6764 = vpack.c.b16 %v6721, %v6720
        %v6765 = vpack.c.b16 %v6723, %v6722
        %v6766 = vpack.c.b16 %v6725, %v6724
        %v6767 = vpack.c.b16 %v6727, %v6726
        %v6768 = vpack.c.b16 %v6729, %v6728
        %v6769 = vpack.c.b16 %v6731, %v6730
        %v6770 = vpack.c.b16 %v6733, %v6732
        %v6771 = vpack.c.b16 %v6735, %v6734
        %v6772 = vpack.c.b16 %v6737, %v6736
        %v6773 = vpack.c.b16 %v6739, %v6738
        %v6774 = vpack.c.b16 %v6741, %v6740
        %v6775 = vpack.c.b16 %v6743, %v6742
        %v6776 = vpack.c.b16 %v6745, %v6744
        %v6777 = vpack.c.b16 %v6747, %v6746
        %v6778 = vpack.c.b16 %v6749, %v6748
        %v6779 = vpack.c.b16 %v6751, %v6750
        %v6780 = vpack.c.b16 %v6753, %v6752
        %v6781 = vpack.c.b16 %v6755, %v6754
        %v6782 = vpack.c.b16 %v6757, %v6756
        %v6783 = vpack.c.b16 %v6759, %v6758
        %6808 = vmatpush.bf16.msra.mxu0 %v6767
        %6809 = vmatpush.bf16.msra.mxu0 %v6766
        %6810 = vmatpush.bf16.msra.mxu0 %v6765
        %6811 = vmatpush.bf16.msra.mxu0 %v6764
        %6812 = vmatpush.bf16.msra.mxu0 %v6763
        %6813 = vmatpush.bf16.msra.mxu0 %v6762
        %6814 = vmatpush.bf16.msra.mxu0 %v6761
        %6815 = vmatpush.bf16.msra.mxu0 %v6760
        %6816 = vmatmul.bf16.gmra.mxu0 %v5266
        %v6817 = vpop.f32.mrf.mxu0
        %v6818 = vadd.f32 0.0, %v6817
        %v6819 = vpop.f32.mrf.mxu0
        %v6820 = vadd.f32 0.0, %v6819
        %6821 = vmatmul.bf16.gmra.mxu0 %v5267
        %v6822 = vpop.f32.mrf.mxu0
        %v6823 = vadd.f32 0.0, %v6822
        %v6824 = vpop.f32.mrf.mxu0
        %v6825 = vadd.f32 0.0, %v6824
        %6826 = vmatmul.bf16.gmra.mxu0 %v5268
        %v6827 = vpop.f32.mrf.mxu0
        %v6828 = vadd.f32 0.0, %v6827
        %v6829 = vpop.f32.mrf.mxu0
        %v6830 = vadd.f32 0.0, %v6829
        %6831 = vmatmul.bf16.gmra.mxu0 %v5269
        %v6832 = vpop.f32.mrf.mxu0
        %v6833 = vadd.f32 0.0, %v6832
        %v6834 = vpop.f32.mrf.mxu0
        %v6835 = vadd.f32 0.0, %v6834
        %6836 = vmatmul.bf16.gmra.mxu0 %v5270
        %v6837 = vpop.f32.mrf.mxu0
        %v6838 = vadd.f32 0.0, %v6837
        %v6839 = vpop.f32.mrf.mxu0
        %v6840 = vadd.f32 0.0, %v6839
        %6841 = vmatmul.bf16.gmra.mxu0 %v5271
        %v6842 = vpop.f32.mrf.mxu0
        %v6843 = vadd.f32 0.0, %v6842
        %v6844 = vpop.f32.mrf.mxu0
        %v6845 = vadd.f32 0.0, %v6844
        %6846 = vmatmul.bf16.gmra.mxu0 %v5272
        %v6847 = vpop.f32.mrf.mxu0
        %v6848 = vadd.f32 0.0, %v6847
        %v6849 = vpop.f32.mrf.mxu0
        %v6850 = vadd.f32 0.0, %v6849
        %6851 = vmatmul.bf16.gmra.mxu0 %v5273
        %v6852 = vpop.f32.mrf.mxu0
        %v6853 = vadd.f32 0.0, %v6852
        %v6854 = vpop.f32.mrf.mxu0
        %v6855 = vadd.f32 0.0, %v6854
        %6856 = vmatmul.bf16.gmra.mxu0 %v5274
        %v6857 = vpop.f32.mrf.mxu0
        %v6858 = vadd.f32 0.0, %v6857
        %v6859 = vpop.f32.mrf.mxu0
        %v6860 = vadd.f32 0.0, %v6859
        %6861 = vmatmul.bf16.gmra.mxu0 %v5275
        %v6862 = vpop.f32.mrf.mxu0
        %v6863 = vadd.f32 0.0, %v6862
        %v6864 = vpop.f32.mrf.mxu0
        %v6865 = vadd.f32 0.0, %v6864
        %6866 = vmatmul.bf16.gmra.mxu0 %v5276
        %v6867 = vpop.f32.mrf.mxu0
        %v6868 = vadd.f32 0.0, %v6867
        %v6869 = vpop.f32.mrf.mxu0
        %v6870 = vadd.f32 0.0, %v6869
        %6871 = vmatmul.bf16.gmra.mxu0 %v5277
        %v6872 = vpop.f32.mrf.mxu0
        %v6873 = vadd.f32 0.0, %v6872
        %v6874 = vpop.f32.mrf.mxu0
        %v6875 = vadd.f32 0.0, %v6874
        %6876 = vmatmul.bf16.gmra.mxu0 %v5278
        %v6877 = vpop.f32.mrf.mxu0
        %v6878 = vadd.f32 0.0, %v6877
        %v6879 = vpop.f32.mrf.mxu0
        %v6880 = vadd.f32 0.0, %v6879
        %6881 = vmatmul.bf16.gmra.mxu0 %v5279
        %v6882 = vpop.f32.mrf.mxu0
        %v6883 = vadd.f32 0.0, %v6882
        %v6884 = vpop.f32.mrf.mxu0
        %v6885 = vadd.f32 0.0, %v6884
        %6886 = vmatmul.bf16.gmra.mxu0 %v5280
        %v6887 = vpop.f32.mrf.mxu0
        %v6888 = vadd.f32 0.0, %v6887
        %v6889 = vpop.f32.mrf.mxu0
        %v6890 = vadd.f32 0.0, %v6889
        %6891 = vmatmul.bf16.gmra.mxu0 %v5281
        %v6892 = vpop.f32.mrf.mxu0
        %v6893 = vadd.f32 0.0, %v6892
        %v6894 = vpop.f32.mrf.mxu0
        %v6895 = vadd.f32 0.0, %v6894
        %6896 = vdwg.mxu0
        %6897 = vmatpush.bf16.msra.mxu0 %v6775
        %6898 = vmatpush.bf16.msra.mxu0 %v6774
        %6899 = vmatpush.bf16.msra.mxu0 %v6773
        %6900 = vmatpush.bf16.msra.mxu0 %v6772
        %6901 = vmatpush.bf16.msra.mxu0 %v6771
        %6902 = vmatpush.bf16.msra.mxu0 %v6770
        %6903 = vmatpush.bf16.msra.mxu0 %v6769
        %6904 = vmatpush.bf16.msra.mxu0 %v6768
        %6905 = vmatmul.bf16.gmra.mxu0 %v5390
        %v6906 = vpop.f32.mrf.mxu0
        %v6907 = vadd.f32 %v6818, %v6906
        %v6908 = vpop.f32.mrf.mxu0
        %v6909 = vadd.f32 %v6820, %v6908
        %6910 = vmatmul.bf16.gmra.mxu0 %v5402
        %v6911 = vpop.f32.mrf.mxu0
        %v6912 = vadd.f32 %v6823, %v6911
        %v6913 = vpop.f32.mrf.mxu0
        %v6914 = vadd.f32 %v6825, %v6913
        %6915 = vmatmul.bf16.gmra.mxu0 %v5414
        %v6916 = vpop.f32.mrf.mxu0
        %v6917 = vadd.f32 %v6828, %v6916
        %v6918 = vpop.f32.mrf.mxu0
        %v6919 = vadd.f32 %v6830, %v6918
        %6920 = vmatmul.bf16.gmra.mxu0 %v5426
        %v6921 = vpop.f32.mrf.mxu0
        %v6922 = vadd.f32 %v6833, %v6921
        %v6923 = vpop.f32.mrf.mxu0
        %v6924 = vadd.f32 %v6835, %v6923
        %6925 = vmatmul.bf16.gmra.mxu0 %v5438
        %v6926 = vpop.f32.mrf.mxu0
        %v6927 = vadd.f32 %v6838, %v6926
        %v6928 = vpop.f32.mrf.mxu0
        %v6929 = vadd.f32 %v6840, %v6928
        %6930 = vmatmul.bf16.gmra.mxu0 %v5450
        %v6931 = vpop.f32.mrf.mxu0
        %v6932 = vadd.f32 %v6843, %v6931
        %v6933 = vpop.f32.mrf.mxu0
        %v6934 = vadd.f32 %v6845, %v6933
        %6935 = vmatmul.bf16.gmra.mxu0 %v5462
        %v6936 = vpop.f32.mrf.mxu0
        %v6937 = vadd.f32 %v6848, %v6936
        %v6938 = vpop.f32.mrf.mxu0
        %v6939 = vadd.f32 %v6850, %v6938
        %6940 = vmatmul.bf16.gmra.mxu0 %v5474
        %v6941 = vpop.f32.mrf.mxu0
        %v6942 = vadd.f32 %v6853, %v6941
        %v6943 = vpop.f32.mrf.mxu0
        %v6944 = vadd.f32 %v6855, %v6943
        %6945 = vmatmul.bf16.gmra.mxu0 %v5486
        %v6946 = vpop.f32.mrf.mxu0
        %v6947 = vadd.f32 %v6858, %v6946
        %v6948 = vpop.f32.mrf.mxu0
        %v6949 = vadd.f32 %v6860, %v6948
        %6950 = vmatmul.bf16.gmra.mxu0 %v5498
        %v6951 = vpop.f32.mrf.mxu0
        %v6952 = vadd.f32 %v6863, %v6951
        %v6953 = vpop.f32.mrf.mxu0
        %v6954 = vadd.f32 %v6865, %v6953
        %6955 = vmatmul.bf16.gmra.mxu0 %v5510
        %v6956 = vpop.f32.mrf.mxu0
        %v6957 = vadd.f32 %v6868, %v6956
        %v6958 = vpop.f32.mrf.mxu0
        %v6959 = vadd.f32 %v6870, %v6958
        %6960 = vmatmul.bf16.gmra.mxu0 %v5522
        %v6961 = vpop.f32.mrf.mxu0
        %v6962 = vadd.f32 %v6873, %v6961
        %v6963 = vpop.f32.mrf.mxu0
        %v6964 = vadd.f32 %v6875, %v6963
        %6965 = vmatmul.bf16.gmra.mxu0 %v5534
        %v6966 = vpop.f32.mrf.mxu0
        %v6967 = vadd.f32 %v6878, %v6966
        %v6968 = vpop.f32.mrf.mxu0
        %v6969 = vadd.f32 %v6880, %v6968
        %6970 = vmatmul.bf16.gmra.mxu0 %v5546
        %v6971 = vpop.f32.mrf.mxu0
        %v6972 = vadd.f32 %v6883, %v6971
        %v6973 = vpop.f32.mrf.mxu0
        %v6974 = vadd.f32 %v6885, %v6973
        %6975 = vmatmul.bf16.gmra.mxu0 %v5558
        %v6976 = vpop.f32.mrf.mxu0
        %v6977 = vadd.f32 %v6888, %v6976
        %v6978 = vpop.f32.mrf.mxu0
        %v6979 = vadd.f32 %v6890, %v6978
        %6980 = vmatmul.bf16.gmra.mxu0 %v5570
        %v6981 = vpop.f32.mrf.mxu0
        %v6982 = vadd.f32 %v6893, %v6981
        %v6983 = vpop.f32.mrf.mxu0
        %v6984 = vadd.f32 %v6895, %v6983
        %6985 = vdwg.mxu0
        %6986 = vmatpush.bf16.msra.mxu0 %v6783
        %6987 = vmatpush.bf16.msra.mxu0 %v6782
        %6988 = vmatpush.bf16.msra.mxu0 %v6781
        %6989 = vmatpush.bf16.msra.mxu0 %v6780
        %6990 = vmatpush.bf16.msra.mxu0 %v6779
        %6991 = vmatpush.bf16.msra.mxu0 %v6778
        %6992 = vmatpush.bf16.msra.mxu0 %v6777
        %6993 = vmatpush.bf16.msra.mxu0 %v6776
        %6994 = vmatmul.bf16.gmra.mxu0 %v5598
        %v6995 = vpop.f32.mrf.mxu0
        %v6996 = vadd.f32 %v6907, %v6995
        %v6997 = vpop.f32.mrf.mxu0
        %v6998 = vadd.f32 %v6909, %v6997
        %6999 = vmatmul.bf16.gmra.mxu0 %v5601
        %v7000 = vpop.f32.mrf.mxu0
        %v7001 = vadd.f32 %v6912, %v7000
        %v7002 = vpop.f32.mrf.mxu0
        %v7003 = vadd.f32 %v6914, %v7002
        %7004 = vmatmul.bf16.gmra.mxu0 %v5604
        %v7005 = vpop.f32.mrf.mxu0
        %v7006 = vadd.f32 %v6917, %v7005
        %v7007 = vpop.f32.mrf.mxu0
        %v7008 = vadd.f32 %v6919, %v7007
        %7009 = vmatmul.bf16.gmra.mxu0 %v5607
        %v7010 = vpop.f32.mrf.mxu0
        %v7011 = vadd.f32 %v6922, %v7010
        %v7012 = vpop.f32.mrf.mxu0
        %v7013 = vadd.f32 %v6924, %v7012
        %7014 = vmatmul.bf16.gmra.mxu0 %v5610
        %v7015 = vpop.f32.mrf.mxu0
        %v7016 = vadd.f32 %v6927, %v7015
        %v7017 = vpop.f32.mrf.mxu0
        %v7018 = vadd.f32 %v6929, %v7017
        %7019 = vmatmul.bf16.gmra.mxu0 %v5613
        %v7020 = vpop.f32.mrf.mxu0
        %v7021 = vadd.f32 %v6932, %v7020
        %v7022 = vpop.f32.mrf.mxu0
        %v7023 = vadd.f32 %v6934, %v7022
        %7024 = vmatmul.bf16.gmra.mxu0 %v5616
        %v7025 = vpop.f32.mrf.mxu0
        %v7026 = vadd.f32 %v6937, %v7025
        %v7027 = vpop.f32.mrf.mxu0
        %v7028 = vadd.f32 %v6939, %v7027
        %7029 = vmatmul.bf16.gmra.mxu0 %v5619
        %v7030 = vpop.f32.mrf.mxu0
        %v7031 = vadd.f32 %v6942, %v7030
        %v7032 = vpop.f32.mrf.mxu0
        %v7033 = vadd.f32 %v6944, %v7032
        %7034 = vmatmul.bf16.gmra.mxu0 %v5622
        %v7035 = vpop.f32.mrf.mxu0
        %v7036 = vadd.f32 %v6947, %v7035
        %v7037 = vpop.f32.mrf.mxu0
        %v7038 = vadd.f32 %v6949, %v7037
        %7039 = vmatmul.bf16.gmra.mxu0 %v5625
        %v7040 = vpop.f32.mrf.mxu0
        %v7041 = vadd.f32 %v6952, %v7040
        %v7042 = vpop.f32.mrf.mxu0
        %v7043 = vadd.f32 %v6954, %v7042
        %7044 = vmatmul.bf16.gmra.mxu0 %v5628
        %v7045 = vpop.f32.mrf.mxu0
        %v7046 = vadd.f32 %v6957, %v7045
        %v7047 = vpop.f32.mrf.mxu0
        %v7048 = vadd.f32 %v6959, %v7047
        %7049 = vmatmul.bf16.gmra.mxu0 %v5631
        %v7050 = vpop.f32.mrf.mxu0
        %v7051 = vadd.f32 %v6962, %v7050
        %v7052 = vpop.f32.mrf.mxu0
        %v7053 = vadd.f32 %v6964, %v7052
        %7054 = vmatmul.bf16.gmra.mxu0 %v5634
        %v7055 = vpop.f32.mrf.mxu0
        %v7056 = vadd.f32 %v6967, %v7055
        %v7057 = vpop.f32.mrf.mxu0
        %v7058 = vadd.f32 %v6969, %v7057
        %7059 = vmatmul.bf16.gmra.mxu0 %v5637
        %v7060 = vpop.f32.mrf.mxu0
        %v7061 = vadd.f32 %v6972, %v7060
        %v7062 = vpop.f32.mrf.mxu0
        %v7063 = vadd.f32 %v6974, %v7062
        %7064 = vmatmul.bf16.gmra.mxu0 %v5640
        %v7065 = vpop.f32.mrf.mxu0
        %v7066 = vadd.f32 %v6977, %v7065
        %v7067 = vpop.f32.mrf.mxu0
        %v7068 = vadd.f32 %v6979, %v7067
        %7069 = vmatmul.bf16.gmra.mxu0 %v5643
        %v7070 = vpop.f32.mrf.mxu0
        %v7071 = vadd.f32 %v6982, %v7070
        %v7072 = vpop.f32.mrf.mxu0
        %v7073 = vadd.f32 %v6984, %v7072
        %7074 = vdwg.mxu0
        %v7075 = vadd.f32 %v6584, %v6996
        %v7076 = vadd.f32 %v6585, %v6998
        %v7077 = vadd.f32 %v6586, %v7001
        %v7078 = vadd.f32 %v6587, %v7003
        %v7079 = vadd.f32 %v6588, %v7006
        %v7080 = vadd.f32 %v6589, %v7008
        %v7081 = vadd.f32 %v6590, %v7011
        %v7082 = vadd.f32 %v6591, %v7013
        %v7083 = vadd.f32 %v6592, %v7016
        %v7084 = vadd.f32 %v6593, %v7018
        %v7085 = vadd.f32 %v6594, %v7021
        %v7086 = vadd.f32 %v6595, %v7023
        %v7087 = vadd.f32 %v6596, %v7026
        %v7088 = vadd.f32 %v6597, %v7028
        %v7089 = vadd.f32 %v6598, %v7031
        %v7090 = vadd.f32 %v6599, %v7033
        %v7091 = vadd.f32 %v6600, %v7036
        %v7092 = vadd.f32 %v6601, %v7038
        %v7093 = vadd.f32 %v6602, %v7041
        %v7094 = vadd.f32 %v6603, %v7043
        %v7095 = vadd.f32 %v6604, %v7046
        %v7096 = vadd.f32 %v6605, %v7048
        %v7097 = vadd.f32 %v6606, %v7051
        %v7098 = vadd.f32 %v6607, %v7053
        %v7099 = vadd.f32 %v6608, %v7056
        %v7100 = vadd.f32 %v6609, %v7058
        %v7101 = vadd.f32 %v6610, %v7061
        %v7102 = vadd.f32 %v6611, %v7063
        %v7103 = vadd.f32 %v6612, %v7066
        %v7104 = vadd.f32 %v6613, %v7068
        %v7105 = vadd.f32 %v6614, %v7071
        %v7106 = vadd.f32 %v6615, %v7073
        %7107 = vxpose.xlu0.b32.start [1/16] %v7075, 128
        %7108 = vxpose.xlu0.b32.cont [2/16] %v7076, 128
        %7109 = vxpose.xlu0.b32.cont [3/16] %v7077, 128
        %7110 = vxpose.xlu0.b32.cont [4/16] %v7078, 128
        %7111 = vxpose.xlu0.b32.cont [5/16] %v7079, 128
        %7112 = vxpose.xlu0.b32.cont [6/16] %v7080, 128
        %7113 = vxpose.xlu0.b32.cont [7/16] %v7081, 128
        %7114 = vxpose.xlu0.b32.cont [8/16] %v7082, 128
        %7115 = vxpose.xlu0.b32.cont [9/16] %v7083, 128
        %7116 = vxpose.xlu0.b32.cont [10/16] %v7084, 128
        %7117 = vxpose.xlu0.b32.cont [11/16] %v7085, 128
        %7118 = vxpose.xlu0.b32.cont [12/16] %v7086, 128
        %7119 = vxpose.xlu0.b32.cont [13/16] %v7087, 128
        %7120 = vxpose.xlu0.b32.cont [14/16] %v7088, 128
        %7121 = vxpose.xlu0.b32.cont [15/16] %v7089, 128
        %7122 = vxpose.xlu0.b32.end [16/16] %v7090, 128
        %v7123 = vpop.trf.xlu0
        %v7124 = vpop.trf.xlu0
        %v7125 = vpop.trf.xlu0
        %v7126 = vpop.trf.xlu0
        %v7127 = vpop.trf.xlu0
        %v7128 = vpop.trf.xlu0
        %v7129 = vpop.trf.xlu0
        %v7130 = vpop.trf.xlu0
        %v7131 = vpop.trf.xlu0
        %v7132 = vpop.trf.xlu0
        %v7133 = vpop.trf.xlu0
        %v7134 = vpop.trf.xlu0
        %v7135 = vpop.trf.xlu0
        %v7136 = vpop.trf.xlu0
        %v7137 = vpop.trf.xlu0
        %v7138 = vpop.trf.xlu0
        %7139 = vxpose.xlu0.b32.start [1/16] %v7091, 128
        %7140 = vxpose.xlu0.b32.cont [2/16] %v7092, 128
        %7141 = vxpose.xlu0.b32.cont [3/16] %v7093, 128
        %7142 = vxpose.xlu0.b32.cont [4/16] %v7094, 128
        %7143 = vxpose.xlu0.b32.cont [5/16] %v7095, 128
        %7144 = vxpose.xlu0.b32.cont [6/16] %v7096, 128
        %7145 = vxpose.xlu0.b32.cont [7/16] %v7097, 128
        %7146 = vxpose.xlu0.b32.cont [8/16] %v7098, 128
        %7147 = vxpose.xlu0.b32.cont [9/16] %v7099, 128
        %7148 = vxpose.xlu0.b32.cont [10/16] %v7100, 128
        %7149 = vxpose.xlu0.b32.cont [11/16] %v7101, 128
        %7150 = vxpose.xlu0.b32.cont [12/16] %v7102, 128
        %7151 = vxpose.xlu0.b32.cont [13/16] %v7103, 128
        %7152 = vxpose.xlu0.b32.cont [14/16] %v7104, 128
        %7153 = vxpose.xlu0.b32.cont [15/16] %v7105, 128
        %7154 = vxpose.xlu0.b32.end [16/16] %v7106, 128
        %v7155 = vpop.trf.xlu0
        %v7156 = vpop.trf.xlu0
        %v7157 = vpop.trf.xlu0
        %v7158 = vpop.trf.xlu0
        %v7159 = vpop.trf.xlu0
        %v7160 = vpop.trf.xlu0
        %v7161 = vpop.trf.xlu0
        %v7162 = vpop.trf.xlu0
        %v7163 = vpop.trf.xlu0
        %v7164 = vpop.trf.xlu0
        %v7165 = vpop.trf.xlu0
        %v7166 = vpop.trf.xlu0
        %v7167 = vpop.trf.xlu0
        %v7168 = vpop.trf.xlu0
        %v7169 = vpop.trf.xlu0
        %v7170 = vpop.trf.xlu0
        %v7171 = vxor.u32 %v7123, 2147483648
        %v7172 = vxor.u32 %v7155, 2147483648
        %v7173 = vmul.f32 %v7171, 1.442695
        %v7174 = vpow.pop %v7173
        %v7175 = vmul.f32 %v7172, 1.442695
        %v7176 = vpow.pop %v7175
        %v7177 = vadd.f32 %v7174, 1.0
        %v7178 = vadd.f32 %v7176, 1.0
        %v7179 = vrcp.pop %v7177
        %v7180 = vmul.f32 %v7177, %v7179
        %v7181 = vsub.f32 1.0, %v7180
        %v7182 = vmul.f32 %v7179, %v7181
        %v7183 = vadd.f32 %v7179, %v7182
        %vm7184 = vweird.f32 %v7177
        %vm7185 = vweird.f32 %v7179
        %vm7186 = vmor %vm7184, %vm7185
        %v7187 = vsel %vm7186, %v7179, %v7183
        %v7188 = vand.u32 2147483647, %v7177
        %vm7189 = vcmp.eq.f32.partialorder %v7188, 8.507059e+37
        %v7190 = vand.u32 %v7177, 2147483648
        %v7191 = vor.u32 1.1754944e-38, %v7190
        %v7192 = vsel %vm7189, %v7191, %v7187
        %v7193 = vmul.f32 1.0, %v7192
        %v7194 = vrcp.pop %v7178
        %v7195 = vmul.f32 %v7178, %v7194
        %v7196 = vsub.f32 1.0, %v7195
        %v7197 = vmul.f32 %v7194, %v7196
        %v7198 = vadd.f32 %v7194, %v7197
        %vm7199 = vweird.f32 %v7178
        %vm7200 = vweird.f32 %v7194
        %vm7201 = vmor %vm7199, %vm7200
        %v7202 = vsel %vm7201, %v7194, %v7198
        %v7203 = vand.u32 2147483647, %v7178
        %vm7204 = vcmp.eq.f32.partialorder %v7203, 8.507059e+37
        %v7205 = vand.u32 %v7178, 2147483648
        %v7206 = vor.u32 1.1754944e-38, %v7205
        %v7207 = vsel %vm7204, %v7206, %v7202
        %v7208 = vmul.f32 1.0, %v7207
        %v7211 = vrot.slane %v7208, 4
        %v7212 = vsel %vm1097, %v7193, %v7211
        %7214 = vst [vmem:[%s521] sm:$0x77] %v7212
        %p7215 = scmp.lt.s32.totalorder %s27, 1
        %s7216 = scalar_select %p7215, %s27, 1
        %s7217 = smul.addr %s7216, 2
        %s7218 = smul.addr %s7217, 4
        %s7219 = scalar_lea.vmem %s11, %s7218
        // Predicated region
        $region101: #{position_decoder_forward.1} parent=63 // pred_check
          %p7220 = pneg %p281
        $region102: #{position_decoder_forward.1} parent=63 // pred_check_branch
          %7222 = sbr.rel (%p7220) target = $region104
        $region103: #{position_decoder_forward.1} parent=63 // pred_region
          _
        $region104: #{position_decoder_forward.1} parent=63 // pred_fallthru
          _
      $region64: #{position_decoder_forward.1} parent=5 // pred_fallthru
        _
      %p7223 = scmp.le.s32.totalorder 2, %s22
      // Predicated region
      $region105: #{position_decoder_forward.1} parent=5 // pred_check
        %p7224 = pneg %p7223
      $region106: #{position_decoder_forward.1} parent=5 // pred_check_branch
        %7226 = sbr.rel (%p7224) target = $region108
      $region107: #{position_decoder_forward.1} parent=5 // pred_region
        %s7227 = ssub.s32 %s22, 2
        // Predicated region
        $region109: #{position_decoder_forward.1} parent=107 // pred_check
          %p7228 = pneg %p287
        $region110: #{position_decoder_forward.1} parent=107 // pred_check_branch
          %7230 = sbr.rel (%p7228) target = $region112
        $region111: #{position_decoder_forward.1} parent=107 // pred_region
          %p7231 = scmp.lt.s32.totalorder %s28, 1
          %s7232 = scalar_select %p7231, %s28, 1
          %s7233 = smul.addr %s7232, 2
          %s7234 = smul.addr %s7233, 4
          %s7235 = scalar_lea.vmem %s11, %s7234
        $region112: #{position_decoder_forward.1} parent=107 // pred_fallthru
          _
      $region108: #{position_decoder_forward.1} parent=5 // pred_fallthru
        _
    $region6: #{position_decoder_forward.1} parent=1 // loop_footer
      %s26 = sadd.s32 1, %s22
    $region7: #{position_decoder_forward.1} parent=1 // loop_footer_branch
      %21 = sbr.rel target = $region3
    $region8: #{position_decoder_forward.1} parent=1 // loop_exit
      _
    %7236 = vsyncpa [#allocation7], 1
    %s7237 = scalar_lea.sflag [#allocation7], 1
    %7238 = vsyncpa %s7237, 1
    %7239 = vsyncpa [#allocation9], 1
    %7240 = vsyncpa [#allocation12], 1
    %7241 = vsyncpa [#allocation15], 1
    %7242 = vsyncpa [#allocation18], 1

</llo_original>
